<compile_context>
chip_gen: v5e
topology: v5e:2x2
jax: 0.10.0
libtpu: 0.0.40
codegen_flags: <defaults>
</compile_context>

<pallas_src>
import functools

import jax
import jax.numpy as jnp
from jax.experimental import pallas as pl
from jax.experimental.pallas import tpu as pltpu


# -----------------------------------------------------------------------------
# Kernel 1: fused GCN drug branch
#   relu(A(XW1)+b1) -> relu(A(.)W2+b2) -> relu(A(.)W3+b3) -> gmp -> relu(fc_g1) -> fc_g2
# -----------------------------------------------------------------------------
def _gcn_branch_kernel(a_ref, x_ref, w1_ref, b1_ref, w2_ref, b2_ref,
                       w3_ref, b3_ref, oh_ref, wg1_ref, bg1_ref,
                       wg2_ref, bg2_ref, o_ref, *, num_graphs):
    a = a_ref[...]                                           # (N, N) bf16

    def gcn(h_bf16, w_ref, b_ref):
        xw = jnp.dot(h_bf16, w_ref[...], preferred_element_type=jnp.float32)
        y = jnp.dot(a, xw.astype(jnp.bfloat16),
                    preferred_element_type=jnp.float32) + b_ref[...]
        return jnp.maximum(y, 0.0)                           # f32 epilogue

    h = gcn(x_ref[...], w1_ref, b1_ref)                      # (N, 78)
    h = gcn(h.astype(jnp.bfloat16), w2_ref, b2_ref)          # (N, 156)
    h = gcn(h.astype(jnp.bfloat16), w3_ref, b3_ref)          # (N, 312) f32

    # Global max pool over the nodes of each graph, entirely in-kernel.
    oh = oh_ref[...]                                         # (N, G) one-hot f32
    rows = []
    for g in range(num_graphs):
        mask_g = oh[:, g:g + 1] > 0.5                        # (N, 1)
        masked = jnp.where(mask_g, h, -1e30)
        rows.append(jnp.max(masked, axis=0, keepdims=True))  # (1, 312)
    pooled = jnp.concatenate(rows, axis=0)                   # (G, 312) f32

    g1 = jnp.dot(pooled.astype(jnp.bfloat16), wg1_ref[...],
                 preferred_element_type=jnp.float32) + bg1_ref[...]
    g1 = jnp.maximum(g1, 0.0)                                # (G, 1024)
    o_ref[...] = jnp.dot(g1.astype(jnp.bfloat16), wg2_ref[...],
                         preferred_element_type=jnp.float32) + bg2_ref[...]


def gcn_branch(a_hat, x, onehot, p):
    g = onehot.shape[1]
    out_dim = p["fc_g2_w"].shape[1]
    bf = jnp.bfloat16
    kernel = functools.partial(_gcn_branch_kernel, num_graphs=g)
    return pl.pallas_call(
        kernel,
        out_shape=jax.ShapeDtypeStruct((g, out_dim), jnp.float32),
    )(a_hat.astype(bf), x.astype(bf),
      p["conv1_w"].astype(bf), p["conv1_b"].reshape(1, -1),
      p["conv2_w"].astype(bf), p["conv2_b"].reshape(1, -1),
      p["conv3_w"].astype(bf), p["conv3_b"].reshape(1, -1),
      onehot,
      p["fc_g1_w"].astype(bf), p["fc_g1_b"].reshape(1, -1),
      p["fc_g2_w"].astype(bf), p["fc_g2_b"].reshape(1, -1))


# -----------------------------------------------------------------------------
# Kernel 2: fused target (protein) branch: Conv1d(1000 -> 32, k=8) + fc1_xt
#   One grid step per batch element; no im2col materialisation in HBM.
# -----------------------------------------------------------------------------
def _target_branch_kernel(emb_ref, wc_ref, bc_ref, wfc_ref, bfc_ref, o_ref,
                          *, k, lout, n_filters):
    e = emb_ref[0]                                           # (Cpad, L) bf16, L = 128
    out_dim = wfc_ref.shape[2]

    # All k taps in ONE MXU matmul: rows j*n_filters + f hold tap j / filter f.
    full = jnp.dot(wc_ref[...], e, preferred_element_type=jnp.float32)   # (k*F, L) f32

    # conv[f, l] = sum_j full[j*F + f, l + j]  (shift-add of cheap value slices)
    conv = full[0:n_filters, 0:lout]
    for j in range(1, k):
        conv = conv + full[j * n_filters:(j + 1) * n_filters, j:j + lout]
    conv = conv + bc_ref[...]                                # (F, lout) f32, bias broadcast
    conv_bf = conv.astype(jnp.bfloat16)

    # fc1_xt fused: xt = sum_f conv[f, :] @ Wfc[f, :, :]  (flatten-free; avoids the
    # (32,121) -> (1,3872) lane relayout a true flatten would require).
    acc = jnp.zeros((1, out_dim), jnp.float32)
    for f in range(n_filters):
        acc = acc + jnp.dot(conv_bf[f:f + 1, :], wfc_ref[f],
                            preferred_element_type=jnp.float32)
    o_ref[0] = acc + bfc_ref[...]                            # lane-dense (1, 128) store


def target_branch(emb, conv_w, conv_b, fc_w, fc_b):
    bsz, c_in, length = emb.shape                            # (B, 1000, 128)
    n_filters, _, k = conv_w.shape                           # (32, 1000, 8)
    lout = length - k + 1                                    # 121
    out_dim = fc_w.shape[1]                                  # 128
    c_pad = ((c_in + 127) // 128) * 128                      # 1024 (aligned K)

    bf = jnp.bfloat16
    emb_p = jnp.pad(emb.astype(bf), ((0, 0), (0, c_pad - c_in), (0, 0)))     # (B, 1024, 128)
    wc = jnp.transpose(conv_w, (2, 0, 1)).reshape(k * n_filters, c_in)
    wc = jnp.pad(wc, ((0, 0), (0, c_pad - c_in))).astype(bf)                 # (256, 1024)
    wfc = fc_w.reshape(n_filters, lout, out_dim).astype(bf)                  # (32, 121, 128)
    bc = conv_b.reshape(n_filters, 1)                                        # (32, 1) f32
    bfc = fc_b.reshape(1, out_dim)                                           # (1, 128) f32

    kernel = functools.partial(_target_branch_kernel,
                               k=k, lout=lout, n_filters=n_filters)
    out = pl.pallas_call(
        kernel,
        grid=(bsz,),
        in_specs=[
            pl.BlockSpec((1, c_pad, length), lambda b: (b, 0, 0)),
            pl.BlockSpec((k * n_filters, c_pad), lambda b: (0, 0)),
            pl.BlockSpec((n_filters, 1), lambda b: (0, 0)),
            pl.BlockSpec((n_filters, lout, out_dim), lambda b: (0, 0, 0)),
            pl.BlockSpec((1, out_dim), lambda b: (0, 0)),
        ],
        out_specs=pl.BlockSpec((1, 1, out_dim), lambda b: (b, 0, 0)),
        out_shape=jax.ShapeDtypeStruct((bsz, 1, out_dim), jnp.float32),
        compiler_params=pltpu.CompilerParams(dimension_semantics=("parallel",)),
    )(emb_p, wc, bc, wfc, bfc)
    return out.reshape(bsz, out_dim)


# -----------------------------------------------------------------------------
# Kernel 3: fused FG linear + concat + head (fc1 -> relu -> fc2 -> relu -> out)
#   fc1 weight is split into three row blocks so no concat / FG round trip is needed.
# -----------------------------------------------------------------------------
def _head_kernel(xg_ref, xt_ref, fg_ref, wfg_ref, bfg_ref,
                 w1a_ref, w1b_ref, w1c_ref, b1_ref,
                 w2_ref, b2_ref, w3_ref, b3_ref, o_ref):
    bf = jnp.bfloat16
    ofg = jnp.dot(fg_ref[...].astype(bf), wfg_ref[...],
                  preferred_element_type=jnp.float32) + bfg_ref[...]        # (B, 128)
    h = (jnp.dot(xg_ref[...].astype(bf), w1a_ref[...], preferred_element_type=jnp.float32)
         + jnp.dot(xt_ref[...].astype(bf), w1b_ref[...], preferred_element_type=jnp.float32)
         + jnp.dot(ofg.astype(bf), w1c_ref[...], preferred_element_type=jnp.float32)
         + b1_ref[...])
    h = jnp.maximum(h, 0.0)                                                 # (B, 1024)
    h = jnp.dot(h.astype(bf), w2_ref[...], preferred_element_type=jnp.float32) + b2_ref[...]
    h = jnp.maximum(h, 0.0)                                                 # (B, 512)
    o_ref[...] = jnp.dot(h.astype(bf), w3_ref[...],
                         preferred_element_type=jnp.float32) + b3_ref[...]  # (B, 1)


def fused_head(x_gcn, xt, fg_feat, p):
    bsz, d = x_gcn.shape
    bf = jnp.bfloat16
    w1 = p["fc1_w"]
    return pl.pallas_call(
        _head_kernel,
        out_shape=jax.ShapeDtypeStruct((bsz, p["out_w"].shape[1]), jnp.float32),
    )(x_gcn, xt, fg_feat,
      p["fg_out_w"].astype(bf), p["fg_out_b"].reshape(1, -1),
      w1[:d].astype(bf), w1[d:2 * d].astype(bf), w1[2 * d:3 * d].astype(bf),
      p["fc1_b"].reshape(1, -1),
      p["fc2_w"].astype(bf), p["fc2_b"].reshape(1, -1),
      p["out_w"].astype(bf), p["out_b"].reshape(1, -1))


# -----------------------------------------------------------------------------
# Glue
# -----------------------------------------------------------------------------
def build_norm_adj(edge_index, num_nodes):
    """A_hat = D^-1/2 (A + I) D^-1/2, PyG GCNConv's default normalization."""
    a = jnp.zeros((num_nodes, num_nodes), jnp.float32)
    a = a.at[edge_index[1], edge_index[0]].set(1.0)          # aggregate src -> dst
    a = a + jnp.eye(num_nodes, dtype=jnp.float32)            # self loops
    deg = jnp.sum(a, axis=1)
    d_inv_sqrt = 1.0 / jnp.sqrt(deg)
    return a * d_inv_sqrt[:, None] * d_inv_sqrt[None, :]


def gcnfg_forward(params, x, a_hat, batch, target, fg_feat, *, num_graphs):
    # ---- GCN (drug) branch: one fused kernel ----
    onehot = (batch[:, None] == jnp.arange(num_graphs)[None, :]).astype(jnp.float32)
    x_gcn = gcn_branch(a_hat, x, onehot, params)                          # (B, 128)

    # ---- target (protein) branch: Conv1d + fc1_xt in one fused kernel ----
    # Cast the embedding table BEFORE the gather so the (B,1000,128) gather writes bf16.
    emb = jnp.take(params["embed_xt"].astype(jnp.bfloat16), target, axis=0)   # (B, 1000, 128)
    xt = target_branch(emb, params["conv_xt_w"], params["conv_xt_b"],
                       params["fc1_xt_w"], params["fc1_xt_b"])            # (B, 128)

    # ---- FG branch + concat + head: one fused kernel ----
    # TODO(synk): match_fg (RDKit + pickled fg2emb) and Prompt_generator are not
    # translatable; fg_feat stands in for the (B, 300) prompt output.
    return fused_head(x_gcn, xt, fg_feat, params)                         # (B, 1)


gcnfg_forward_jit = jax.jit(gcnfg_forward, static_argnames=("num_graphs",))


def init_params(key):
    num_features_xd = 78
    embed_dim = 128
    n_filters = 32
    output_dim = 128
    num_features_xt = 25

    def nrm(k, shape, scale=0.05):
        return scale * jax.random.normal(k, shape, dtype=jnp.float32)

    ks = jax.random.split(key, 24)
    return {
        "conv1_w": nrm(ks[0], (num_features_xd, num_features_xd)),
        "conv1_b": nrm(ks[1], (num_features_xd,)),
        "conv2_w": nrm(ks[2], (num_features_xd, num_features_xd * 2)),
        "conv2_b": nrm(ks[3], (num_features_xd * 2,)),
        "conv3_w": nrm(ks[4], (num_features_xd * 2, num_features_xd * 4)),
        "conv3_b": nrm(ks[5], (num_features_xd * 4,)),
        "fc_g1_w": nrm(ks[6], (num_features_xd * 4, 1024)),
        "fc_g1_b": nrm(ks[7], (1024,)),
        "fc_g2_w": nrm(ks[8], (1024, output_dim)),
        "fc_g2_b": nrm(ks[9], (output_dim,)),
        "embed_xt": nrm(ks[10], (num_features_xt + 1, embed_dim)),
        "conv_xt_w": nrm(ks[11], (n_filters, 1000, 8)),
        "conv_xt_b": nrm(ks[12], (n_filters,)),
        "fc1_xt_w": nrm(ks[13], (32 * 121, output_dim)),
        "fc1_xt_b": nrm(ks[14], (output_dim,)),
        "fg_out_w": nrm(ks[15], (300, output_dim)),
        "fg_out_b": nrm(ks[16], (output_dim,)),
        "fc1_w": nrm(ks[17], (3 * output_dim, 1024)),
        "fc1_b": nrm(ks[18], (1024,)),
        "fc2_w": nrm(ks[19], (1024, 512)),
        "fc2_b": nrm(ks[20], (512,)),
        "out_w": nrm(ks[21], (512, 1)),
        "out_b": nrm(ks[22], (1,)),
    }


if __name__ == "__main__":
    key = jax.random.PRNGKey(0)
    k_param, k_x, k_t, k_fg = jax.random.split(key, 4)

    params = init_params(k_param)

    # Small synthetic batch: 2 ring graphs of 10 nodes each, 78-dim node features.
    num_graphs = 2
    nodes_per_graph = 10
    num_nodes = num_graphs * nodes_per_graph

    x = jax.random.normal(k_x, (num_nodes, 78), dtype=jnp.float32)

    src, dst = [], []
    for g in range(num_graphs):
        base = g * nodes_per_graph
        for i in range(nodes_per_graph):
            a, b = base + i, base + (i + 1) % nodes_per_graph
            src += [a, b]
            dst += [b, a]
    edge_index = jnp.array([src, dst], dtype=jnp.int32)                   # (2, 40)
    batch = jnp.array([g for g in range(num_graphs) for _ in range(nodes_per_graph)],
                      dtype=jnp.int32)

    a_hat = build_norm_adj(edge_index, num_nodes)                         # (20, 20)

    target = jax.random.randint(k_t, (num_graphs, 1000), 0, 26, dtype=jnp.int32)
    fg_feat = jax.random.normal(k_fg, (num_graphs, 300), dtype=jnp.float32)

    out = gcnfg_forward_jit(params, x, a_hat, batch, target, fg_feat,
                            num_graphs=num_graphs)
    out = jax.block_until_ready(out)
    assert out.shape == (num_graphs, 1) and out.dtype == jnp.float32
    print("KERNEL_OK")
</pallas_src>

<mosaic_0001>
module attributes {stable_mosaic.version = 11 : i64} {
  func.func @_gcn_branch_kernel(%arg0: memref<20x20xbf16, #tpu.memory_space<vmem>>, %arg1: memref<20x78xbf16, #tpu.memory_space<vmem>>, %arg2: memref<78x78xbf16, #tpu.memory_space<vmem>>, %arg3: memref<1x78xf32, #tpu.memory_space<vmem>>, %arg4: memref<78x156xbf16, #tpu.memory_space<vmem>>, %arg5: memref<1x156xf32, #tpu.memory_space<vmem>>, %arg6: memref<156x312xbf16, #tpu.memory_space<vmem>>, %arg7: memref<1x312xf32, #tpu.memory_space<vmem>>, %arg8: memref<20x2xf32, #tpu.memory_space<vmem>>, %arg9: memref<312x1024xbf16, #tpu.memory_space<vmem>>, %arg10: memref<1x1024xf32, #tpu.memory_space<vmem>>, %arg11: memref<1024x128xbf16, #tpu.memory_space<vmem>>, %arg12: memref<1x128xf32, #tpu.memory_space<vmem>>, %arg13: memref<2x128xf32, #tpu.memory_space<vmem>>) attributes {dimension_semantics = [], scalar_prefetch = 0 : i64, scratch_operands = 0 : i64, tpu.core_type = #tpu.core_type<tc>} {
    %c0 = arith.constant 0 : index
    %c0_0 = arith.constant 0 : index
    %0 = vector.load %arg0[%c0, %c0_0] : memref<20x20xbf16, #tpu.memory_space<vmem>>, vector<20x20xbf16>
    %c0_1 = arith.constant 0 : index
    %c0_2 = arith.constant 0 : index
    %1 = vector.load %arg1[%c0_1, %c0_2] : memref<20x78xbf16, #tpu.memory_space<vmem>>, vector<20x78xbf16>
    %c0_3 = arith.constant 0 : index
    %c0_4 = arith.constant 0 : index
    %2 = vector.load %arg2[%c0_3, %c0_4] : memref<78x78xbf16, #tpu.memory_space<vmem>>, vector<78x78xbf16>
    %cst = arith.constant dense<0.000000e+00> : vector<20x78xf32>
    %3 = tpu.matmul %1, %2, %cst {dimension_numbers = #tpu.dot_dimension_numbers<[1], [0], [0], [1], [0, 0, 1, 1], [], []>} : vector<20x78xbf16>, vector<78x78xbf16>, vector<20x78xf32> -> vector<20x78xf32>
    %4 = arith.truncf %3 : vector<20x78xf32> to vector<20x78xbf16>
    %cst_5 = arith.constant dense<0.000000e+00> : vector<20x78xf32>
    %5 = tpu.matmul %0, %4, %cst_5 {dimension_numbers = #tpu.dot_dimension_numbers<[1], [0], [0], [1], [0, 0, 1, 1], [], []>} : vector<20x20xbf16>, vector<20x78xbf16>, vector<20x78xf32> -> vector<20x78xf32>
    %c0_6 = arith.constant 0 : index
    %c0_7 = arith.constant 0 : index
    %6 = vector.load %arg3[%c0_6, %c0_7] : memref<1x78xf32, #tpu.memory_space<vmem>>, vector<1x78xf32>
    %7 = vector.broadcast %6 : vector<1x78xf32> to vector<20x78xf32>
    %8 = arith.addf %5, %7 : vector<20x78xf32>
    %cst_8 = arith.constant 0.000000e+00 : f32
    %9 = vector.broadcast %cst_8 : f32 to vector<20x78xf32>
    %10 = arith.maximumf %8, %9 : vector<20x78xf32>
    %11 = arith.truncf %10 : vector<20x78xf32> to vector<20x78xbf16>
    %c0_9 = arith.constant 0 : index
    %c0_10 = arith.constant 0 : index
    %12 = vector.load %arg4[%c0_9, %c0_10] : memref<78x156xbf16, #tpu.memory_space<vmem>>, vector<78x156xbf16>
    %cst_11 = arith.constant dense<0.000000e+00> : vector<20x156xf32>
    %13 = tpu.matmul %11, %12, %cst_11 {dimension_numbers = #tpu.dot_dimension_numbers<[1], [0], [0], [1], [0, 0, 1, 1], [], []>} : vector<20x78xbf16>, vector<78x156xbf16>, vector<20x156xf32> -> vector<20x156xf32>
    %14 = arith.truncf %13 : vector<20x156xf32> to vector<20x156xbf16>
    %cst_12 = arith.constant dense<0.000000e+00> : vector<20x156xf32>
    %15 = tpu.matmul %0, %14, %cst_12 {dimension_numbers = #tpu.dot_dimension_numbers<[1], [0], [0], [1], [0, 0, 1, 1], [], []>} : vector<20x20xbf16>, vector<20x156xbf16>, vector<20x156xf32> -> vector<20x156xf32>
    %c0_13 = arith.constant 0 : index
    %c0_14 = arith.constant 0 : index
    %16 = vector.load %arg5[%c0_13, %c0_14] : memref<1x156xf32, #tpu.memory_space<vmem>>, vector<1x156xf32>
    %17 = vector.broadcast %16 : vector<1x156xf32> to vector<20x156xf32>
    %18 = arith.addf %15, %17 : vector<20x156xf32>
    %cst_15 = arith.constant 0.000000e+00 : f32
    %19 = vector.broadcast %cst_15 : f32 to vector<20x156xf32>
    %20 = arith.maximumf %18, %19 : vector<20x156xf32>
    %21 = arith.truncf %20 : vector<20x156xf32> to vector<20x156xbf16>
    %c0_16 = arith.constant 0 : index
    %c0_17 = arith.constant 0 : index
    %22 = vector.load %arg6[%c0_16, %c0_17] : memref<156x312xbf16, #tpu.memory_space<vmem>>, vector<156x312xbf16>
    %cst_18 = arith.constant dense<0.000000e+00> : vector<20x312xf32>
    %23 = tpu.matmul %21, %22, %cst_18 {dimension_numbers = #tpu.dot_dimension_numbers<[1], [0], [0], [1], [0, 0, 1, 1], [], []>} : vector<20x156xbf16>, vector<156x312xbf16>, vector<20x312xf32> -> vector<20x312xf32>
    %24 = arith.truncf %23 : vector<20x312xf32> to vector<20x312xbf16>
    %cst_19 = arith.constant dense<0.000000e+00> : vector<20x312xf32>
    %25 = tpu.matmul %0, %24, %cst_19 {dimension_numbers = #tpu.dot_dimension_numbers<[1], [0], [0], [1], [0, 0, 1, 1], [], []>} : vector<20x20xbf16>, vector<20x312xbf16>, vector<20x312xf32> -> vector<20x312xf32>
    %c0_20 = arith.constant 0 : index
    %c0_21 = arith.constant 0 : index
    %26 = vector.load %arg7[%c0_20, %c0_21] : memref<1x312xf32, #tpu.memory_space<vmem>>, vector<1x312xf32>
    %27 = vector.broadcast %26 : vector<1x312xf32> to vector<20x312xf32>
    %28 = arith.addf %25, %27 : vector<20x312xf32>
    %cst_22 = arith.constant 0.000000e+00 : f32
    %29 = vector.broadcast %cst_22 : f32 to vector<20x312xf32>
    %30 = arith.maximumf %28, %29 : vector<20x312xf32>
    %c0_23 = arith.constant 0 : index
    %c0_24 = arith.constant 0 : index
    %31 = vector.load %arg8[%c0_23, %c0_24] : memref<20x2xf32, #tpu.memory_space<vmem>>, vector<20x2xf32>
    %32 = vector.extract_strided_slice %31 {offsets = [0, 0], sizes = [20, 1], strides = [1, 1]} : vector<20x2xf32> to vector<20x1xf32>
    %cst_25 = arith.constant 5.000000e-01 : f32
    %33 = vector.broadcast %cst_25 : f32 to vector<20x1xf32>
    %34 = arith.cmpf ogt, %32, %33 : vector<20x1xf32>
    %cst_26 = arith.constant -1.000000e+30 : f32
    %35 = vector.shape_cast %34 : vector<20x1xi1> to vector<20x1xi1>
    %36 = vector.broadcast %35 : vector<20x1xi1> to vector<20x312xi1>
    %37 = vector.broadcast %cst_26 : f32 to vector<20x312xf32>
    %38 = arith.select %36, %30, %37 : vector<20x312xi1>, vector<20x312xf32>
    %cst_27 = arith.constant dense<0xFF800000> : vector<312xf32>
    %39 = vector.multi_reduction <maximumf>, %38, %cst_27 [0] : vector<20x312xf32> to vector<312xf32>
    %40 = vector.shape_cast %39 : vector<312xf32> to vector<1x312xf32>
    %41 = vector.extract_strided_slice %31 {offsets = [0, 1], sizes = [20, 1], strides = [1, 1]} : vector<20x2xf32> to vector<20x1xf32>
    %cst_28 = arith.constant 5.000000e-01 : f32
    %42 = vector.broadcast %cst_28 : f32 to vector<20x1xf32>
    %43 = arith.cmpf ogt, %41, %42 : vector<20x1xf32>
    %cst_29 = arith.constant -1.000000e+30 : f32
    %44 = vector.shape_cast %43 : vector<20x1xi1> to vector<20x1xi1>
    %45 = vector.broadcast %44 : vector<20x1xi1> to vector<20x312xi1>
    %46 = vector.broadcast %cst_29 : f32 to vector<20x312xf32>
    %47 = arith.select %45, %30, %46 : vector<20x312xi1>, vector<20x312xf32>
    %cst_30 = arith.constant dense<0xFF800000> : vector<312xf32>
    %48 = vector.multi_reduction <maximumf>, %47, %cst_30 [0] : vector<20x312xf32> to vector<312xf32>
    %49 = vector.shape_cast %48 : vector<312xf32> to vector<1x312xf32>
    %50 = tpu.concatenate %40, %49 in 0 : vector<1x312xf32>, vector<1x312xf32> -> vector<2x312xf32>
    %51 = arith.truncf %50 : vector<2x312xf32> to vector<2x312xbf16>
    %c0_31 = arith.constant 0 : index
    %c0_32 = arith.constant 0 : index
    %52 = vector.load %arg9[%c0_31, %c0_32] : memref<312x1024xbf16, #tpu.memory_space<vmem>>, vector<312x1024xbf16>
    %cst_33 = arith.constant dense<0.000000e+00> : vector<2x1024xf32>
    %53 = tpu.matmul %51, %52, %cst_33 {dimension_numbers = #tpu.dot_dimension_numbers<[1], [0], [0], [1], [0, 0, 1, 1], [], []>} : vector<2x312xbf16>, vector<312x1024xbf16>, vector<2x1024xf32> -> vector<2x1024xf32>
    %c0_34 = arith.constant 0 : index
    %c0_35 = arith.constant 0 : index
    %54 = vector.load %arg10[%c0_34, %c0_35] : memref<1x1024xf32, #tpu.memory_space<vmem>>, vector<1x1024xf32>
    %55 = vector.broadcast %54 : vector<1x1024xf32> to vector<2x1024xf32>
    %56 = arith.addf %53, %55 : vector<2x1024xf32>
    %cst_36 = arith.constant 0.000000e+00 : f32
    %57 = vector.broadcast %cst_36 : f32 to vector<2x1024xf32>
    %58 = arith.maximumf %56, %57 : vector<2x1024xf32>
    %59 = arith.truncf %58 : vector<2x1024xf32> to vector<2x1024xbf16>
    %c0_37 = arith.constant 0 : index
    %c0_38 = arith.constant 0 : index
    %60 = vector.load %arg11[%c0_37, %c0_38] : memref<1024x128xbf16, #tpu.memory_space<vmem>>, vector<1024x128xbf16>
    %cst_39 = arith.constant dense<0.000000e+00> : vector<2x128xf32>
    %61 = tpu.matmul %59, %60, %cst_39 {dimension_numbers = #tpu.dot_dimension_numbers<[1], [0], [0], [1], [0, 0, 1, 1], [], []>} : vector<2x1024xbf16>, vector<1024x128xbf16>, vector<2x128xf32> -> vector<2x128xf32>
    %c0_40 = arith.constant 0 : index
    %c0_41 = arith.constant 0 : index
    %62 = vector.load %arg12[%c0_40, %c0_41] : memref<1x128xf32, #tpu.memory_space<vmem>>, vector<1x128xf32>
    %63 = vector.broadcast %62 : vector<1x128xf32> to vector<2x128xf32>
    %64 = arith.addf %61, %63 : vector<2x128xf32>
    %c0_42 = arith.constant 0 : index
    %c0_43 = arith.constant 0 : index
    %65 = vector.load %arg13[%c0_42, %c0_43] : memref<2x128xf32, #tpu.memory_space<vmem>>, vector<2x128xf32>
    tpu.vector_store %arg13[%c0_42, %c0_43], %64 {strides = array<i32>} : memref<2x128xf32, #tpu.memory_space<vmem>>, vector<2x128xf32>,
    return
  }
}

module attributes {stable_mosaic.version = 11 : i64} {
  func.func @_target_branch_kernel(%arg0: i32, %arg1: memref<1x1024x128xbf16, #tpu.memory_space<vmem>>, %arg2: memref<256x1024xbf16, #tpu.memory_space<vmem>>, %arg3: memref<32x1xf32, #tpu.memory_space<vmem>>, %arg4: memref<32x121x128xbf16, #tpu.memory_space<vmem>>, %arg5: memref<1x128xf32, #tpu.memory_space<vmem>>, %arg6: memref<1x1x128xf32, #tpu.memory_space<vmem>>) attributes {dimension_semantics = [#tpu.dimension_semantics<parallel>], iteration_bounds = array<i64: 2>, scalar_prefetch = 0 : i64, scratch_operands = 0 : i64, tpu.core_type = #tpu.core_type<tc>, window_params = [{transform_indices = @transform_0, window_bounds = array<i64: 1, 1024, 128>}, {pipeline_mode = #tpu.pipeline_mode<synchronous>, transform_indices = @transform_1, window_bounds = array<i64: 256, 1024>}, {pipeline_mode = #tpu.pipeline_mode<synchronous>, transform_indices = @transform_2, window_bounds = array<i64: 32, 1>}, {pipeline_mode = #tpu.pipeline_mode<synchronous>, transform_indices = @transform_3, window_bounds = array<i64: 32, 121, 128>}, {pipeline_mode = #tpu.pipeline_mode<synchronous>, transform_indices = @transform_4, window_bounds = array<i64: 1, 128>}, {transform_indices = @transform_5, window_bounds = array<i64: 1, 1, 128>}]} {
    %c0 = arith.constant 0 : index
    %c0_0 = arith.constant 0 : index
    %c0_1 = arith.constant 0 : index
    %0 = vector.load %arg1[%c0, %c0_0, %c0_1] : memref<1x1024x128xbf16, #tpu.memory_space<vmem>>, vector<1x1024x128xbf16>
    %1 = vector.shape_cast %0 : vector<1x1024x128xbf16> to vector<1024x128xbf16>
    %c0_2 = arith.constant 0 : index
    %c0_3 = arith.constant 0 : index
    %2 = vector.load %arg2[%c0_2, %c0_3] : memref<256x1024xbf16, #tpu.memory_space<vmem>>, vector<256x1024xbf16>
    %cst = arith.constant dense<0.000000e+00> : vector<256x128xf32>
    %3 = tpu.matmul %2, %1, %cst {dimension_numbers = #tpu.dot_dimension_numbers<[1], [0], [0], [1], [0, 0, 1, 1], [], []>} : vector<256x1024xbf16>, vector<1024x128xbf16>, vector<256x128xf32> -> vector<256x128xf32>
    %4 = vector.extract_strided_slice %3 {offsets = [0, 0], sizes = [32, 121], strides = [1, 1]} : vector<256x128xf32> to vector<32x121xf32>
    %5 = vector.extract_strided_slice %3 {offsets = [32, 1], sizes = [32, 121], strides = [1, 1]} : vector<256x128xf32> to vector<32x121xf32>
    %6 = arith.addf %4, %5 : vector<32x121xf32>
    %7 = vector.extract_strided_slice %3 {offsets = [64, 2], sizes = [32, 121], strides = [1, 1]} : vector<256x128xf32> to vector<32x121xf32>
    %8 = arith.addf %6, %7 : vector<32x121xf32>
    %9 = vector.extract_strided_slice %3 {offsets = [96, 3], sizes = [32, 121], strides = [1, 1]} : vector<256x128xf32> to vector<32x121xf32>
    %10 = arith.addf %8, %9 : vector<32x121xf32>
    %11 = vector.extract_strided_slice %3 {offsets = [128, 4], sizes = [32, 121], strides = [1, 1]} : vector<256x128xf32> to vector<32x121xf32>
    %12 = arith.addf %10, %11 : vector<32x121xf32>
    %13 = vector.extract_strided_slice %3 {offsets = [160, 5], sizes = [32, 121], strides = [1, 1]} : vector<256x128xf32> to vector<32x121xf32>
    %14 = arith.addf %12, %13 : vector<32x121xf32>
    %15 = vector.extract_strided_slice %3 {offsets = [192, 6], sizes = [32, 121], strides = [1, 1]} : vector<256x128xf32> to vector<32x121xf32>
    %16 = arith.addf %14, %15 : vector<32x121xf32>
    %17 = vector.extract_strided_slice %3 {offsets = [224, 7], sizes = [32, 121], strides = [1, 1]} : vector<256x128xf32> to vector<32x121xf32>
    %18 = arith.addf %16, %17 : vector<32x121xf32>
    %c0_4 = arith.constant 0 : index
    %c0_5 = arith.constant 0 : index
    %19 = vector.load %arg3[%c0_4, %c0_5] : memref<32x1xf32, #tpu.memory_space<vmem>>, vector<32x1xf32>
    %20 = vector.broadcast %19 : vector<32x1xf32> to vector<32x121xf32>
    %21 = arith.addf %18, %20 : vector<32x121xf32>
    %22 = arith.truncf %21 : vector<32x121xf32> to vector<32x121xbf16>
    %cst_6 = arith.constant 0.000000e+00 : f32
    %23 = vector.broadcast %cst_6 : f32 to vector<1x128xf32>
    %24 = vector.extract_strided_slice %22 {offsets = [0, 0], sizes = [1, 121], strides = [1, 1]} : vector<32x121xbf16> to vector<1x121xbf16>
    %c0_7 = arith.constant 0 : index
    %c0_8 = arith.constant 0 : index
    %c0_9 = arith.constant 0 : index
    %25 = vector.load %arg4[%c0_7, %c0_8, %c0_9] : memref<32x121x128xbf16, #tpu.memory_space<vmem>>, vector<1x121x128xbf16>
    %26 = vector.shape_cast %25 : vector<1x121x128xbf16> to vector<121x128xbf16>
    %cst_10 = arith.constant dense<0.000000e+00> : vector<1x128xf32>
    %27 = tpu.matmul %24, %26, %cst_10 {dimension_numbers = #tpu.dot_dimension_numbers<[1], [0], [0], [1], [0, 0, 1, 1], [], []>} : vector<1x121xbf16>, vector<121x128xbf16>, vector<1x128xf32> -> vector<1x128xf32>
    %28 = arith.addf %23, %27 : vector<1x128xf32>
    %29 = vector.extract_strided_slice %22 {offsets = [1, 0], sizes = [1, 121], strides = [1, 1]} : vector<32x121xbf16> to vector<1x121xbf16>
    %c1 = arith.constant 1 : index
    %c0_11 = arith.constant 0 : index
    %c0_12 = arith.constant 0 : index
    %30 = vector.load %arg4[%c1, %c0_11, %c0_12] : memref<32x121x128xbf16, #tpu.memory_space<vmem>>, vector<1x121x128xbf16>
    %31 = vector.shape_cast %30 : vector<1x121x128xbf16> to vector<121x128xbf16>
    %cst_13 = arith.constant dense<0.000000e+00> : vector<1x128xf32>
    %32 = tpu.matmul %29, %31, %cst_13 {dimension_numbers = #tpu.dot_dimension_numbers<[1], [0], [0], [1], [0, 0, 1, 1], [], []>} : vector<1x121xbf16>, vector<121x128xbf16>, vector<1x128xf32> -> vector<1x128xf32>
    %33 = arith.addf %28, %32 : vector<1x128xf32>
    %34 = vector.extract_strided_slice %22 {offsets = [2, 0], sizes = [1, 121], strides = [1, 1]} : vector<32x121xbf16> to vector<1x121xbf16>
    %c2 = arith.constant 2 : index
    %c0_14 = arith.constant 0 : index
    %c0_15 = arith.constant 0 : index
    %35 = vector.load %arg4[%c2, %c0_14, %c0_15] : memref<32x121x128xbf16, #tpu.memory_space<vmem>>, vector<1x121x128xbf16>
    %36 = vector.shape_cast %35 : vector<1x121x128xbf16> to vector<121x128xbf16>
    %cst_16 = arith.constant dense<0.000000e+00> : vector<1x128xf32>
    %37 = tpu.matmul %34, %36, %cst_16 {dimension_numbers = #tpu.dot_dimension_numbers<[1], [0], [0], [1], [0, 0, 1, 1], [], []>} : vector<1x121xbf16>, vector<121x128xbf16>, vector<1x128xf32> -> vector<1x128xf32>
    %38 = arith.addf %33, %37 : vector<1x128xf32>
    %39 = vector.extract_strided_slice %22 {offsets = [3, 0], sizes = [1, 121], strides = [1, 1]} : vector<32x121xbf16> to vector<1x121xbf16>
    %c3 = arith.constant 3 : index
    %c0_17 = arith.constant 0 : index
    %c0_18 = arith.constant 0 : index
    %40 = vector.load %arg4[%c3, %c0_17, %c0_18] : memref<32x121x128xbf16, #tpu.memory_space<vmem>>, vector<1x121x128xbf16>
    %41 = vector.shape_cast %40 : vector<1x121x128xbf16> to vector<121x128xbf16>
    %cst_19 = arith.constant dense<0.000000e+00> : vector<1x128xf32>
    %42 = tpu.matmul %39, %41, %cst_19 {dimension_numbers = #tpu.dot_dimension_numbers<[1], [0], [0], [1], [0, 0, 1, 1], [], []>} : vector<1x121xbf16>, vector<121x128xbf16>, vector<1x128xf32> -> vector<1x128xf32>
    %43 = arith.addf %38, %42 : vector<1x128xf32>
    %44 = vector.extract_strided_slice %22 {offsets = [4, 0], sizes = [1, 121], strides = [1, 1]} : vector<32x121xbf16> to vector<1x121xbf16>
    %c4 = arith.constant 4 : index
    %c0_20 = arith.constant 0 : index
    %c0_21 = arith.constant 0 : index
    %45 = vector.load %arg4[%c4, %c0_20, %c0_21] : memref<32x121x128xbf16, #tpu.memory_space<vmem>>, vector<1x121x128xbf16>
    %46 = vector.shape_cast %45 : vector<1x121x128xbf16> to vector<121x128xbf16>
    %cst_22 = arith.constant dense<0.000000e+00> : vector<1x128xf32>
    %47 = tpu.matmul %44, %46, %cst_22 {dimension_numbers = #tpu.dot_dimension_numbers<[1], [0], [0], [1], [0, 0, 1, 1], [], []>} : vector<1x121xbf16>, vector<121x128xbf16>, vector<1x128xf32> -> vector<1x128xf32>
    %48 = arith.addf %43, %47 : vector<1x128xf32>
    %49 = vector.extract_strided_slice %22 {offsets = [5, 0], sizes = [1, 121], strides = [1, 1]} : vector<32x121xbf16> to vector<1x121xbf16>
    %c5 = arith.constant 5 : index
    %c0_23 = arith.constant 0 : index
    %c0_24 = arith.constant 0 : index
    %50 = vector.load %arg4[%c5, %c0_23, %c0_24] : memref<32x121x128xbf16, #tpu.memory_space<vmem>>, vector<1x121x128xbf16>
    %51 = vector.shape_cast %50 : vector<1x121x128xbf16> to vector<121x128xbf16>
    %cst_25 = arith.constant dense<0.000000e+00> : vector<1x128xf32>
    %52 = tpu.matmul %49, %51, %cst_25 {dimension_numbers = #tpu.dot_dimension_numbers<[1], [0], [0], [1], [0, 0, 1, 1], [], []>} : vector<1x121xbf16>, vector<121x128xbf16>, vector<1x128xf32> -> vector<1x128xf32>
    %53 = arith.addf %48, %52 : vector<1x128xf32>
    %54 = vector.extract_strided_slice %22 {offsets = [6, 0], sizes = [1, 121], strides = [1, 1]} : vector<32x121xbf16> to vector<1x121xbf16>
    %c6 = arith.constant 6 : index
    %c0_26 = arith.constant 0 : index
    %c0_27 = arith.constant 0 : index
    %55 = vector.load %arg4[%c6, %c0_26, %c0_27] : memref<32x121x128xbf16, #tpu.memory_space<vmem>>, vector<1x121x128xbf16>
    %56 = vector.shape_cast %55 : vector<1x121x128xbf16> to vector<121x128xbf16>
    %cst_28 = arith.constant dense<0.000000e+00> : vector<1x128xf32>
    %57 = tpu.matmul %54, %56, %cst_28 {dimension_numbers = #tpu.dot_dimension_numbers<[1], [0], [0], [1], [0, 0, 1, 1], [], []>} : vector<1x121xbf16>, vector<121x128xbf16>, vector<1x128xf32> -> vector<1x128xf32>
    %58 = arith.addf %53, %57 : vector<1x128xf32>
    %59 = vector.extract_strided_slice %22 {offsets = [7, 0], sizes = [1, 121], strides = [1, 1]} : vector<32x121xbf16> to vector<1x121xbf16>
    %c7 = arith.constant 7 : index
    %c0_29 = arith.constant 0 : index
    %c0_30 = arith.constant 0 : index
    %60 = vector.load %arg4[%c7, %c0_29, %c0_30] : memref<32x121x128xbf16, #tpu.memory_space<vmem>>, vector<1x121x128xbf16>
    %61 = vector.shape_cast %60 : vector<1x121x128xbf16> to vector<121x128xbf16>
    %cst_31 = arith.constant dense<0.000000e+00> : vector<1x128xf32>
    %62 = tpu.matmul %59, %61, %cst_31 {dimension_numbers = #tpu.dot_dimension_numbers<[1], [0], [0], [1], [0, 0, 1, 1], [], []>} : vector<1x121xbf16>, vector<121x128xbf16>, vector<1x128xf32> -> vector<1x128xf32>
    %63 = arith.addf %58, %62 : vector<1x128xf32>
    %64 = vector.extract_strided_slice %22 {offsets = [8, 0], sizes = [1, 121], strides = [1, 1]} : vector<32x121xbf16> to vector<1x121xbf16>
    %c8 = arith.constant 8 : index
    %c0_32 = arith.constant 0 : index
    %c0_33 = arith.constant 0 : index
    %65 = vector.load %arg4[%c8, %c0_32, %c0_33] : memref<32x121x128xbf16, #tpu.memory_space<vmem>>, vector<1x121x128xbf16>
    %66 = vector.shape_cast %65 : vector<1x121x128xbf16> to vector<121x128xbf16>
    %cst_34 = arith.constant dense<0.000000e+00> : vector<1x128xf32>
    %67 = tpu.matmul %64, %66, %cst_34 {dimension_numbers = #tpu.dot_dimension_numbers<[1], [0], [0], [1], [0, 0, 1, 1], [], []>} : vector<1x121xbf16>, vector<121x128xbf16>, vector<1x128xf32> -> vector<1x128xf32>
    %68 = arith.addf %63, %67 : vector<1x128xf32>
    %69 = vector.extract_strided_slice %22 {offsets = [9, 0], sizes = [1, 121], strides = [1, 1]} : vector<32x121xbf16> to vector<1x121xbf16>
    %c9 = arith.constant 9 : index
    %c0_35 = arith.constant 0 : index
    %c0_36 = arith.constant 0 : index
    %70 = vector.load %arg4[%c9, %c0_35, %c0_36] : memref<32x121x128xbf16, #tpu.memory_space<vmem>>, vector<1x121x128xbf16>
    %71 = vector.shape_cast %70 : vector<1x121x128xbf16> to vector<121x128xbf16>
    %cst_37 = arith.constant dense<0.000000e+00> : vector<1x128xf32>
    %72 = tpu.matmul %69, %71, %cst_37 {dimension_numbers = #tpu.dot_dimension_numbers<[1], [0], [0], [1], [0, 0, 1, 1], [], []>} : vector<1x121xbf16>, vector<121x128xbf16>, vector<1x128xf32> -> vector<1x128xf32>
    %73 = arith.addf %68, %72 : vector<1x128xf32>
    %74 = vector.extract_strided_slice %22 {offsets = [10, 0], sizes = [1, 121], strides = [1, 1]} : vector<32x121xbf16> to vector<1x121xbf16>
    %c10 = arith.constant 10 : index
    %c0_38 = arith.constant 0 : index
    %c0_39 = arith.constant 0 : index
    %75 = vector.load %arg4[%c10, %c0_38, %c0_39] : memref<32x121x128xbf16, #tpu.memory_space<vmem>>, vector<1x121x128xbf16>
    %76 = vector.shape_cast %75 : vector<1x121x128xbf16> to vector<121x128xbf16>
    %cst_40 = arith.constant dense<0.000000e+00> : vector<1x128xf32>
    %77 = tpu.matmul %74, %76, %cst_40 {dimension_numbers = #tpu.dot_dimension_numbers<[1], [0], [0], [1], [0, 0, 1, 1], [], []>} : vector<1x121xbf16>, vector<121x128xbf16>, vector<1x128xf32> -> vector<1x128xf32>
    %78 = arith.addf %73, %77 : vector<1x128xf32>
    %79 = vector.extract_strided_slice %22 {offsets = [11, 0], sizes = [1, 121], strides = [1, 1]} : vector<32x121xbf16> to vector<1x121xbf16>
    %c11 = arith.constant 11 : index
    %c0_41 = arith.constant 0 : index
    %c0_42 = arith.constant 0 : index
    %80 = vector.load %arg4[%c11, %c0_41, %c0_42] : memref<32x121x128xbf16, #tpu.memory_space<vmem>>, vector<1x121x128xbf16>
    %81 = vector.shape_cast %80 : vector<1x121x128xbf16> to vector<121x128xbf16>
    %cst_43 = arith.constant dense<0.000000e+00> : vector<1x128xf32>
    %82 = tpu.matmul %79, %81, %cst_43 {dimension_numbers = #tpu.dot_dimension_numbers<[1], [0], [0], [1], [0, 0, 1, 1], [], []>} : vector<1x121xbf16>, vector<121x128xbf16>, vector<1x128xf32> -> vector<1x128xf32>
    %83 = arith.addf %78, %82 : vector<1x128xf32>
    %84 = vector.extract_strided_slice %22 {offsets = [12, 0], sizes = [1, 121], strides = [1, 1]} : vector<32x121xbf16> to vector<1x121xbf16>
    %c12 = arith.constant 12 : index
    %c0_44 = arith.constant 0 : index
    %c0_45 = arith.constant 0 : index
    %85 = vector.load %arg4[%c12, %c0_44, %c0_45] : memref<32x121x128xbf16, #tpu.memory_space<vmem>>, vector<1x121x128xbf16>
    %86 = vector.shape_cast %85 : vector<1x121x128xbf16> to vector<121x128xbf16>
    %cst_46 = arith.constant dense<0.000000e+00> : vector<1x128xf32>
    %87 = tpu.matmul %84, %86, %cst_46 {dimension_numbers = #tpu.dot_dimension_numbers<[1], [0], [0], [1], [0, 0, 1, 1], [], []>} : vector<1x121xbf16>, vector<121x128xbf16>, vector<1x128xf32> -> vector<1x128xf32>
    %88 = arith.addf %83, %87 : vector<1x128xf32>
    %89 = vector.extract_strided_slice %22 {offsets = [13, 0], sizes = [1, 121], strides = [1, 1]} : vector<32x121xbf16> to vector<1x121xbf16>
    %c13 = arith.constant 13 : index
    %c0_47 = arith.constant 0 : index
    %c0_48 = arith.constant 0 : index
    %90 = vector.load %arg4[%c13, %c0_47, %c0_48] : memref<32x121x128xbf16, #tpu.memory_space<vmem>>, vector<1x121x128xbf16>
    %91 = vector.shape_cast %90 : vector<1x121x128xbf16> to vector<121x128xbf16>
    %cst_49 = arith.constant dense<0.000000e+00> : vector<1x128xf32>
    %92 = tpu.matmul %89, %91, %cst_49 {dimension_numbers = #tpu.dot_dimension_numbers<[1], [0], [0], [1], [0, 0, 1, 1], [], []>} : vector<1x121xbf16>, vector<121x128xbf16>, vector<1x128xf32> -> vector<1x128xf32>
    %93 = arith.addf %88, %92 : vector<1x128xf32>
    %94 = vector.extract_strided_slice %22 {offsets = [14, 0], sizes = [1, 121], strides = [1, 1]} : vector<32x121xbf16> to vector<1x121xbf16>
    %c14 = arith.constant 14 : index
    %c0_50 = arith.constant 0 : index
    %c0_51 = arith.constant 0 : index
    %95 = vector.load %arg4[%c14, %c0_50, %c0_51] : memref<32x121x128xbf16, #tpu.memory_space<vmem>>, vector<1x121x128xbf16>
    %96 = vector.shape_cast %95 : vector<1x121x128xbf16> to vector<121x128xbf16>
    %cst_52 = arith.constant dense<0.000000e+00> : vector<1x128xf32>
    %97 = tpu.matmul %94, %96, %cst_52 {dimension_numbers = #tpu.dot_dimension_numbers<[1], [0], [0], [1], [0, 0, 1, 1], [], []>} : vector<1x121xbf16>, vector<121x128xbf16>, vector<1x128xf32> -> vector<1x128xf32>
    %98 = arith.addf %93, %97 : vector<1x128xf32>
    %99 = vector.extract_strided_slice %22 {offsets = [15, 0], sizes = [1, 121], strides = [1, 1]} : vector<32x121xbf16> to vector<1x121xbf16>
    %c15 = arith.constant 15 : index
    %c0_53 = arith.constant 0 : index
    %c0_54 = arith.constant 0 : index
    %100 = vector.load %arg4[%c15, %c0_53, %c0_54] : memref<32x121x128xbf16, #tpu.memory_space<vmem>>, vector<1x121x128xbf16>
    %101 = vector.shape_cast %100 : vector<1x121x128xbf16> to vector<121x128xbf16>
    %cst_55 = arith.constant dense<0.000000e+00> : vector<1x128xf32>
    %102 = tpu.matmul %99, %101, %cst_55 {dimension_numbers = #tpu.dot_dimension_numbers<[1], [0], [0], [1], [0, 0, 1, 1], [], []>} : vector<1x121xbf16>, vector<121x128xbf16>, vector<1x128xf32> -> vector<1x128xf32>
    %103 = arith.addf %98, %102 : vector<1x128xf32>
    %104 = vector.extract_strided_slice %22 {offsets = [16, 0], sizes = [1, 121], strides = [1, 1]} : vector<32x121xbf16> to vector<1x121xbf16>
    %c16 = arith.constant 16 : index
    %c0_56 = arith.constant 0 : index
    %c0_57 = arith.constant 0 : index
    %105 = vector.load %arg4[%c16, %c0_56, %c0_57] : memref<32x121x128xbf16, #tpu.memory_space<vmem>>, vector<1x121x128xbf16>
    %106 = vector.shape_cast %105 : vector<1x121x128xbf16> to vector<121x128xbf16>
    %cst_58 = arith.constant dense<0.000000e+00> : vector<1x128xf32>
    %107 = tpu.matmul %104, %106, %cst_58 {dimension_numbers = #tpu.dot_dimension_numbers<[1], [0], [0], [1], [0, 0, 1, 1], [], []>} : vector<1x121xbf16>, vector<121x128xbf16>, vector<1x128xf32> -> vector<1x128xf32>
    %108 = arith.addf %103, %107 : vector<1x128xf32>
    %109 = vector.extract_strided_slice %22 {offsets = [17, 0], sizes = [1, 121], strides = [1, 1]} : vector<32x121xbf16> to vector<1x121xbf16>
    %c17 = arith.constant 17 : index
    %c0_59 = arith.constant 0 : index
    %c0_60 = arith.constant 0 : index
    %110 = vector.load %arg4[%c17, %c0_59, %c0_60] : memref<32x121x128xbf16, #tpu.memory_space<vmem>>, vector<1x121x128xbf16>
    %111 = vector.shape_cast %110 : vector<1x121x128xbf16> to vector<121x128xbf16>
    %cst_61 = arith.constant dense<0.000000e+00> : vector<1x128xf32>
    %112 = tpu.matmul %109, %111, %cst_61 {dimension_numbers = #tpu.dot_dimension_numbers<[1], [0], [0], [1], [0, 0, 1, 1], [], []>} : vector<1x121xbf16>, vector<121x128xbf16>, vector<1x128xf32> -> vector<1x128xf32>
    %113 = arith.addf %108, %112 : vector<1x128xf32>
    %114 = vector.extract_strided_slice %22 {offsets = [18, 0], sizes = [1, 121], strides = [1, 1]} : vector<32x121xbf16> to vector<1x121xbf16>
    %c18 = arith.constant 18 : index
    %c0_62 = arith.constant 0 : index
    %c0_63 = arith.constant 0 : index
    %115 = vector.load %arg4[%c18, %c0_62, %c0_63] : memref<32x121x128xbf16, #tpu.memory_space<vmem>>, vector<1x121x128xbf16>
    %116 = vector.shape_cast %115 : vector<1x121x128xbf16> to vector<121x128xbf16>
    %cst_64 = arith.constant dense<0.000000e+00> : vector<1x128xf32>
    %117 = tpu.matmul %114, %116, %cst_64 {dimension_numbers = #tpu.dot_dimension_numbers<[1], [0], [0], [1], [0, 0, 1, 1], [], []>} : vector<1x121xbf16>, vector<121x128xbf16>, vector<1x128xf32> -> vector<1x128xf32>
    %118 = arith.addf %113, %117 : vector<1x128xf32>
    %119 = vector.extract_strided_slice %22 {offsets = [19, 0], sizes = [1, 121], strides = [1, 1]} : vector<32x121xbf16> to vector<1x121xbf16>
    %c19 = arith.constant 19 : index
    %c0_65 = arith.constant 0 : index
    %c0_66 = arith.constant 0 : index
    %120 = vector.load %arg4[%c19, %c0_65, %c0_66] : memref<32x121x128xbf16, #tpu.memory_space<vmem>>, vector<1x121x128xbf16>
    %121 = vector.shape_cast %120 : vector<1x121x128xbf16> to vector<121x128xbf16>
    %cst_67 = arith.constant dense<0.000000e+00> : vector<1x128xf32>
    %122 = tpu.matmul %119, %121, %cst_67 {dimension_numbers = #tpu.dot_dimension_numbers<[1], [0], [0], [1], [0, 0, 1, 1], [], []>} : vector<1x121xbf16>, vector<121x128xbf16>, vector<1x128xf32> -> vector<1x128xf32>
    %123 = arith.addf %118, %122 : vector<1x128xf32>
    %124 = vector.extract_strided_slice %22 {offsets = [20, 0], sizes = [1, 121], strides = [1, 1]} : vector<32x121xbf16> to vector<1x121xbf16>
    %c20 = arith.constant 20 : index
    %c0_68 = arith.constant 0 : index
    %c0_69 = arith.constant 0 : index
    %125 = vector.load %arg4[%c20, %c0_68, %c0_69] : memref<32x121x128xbf16, #tpu.memory_space<vmem>>, vector<1x121x128xbf16>
    %126 = vector.shape_cast %125 : vector<1x121x128xbf16> to vector<121x128xbf16>
    %cst_70 = arith.constant dense<0.000000e+00> : vector<1x128xf32>
    %127 = tpu.matmul %124, %126, %cst_70 {dimension_numbers = #tpu.dot_dimension_numbers<[1], [0], [0], [1], [0, 0, 1, 1], [], []>} : vector<1x121xbf16>, vector<121x128xbf16>, vector<1x128xf32> -> vector<1x128xf32>
    %128 = arith.addf %123, %127 : vector<1x128xf32>
    %129 = vector.extract_strided_slice %22 {offsets = [21, 0], sizes = [1, 121], strides = [1, 1]} : vector<32x121xbf16> to vector<1x121xbf16>
    %c21 = arith.constant 21 : index
    %c0_71 = arith.constant 0 : index
    %c0_72 = arith.constant 0 : index
    %130 = vector.load %arg4[%c21, %c0_71, %c0_72] : memref<32x121x128xbf16, #tpu.memory_space<vmem>>, vector<1x121x128xbf16>
    %131 = vector.shape_cast %130 : vector<1x121x128xbf16> to vector<121x128xbf16>
    %cst_73 = arith.constant dense<0.000000e+00> : vector<1x128xf32>
    %132 = tpu.matmul %129, %131, %cst_73 {dimension_numbers = #tpu.dot_dimension_numbers<[1], [0], [0], [1], [0, 0, 1, 1], [], []>} : vector<1x121xbf16>, vector<121x128xbf16>, vector<1x128xf32> -> vector<1x128xf32>
    %133 = arith.addf %128, %132 : vector<1x128xf32>
    %134 = vector.extract_strided_slice %22 {offsets = [22, 0], sizes = [1, 121], strides = [1, 1]} : vector<32x121xbf16> to vector<1x121xbf16>
    %c22 = arith.constant 22 : index
    %c0_74 = arith.constant 0 : index
    %c0_75 = arith.constant 0 : index
    %135 = vector.load %arg4[%c22, %c0_74, %c0_75] : memref<32x121x128xbf16, #tpu.memory_space<vmem>>, vector<1x121x128xbf16>
    %136 = vector.shape_cast %135 : vector<1x121x128xbf16> to vector<121x128xbf16>
    %cst_76 = arith.constant dense<0.000000e+00> : vector<1x128xf32>
    %137 = tpu.matmul %134, %136, %cst_76 {dimension_numbers = #tpu.dot_dimension_numbers<[1], [0], [0], [1], [0, 0, 1, 1], [], []>} : vector<1x121xbf16>, vector<121x128xbf16>, vector<1x128xf32> -> vector<1x128xf32>
    %138 = arith.addf %133, %137 : vector<1x128xf32>
    %139 = vector.extract_strided_slice %22 {offsets = [23, 0], sizes = [1, 121], strides = [1, 1]} : vector<32x121xbf16> to vector<1x121xbf16>
    %c23 = arith.constant 23 : index
    %c0_77 = arith.constant 0 : index
    %c0_78 = arith.constant 0 : index
    %140 = vector.load %arg4[%c23, %c0_77, %c0_78] : memref<32x121x128xbf16, #tpu.memory_space<vmem>>, vector<1x121x128xbf16>
    %141 = vector.shape_cast %140 : vector<1x121x128xbf16> to vector<121x128xbf16>
    %cst_79 = arith.constant dense<0.000000e+00> : vector<1x128xf32>
    %142 = tpu.matmul %139, %141, %cst_79 {dimension_numbers = #tpu.dot_dimension_numbers<[1], [0], [0], [1], [0, 0, 1, 1], [], []>} : vector<1x121xbf16>, vector<121x128xbf16>, vector<1x128xf32> -> vector<1x128xf32>
    %143 = arith.addf %138, %142 : vector<1x128xf32>
    %144 = vector.extract_strided_slice %22 {offsets = [24, 0], sizes = [1, 121], strides = [1, 1]} : vector<32x121xbf16> to vector<1x121xbf16>
    %c24 = arith.constant 24 : index
    %c0_80 = arith.constant 0 : index
    %c0_81 = arith.constant 0 : index
    %145 = vector.load %arg4[%c24, %c0_80, %c0_81] : memref<32x121x128xbf16, #tpu.memory_space<vmem>>, vector<1x121x128xbf16>
    %146 = vector.shape_cast %145 : vector<1x121x128xbf16> to vector<121x128xbf16>
    %cst_82 = arith.constant dense<0.000000e+00> : vector<1x128xf32>
    %147 = tpu.matmul %144, %146, %cst_82 {dimension_numbers = #tpu.dot_dimension_numbers<[1], [0], [0], [1], [0, 0, 1, 1], [], []>} : vector<1x121xbf16>, vector<121x128xbf16>, vector<1x128xf32> -> vector<1x128xf32>
    %148 = arith.addf %143, %147 : vector<1x128xf32>
    %149 = vector.extract_strided_slice %22 {offsets = [25, 0], sizes = [1, 121], strides = [1, 1]} : vector<32x121xbf16> to vector<1x121xbf16>
    %c25 = arith.constant 25 : index
    %c0_83 = arith.constant 0 : index
    %c0_84 = arith.constant 0 : index
    %150 = vector.load %arg4[%c25, %c0_83, %c0_84] : memref<32x121x128xbf16, #tpu.memory_space<vmem>>, vector<1x121x128xbf16>
    %151 = vector.shape_cast %150 : vector<1x121x128xbf16> to vector<121x128xbf16>
    %cst_85 = arith.constant dense<0.000000e+00> : vector<1x128xf32>
    %152 = tpu.matmul %149, %151, %cst_85 {dimension_numbers = #tpu.dot_dimension_numbers<[1], [0], [0], [1], [0, 0, 1, 1], [], []>} : vector<1x121xbf16>, vector<121x128xbf16>, vector<1x128xf32> -> vector<1x128xf32>
    %153 = arith.addf %148, %152 : vector<1x128xf32>
    %154 = vector.extract_strided_slice %22 {offsets = [26, 0], sizes = [1, 121], strides = [1, 1]} : vector<32x121xbf16> to vector<1x121xbf16>
    %c26 = arith.constant 26 : index
    %c0_86 = arith.constant 0 : index
    %c0_87 = arith.constant 0 : index
    %155 = vector.load %arg4[%c26, %c0_86, %c0_87] : memref<32x121x128xbf16, #tpu.memory_space<vmem>>, vector<1x121x128xbf16>
    %156 = vector.shape_cast %155 : vector<1x121x128xbf16> to vector<121x128xbf16>
    %cst_88 = arith.constant dense<0.000000e+00> : vector<1x128xf32>
    %157 = tpu.matmul %154, %156, %cst_88 {dimension_numbers = #tpu.dot_dimension_numbers<[1], [0], [0], [1], [0, 0, 1, 1], [], []>} : vector<1x121xbf16>, vector<121x128xbf16>, vector<1x128xf32> -> vector<1x128xf32>
    %158 = arith.addf %153, %157 : vector<1x128xf32>
    %159 = vector.extract_strided_slice %22 {offsets = [27, 0], sizes = [1, 121], strides = [1, 1]} : vector<32x121xbf16> to vector<1x121xbf16>
    %c27 = arith.constant 27 : index
    %c0_89 = arith.constant 0 : index
    %c0_90 = arith.constant 0 : index
    %160 = vector.load %arg4[%c27, %c0_89, %c0_90] : memref<32x121x128xbf16, #tpu.memory_space<vmem>>, vector<1x121x128xbf16>
    %161 = vector.shape_cast %160 : vector<1x121x128xbf16> to vector<121x128xbf16>
    %cst_91 = arith.constant dense<0.000000e+00> : vector<1x128xf32>
    %162 = tpu.matmul %159, %161, %cst_91 {dimension_numbers = #tpu.dot_dimension_numbers<[1], [0], [0], [1], [0, 0, 1, 1], [], []>} : vector<1x121xbf16>, vector<121x128xbf16>, vector<1x128xf32> -> vector<1x128xf32>
    %163 = arith.addf %158, %162 : vector<1x128xf32>
    %164 = vector.extract_strided_slice %22 {offsets = [28, 0], sizes = [1, 121], strides = [1, 1]} : vector<32x121xbf16> to vector<1x121xbf16>
    %c28 = arith.constant 28 : index
    %c0_92 = arith.constant 0 : index
    %c0_93 = arith.constant 0 : index
    %165 = vector.load %arg4[%c28, %c0_92, %c0_93] : memref<32x121x128xbf16, #tpu.memory_space<vmem>>, vector<1x121x128xbf16>
    %166 = vector.shape_cast %165 : vector<1x121x128xbf16> to vector<121x128xbf16>
    %cst_94 = arith.constant dense<0.000000e+00> : vector<1x128xf32>
    %167 = tpu.matmul %164, %166, %cst_94 {dimension_numbers = #tpu.dot_dimension_numbers<[1], [0], [0], [1], [0, 0, 1, 1], [], []>} : vector<1x121xbf16>, vector<121x128xbf16>, vector<1x128xf32> -> vector<1x128xf32>
    %168 = arith.addf %163, %167 : vector<1x128xf32>
    %169 = vector.extract_strided_slice %22 {offsets = [29, 0], sizes = [1, 121], strides = [1, 1]} : vector<32x121xbf16> to vector<1x121xbf16>
    %c29 = arith.constant 29 : index
    %c0_95 = arith.constant 0 : index
    %c0_96 = arith.constant 0 : index
    %170 = vector.load %arg4[%c29, %c0_95, %c0_96] : memref<32x121x128xbf16, #tpu.memory_space<vmem>>, vector<1x121x128xbf16>
    %171 = vector.shape_cast %170 : vector<1x121x128xbf16> to vector<121x128xbf16>
    %cst_97 = arith.constant dense<0.000000e+00> : vector<1x128xf32>
    %172 = tpu.matmul %169, %171, %cst_97 {dimension_numbers = #tpu.dot_dimension_numbers<[1], [0], [0], [1], [0, 0, 1, 1], [], []>} : vector<1x121xbf16>, vector<121x128xbf16>, vector<1x128xf32> -> vector<1x128xf32>
    %173 = arith.addf %168, %172 : vector<1x128xf32>
    %174 = vector.extract_strided_slice %22 {offsets = [30, 0], sizes = [1, 121], strides = [1, 1]} : vector<32x121xbf16> to vector<1x121xbf16>
    %c30 = arith.constant 30 : index
    %c0_98 = arith.constant 0 : index
    %c0_99 = arith.constant 0 : index
    %175 = vector.load %arg4[%c30, %c0_98, %c0_99] : memref<32x121x128xbf16, #tpu.memory_space<vmem>>, vector<1x121x128xbf16>
    %176 = vector.shape_cast %175 : vector<1x121x128xbf16> to vector<121x128xbf16>
    %cst_100 = arith.constant dense<0.000000e+00> : vector<1x128xf32>
    %177 = tpu.matmul %174, %176, %cst_100 {dimension_numbers = #tpu.dot_dimension_numbers<[1], [0], [0], [1], [0, 0, 1, 1], [], []>} : vector<1x121xbf16>, vector<121x128xbf16>, vector<1x128xf32> -> vector<1x128xf32>
    %178 = arith.addf %173, %177 : vector<1x128xf32>
    %179 = vector.extract_strided_slice %22 {offsets = [31, 0], sizes = [1, 121], strides = [1, 1]} : vector<32x121xbf16> to vector<1x121xbf16>
    %c31 = arith.constant 31 : index
    %c0_101 = arith.constant 0 : index
    %c0_102 = arith.constant 0 : index
    %180 = vector.load %arg4[%c31, %c0_101, %c0_102] : memref<32x121x128xbf16, #tpu.memory_space<vmem>>, vector<1x121x128xbf16>
    %181 = vector.shape_cast %180 : vector<1x121x128xbf16> to vector<121x128xbf16>
    %cst_103 = arith.constant dense<0.000000e+00> : vector<1x128xf32>
    %182 = tpu.matmul %179, %181, %cst_103 {dimension_numbers = #tpu.dot_dimension_numbers<[1], [0], [0], [1], [0, 0, 1, 1], [], []>} : vector<1x121xbf16>, vector<121x128xbf16>, vector<1x128xf32> -> vector<1x128xf32>
    %183 = arith.addf %178, %182 : vector<1x128xf32>
    %c0_104 = arith.constant 0 : index
    %c0_105 = arith.constant 0 : index
    %184 = vector.load %arg5[%c0_104, %c0_105] : memref<1x128xf32, #tpu.memory_space<vmem>>, vector<1x128xf32>
    %185 = arith.addf %183, %184 : vector<1x128xf32>
    %c0_106 = arith.constant 0 : index
    %c0_107 = arith.constant 0 : index
    %c0_108 = arith.constant 0 : index
    %186 = vector.load %arg6[%c0_106, %c0_107, %c0_108] : memref<1x1x128xf32, #tpu.memory_space<vmem>>, vector<1x1x128xf32>
    %187 = vector.shape_cast %186 : vector<1x1x128xf32> to vector<1x128xf32>
    %188 = vector.shape_cast %185 : vector<1x128xf32> to vector<1x1x128xf32>
    tpu.vector_store %arg6[%c0_106, %c0_107, %c0_108], %188 {strides = array<i32>} : memref<1x1x128xf32, #tpu.memory_space<vmem>>, vector<1x1x128xf32>,
    return
  }
  func.func @transform_0(%arg0: i32) -> (i32, i32, i32) {
    %c0_i32 = arith.constant 0 : i32
    %c0_i32_0 = arith.constant 0 : i32
    %c0_i32_1 = arith.constant 0 : i32
    return %arg0, %c0_i32, %c0_i32_0 : i32, i32, i32
  }
  func.func @transform_1(%arg0: i32) -> (i32, i32) {
    %c0_i32 = arith.constant 0 : i32
    %c0_i32_0 = arith.constant 0 : i32
    %c0_i32_1 = arith.constant 0 : i32
    return %c0_i32, %c0_i32_0 : i32, i32
  }
  func.func @transform_2(%arg0: i32) -> (i32, i32) {
    %c0_i32 = arith.constant 0 : i32
    %c0_i32_0 = arith.constant 0 : i32
    %c0_i32_1 = arith.constant 0 : i32
    return %c0_i32, %c0_i32_0 : i32, i32
  }
  func.func @transform_3(%arg0: i32) -> (i32, i32, i32) {
    %c0_i32 = arith.constant 0 : i32
    %c0_i32_0 = arith.constant 0 : i32
    %c0_i32_1 = arith.constant 0 : i32
    %c0_i32_2 = arith.constant 0 : i32
    return %c0_i32, %c0_i32_0, %c0_i32_1 : i32, i32, i32
  }
  func.func @transform_4(%arg0: i32) -> (i32, i32) {
    %c0_i32 = arith.constant 0 : i32
    %c0_i32_0 = arith.constant 0 : i32
    %c0_i32_1 = arith.constant 0 : i32
    return %c0_i32, %c0_i32_0 : i32, i32
  }
  func.func @transform_5(%arg0: i32) -> (i32, i32, i32) {
    %c0_i32 = arith.constant 0 : i32
    %c0_i32_0 = arith.constant 0 : i32
    %c0_i32_1 = arith.constant 0 : i32
    return %arg0, %c0_i32, %c0_i32_0 : i32, i32, i32
  }
}

module attributes {stable_mosaic.version = 11 : i64} {
  func.func @_head_kernel(%arg0: memref<2x128xf32, #tpu.memory_space<vmem>>, %arg1: memref<2x128xf32, #tpu.memory_space<vmem>>, %arg2: memref<2x300xf32, #tpu.memory_space<vmem>>, %arg3: memref<300x128xbf16, #tpu.memory_space<vmem>>, %arg4: memref<1x128xf32, #tpu.memory_space<vmem>>, %arg5: memref<128x1024xbf16, #tpu.memory_space<vmem>>, %arg6: memref<128x1024xbf16, #tpu.memory_space<vmem>>, %arg7: memref<128x1024xbf16, #tpu.memory_space<vmem>>, %arg8: memref<1x1024xf32, #tpu.memory_space<vmem>>, %arg9: memref<1024x512xbf16, #tpu.memory_space<vmem>>, %arg10: memref<1x512xf32, #tpu.memory_space<vmem>>, %arg11: memref<512x1xbf16, #tpu.memory_space<vmem>>, %arg12: memref<1x1xf32, #tpu.memory_space<vmem>>, %arg13: memref<2x1xf32, #tpu.memory_space<vmem>>) attributes {dimension_semantics = [], scalar_prefetch = 0 : i64, scratch_operands = 0 : i64, tpu.core_type = #tpu.core_type<tc>} {
    %c0 = arith.constant 0 : index
    %c0_0 = arith.constant 0 : index
    %0 = vector.load %arg2[%c0, %c0_0] : memref<2x300xf32, #tpu.memory_space<vmem>>, vector<2x300xf32>
    %1 = arith.truncf %0 : vector<2x300xf32> to vector<2x300xbf16>
    %c0_1 = arith.constant 0 : index
    %c0_2 = arith.constant 0 : index
    %2 = vector.load %arg3[%c0_1, %c0_2] : memref<300x128xbf16, #tpu.memory_space<vmem>>, vector<300x128xbf16>
    %cst = arith.constant dense<0.000000e+00> : vector<2x128xf32>
    %3 = tpu.matmul %1, %2, %cst {dimension_numbers = #tpu.dot_dimension_numbers<[1], [0], [0], [1], [0, 0, 1, 1], [], []>} : vector<2x300xbf16>, vector<300x128xbf16>, vector<2x128xf32> -> vector<2x128xf32>
    %c0_3 = arith.constant 0 : index
    %c0_4 = arith.constant 0 : index
    %4 = vector.load %arg4[%c0_3, %c0_4] : memref<1x128xf32, #tpu.memory_space<vmem>>, vector<1x128xf32>
    %5 = vector.broadcast %4 : vector<1x128xf32> to vector<2x128xf32>
    %6 = arith.addf %3, %5 : vector<2x128xf32>
    %c0_5 = arith.constant 0 : index
    %c0_6 = arith.constant 0 : index
    %7 = vector.load %arg0[%c0_5, %c0_6] : memref<2x128xf32, #tpu.memory_space<vmem>>, vector<2x128xf32>
    %8 = arith.truncf %7 : vector<2x128xf32> to vector<2x128xbf16>
    %c0_7 = arith.constant 0 : index
    %c0_8 = arith.constant 0 : index
    %9 = vector.load %arg5[%c0_7, %c0_8] : memref<128x1024xbf16, #tpu.memory_space<vmem>>, vector<128x1024xbf16>
    %cst_9 = arith.constant dense<0.000000e+00> : vector<2x1024xf32>
    %10 = tpu.matmul %8, %9, %cst_9 {dimension_numbers = #tpu.dot_dimension_numbers<[1], [0], [0], [1], [0, 0, 1, 1], [], []>} : vector<2x128xbf16>, vector<128x1024xbf16>, vector<2x1024xf32> -> vector<2x1024xf32>
    %c0_10 = arith.constant 0 : index
    %c0_11 = arith.constant 0 : index
    %11 = vector.load %arg1[%c0_10, %c0_11] : memref<2x128xf32, #tpu.memory_space<vmem>>, vector<2x128xf32>
    %12 = arith.truncf %11 : vector<2x128xf32> to vector<2x128xbf16>
    %c0_12 = arith.constant 0 : index
    %c0_13 = arith.constant 0 : index
    %13 = vector.load %arg6[%c0_12, %c0_13] : memref<128x1024xbf16, #tpu.memory_space<vmem>>, vector<128x1024xbf16>
    %cst_14 = arith.constant dense<0.000000e+00> : vector<2x1024xf32>
    %14 = tpu.matmul %12, %13, %cst_14 {dimension_numbers = #tpu.dot_dimension_numbers<[1], [0], [0], [1], [0, 0, 1, 1], [], []>} : vector<2x128xbf16>, vector<128x1024xbf16>, vector<2x1024xf32> -> vector<2x1024xf32>
    %15 = arith.addf %10, %14 : vector<2x1024xf32>
    %16 = arith.truncf %6 : vector<2x128xf32> to vector<2x128xbf16>
    %c0_15 = arith.constant 0 : index
    %c0_16 = arith.constant 0 : index
    %17 = vector.load %arg7[%c0_15, %c0_16] : memref<128x1024xbf16, #tpu.memory_space<vmem>>, vector<128x1024xbf16>
    %cst_17 = arith.constant dense<0.000000e+00> : vector<2x1024xf32>
    %18 = tpu.matmul %16, %17, %cst_17 {dimension_numbers = #tpu.dot_dimension_numbers<[1], [0], [0], [1], [0, 0, 1, 1], [], []>} : vector<2x128xbf16>, vector<128x1024xbf16>, vector<2x1024xf32> -> vector<2x1024xf32>
    %19 = arith.addf %15, %18 : vector<2x1024xf32>
    %c0_18 = arith.constant 0 : index
    %c0_19 = arith.constant 0 : index
    %20 = vector.load %arg8[%c0_18, %c0_19] : memref<1x1024xf32, #tpu.memory_space<vmem>>, vector<1x1024xf32>
    %21 = vector.broadcast %20 : vector<1x1024xf32> to vector<2x1024xf32>
    %22 = arith.addf %19, %21 : vector<2x1024xf32>
    %cst_20 = arith.constant 0.000000e+00 : f32
    %23 = vector.broadcast %cst_20 : f32 to vector<2x1024xf32>
    %24 = arith.maximumf %22, %23 : vector<2x1024xf32>
    %25 = arith.truncf %24 : vector<2x1024xf32> to vector<2x1024xbf16>
    %c0_21 = arith.constant 0 : index
    %c0_22 = arith.constant 0 : index
    %26 = vector.load %arg9[%c0_21, %c0_22] : memref<1024x512xbf16, #tpu.memory_space<vmem>>, vector<1024x512xbf16>
    %cst_23 = arith.constant dense<0.000000e+00> : vector<2x512xf32>
    %27 = tpu.matmul %25, %26, %cst_23 {dimension_numbers = #tpu.dot_dimension_numbers<[1], [0], [0], [1], [0, 0, 1, 1], [], []>} : vector<2x1024xbf16>, vector<1024x512xbf16>, vector<2x512xf32> -> vector<2x512xf32>
    %c0_24 = arith.constant 0 : index
    %c0_25 = arith.constant 0 : index
    %28 = vector.load %arg10[%c0_24, %c0_25] : memref<1x512xf32, #tpu.memory_space<vmem>>, vector<1x512xf32>
    %29 = vector.broadcast %28 : vector<1x512xf32> to vector<2x512xf32>
    %30 = arith.addf %27, %29 : vector<2x512xf32>
    %cst_26 = arith.constant 0.000000e+00 : f32
    %31 = vector.broadcast %cst_26 : f32 to vector<2x512xf32>
    %32 = arith.maximumf %30, %31 : vector<2x512xf32>
    %33 = arith.truncf %32 : vector<2x512xf32> to vector<2x512xbf16>
    %c0_27 = arith.constant 0 : index
    %c0_28 = arith.constant 0 : index
    %34 = vector.load %arg11[%c0_27, %c0_28] : memref<512x1xbf16, #tpu.memory_space<vmem>>, vector<512x1xbf16>
    %cst_29 = arith.constant dense<0.000000e+00> : vector<2x1xf32>
    %35 = tpu.matmul %33, %34, %cst_29 {dimension_numbers = #tpu.dot_dimension_numbers<[1], [0], [0], [1], [0, 0, 1, 1], [], []>} : vector<2x512xbf16>, vector<512x1xbf16>, vector<2x1xf32> -> vector<2x1xf32>
    %c0_30 = arith.constant 0 : index
    %c0_31 = arith.constant 0 : index
    %36 = vector.load %arg12[%c0_30, %c0_31] : memref<1x1xf32, #tpu.memory_space<vmem>>, vector<1x1xf32>
    %37 = vector.broadcast %36 : vector<1x1xf32> to vector<2x1xf32>
    %38 = arith.addf %35, %37 : vector<2x1xf32>
    %c0_32 = arith.constant 0 : index
    %c0_33 = arith.constant 0 : index
    %39 = vector.load %arg13[%c0_32, %c0_33] : memref<2x1xf32, #tpu.memory_space<vmem>>, vector<2x1xf32>
    tpu.vector_store %arg13[%c0_32, %c0_33], %38 {strides = array<i32>} : memref<2x1xf32, #tpu.memory_space<vmem>>, vector<2x1xf32>,
    return
  }
}

</mosaic_0001>

<llo_original>
// kernel: gcnfg_forward.3
$region0: #{gcnfg_forward.3}
  #allocation0 [shape = 'u32[]', space=smem, size = 0x4, offset = 0x4, fixed_abs, tag = 'smem constant byte address 0x4 - core index']
  #allocation1 [shape = 'u32[72,128]{1,0:T(1,128)}', space=vmem, size = 0x9000, scoped, tag = 'internal scratch']
  %s0 = inlined_call_operand.vmem [shape: bf16[20,20], index: 0, kind: input, shape index: {}]
  %s1 = inlined_call_operand.vmem [shape: bf16[20,78], index: 1, kind: input, shape index: {}]
  %s2 = inlined_call_operand.vmem [shape: bf16[78,78], index: 2, kind: input, shape index: {}]
  %s3 = inlined_call_operand.vmem [shape: f32[1,78], index: 3, kind: input, shape index: {}]
  %s4 = inlined_call_operand.vmem [shape: bf16[78,156], index: 4, kind: input, shape index: {}]
  %s5 = inlined_call_operand.vmem [shape: f32[1,156], index: 5, kind: input, shape index: {}]
  %s6 = inlined_call_operand.vmem [shape: bf16[156,312], index: 6, kind: input, shape index: {}]
  %s7 = inlined_call_operand.vmem [shape: f32[1,312], index: 7, kind: input, shape index: {}]
  %s8 = inlined_call_operand.vmem [shape: f32[20,2], index: 8, kind: input, shape index: {}]
  %s9 = inlined_call_operand.vmem [shape: bf16[312,1024], index: 9, kind: input, shape index: {}]
  %s10 = inlined_call_operand.vmem [shape: f32[1,1024], index: 10, kind: input, shape index: {}]
  %s11 = inlined_call_operand.vmem [shape: bf16[1024,128], index: 11, kind: input, shape index: {}]
  %s12 = inlined_call_operand.vmem [shape: f32[1,128], index: 12, kind: input, shape index: {}]
  %s13 = inlined_call_operand.vmem [shape: f32[2,128], index: 13, kind: output, shape index: {}]
  %s14 = sld [smem:[#allocation0]]
  $region62: #{gcnfg_forward.3} parent=0
    _
  %s16 = ssub.s32 1, %s14
  %s17 = scalar_select 0, %s16, %s14
  // Predicated region
  $region2: #{gcnfg_forward.3} parent=0 // pred_check
    _
  $region3: #{gcnfg_forward.3} parent=0 // pred_check_branch
    %19 = sbr.rel (0) target = $region5
  $region4: #{gcnfg_forward.3} parent=0 // pred_region
    _
  $region5: #{gcnfg_forward.3} parent=0 // pred_fallthru
    _
  // Predicated region
  $region6: #{gcnfg_forward.3} parent=0 // pred_check
    _
  $region7: #{gcnfg_forward.3} parent=0 // pred_check_branch
    %21 = sbr.rel (0) target = $region9
  $region8: #{gcnfg_forward.3} parent=0 // pred_region
    _
  $region9: #{gcnfg_forward.3} parent=0 // pred_fallthru
    _
  // Predicated region
  $region10: #{gcnfg_forward.3} parent=0 // pred_check
    _
  $region11: #{gcnfg_forward.3} parent=0 // pred_check_branch
    %23 = sbr.rel (0) target = $region13
  $region12: #{gcnfg_forward.3} parent=0 // pred_region
    _
  $region13: #{gcnfg_forward.3} parent=0 // pred_fallthru
    _
  // Predicated region
  $region14: #{gcnfg_forward.3} parent=0 // pred_check
    _
  $region15: #{gcnfg_forward.3} parent=0 // pred_check_branch
    %25 = sbr.rel (0) target = $region17
  $region16: #{gcnfg_forward.3} parent=0 // pred_region
    _
  $region17: #{gcnfg_forward.3} parent=0 // pred_fallthru
    _
  // Predicated region
  $region18: #{gcnfg_forward.3} parent=0 // pred_check
    _
  $region19: #{gcnfg_forward.3} parent=0 // pred_check_branch
    %27 = sbr.rel (0) target = $region21
  $region20: #{gcnfg_forward.3} parent=0 // pred_region
    _
  $region21: #{gcnfg_forward.3} parent=0 // pred_fallthru
    _
  // Predicated region
  $region22: #{gcnfg_forward.3} parent=0 // pred_check
    _
  $region23: #{gcnfg_forward.3} parent=0 // pred_check_branch
    %29 = sbr.rel (0) target = $region25
  $region24: #{gcnfg_forward.3} parent=0 // pred_region
    _
  $region25: #{gcnfg_forward.3} parent=0 // pred_fallthru
    _
  // Predicated region
  $region26: #{gcnfg_forward.3} parent=0 // pred_check
    _
  $region27: #{gcnfg_forward.3} parent=0 // pred_check_branch
    %31 = sbr.rel (0) target = $region29
  $region28: #{gcnfg_forward.3} parent=0 // pred_region
    _
  $region29: #{gcnfg_forward.3} parent=0 // pred_fallthru
    _
  // Predicated region
  $region30: #{gcnfg_forward.3} parent=0 // pred_check
    _
  $region31: #{gcnfg_forward.3} parent=0 // pred_check_branch
    %33 = sbr.rel (0) target = $region33
  $region32: #{gcnfg_forward.3} parent=0 // pred_region
    _
  $region33: #{gcnfg_forward.3} parent=0 // pred_fallthru
    _
  // Predicated region
  $region34: #{gcnfg_forward.3} parent=0 // pred_check
    _
  $region35: #{gcnfg_forward.3} parent=0 // pred_check_branch
    %35 = sbr.rel (0) target = $region37
  $region36: #{gcnfg_forward.3} parent=0 // pred_region
    _
  $region37: #{gcnfg_forward.3} parent=0 // pred_fallthru
    _
  // Predicated region
  $region38: #{gcnfg_forward.3} parent=0 // pred_check
    _
  $region39: #{gcnfg_forward.3} parent=0 // pred_check_branch
    %37 = sbr.rel (0) target = $region41
  $region40: #{gcnfg_forward.3} parent=0 // pred_region
    _
  $region41: #{gcnfg_forward.3} parent=0 // pred_fallthru
    _
  // Predicated region
  $region42: #{gcnfg_forward.3} parent=0 // pred_check
    _
  $region43: #{gcnfg_forward.3} parent=0 // pred_check_branch
    %39 = sbr.rel (0) target = $region45
  $region44: #{gcnfg_forward.3} parent=0 // pred_region
    _
  $region45: #{gcnfg_forward.3} parent=0 // pred_fallthru
    _
  // Predicated region
  $region46: #{gcnfg_forward.3} parent=0 // pred_check
    _
  $region47: #{gcnfg_forward.3} parent=0 // pred_check_branch
    %41 = sbr.rel (0) target = $region49
  $region48: #{gcnfg_forward.3} parent=0 // pred_region
    _
  $region49: #{gcnfg_forward.3} parent=0 // pred_fallthru
    _
  // Predicated region
  $region50: #{gcnfg_forward.3} parent=0 // pred_check
    _
  $region51: #{gcnfg_forward.3} parent=0 // pred_check_branch
    %43 = sbr.rel (0) target = $region53
  $region52: #{gcnfg_forward.3} parent=0 // pred_region
    _
  $region53: #{gcnfg_forward.3} parent=0 // pred_fallthru
    _
  %v45 = vld [vmem:[%s0] sm:$0xf]
  %v46 = vld [vmem:[%s0 + $0x4] sm:$0xf]
  %v47 = vld [vmem:[%s0 + $0x8] sm:$0x3]
  %v48 = vld [vmem:[%s1] sm:$0xf]
  %v49 = vld [vmem:[%s1 + $0x4] sm:$0xf]
  %v50 = vld [vmem:[%s1 + $0x8] sm:$0x3]
  %v51 = vld [vmem:[%s2] sm:$0xf]
  %v52 = vld [vmem:[%s2 + $0x4] sm:$0xf]
  %v53 = vld [vmem:[%s2 + $0x8] sm:$0xf]
  %v54 = vld [vmem:[%s2 + $0xc] sm:$0xf]
  %v55 = vld [vmem:[%s2 + $0x10] sm:$0xf]
  %v56 = vld [vmem:[%s2 + $0x14] sm:$0xf]
  %v57 = vld [vmem:[%s2 + $0x18] sm:$0xf]
  %v58 = vld [vmem:[%s2 + $0x1c] sm:$0xf]
  %v59 = vld [vmem:[%s2 + $0x20] sm:$0xf]
  %v60 = vld [vmem:[%s2 + $0x24] sm:$0x7]
  %v64 = vunpack.c.l.b16 %v48
  %v65 = vunpack.c.l.b16 %v49
  %v66 = vunpack.c.l.b16 %v50
  %v67 = vpack.c.b16 %v65, %v64
  %v68 = vpack.c.b16 %v66, %v66
  %v79 = vunpack.c.l.b16 %v51
  %v80 = vunpack.c.l.b16 %v52
  %v81 = vunpack.c.l.b16 %v53
  %v82 = vunpack.c.l.b16 %v54
  %v83 = vunpack.c.l.b16 %v55
  %v84 = vunpack.c.l.b16 %v56
  %v85 = vunpack.c.l.b16 %v57
  %v86 = vunpack.c.l.b16 %v58
  %v87 = vunpack.c.l.b16 %v59
  %v88 = vunpack.c.l.b16 %v60
  %v89 = vpack.c.b16 %v80, %v79
  %v90 = vpack.c.b16 %v82, %v81
  %v91 = vpack.c.b16 %v84, %v83
  %v92 = vpack.c.b16 %v86, %v85
  %v93 = vpack.c.b16 %v88, %v87
  %vm98 = vcmask 637952
  %v100 = vsel %vm98, %v67, 0
  %v103 = vsel %vm98, %v68, 0
  %vm105 = vcmask 1046528
  %v107 = vsel %vm105, %v93, 0
  %109 = vmatpush.bf16.msra.mxu0 0
  %110 = vmatpush.bf16.msra.mxu0 0
  %111 = vmatpush.bf16.msra.mxu0 0
  %112 = vmatpush.bf16.msra.mxu0 %v107
  %113 = vmatpush.bf16.msra.mxu0 %v92
  %114 = vmatpush.bf16.msra.mxu0 %v91
  %115 = vmatpush.bf16.msra.mxu0 %v90
  %116 = vmatpush.bf16.msra.mxu0 %v89
  %117 = vmatmul.bf16.gmra.mxu0 %v100
  %v118 = vpop.f32.mrf.mxu0
  %v119 = vadd.f32 0.0, %v118
  %v120 = vpop.f32.mrf.mxu0
  %v121 = vadd.f32 0.0, %v120
  %122 = vmatmul.bf16.gmra.mxu0 %v103
  %v123 = vpop.f32.mrf.mxu0
  %v124 = vadd.f32 0.0, %v123
  %v125 = vpop.f32.mrf.mxu0
  %126 = vdwg.mxu0
  %v127 = vpack.c.bf16 %v121, %v119
  %v128 = vpack.c.bf16 %v124, %v124
  %v129 = vld [vmem:[%s3] sm:$0x1]
  %v131 = vperm.slane %v129, 0
  %v136 = vunpack.c.l.b16 %v45
  %v137 = vunpack.c.l.b16 %v46
  %v138 = vunpack.c.l.b16 %v47
  %v139 = vpack.c.b16 %v137, %v136
  %v140 = vpack.c.b16 %v138, %v138
  %vm141 = vcmask 162816
  %v143 = vsel %vm141, %v139, 0
  %v146 = vsel %vm141, %v140, 0
  %vm148 = vcmask 1041408
  %v150 = vsel %vm148, %v128, 0
  %152 = vmatpush.bf16.msra.mxu0 0
  %153 = vmatpush.bf16.msra.mxu0 0
  %154 = vmatpush.bf16.msra.mxu0 0
  %155 = vmatpush.bf16.msra.mxu0 0
  %156 = vmatpush.bf16.msra.mxu0 0
  %157 = vmatpush.bf16.msra.mxu0 0
  %158 = vmatpush.bf16.msra.mxu0 %v150
  %159 = vmatpush.bf16.msra.mxu0 %v127
  %160 = vmatmul.bf16.gmra.mxu0 %v143
  %v161 = vpop.f32.mrf.mxu0
  %v162 = vadd.f32 %v131, %v161
  %v163 = vpop.f32.mrf.mxu0
  %v164 = vadd.f32 %v131, %v163
  %165 = vmatmul.bf16.gmra.mxu0 %v146
  %v166 = vpop.f32.mrf.mxu0
  %v167 = vadd.f32 %v131, %v166
  %v168 = vpop.f32.mrf.mxu0
  %169 = vdwg.mxu0
  %v170 = vmax.f32 %v162, 0.0
  %v171 = vmax.f32 %v164, 0.0
  %v172 = vmax.f32 %v167, 0.0
  %v173 = vpack.c.bf16 %v171, %v170
  %v174 = vpack.c.bf16 %v172, %v172
  %v175 = vld [vmem:[%s4] sm:$0xff]
  %v176 = vld [vmem:[%s4 + $0x8] sm:$0xff]
  %v177 = vld [vmem:[%s4 + $0x10] sm:$0xff]
  %v178 = vld [vmem:[%s4 + $0x18] sm:$0xff]
  %v179 = vld [vmem:[%s4 + $0x20] sm:$0xff]
  %v180 = vld [vmem:[%s4 + $0x28] sm:$0xff]
  %v181 = vld [vmem:[%s4 + $0x30] sm:$0xff]
  %v182 = vld [vmem:[%s4 + $0x38] sm:$0xff]
  %v183 = vld [vmem:[%s4 + $0x40] sm:$0xff]
  %v184 = vld [vmem:[%s4 + $0x48] sm:$0x77]
  %v195 = vunpack.c.l.b16 %v175
  %v196 = vunpack.c.h.b16 %v175
  %v197 = vunpack.c.l.b16 %v176
  %v198 = vunpack.c.h.b16 %v176
  %v199 = vunpack.c.l.b16 %v177
  %v200 = vunpack.c.h.b16 %v177
  %v201 = vunpack.c.l.b16 %v178
  %v202 = vunpack.c.h.b16 %v178
  %v203 = vunpack.c.l.b16 %v179
  %v204 = vunpack.c.h.b16 %v179
  %v205 = vunpack.c.l.b16 %v180
  %v206 = vunpack.c.h.b16 %v180
  %v207 = vunpack.c.l.b16 %v181
  %v208 = vunpack.c.h.b16 %v181
  %v209 = vunpack.c.l.b16 %v182
  %v210 = vunpack.c.h.b16 %v182
  %v211 = vunpack.c.l.b16 %v183
  %v212 = vunpack.c.h.b16 %v183
  %v213 = vunpack.c.l.b16 %v184
  %v214 = vunpack.c.h.b16 %v184
  %v215 = vpack.c.b16 %v197, %v195
  %v216 = vpack.c.b16 %v198, %v196
  %v217 = vpack.c.b16 %v201, %v199
  %v218 = vpack.c.b16 %v202, %v200
  %v219 = vpack.c.b16 %v205, %v203
  %v220 = vpack.c.b16 %v206, %v204
  %v221 = vpack.c.b16 %v209, %v207
  %v222 = vpack.c.b16 %v210, %v208
  %v223 = vpack.c.b16 %v213, %v211
  %v224 = vpack.c.b16 %v214, %v212
  %v234 = vsel %vm98, %v173, 0
  %v237 = vsel %vm98, %v174, 0
  %v240 = vsel %vm105, %v223, 0
  %v243 = vsel %vm105, %v224, 0
  %245 = vmatpush.bf16.msra.mxu0 0
  %246 = vmatpush.bf16.msra.mxu0 0
  %247 = vmatpush.bf16.msra.mxu0 0
  %248 = vmatpush.bf16.msra.mxu0 %v240
  %249 = vmatpush.bf16.msra.mxu0 %v221
  %250 = vmatpush.bf16.msra.mxu0 %v219
  %251 = vmatpush.bf16.msra.mxu0 %v217
  %252 = vmatpush.bf16.msra.mxu0 %v215
  %253 = vmatmul.bf16.gmra.mxu0 %v234
  %v254 = vpop.f32.mrf.mxu0
  %v255 = vadd.f32 0.0, %v254
  %v256 = vpop.f32.mrf.mxu0
  %v257 = vadd.f32 0.0, %v256
  %258 = vmatmul.bf16.gmra.mxu0 %v237
  %v259 = vpop.f32.mrf.mxu0
  %v260 = vadd.f32 0.0, %v259
  %v261 = vpop.f32.mrf.mxu0
  %262 = vdwg.mxu0
  %263 = vmatpush.bf16.msra.mxu0 0
  %264 = vmatpush.bf16.msra.mxu0 0
  %265 = vmatpush.bf16.msra.mxu0 0
  %266 = vmatpush.bf16.msra.mxu0 %v243
  %267 = vmatpush.bf16.msra.mxu0 %v222
  %268 = vmatpush.bf16.msra.mxu0 %v220
  %269 = vmatpush.bf16.msra.mxu0 %v218
  %270 = vmatpush.bf16.msra.mxu0 %v216
  %271 = vmatmul.bf16.gmra.mxu0 %v234
  %v272 = vpop.f32.mrf.mxu0
  %v273 = vadd.f32 0.0, %v272
  %v274 = vpop.f32.mrf.mxu0
  %v275 = vadd.f32 0.0, %v274
  %276 = vmatmul.bf16.gmra.mxu0 %v237
  %v277 = vpop.f32.mrf.mxu0
  %v278 = vadd.f32 0.0, %v277
  %v279 = vpop.f32.mrf.mxu0
  %280 = vdwg.mxu0
  %v281 = vpack.c.bf16 %v257, %v255
  %v282 = vpack.c.bf16 %v275, %v273
  %v283 = vpack.c.bf16 %v260, %v260
  %v284 = vpack.c.bf16 %v278, %v278
  %v285 = vld [vmem:[%s5] sm:$0x3]
  %v287 = vperm.slane %v285, 0
  %v288 = vperm.slane %v285, 1
  %v292 = vsel %vm148, %v283, 0
  %v295 = vsel %vm148, %v284, 0
  %297 = vmatpush.bf16.msra.mxu0 0
  %298 = vmatpush.bf16.msra.mxu0 0
  %299 = vmatpush.bf16.msra.mxu0 0
  %300 = vmatpush.bf16.msra.mxu0 0
  %301 = vmatpush.bf16.msra.mxu0 0
  %302 = vmatpush.bf16.msra.mxu0 0
  %303 = vmatpush.bf16.msra.mxu0 %v292
  %304 = vmatpush.bf16.msra.mxu0 %v281
  %305 = vmatmul.bf16.gmra.mxu0 %v143
  %v306 = vpop.f32.mrf.mxu0
  %v307 = vadd.f32 %v287, %v306
  %v308 = vpop.f32.mrf.mxu0
  %v309 = vadd.f32 %v287, %v308
  %310 = vmatmul.bf16.gmra.mxu0 %v146
  %v311 = vpop.f32.mrf.mxu0
  %v312 = vadd.f32 %v287, %v311
  %v313 = vpop.f32.mrf.mxu0
  %314 = vdwg.mxu0
  %315 = vmatpush.bf16.msra.mxu0 0
  %316 = vmatpush.bf16.msra.mxu0 0
  %317 = vmatpush.bf16.msra.mxu0 0
  %318 = vmatpush.bf16.msra.mxu0 0
  %319 = vmatpush.bf16.msra.mxu0 0
  %320 = vmatpush.bf16.msra.mxu0 0
  %321 = vmatpush.bf16.msra.mxu0 %v295
  %322 = vmatpush.bf16.msra.mxu0 %v282
  %323 = vmatmul.bf16.gmra.mxu0 %v143
  %v324 = vpop.f32.mrf.mxu0
  %v325 = vadd.f32 %v288, %v324
  %v326 = vpop.f32.mrf.mxu0
  %v327 = vadd.f32 %v288, %v326
  %328 = vmatmul.bf16.gmra.mxu0 %v146
  %v329 = vpop.f32.mrf.mxu0
  %v330 = vadd.f32 %v288, %v329
  %v331 = vpop.f32.mrf.mxu0
  %332 = vdwg.mxu0
  %v333 = vmax.f32 %v307, 0.0
  %v334 = vmax.f32 %v325, 0.0
  %v335 = vmax.f32 %v309, 0.0
  %v336 = vmax.f32 %v327, 0.0
  %v337 = vmax.f32 %v312, 0.0
  %v338 = vmax.f32 %v330, 0.0
  %v339 = vpack.c.bf16 %v335, %v333
  %v340 = vpack.c.bf16 %v336, %v334
  %v341 = vpack.c.bf16 %v337, %v337
  %v342 = vpack.c.bf16 %v338, %v338
  %v343 = vld [vmem:[%s6] sm:$0xff]
  %v344 = vld [vmem:[%s6 + $0x8] sm:$0xf]
  %v345 = vld [vmem:[%s6 + $0xc] sm:$0xff]
  %v346 = vld [vmem:[%s6 + $0x14] sm:$0xf]
  %v347 = vld [vmem:[%s6 + $0x18] sm:$0xff]
  %v348 = vld [vmem:[%s6 + $0x20] sm:$0xf]
  %v349 = vld [vmem:[%s6 + $0x24] sm:$0xff]
  %v350 = vld [vmem:[%s6 + $0x2c] sm:$0xf]
  %v351 = vld [vmem:[%s6 + $0x30] sm:$0xff]
  %v352 = vld [vmem:[%s6 + $0x38] sm:$0xf]
  %v353 = vld [vmem:[%s6 + $0x3c] sm:$0xff]
  %v354 = vld [vmem:[%s6 + $0x44] sm:$0xf]
  %v355 = vld [vmem:[%s6 + $0x48] sm:$0xff]
  %v356 = vld [vmem:[%s6 + $0x50] sm:$0xf]
  %v357 = vld [vmem:[%s6 + $0x54] sm:$0xff]
  %v358 = vld [vmem:[%s6 + $0x5c] sm:$0xf]
  %v359 = vld [vmem:[%s6 + $0x60] sm:$0xff]
  %v360 = vld [vmem:[%s6 + $0x68] sm:$0xf]
  %v361 = vld [vmem:[%s6 + $0x6c] sm:$0xff]
  %v362 = vld [vmem:[%s6 + $0x74] sm:$0xf]
  %v363 = vld [vmem:[%s6 + $0x78] sm:$0xff]
  %v364 = vld [vmem:[%s6 + $0x80] sm:$0xf]
  %v365 = vld [vmem:[%s6 + $0x84] sm:$0xff]
  %v366 = vld [vmem:[%s6 + $0x8c] sm:$0xf]
  %v367 = vld [vmem:[%s6 + $0x90] sm:$0xff]
  %v368 = vld [vmem:[%s6 + $0x98] sm:$0xf]
  %v369 = vld [vmem:[%s6 + $0x9c] sm:$0xff]
  %v370 = vld [vmem:[%s6 + $0xa4] sm:$0xf]
  %v371 = vld [vmem:[%s6 + $0xa8] sm:$0xff]
  %v372 = vld [vmem:[%s6 + $0xb0] sm:$0xf]
  %v373 = vld [vmem:[%s6 + $0xb4] sm:$0xff]
  %v374 = vld [vmem:[%s6 + $0xbc] sm:$0xf]
  %v375 = vld [vmem:[%s6 + $0xc0] sm:$0xff]
  %v376 = vld [vmem:[%s6 + $0xc8] sm:$0xf]
  %v377 = vld [vmem:[%s6 + $0xcc] sm:$0xff]
  %v378 = vld [vmem:[%s6 + $0xd4] sm:$0xf]
  %v379 = vld [vmem:[%s6 + $0xd8] sm:$0xff]
  %v380 = vld [vmem:[%s6 + $0xe0] sm:$0xf]
  %v381 = vld [vmem:[%s6 + $0xe4] sm:$0x33]
  %v382 = vld [vmem:[%s6 + $0xec] sm:$0x3]
  %v423 = vunpack.c.l.b16 %v343
  %v424 = vunpack.c.h.b16 %v343
  %v425 = vunpack.c.l.b16 %v344
  %v426 = vunpack.c.l.b16 %v345
  %v427 = vunpack.c.h.b16 %v345
  %v428 = vunpack.c.l.b16 %v346
  %v429 = vunpack.c.l.b16 %v347
  %v430 = vunpack.c.h.b16 %v347
  %v431 = vunpack.c.l.b16 %v348
  %v432 = vunpack.c.l.b16 %v349
  %v433 = vunpack.c.h.b16 %v349
  %v434 = vunpack.c.l.b16 %v350
  %v435 = vunpack.c.l.b16 %v351
  %v436 = vunpack.c.h.b16 %v351
  %v437 = vunpack.c.l.b16 %v352
  %v438 = vunpack.c.l.b16 %v353
  %v439 = vunpack.c.h.b16 %v353
  %v440 = vunpack.c.l.b16 %v354
  %v441 = vunpack.c.l.b16 %v355
  %v442 = vunpack.c.h.b16 %v355
  %v443 = vunpack.c.l.b16 %v356
  %v444 = vunpack.c.l.b16 %v357
  %v445 = vunpack.c.h.b16 %v357
  %v446 = vunpack.c.l.b16 %v358
  %v447 = vunpack.c.l.b16 %v359
  %v448 = vunpack.c.h.b16 %v359
  %v449 = vunpack.c.l.b16 %v360
  %v450 = vunpack.c.l.b16 %v361
  %v451 = vunpack.c.h.b16 %v361
  %v452 = vunpack.c.l.b16 %v362
  %v453 = vunpack.c.l.b16 %v363
  %v454 = vunpack.c.h.b16 %v363
  %v455 = vunpack.c.l.b16 %v364
  %v456 = vunpack.c.l.b16 %v365
  %v457 = vunpack.c.h.b16 %v365
  %v458 = vunpack.c.l.b16 %v366
  %v459 = vunpack.c.l.b16 %v367
  %v460 = vunpack.c.h.b16 %v367
  %v461 = vunpack.c.l.b16 %v368
  %v462 = vunpack.c.l.b16 %v369
  %v463 = vunpack.c.h.b16 %v369
  %v464 = vunpack.c.l.b16 %v370
  %v465 = vunpack.c.l.b16 %v371
  %v466 = vunpack.c.h.b16 %v371
  %v467 = vunpack.c.l.b16 %v372
  %v468 = vunpack.c.l.b16 %v373
  %v469 = vunpack.c.h.b16 %v373
  %v470 = vunpack.c.l.b16 %v374
  %v471 = vunpack.c.l.b16 %v375
  %v472 = vunpack.c.h.b16 %v375
  %v473 = vunpack.c.l.b16 %v376
  %v474 = vunpack.c.l.b16 %v377
  %v475 = vunpack.c.h.b16 %v377
  %v476 = vunpack.c.l.b16 %v378
  %v477 = vunpack.c.l.b16 %v379
  %v478 = vunpack.c.h.b16 %v379
  %v479 = vunpack.c.l.b16 %v380
  %v480 = vunpack.c.l.b16 %v381
  %v481 = vunpack.c.h.b16 %v381
  %v482 = vunpack.c.l.b16 %v382
  %v483 = vpack.c.b16 %v426, %v423
  %v484 = vpack.c.b16 %v427, %v424
  %v485 = vpack.c.b16 %v428, %v425
  %v486 = vpack.c.b16 %v432, %v429
  %v487 = vpack.c.b16 %v433, %v430
  %v488 = vpack.c.b16 %v434, %v431
  %v489 = vpack.c.b16 %v438, %v435
  %v490 = vpack.c.b16 %v439, %v436
  %v491 = vpack.c.b16 %v440, %v437
  %v492 = vpack.c.b16 %v444, %v441
  %v493 = vpack.c.b16 %v445, %v442
  %v494 = vpack.c.b16 %v446, %v443
  %v495 = vpack.c.b16 %v450, %v447
  %v496 = vpack.c.b16 %v451, %v448
  %v497 = vpack.c.b16 %v452, %v449
  %v498 = vpack.c.b16 %v456, %v453
  %v499 = vpack.c.b16 %v457, %v454
  %v500 = vpack.c.b16 %v458, %v455
  %v501 = vpack.c.b16 %v462, %v459
  %v502 = vpack.c.b16 %v463, %v460
  %v503 = vpack.c.b16 %v464, %v461
  %v504 = vpack.c.b16 %v468, %v465
  %v505 = vpack.c.b16 %v469, %v466
  %v506 = vpack.c.b16 %v470, %v467
  %v507 = vpack.c.b16 %v474, %v471
  %v508 = vpack.c.b16 %v475, %v472
  %v509 = vpack.c.b16 %v476, %v473
  %v510 = vpack.c.b16 %v480, %v477
  %v511 = vpack.c.b16 %v481, %v478
  %v512 = vpack.c.b16 %v482, %v479
  %vm540 = vcmask 228352
  %v542 = vsel %vm540, %v340, 0
  %v545 = vsel %vm540, %v342, 0
  %vm547 = vcmask 1045504
  %v549 = vsel %vm547, %v510, 0
  %v552 = vsel %vm547, %v511, 0
  %v555 = vsel %vm547, %v512, 0
  %557 = vmatpush.bf16.msra.mxu0 %v504
  %558 = vmatpush.bf16.msra.mxu0 %v501
  %559 = vmatpush.bf16.msra.mxu0 %v498
  %560 = vmatpush.bf16.msra.mxu0 %v495
  %561 = vmatpush.bf16.msra.mxu0 %v492
  %562 = vmatpush.bf16.msra.mxu0 %v489
  %563 = vmatpush.bf16.msra.mxu0 %v486
  %564 = vmatpush.bf16.msra.mxu0 %v483
  %565 = vmatmul.bf16.gmra.mxu0 %v339
  %v566 = vpop.f32.mrf.mxu0
  %v567 = vadd.f32 0.0, %v566
  %v568 = vpop.f32.mrf.mxu0
  %v569 = vadd.f32 0.0, %v568
  %570 = vmatmul.bf16.gmra.mxu0 %v341
  %v571 = vpop.f32.mrf.mxu0
  %v572 = vadd.f32 0.0, %v571
  %v573 = vpop.f32.mrf.mxu0
  %574 = vdwg.mxu0
  %575 = vmatpush.bf16.msra.mxu0 0
  %576 = vmatpush.bf16.msra.mxu0 0
  %577 = vmatpush.bf16.msra.mxu0 0
  %578 = vmatpush.bf16.msra.mxu0 0
  %579 = vmatpush.bf16.msra.mxu0 0
  %580 = vmatpush.bf16.msra.mxu0 0
  %581 = vmatpush.bf16.msra.mxu0 %v549
  %582 = vmatpush.bf16.msra.mxu0 %v507
  %583 = vmatmul.bf16.gmra.mxu0 %v542
  %v584 = vpop.f32.mrf.mxu0
  %v585 = vadd.f32 %v567, %v584
  %v586 = vpop.f32.mrf.mxu0
  %v587 = vadd.f32 %v569, %v586
  %588 = vmatmul.bf16.gmra.mxu0 %v545
  %v589 = vpop.f32.mrf.mxu0
  %v590 = vadd.f32 %v572, %v589
  %v591 = vpop.f32.mrf.mxu0
  %592 = vdwg.mxu0
  %593 = vmatpush.bf16.msra.mxu0 %v505
  %594 = vmatpush.bf16.msra.mxu0 %v502
  %595 = vmatpush.bf16.msra.mxu0 %v499
  %596 = vmatpush.bf16.msra.mxu0 %v496
  %597 = vmatpush.bf16.msra.mxu0 %v493
  %598 = vmatpush.bf16.msra.mxu0 %v490
  %599 = vmatpush.bf16.msra.mxu0 %v487
  %600 = vmatpush.bf16.msra.mxu0 %v484
  %601 = vmatmul.bf16.gmra.mxu0 %v339
  %v602 = vpop.f32.mrf.mxu0
  %v603 = vadd.f32 0.0, %v602
  %v604 = vpop.f32.mrf.mxu0
  %v605 = vadd.f32 0.0, %v604
  %606 = vmatmul.bf16.gmra.mxu0 %v341
  %v607 = vpop.f32.mrf.mxu0
  %v608 = vadd.f32 0.0, %v607
  %v609 = vpop.f32.mrf.mxu0
  %610 = vdwg.mxu0
  %611 = vmatpush.bf16.msra.mxu0 0
  %612 = vmatpush.bf16.msra.mxu0 0
  %613 = vmatpush.bf16.msra.mxu0 0
  %614 = vmatpush.bf16.msra.mxu0 0
  %615 = vmatpush.bf16.msra.mxu0 0
  %616 = vmatpush.bf16.msra.mxu0 0
  %617 = vmatpush.bf16.msra.mxu0 %v552
  %618 = vmatpush.bf16.msra.mxu0 %v508
  %619 = vmatmul.bf16.gmra.mxu0 %v542
  %v620 = vpop.f32.mrf.mxu0
  %v621 = vadd.f32 %v603, %v620
  %v622 = vpop.f32.mrf.mxu0
  %v623 = vadd.f32 %v605, %v622
  %624 = vmatmul.bf16.gmra.mxu0 %v545
  %v625 = vpop.f32.mrf.mxu0
  %v626 = vadd.f32 %v608, %v625
  %v627 = vpop.f32.mrf.mxu0
  %628 = vdwg.mxu0
  %629 = vmatpush.bf16.msra.mxu0 %v506
  %630 = vmatpush.bf16.msra.mxu0 %v503
  %631 = vmatpush.bf16.msra.mxu0 %v500
  %632 = vmatpush.bf16.msra.mxu0 %v497
  %633 = vmatpush.bf16.msra.mxu0 %v494
  %634 = vmatpush.bf16.msra.mxu0 %v491
  %635 = vmatpush.bf16.msra.mxu0 %v488
  %636 = vmatpush.bf16.msra.mxu0 %v485
  %637 = vmatmul.bf16.gmra.mxu0 %v339
  %v638 = vpop.f32.mrf.mxu0
  %v639 = vadd.f32 0.0, %v638
  %v640 = vpop.f32.mrf.mxu0
  %v641 = vadd.f32 0.0, %v640
  %642 = vmatmul.bf16.gmra.mxu0 %v341
  %v643 = vpop.f32.mrf.mxu0
  %v644 = vadd.f32 0.0, %v643
  %v645 = vpop.f32.mrf.mxu0
  %646 = vdwg.mxu0
  %647 = vmatpush.bf16.msra.mxu0 0
  %648 = vmatpush.bf16.msra.mxu0 0
  %649 = vmatpush.bf16.msra.mxu0 0
  %650 = vmatpush.bf16.msra.mxu0 0
  %651 = vmatpush.bf16.msra.mxu0 0
  %652 = vmatpush.bf16.msra.mxu0 0
  %653 = vmatpush.bf16.msra.mxu0 %v555
  %654 = vmatpush.bf16.msra.mxu0 %v509
  %655 = vmatmul.bf16.gmra.mxu0 %v542
  %v656 = vpop.f32.mrf.mxu0
  %v657 = vadd.f32 %v639, %v656
  %v658 = vpop.f32.mrf.mxu0
  %v659 = vadd.f32 %v641, %v658
  %660 = vmatmul.bf16.gmra.mxu0 %v545
  %v661 = vpop.f32.mrf.mxu0
  %v662 = vadd.f32 %v644, %v661
  %v663 = vpop.f32.mrf.mxu0
  %664 = vdwg.mxu0
  %v665 = vpack.c.bf16 %v587, %v585
  %v666 = vpack.c.bf16 %v623, %v621
  %v667 = vpack.c.bf16 %v659, %v657
  %v668 = vpack.c.bf16 %v590, %v590
  %v669 = vpack.c.bf16 %v626, %v626
  %v670 = vpack.c.bf16 %v662, %v662
  %v671 = vld [vmem:[%s7] sm:$0x7]
  %v673 = vperm.slane %v671, 0
  %v674 = vperm.slane %v671, 1
  %v675 = vperm.slane %v671, 2
  %v680 = vsel %vm148, %v668, 0
  %v683 = vsel %vm148, %v669, 0
  %v686 = vsel %vm148, %v670, 0
  %688 = vmatpush.bf16.msra.mxu0 0
  %689 = vmatpush.bf16.msra.mxu0 0
  %690 = vmatpush.bf16.msra.mxu0 0
  %691 = vmatpush.bf16.msra.mxu0 0
  %692 = vmatpush.bf16.msra.mxu0 0
  %693 = vmatpush.bf16.msra.mxu0 0
  %694 = vmatpush.bf16.msra.mxu0 %v680
  %695 = vmatpush.bf16.msra.mxu0 %v665
  %696 = vmatmul.bf16.gmra.mxu0 %v143
  %v697 = vpop.f32.mrf.mxu0
  %v698 = vadd.f32 %v673, %v697
  %v699 = vpop.f32.mrf.mxu0
  %v700 = vadd.f32 %v673, %v699
  %701 = vmatmul.bf16.gmra.mxu0 %v146
  %v702 = vpop.f32.mrf.mxu0
  %v703 = vadd.f32 %v673, %v702
  %v704 = vpop.f32.mrf.mxu0
  %705 = vdwg.mxu0
  %706 = vmatpush.bf16.msra.mxu0 0
  %707 = vmatpush.bf16.msra.mxu0 0
  %708 = vmatpush.bf16.msra.mxu0 0
  %709 = vmatpush.bf16.msra.mxu0 0
  %710 = vmatpush.bf16.msra.mxu0 0
  %711 = vmatpush.bf16.msra.mxu0 0
  %712 = vmatpush.bf16.msra.mxu0 %v683
  %713 = vmatpush.bf16.msra.mxu0 %v666
  %714 = vmatmul.bf16.gmra.mxu0 %v143
  %v715 = vpop.f32.mrf.mxu0
  %v716 = vadd.f32 %v674, %v715
  %v717 = vpop.f32.mrf.mxu0
  %v718 = vadd.f32 %v674, %v717
  %719 = vmatmul.bf16.gmra.mxu0 %v146
  %v720 = vpop.f32.mrf.mxu0
  %v721 = vadd.f32 %v674, %v720
  %v722 = vpop.f32.mrf.mxu0
  %723 = vdwg.mxu0
  %724 = vmatpush.bf16.msra.mxu0 0
  %725 = vmatpush.bf16.msra.mxu0 0
  %726 = vmatpush.bf16.msra.mxu0 0
  %727 = vmatpush.bf16.msra.mxu0 0
  %728 = vmatpush.bf16.msra.mxu0 0
  %729 = vmatpush.bf16.msra.mxu0 0
  %730 = vmatpush.bf16.msra.mxu0 %v686
  %731 = vmatpush.bf16.msra.mxu0 %v667
  %732 = vmatmul.bf16.gmra.mxu0 %v143
  %v733 = vpop.f32.mrf.mxu0
  %v734 = vadd.f32 %v675, %v733
  %v735 = vpop.f32.mrf.mxu0
  %v736 = vadd.f32 %v675, %v735
  %737 = vmatmul.bf16.gmra.mxu0 %v146
  %v738 = vpop.f32.mrf.mxu0
  %v739 = vadd.f32 %v675, %v738
  %v740 = vpop.f32.mrf.mxu0
  %741 = vdwg.mxu0
  %v742 = vmax.f32 %v698, 0.0
  %v743 = vmax.f32 %v716, 0.0
  %v744 = vmax.f32 %v734, 0.0
  %v745 = vmax.f32 %v700, 0.0
  %v746 = vmax.f32 %v718, 0.0
  %v747 = vmax.f32 %v736, 0.0
  %v748 = vmax.f32 %v703, 0.0
  %v749 = vmax.f32 %v721, 0.0
  %v750 = vmax.f32 %v739, 0.0
  %v751 = vld [vmem:[%s8] sm:$0xff]
  %v752 = vld [vmem:[%s8 + $0x8] sm:$0xff]
  %v753 = vld [vmem:[%s8 + $0x10] sm:$0xf]
  %vm754 = vcmp.gt.f32.partialorder %v751, 0.5
  %vm755 = vcmp.gt.f32.partialorder %v752, 0.5
  %vm756 = vcmp.gt.f32.partialorder %v753, 0.5
  %v757 = vsel %vm754, 1, 0
  %v758 = vsel %vm755, 1, 0
  %v759 = vsel %vm756, 1, 0
  %760 = vset.pattern.permute.xlu0 0
  %761 = vperm.xlu0 %760, %v757
  %v762 = vpop.permute.xlu0 %761
  %763 = vset.pattern.permute.xlu0 0
  %764 = vperm.xlu0 %763, %v758
  %v765 = vpop.permute.xlu0 %764
  %766 = vset.pattern.permute.xlu0 0
  %767 = vperm.xlu0 %766, %v759
  %v768 = vpop.permute.xlu0 %767
  %vm769 = vcmp.eq.s32.totalorder %v762, 1
  %vm770 = vcmp.eq.s32.totalorder %v765, 1
  %vm771 = vcmp.eq.s32.totalorder %v768, 1
  %v772 = vsel %vm769, %v742, -1e+30
  %v773 = vsel %vm769, %v743, -1e+30
  %v774 = vsel %vm769, %v744, -1e+30
  %v775 = vsel %vm770, %v745, -1e+30
  %v776 = vsel %vm770, %v746, -1e+30
  %v777 = vsel %vm770, %v747, -1e+30
  %v778 = vsel %vm771, %v748, -1e+30
  %v779 = vsel %vm771, %v749, -1e+30
  %v780 = vsel %vm771, %v750, -1e+30
  %vm781 = vcmask 1043456
  %v782 = vsel %vm781, %v778, -inf
  %v783 = vmax.f32 %v772, %v782
  %v784 = vmax.f32 %v783, %v775
  %v785 = vrot.slane %v784, 4
  %v786 = vmax.f32 %v784, %v785
  %v787 = vrot.slane %v786, 2
  %v788 = vmax.f32 %v786, %v787
  %v789 = vrot.slane %v788, 1
  %v790 = vmax.f32 %v788, %v789
  %v791 = vsel %vm781, %v779, -inf
  %v792 = vmax.f32 %v773, %v791
  %v793 = vmax.f32 %v792, %v776
  %v794 = vrot.slane %v793, 4
  %v795 = vmax.f32 %v793, %v794
  %v796 = vrot.slane %v795, 2
  %v797 = vmax.f32 %v795, %v796
  %v798 = vrot.slane %v797, 1
  %v799 = vmax.f32 %v797, %v798
  %vm800 = vcmask 457728
  %v801 = vsel %vm800, %v774, -inf
  %v802 = vsel %vm800, %v777, -inf
  %vm803 = vcmask 453632
  %v804 = vsel %vm803, %v780, -inf
  %v805 = vmax.f32 %v801, %v804
  %v806 = vmax.f32 %v805, %v802
  %v807 = vrot.slane %v806, 4
  %v808 = vmax.f32 %v806, %v807
  %v809 = vrot.slane %v808, 2
  %v810 = vmax.f32 %v808, %v809
  %v811 = vrot.slane %v810, 1
  %v812 = vmax.f32 %v810, %v811
  %813 = vset.pattern.permute.xlu0 1
  %814 = vperm.xlu0 %813, %v757
  %v815 = vpop.permute.xlu0 %814
  %816 = vset.pattern.permute.xlu0 1
  %817 = vperm.xlu0 %816, %v758
  %v818 = vpop.permute.xlu0 %817
  %819 = vset.pattern.permute.xlu0 1
  %820 = vperm.xlu0 %819, %v759
  %v821 = vpop.permute.xlu0 %820
  %vm822 = vcmp.eq.s32.totalorder %v815, 1
  %vm823 = vcmp.eq.s32.totalorder %v818, 1
  %vm824 = vcmp.eq.s32.totalorder %v821, 1
  %v825 = vsel %vm822, %v742, -1e+30
  %v826 = vsel %vm822, %v743, -1e+30
  %v827 = vsel %vm822, %v744, -1e+30
  %v828 = vsel %vm823, %v745, -1e+30
  %v829 = vsel %vm823, %v746, -1e+30
  %v830 = vsel %vm823, %v747, -1e+30
  %v831 = vsel %vm824, %v748, -1e+30
  %v832 = vsel %vm824, %v749, -1e+30
  %v833 = vsel %vm824, %v750, -1e+30
  %v834 = vsel %vm781, %v831, -inf
  %v835 = vmax.f32 %v825, %v834
  %v836 = vmax.f32 %v835, %v828
  %v837 = vrot.slane %v836, 4
  %v838 = vmax.f32 %v836, %v837
  %v839 = vrot.slane %v838, 2
  %v840 = vmax.f32 %v838, %v839
  %v841 = vrot.slane %v840, 1
  %v842 = vmax.f32 %v840, %v841
  %v843 = vsel %vm781, %v832, -inf
  %v844 = vmax.f32 %v826, %v843
  %v845 = vmax.f32 %v844, %v829
  %v846 = vrot.slane %v845, 4
  %v847 = vmax.f32 %v845, %v846
  %v848 = vrot.slane %v847, 2
  %v849 = vmax.f32 %v847, %v848
  %v850 = vrot.slane %v849, 1
  %v851 = vmax.f32 %v849, %v850
  %v852 = vsel %vm800, %v827, -inf
  %v853 = vsel %vm800, %v830, -inf
  %v854 = vsel %vm803, %v833, -inf
  %v855 = vmax.f32 %v852, %v854
  %v856 = vmax.f32 %v855, %v853
  %v857 = vrot.slane %v856, 4
  %v858 = vmax.f32 %v856, %v857
  %v859 = vrot.slane %v858, 2
  %v860 = vmax.f32 %v858, %v859
  %v861 = vrot.slane %v860, 1
  %v862 = vmax.f32 %v860, %v861
  %vm863 = vcmask 1040384
  %v864 = vsel %vm863, %v790, %v842
  %v865 = vsel %vm863, %v799, %v851
  %v866 = vsel %vm863, %v812, %v862
  %v867 = vpack.c.bf16 %v864, %v864
  %v868 = vpack.c.bf16 %v865, %v865
  %v869 = vpack.c.bf16 %v866, %v866
  %v870 = vld [vmem:[%s9] sm:$0xff]
  %v871 = vld [vmem:[%s9 + $0x8] sm:$0xff]
  %v872 = vld [vmem:[%s9 + $0x10] sm:$0xff]
  %v873 = vld [vmem:[%s9 + $0x18] sm:$0xff]
  %v874 = vld [vmem:[%s9 + $0x20] sm:$0xff]
  %v875 = vld [vmem:[%s9 + $0x28] sm:$0xff]
  %v876 = vld [vmem:[%s9 + $0x30] sm:$0xff]
  %v877 = vld [vmem:[%s9 + $0x38] sm:$0xff]
  %v878 = vld [vmem:[%s9 + $0x40] sm:$0xff]
  %v879 = vld [vmem:[%s9 + $0x48] sm:$0xff]
  %v880 = vld [vmem:[%s9 + $0x50] sm:$0xff]
  %v881 = vld [vmem:[%s9 + $0x58] sm:$0xff]
  %v882 = vld [vmem:[%s9 + $0x60] sm:$0xff]
  %v883 = vld [vmem:[%s9 + $0x68] sm:$0xff]
  %v884 = vld [vmem:[%s9 + $0x70] sm:$0xff]
  %v885 = vld [vmem:[%s9 + $0x78] sm:$0xff]
  %v886 = vld [vmem:[%s9 + $0x80] sm:$0xff]
  %v887 = vld [vmem:[%s9 + $0x88] sm:$0xff]
  %v888 = vld [vmem:[%s9 + $0x90] sm:$0xff]
  %v889 = vld [vmem:[%s9 + $0x98] sm:$0xff]
  %v890 = vld [vmem:[%s9 + $0xa0] sm:$0xff]
  %v891 = vld [vmem:[%s9 + $0xa8] sm:$0xff]
  %v892 = vld [vmem:[%s9 + $0xb0] sm:$0xff]
  %v893 = vld [vmem:[%s9 + $0xb8] sm:$0xff]
  %v894 = vld [vmem:[%s9 + $0xc0] sm:$0xff]
  %v895 = vld [vmem:[%s9 + $0xc8] sm:$0xff]
  %v896 = vld [vmem:[%s9 + $0xd0] sm:$0xff]
  %v897 = vld [vmem:[%s9 + $0xd8] sm:$0xff]
  %v898 = vld [vmem:[%s9 + $0xe0] sm:$0xff]
  %v899 = vld [vmem:[%s9 + $0xe8] sm:$0xff]
  %v900 = vld [vmem:[%s9 + $0xf0] sm:$0xff]
  %v901 = vld [vmem:[%s9 + $0xf8] sm:$0xff]
  %v902 = vld [vmem:[%s9 + $0x100] sm:$0xff]
  %v903 = vld [vmem:[%s9 + $0x108] sm:$0xff]
  %v904 = vld [vmem:[%s9 + $0x110] sm:$0xff]
  %v905 = vld [vmem:[%s9 + $0x118] sm:$0xff]
  %v906 = vld [vmem:[%s9 + $0x120] sm:$0xff]
  %v907 = vld [vmem:[%s9 + $0x128] sm:$0xff]
  %v908 = vld [vmem:[%s9 + $0x130] sm:$0xff]
  %v909 = vld [vmem:[%s9 + $0x138] sm:$0xff]
  %v910 = vld [vmem:[%s9 + $0x140] sm:$0xff]
  %v911 = vld [vmem:[%s9 + $0x148] sm:$0xff]
  %v912 = vld [vmem:[%s9 + $0x150] sm:$0xff]
  %v913 = vld [vmem:[%s9 + $0x158] sm:$0xff]
  %v914 = vld [vmem:[%s9 + $0x160] sm:$0xff]
  %v915 = vld [vmem:[%s9 + $0x168] sm:$0xff]
  %v916 = vld [vmem:[%s9 + $0x170] sm:$0xff]
  %v917 = vld [vmem:[%s9 + $0x178] sm:$0xff]
  %v918 = vld [vmem:[%s9 + $0x180] sm:$0xff]
  %v919 = vld [vmem:[%s9 + $0x188] sm:$0xff]
  %v920 = vld [vmem:[%s9 + $0x190] sm:$0xff]
  %v921 = vld [vmem:[%s9 + $0x198] sm:$0xff]
  %v922 = vld [vmem:[%s9 + $0x1a0] sm:$0xff]
  %v923 = vld [vmem:[%s9 + $0x1a8] sm:$0xff]
  %v924 = vld [vmem:[%s9 + $0x1b0] sm:$0xff]
  %v925 = vld [vmem:[%s9 + $0x1b8] sm:$0xff]
  %v926 = vld [vmem:[%s9 + $0x1c0] sm:$0xff]
  %v927 = vld [vmem:[%s9 + $0x1c8] sm:$0xff]
  %v928 = vld [vmem:[%s9 + $0x1d0] sm:$0xff]
  %v929 = vld [vmem:[%s9 + $0x1d8] sm:$0xff]
  %v930 = vld [vmem:[%s9 + $0x1e0] sm:$0xff]
  %v931 = vld [vmem:[%s9 + $0x1e8] sm:$0xff]
  %v932 = vld [vmem:[%s9 + $0x1f0] sm:$0xff]
  %v933 = vld [vmem:[%s9 + $0x1f8] sm:$0xff]
  %v934 = vld [vmem:[%s9 + $0x200] sm:$0xff]
  %v935 = vld [vmem:[%s9 + $0x208] sm:$0xff]
  %v936 = vld [vmem:[%s9 + $0x210] sm:$0xff]
  %v937 = vld [vmem:[%s9 + $0x218] sm:$0xff]
  %v938 = vld [vmem:[%s9 + $0x220] sm:$0xff]
  %v939 = vld [vmem:[%s9 + $0x228] sm:$0xff]
  %v940 = vld [vmem:[%s9 + $0x230] sm:$0xff]
  %v941 = vld [vmem:[%s9 + $0x238] sm:$0xff]
  %v942 = vld [vmem:[%s9 + $0x240] sm:$0xff]
  %v943 = vld [vmem:[%s9 + $0x248] sm:$0xff]
  %v944 = vld [vmem:[%s9 + $0x250] sm:$0xff]
  %v945 = vld [vmem:[%s9 + $0x258] sm:$0xff]
  %v946 = vld [vmem:[%s9 + $0x260] sm:$0xff]
  %v947 = vld [vmem:[%s9 + $0x268] sm:$0xff]
  %v948 = vld [vmem:[%s9 + $0x270] sm:$0xff]
  %v949 = vld [vmem:[%s9 + $0x278] sm:$0xff]
  %v950 = vld [vmem:[%s9 + $0x280] sm:$0xff]
  %v951 = vld [vmem:[%s9 + $0x288] sm:$0xff]
  %v952 = vld [vmem:[%s9 + $0x290] sm:$0xff]
  %v953 = vld [vmem:[%s9 + $0x298] sm:$0xff]
  %v954 = vld [vmem:[%s9 + $0x2a0] sm:$0xff]
  %v955 = vld [vmem:[%s9 + $0x2a8] sm:$0xff]
  %v956 = vld [vmem:[%s9 + $0x2b0] sm:$0xff]
  %v957 = vld [vmem:[%s9 + $0x2b8] sm:$0xff]
  %v958 = vld [vmem:[%s9 + $0x2c0] sm:$0xff]
  %v959 = vld [vmem:[%s9 + $0x2c8] sm:$0xff]
  %v960 = vld [vmem:[%s9 + $0x2d0] sm:$0xff]
  %v961 = vld [vmem:[%s9 + $0x2d8] sm:$0xff]
  %v962 = vld [vmem:[%s9 + $0x2e0] sm:$0xff]
  %v963 = vld [vmem:[%s9 + $0x2e8] sm:$0xff]
  %v964 = vld [vmem:[%s9 + $0x2f0] sm:$0xff]
  %v965 = vld [vmem:[%s9 + $0x2f8] sm:$0xff]
  %v966 = vld [vmem:[%s9 + $0x300] sm:$0xff]
  %v967 = vld [vmem:[%s9 + $0x308] sm:$0xff]
  %v968 = vld [vmem:[%s9 + $0x310] sm:$0xff]
  %v969 = vld [vmem:[%s9 + $0x318] sm:$0xff]
  %v970 = vld [vmem:[%s9 + $0x320] sm:$0xff]
  %v971 = vld [vmem:[%s9 + $0x328] sm:$0xff]
  %v972 = vld [vmem:[%s9 + $0x330] sm:$0xff]
  %v973 = vld [vmem:[%s9 + $0x338] sm:$0xff]
  %v974 = vld [vmem:[%s9 + $0x340] sm:$0xff]
  %v975 = vld [vmem:[%s9 + $0x348] sm:$0xff]
  %v976 = vld [vmem:[%s9 + $0x350] sm:$0xff]
  %v977 = vld [vmem:[%s9 + $0x358] sm:$0xff]
  %v978 = vld [vmem:[%s9 + $0x360] sm:$0xff]
  %v979 = vld [vmem:[%s9 + $0x368] sm:$0xff]
  %v980 = vld [vmem:[%s9 + $0x370] sm:$0xff]
  %v981 = vld [vmem:[%s9 + $0x378] sm:$0xff]
  %v982 = vld [vmem:[%s9 + $0x380] sm:$0xff]
  %v983 = vld [vmem:[%s9 + $0x388] sm:$0xff]
  %v984 = vld [vmem:[%s9 + $0x390] sm:$0xff]
  %v985 = vld [vmem:[%s9 + $0x398] sm:$0xff]
  %v986 = vld [vmem:[%s9 + $0x3a0] sm:$0xff]
  %v987 = vld [vmem:[%s9 + $0x3a8] sm:$0xff]
  %v988 = vld [vmem:[%s9 + $0x3b0] sm:$0xff]
  %v989 = vld [vmem:[%s9 + $0x3b8] sm:$0xff]
  %v990 = vld [vmem:[%s9 + $0x3c0] sm:$0xff]
  %v991 = vld [vmem:[%s9 + $0x3c8] sm:$0xff]
  %v992 = vld [vmem:[%s9 + $0x3d0] sm:$0xff]
  %v993 = vld [vmem:[%s9 + $0x3d8] sm:$0xff]
  %v994 = vld [vmem:[%s9 + $0x3e0] sm:$0xff]
  %v995 = vld [vmem:[%s9 + $0x3e8] sm:$0xff]
  %v996 = vld [vmem:[%s9 + $0x3f0] sm:$0xff]
  %v997 = vld [vmem:[%s9 + $0x3f8] sm:$0xff]
  %v998 = vld [vmem:[%s9 + $0x400] sm:$0xff]
  %v999 = vld [vmem:[%s9 + $0x408] sm:$0xff]
  %v1000 = vld [vmem:[%s9 + $0x410] sm:$0xff]
  %v1001 = vld [vmem:[%s9 + $0x418] sm:$0xff]
  %v1002 = vld [vmem:[%s9 + $0x420] sm:$0xff]
  %v1003 = vld [vmem:[%s9 + $0x428] sm:$0xff]
  %v1004 = vld [vmem:[%s9 + $0x430] sm:$0xff]
  %v1005 = vld [vmem:[%s9 + $0x438] sm:$0xff]
  %v1006 = vld [vmem:[%s9 + $0x440] sm:$0xff]
  %v1007 = vld [vmem:[%s9 + $0x448] sm:$0xff]
  %v1008 = vld [vmem:[%s9 + $0x450] sm:$0xff]
  %v1009 = vld [vmem:[%s9 + $0x458] sm:$0xff]
  %v1010 = vld [vmem:[%s9 + $0x460] sm:$0xff]
  %v1011 = vld [vmem:[%s9 + $0x468] sm:$0xff]
  %v1012 = vld [vmem:[%s9 + $0x470] sm:$0xff]
  %v1013 = vld [vmem:[%s9 + $0x478] sm:$0xff]
  %v1014 = vld [vmem:[%s9 + $0x480] sm:$0xff]
  %v1015 = vld [vmem:[%s9 + $0x488] sm:$0xff]
  %v1016 = vld [vmem:[%s9 + $0x490] sm:$0xff]
  %v1017 = vld [vmem:[%s9 + $0x498] sm:$0xff]
  %v1018 = vld [vmem:[%s9 + $0x4a0] sm:$0xff]
  %v1019 = vld [vmem:[%s9 + $0x4a8] sm:$0xff]
  %v1020 = vld [vmem:[%s9 + $0x4b0] sm:$0xff]
  %v1021 = vld [vmem:[%s9 + $0x4b8] sm:$0xff]
  %v1022 = vld [vmem:[%s9 + $0x4c0] sm:$0xff]
  %v1023 = vld [vmem:[%s9 + $0x4c8] sm:$0xff]
  %v1024 = vld [vmem:[%s9 + $0x4d0] sm:$0xff]
  %v1025 = vld [vmem:[%s9 + $0x4d8] sm:$0xff]
  %v1026 = vld [vmem:[%s10] sm:$0xff]
  %v1028 = vperm.slane %v1026, 0
  %v1029 = vperm.slane %v1026, 1
  %v1030 = vperm.slane %v1026, 2
  %v1031 = vperm.slane %v1026, 3
  %v1032 = vperm.slane %v1026, 4
  %v1033 = vperm.slane %v1026, 5
  %v1034 = vperm.slane %v1026, 6
  %v1035 = vperm.slane %v1026, 7
  %v1200 = vunpack.c.l.b16 %v870
  %v1201 = vunpack.c.h.b16 %v870
  %v1202 = vunpack.c.l.b16 %v871
  %v1203 = vunpack.c.h.b16 %v871
  %v1204 = vunpack.c.l.b16 %v872
  %v1205 = vunpack.c.h.b16 %v872
  %v1206 = vunpack.c.l.b16 %v873
  %v1207 = vunpack.c.h.b16 %v873
  %v1208 = vunpack.c.l.b16 %v874
  %v1209 = vunpack.c.h.b16 %v874
  %v1210 = vunpack.c.l.b16 %v875
  %v1211 = vunpack.c.h.b16 %v875
  %v1212 = vunpack.c.l.b16 %v876
  %v1213 = vunpack.c.h.b16 %v876
  %v1214 = vunpack.c.l.b16 %v877
  %v1215 = vunpack.c.h.b16 %v877
  %v1216 = vunpack.c.l.b16 %v878
  %v1217 = vunpack.c.h.b16 %v878
  %v1218 = vunpack.c.l.b16 %v879
  %v1219 = vunpack.c.h.b16 %v879
  %v1220 = vunpack.c.l.b16 %v880
  %v1221 = vunpack.c.h.b16 %v880
  %v1222 = vunpack.c.l.b16 %v881
  %v1223 = vunpack.c.h.b16 %v881
  %v1224 = vunpack.c.l.b16 %v882
  %v1225 = vunpack.c.h.b16 %v882
  %v1226 = vunpack.c.l.b16 %v883
  %v1227 = vunpack.c.h.b16 %v883
  %v1228 = vunpack.c.l.b16 %v884
  %v1229 = vunpack.c.h.b16 %v884
  %v1230 = vunpack.c.l.b16 %v885
  %v1231 = vunpack.c.h.b16 %v885
  %v1232 = vunpack.c.l.b16 %v886
  %v1233 = vunpack.c.h.b16 %v886
  %v1234 = vunpack.c.l.b16 %v887
  %v1235 = vunpack.c.h.b16 %v887
  %v1236 = vunpack.c.l.b16 %v888
  %v1237 = vunpack.c.h.b16 %v888
  %v1238 = vunpack.c.l.b16 %v889
  %v1239 = vunpack.c.h.b16 %v889
  %v1240 = vunpack.c.l.b16 %v890
  %v1241 = vunpack.c.h.b16 %v890
  %v1242 = vunpack.c.l.b16 %v891
  %v1243 = vunpack.c.h.b16 %v891
  %v1244 = vunpack.c.l.b16 %v892
  %v1245 = vunpack.c.h.b16 %v892
  %v1246 = vunpack.c.l.b16 %v893
  %v1247 = vunpack.c.h.b16 %v893
  %v1248 = vunpack.c.l.b16 %v894
  %v1249 = vunpack.c.h.b16 %v894
  %v1250 = vunpack.c.l.b16 %v895
  %v1251 = vunpack.c.h.b16 %v895
  %v1252 = vunpack.c.l.b16 %v896
  %v1253 = vunpack.c.h.b16 %v896
  %v1254 = vunpack.c.l.b16 %v897
  %v1255 = vunpack.c.h.b16 %v897
  %v1256 = vunpack.c.l.b16 %v898
  %v1257 = vunpack.c.h.b16 %v898
  %v1258 = vunpack.c.l.b16 %v899
  %v1259 = vunpack.c.h.b16 %v899
  %v1260 = vunpack.c.l.b16 %v900
  %v1261 = vunpack.c.h.b16 %v900
  %v1262 = vunpack.c.l.b16 %v901
  %v1263 = vunpack.c.h.b16 %v901
  %v1264 = vunpack.c.l.b16 %v902
  %v1265 = vunpack.c.h.b16 %v902
  %v1266 = vunpack.c.l.b16 %v903
  %v1267 = vunpack.c.h.b16 %v903
  %v1268 = vunpack.c.l.b16 %v904
  %v1269 = vunpack.c.h.b16 %v904
  %v1270 = vunpack.c.l.b16 %v905
  %v1271 = vunpack.c.h.b16 %v905
  %v1272 = vunpack.c.l.b16 %v906
  %v1273 = vunpack.c.h.b16 %v906
  %v1274 = vunpack.c.l.b16 %v907
  %v1275 = vunpack.c.h.b16 %v907
  %v1276 = vunpack.c.l.b16 %v908
  %v1277 = vunpack.c.h.b16 %v908
  %v1278 = vunpack.c.l.b16 %v909
  %v1279 = vunpack.c.h.b16 %v909
  %v1280 = vunpack.c.l.b16 %v910
  %v1281 = vunpack.c.h.b16 %v910
  %v1282 = vunpack.c.l.b16 %v911
  %v1283 = vunpack.c.h.b16 %v911
  %v1284 = vunpack.c.l.b16 %v912
  %v1285 = vunpack.c.h.b16 %v912
  %v1286 = vunpack.c.l.b16 %v913
  %v1287 = vunpack.c.h.b16 %v913
  %v1288 = vunpack.c.l.b16 %v914
  %v1289 = vunpack.c.h.b16 %v914
  %v1290 = vunpack.c.l.b16 %v915
  %v1291 = vunpack.c.h.b16 %v915
  %v1292 = vunpack.c.l.b16 %v916
  %v1293 = vunpack.c.h.b16 %v916
  %v1294 = vunpack.c.l.b16 %v917
  %v1295 = vunpack.c.h.b16 %v917
  %v1296 = vunpack.c.l.b16 %v918
  %v1297 = vunpack.c.h.b16 %v918
  %v1298 = vunpack.c.l.b16 %v919
  %v1299 = vunpack.c.h.b16 %v919
  %v1300 = vunpack.c.l.b16 %v920
  %v1301 = vunpack.c.h.b16 %v920
  %v1302 = vunpack.c.l.b16 %v921
  %v1303 = vunpack.c.h.b16 %v921
  %v1304 = vunpack.c.l.b16 %v922
  %v1305 = vunpack.c.h.b16 %v922
  %v1306 = vunpack.c.l.b16 %v923
  %v1307 = vunpack.c.h.b16 %v923
  %v1308 = vunpack.c.l.b16 %v924
  %v1309 = vunpack.c.h.b16 %v924
  %v1310 = vunpack.c.l.b16 %v925
  %v1311 = vunpack.c.h.b16 %v925
  %v1312 = vunpack.c.l.b16 %v926
  %v1313 = vunpack.c.h.b16 %v926
  %v1314 = vunpack.c.l.b16 %v927
  %v1315 = vunpack.c.h.b16 %v927
  %v1316 = vunpack.c.l.b16 %v928
  %v1317 = vunpack.c.h.b16 %v928
  %v1318 = vunpack.c.l.b16 %v929
  %v1319 = vunpack.c.h.b16 %v929
  %v1320 = vunpack.c.l.b16 %v930
  %v1321 = vunpack.c.h.b16 %v930
  %v1322 = vunpack.c.l.b16 %v931
  %v1323 = vunpack.c.h.b16 %v931
  %v1324 = vunpack.c.l.b16 %v932
  %v1325 = vunpack.c.h.b16 %v932
  %v1326 = vunpack.c.l.b16 %v933
  %v1327 = vunpack.c.h.b16 %v933
  %v1328 = vunpack.c.l.b16 %v934
  %v1329 = vunpack.c.h.b16 %v934
  %v1330 = vunpack.c.l.b16 %v935
  %v1331 = vunpack.c.h.b16 %v935
  %v1332 = vunpack.c.l.b16 %v936
  %v1333 = vunpack.c.h.b16 %v936
  %v1334 = vunpack.c.l.b16 %v937
  %v1335 = vunpack.c.h.b16 %v937
  %v1336 = vunpack.c.l.b16 %v938
  %v1337 = vunpack.c.h.b16 %v938
  %v1338 = vunpack.c.l.b16 %v939
  %v1339 = vunpack.c.h.b16 %v939
  %v1340 = vunpack.c.l.b16 %v940
  %v1341 = vunpack.c.h.b16 %v940
  %v1342 = vunpack.c.l.b16 %v941
  %v1343 = vunpack.c.h.b16 %v941
  %v1344 = vunpack.c.l.b16 %v942
  %v1345 = vunpack.c.h.b16 %v942
  %v1346 = vunpack.c.l.b16 %v943
  %v1347 = vunpack.c.h.b16 %v943
  %v1348 = vunpack.c.l.b16 %v944
  %v1349 = vunpack.c.h.b16 %v944
  %v1350 = vunpack.c.l.b16 %v945
  %v1351 = vunpack.c.h.b16 %v945
  %v1352 = vunpack.c.l.b16 %v946
  %v1353 = vunpack.c.h.b16 %v946
  %v1354 = vunpack.c.l.b16 %v947
  %v1355 = vunpack.c.h.b16 %v947
  %v1356 = vunpack.c.l.b16 %v948
  %v1357 = vunpack.c.h.b16 %v948
  %v1358 = vunpack.c.l.b16 %v949
  %v1359 = vunpack.c.h.b16 %v949
  %v1360 = vunpack.c.l.b16 %v950
  %v1361 = vunpack.c.h.b16 %v950
  %v1362 = vunpack.c.l.b16 %v951
  %v1363 = vunpack.c.h.b16 %v951
  %v1364 = vunpack.c.l.b16 %v952
  %v1365 = vunpack.c.h.b16 %v952
  %v1366 = vunpack.c.l.b16 %v953
  %v1367 = vunpack.c.h.b16 %v953
  %v1368 = vunpack.c.l.b16 %v954
  %v1369 = vunpack.c.h.b16 %v954
  %v1370 = vunpack.c.l.b16 %v955
  %v1371 = vunpack.c.h.b16 %v955
  %v1372 = vunpack.c.l.b16 %v956
  %v1373 = vunpack.c.h.b16 %v956
  %v1374 = vunpack.c.l.b16 %v957
  %v1375 = vunpack.c.h.b16 %v957
  %v1376 = vunpack.c.l.b16 %v958
  %v1377 = vunpack.c.h.b16 %v958
  %v1378 = vunpack.c.l.b16 %v959
  %v1379 = vunpack.c.h.b16 %v959
  %v1380 = vunpack.c.l.b16 %v960
  %v1381 = vunpack.c.h.b16 %v960
  %v1382 = vunpack.c.l.b16 %v961
  %v1383 = vunpack.c.h.b16 %v961
  %v1384 = vunpack.c.l.b16 %v962
  %v1385 = vunpack.c.h.b16 %v962
  %v1386 = vunpack.c.l.b16 %v963
  %v1387 = vunpack.c.h.b16 %v963
  %v1388 = vunpack.c.l.b16 %v964
  %v1389 = vunpack.c.h.b16 %v964
  %v1390 = vunpack.c.l.b16 %v965
  %v1391 = vunpack.c.h.b16 %v965
  %v1392 = vunpack.c.l.b16 %v966
  %v1393 = vunpack.c.h.b16 %v966
  %v1394 = vunpack.c.l.b16 %v967
  %v1395 = vunpack.c.h.b16 %v967
  %v1396 = vunpack.c.l.b16 %v968
  %v1397 = vunpack.c.h.b16 %v968
  %v1398 = vunpack.c.l.b16 %v969
  %v1399 = vunpack.c.h.b16 %v969
  %v1400 = vunpack.c.l.b16 %v970
  %v1401 = vunpack.c.h.b16 %v970
  %v1402 = vunpack.c.l.b16 %v971
  %v1403 = vunpack.c.h.b16 %v971
  %v1404 = vunpack.c.l.b16 %v972
  %v1405 = vunpack.c.h.b16 %v972
  %v1406 = vunpack.c.l.b16 %v973
  %v1407 = vunpack.c.h.b16 %v973
  %v1408 = vunpack.c.l.b16 %v974
  %v1409 = vunpack.c.h.b16 %v974
  %v1410 = vunpack.c.l.b16 %v975
  %v1411 = vunpack.c.h.b16 %v975
  %v1412 = vunpack.c.l.b16 %v976
  %v1413 = vunpack.c.h.b16 %v976
  %v1414 = vunpack.c.l.b16 %v977
  %v1415 = vunpack.c.h.b16 %v977
  %v1416 = vunpack.c.l.b16 %v978
  %v1417 = vunpack.c.h.b16 %v978
  %v1418 = vunpack.c.l.b16 %v979
  %v1419 = vunpack.c.h.b16 %v979
  %v1420 = vunpack.c.l.b16 %v980
  %v1421 = vunpack.c.h.b16 %v980
  %v1422 = vunpack.c.l.b16 %v981
  %v1423 = vunpack.c.h.b16 %v981
  %v1424 = vunpack.c.l.b16 %v982
  %v1425 = vunpack.c.h.b16 %v982
  %v1426 = vunpack.c.l.b16 %v983
  %v1427 = vunpack.c.h.b16 %v983
  %v1428 = vunpack.c.l.b16 %v984
  %v1429 = vunpack.c.h.b16 %v984
  %v1430 = vunpack.c.l.b16 %v985
  %v1431 = vunpack.c.h.b16 %v985
  %v1432 = vunpack.c.l.b16 %v986
  %v1433 = vunpack.c.h.b16 %v986
  %v1434 = vunpack.c.l.b16 %v987
  %v1435 = vunpack.c.h.b16 %v987
  %v1436 = vunpack.c.l.b16 %v988
  %v1437 = vunpack.c.h.b16 %v988
  %v1438 = vunpack.c.l.b16 %v989
  %v1439 = vunpack.c.h.b16 %v989
  %v1440 = vunpack.c.l.b16 %v990
  %v1441 = vunpack.c.h.b16 %v990
  %v1442 = vunpack.c.l.b16 %v991
  %v1443 = vunpack.c.h.b16 %v991
  %v1444 = vunpack.c.l.b16 %v992
  %v1445 = vunpack.c.h.b16 %v992
  %v1446 = vunpack.c.l.b16 %v993
  %v1447 = vunpack.c.h.b16 %v993
  %v1448 = vunpack.c.l.b16 %v994
  %v1449 = vunpack.c.h.b16 %v994
  %v1450 = vunpack.c.l.b16 %v995
  %v1451 = vunpack.c.h.b16 %v995
  %v1452 = vunpack.c.l.b16 %v996
  %v1453 = vunpack.c.h.b16 %v996
  %v1454 = vunpack.c.l.b16 %v997
  %v1455 = vunpack.c.h.b16 %v997
  %v1456 = vunpack.c.l.b16 %v998
  %v1457 = vunpack.c.h.b16 %v998
  %v1458 = vunpack.c.l.b16 %v999
  %v1459 = vunpack.c.h.b16 %v999
  %v1460 = vunpack.c.l.b16 %v1000
  %v1461 = vunpack.c.h.b16 %v1000
  %v1462 = vunpack.c.l.b16 %v1001
  %v1463 = vunpack.c.h.b16 %v1001
  %v1464 = vunpack.c.l.b16 %v1002
  %v1465 = vunpack.c.h.b16 %v1002
  %v1466 = vunpack.c.l.b16 %v1003
  %v1467 = vunpack.c.h.b16 %v1003
  %v1468 = vunpack.c.l.b16 %v1004
  %v1469 = vunpack.c.h.b16 %v1004
  %v1470 = vunpack.c.l.b16 %v1005
  %v1471 = vunpack.c.h.b16 %v1005
  %v1472 = vunpack.c.l.b16 %v1006
  %v1473 = vunpack.c.h.b16 %v1006
  %v1474 = vunpack.c.l.b16 %v1007
  %v1475 = vunpack.c.h.b16 %v1007
  %v1476 = vunpack.c.l.b16 %v1008
  %v1477 = vunpack.c.h.b16 %v1008
  %v1478 = vunpack.c.l.b16 %v1009
  %v1479 = vunpack.c.h.b16 %v1009
  %v1480 = vunpack.c.l.b16 %v1010
  %v1481 = vunpack.c.h.b16 %v1010
  %v1482 = vunpack.c.l.b16 %v1011
  %v1483 = vunpack.c.h.b16 %v1011
  %v1484 = vunpack.c.l.b16 %v1012
  %v1485 = vunpack.c.h.b16 %v1012
  %v1486 = vunpack.c.l.b16 %v1013
  %v1487 = vunpack.c.h.b16 %v1013
  %v1488 = vunpack.c.l.b16 %v1014
  %v1489 = vunpack.c.h.b16 %v1014
  %v1490 = vunpack.c.l.b16 %v1015
  %v1491 = vunpack.c.h.b16 %v1015
  %v1492 = vunpack.c.l.b16 %v1016
  %v1493 = vunpack.c.h.b16 %v1016
  %v1494 = vunpack.c.l.b16 %v1017
  %v1495 = vunpack.c.h.b16 %v1017
  %v1496 = vunpack.c.l.b16 %v1018
  %v1497 = vunpack.c.h.b16 %v1018
  %v1498 = vunpack.c.l.b16 %v1019
  %v1499 = vunpack.c.h.b16 %v1019
  %v1500 = vunpack.c.l.b16 %v1020
  %v1501 = vunpack.c.h.b16 %v1020
  %v1502 = vunpack.c.l.b16 %v1021
  %v1503 = vunpack.c.h.b16 %v1021
  %v1504 = vunpack.c.l.b16 %v1022
  %v1505 = vunpack.c.h.b16 %v1022
  %v1506 = vunpack.c.l.b16 %v1023
  %v1507 = vunpack.c.h.b16 %v1023
  %v1508 = vunpack.c.l.b16 %v1024
  %v1509 = vunpack.c.h.b16 %v1024
  %v1510 = vunpack.c.l.b16 %v1025
  %v1511 = vunpack.c.h.b16 %v1025
  %v1512 = vpack.c.b16 %v1208, %v1200
  %v1513 = vpack.c.b16 %v1209, %v1201
  %v1514 = vpack.c.b16 %v1210, %v1202
  %v1515 = vpack.c.b16 %v1211, %v1203
  %v1516 = vpack.c.b16 %v1212, %v1204
  %v1517 = vpack.c.b16 %v1213, %v1205
  %v1518 = vpack.c.b16 %v1214, %v1206
  %v1519 = vpack.c.b16 %v1215, %v1207
  %v1520 = vpack.c.b16 %v1224, %v1216
  %v1521 = vpack.c.b16 %v1225, %v1217
  %v1522 = vpack.c.b16 %v1226, %v1218
  %v1523 = vpack.c.b16 %v1227, %v1219
  %v1524 = vpack.c.b16 %v1228, %v1220
  %v1525 = vpack.c.b16 %v1229, %v1221
  %v1526 = vpack.c.b16 %v1230, %v1222
  %v1527 = vpack.c.b16 %v1231, %v1223
  %v1528 = vpack.c.b16 %v1240, %v1232
  %v1529 = vpack.c.b16 %v1241, %v1233
  %v1530 = vpack.c.b16 %v1242, %v1234
  %v1531 = vpack.c.b16 %v1243, %v1235
  %v1532 = vpack.c.b16 %v1244, %v1236
  %v1533 = vpack.c.b16 %v1245, %v1237
  %v1534 = vpack.c.b16 %v1246, %v1238
  %v1535 = vpack.c.b16 %v1247, %v1239
  %v1536 = vpack.c.b16 %v1256, %v1248
  %v1537 = vpack.c.b16 %v1257, %v1249
  %v1538 = vpack.c.b16 %v1258, %v1250
  %v1539 = vpack.c.b16 %v1259, %v1251
  %v1540 = vpack.c.b16 %v1260, %v1252
  %v1541 = vpack.c.b16 %v1261, %v1253
  %v1542 = vpack.c.b16 %v1262, %v1254
  %v1543 = vpack.c.b16 %v1263, %v1255
  %v1544 = vpack.c.b16 %v1272, %v1264
  %v1545 = vpack.c.b16 %v1273, %v1265
  %v1546 = vpack.c.b16 %v1274, %v1266
  %v1547 = vpack.c.b16 %v1275, %v1267
  %v1548 = vpack.c.b16 %v1276, %v1268
  %v1549 = vpack.c.b16 %v1277, %v1269
  %v1550 = vpack.c.b16 %v1278, %v1270
  %v1551 = vpack.c.b16 %v1279, %v1271
  %v1552 = vpack.c.b16 %v1288, %v1280
  %v1553 = vpack.c.b16 %v1289, %v1281
  %v1554 = vpack.c.b16 %v1290, %v1282
  %v1555 = vpack.c.b16 %v1291, %v1283
  %v1556 = vpack.c.b16 %v1292, %v1284
  %v1557 = vpack.c.b16 %v1293, %v1285
  %v1558 = vpack.c.b16 %v1294, %v1286
  %v1559 = vpack.c.b16 %v1295, %v1287
  %v1560 = vpack.c.b16 %v1304, %v1296
  %v1561 = vpack.c.b16 %v1305, %v1297
  %v1562 = vpack.c.b16 %v1306, %v1298
  %v1563 = vpack.c.b16 %v1307, %v1299
  %v1564 = vpack.c.b16 %v1308, %v1300
  %v1565 = vpack.c.b16 %v1309, %v1301
  %v1566 = vpack.c.b16 %v1310, %v1302
  %v1567 = vpack.c.b16 %v1311, %v1303
  %v1568 = vpack.c.b16 %v1320, %v1312
  %v1569 = vpack.c.b16 %v1321, %v1313
  %v1570 = vpack.c.b16 %v1322, %v1314
  %v1571 = vpack.c.b16 %v1323, %v1315
  %v1572 = vpack.c.b16 %v1324, %v1316
  %v1573 = vpack.c.b16 %v1325, %v1317
  %v1574 = vpack.c.b16 %v1326, %v1318
  %v1575 = vpack.c.b16 %v1327, %v1319
  %v1576 = vpack.c.b16 %v1336, %v1328
  %v1577 = vpack.c.b16 %v1337, %v1329
  %v1578 = vpack.c.b16 %v1338, %v1330
  %v1579 = vpack.c.b16 %v1339, %v1331
  %v1580 = vpack.c.b16 %v1340, %v1332
  %v1581 = vpack.c.b16 %v1341, %v1333
  %v1582 = vpack.c.b16 %v1342, %v1334
  %v1583 = vpack.c.b16 %v1343, %v1335
  %v1584 = vpack.c.b16 %v1352, %v1344
  %v1585 = vpack.c.b16 %v1353, %v1345
  %v1586 = vpack.c.b16 %v1354, %v1346
  %v1587 = vpack.c.b16 %v1355, %v1347
  %v1588 = vpack.c.b16 %v1356, %v1348
  %v1589 = vpack.c.b16 %v1357, %v1349
  %v1590 = vpack.c.b16 %v1358, %v1350
  %v1591 = vpack.c.b16 %v1359, %v1351
  %v1592 = vpack.c.b16 %v1368, %v1360
  %v1593 = vpack.c.b16 %v1369, %v1361
  %v1594 = vpack.c.b16 %v1370, %v1362
  %v1595 = vpack.c.b16 %v1371, %v1363
  %v1596 = vpack.c.b16 %v1372, %v1364
  %v1597 = vpack.c.b16 %v1373, %v1365
  %v1598 = vpack.c.b16 %v1374, %v1366
  %v1599 = vpack.c.b16 %v1375, %v1367
  %v1600 = vpack.c.b16 %v1384, %v1376
  %v1601 = vpack.c.b16 %v1385, %v1377
  %v1602 = vpack.c.b16 %v1386, %v1378
  %v1603 = vpack.c.b16 %v1387, %v1379
  %v1604 = vpack.c.b16 %v1388, %v1380
  %v1605 = vpack.c.b16 %v1389, %v1381
  %v1606 = vpack.c.b16 %v1390, %v1382
  %v1607 = vpack.c.b16 %v1391, %v1383
  %v1608 = vpack.c.b16 %v1400, %v1392
  %v1609 = vpack.c.b16 %v1401, %v1393
  %v1610 = vpack.c.b16 %v1402, %v1394
  %v1611 = vpack.c.b16 %v1403, %v1395
  %v1612 = vpack.c.b16 %v1404, %v1396
  %v1613 = vpack.c.b16 %v1405, %v1397
  %v1614 = vpack.c.b16 %v1406, %v1398
  %v1615 = vpack.c.b16 %v1407, %v1399
  %v1616 = vpack.c.b16 %v1416, %v1408
  %v1617 = vpack.c.b16 %v1417, %v1409
  %v1618 = vpack.c.b16 %v1418, %v1410
  %v1619 = vpack.c.b16 %v1419, %v1411
  %v1620 = vpack.c.b16 %v1420, %v1412
  %v1621 = vpack.c.b16 %v1421, %v1413
  %v1622 = vpack.c.b16 %v1422, %v1414
  %v1623 = vpack.c.b16 %v1423, %v1415
  %v1624 = vpack.c.b16 %v1432, %v1424
  %v1625 = vpack.c.b16 %v1433, %v1425
  %v1626 = vpack.c.b16 %v1434, %v1426
  %v1627 = vpack.c.b16 %v1435, %v1427
  %v1628 = vpack.c.b16 %v1436, %v1428
  %v1629 = vpack.c.b16 %v1437, %v1429
  %v1630 = vpack.c.b16 %v1438, %v1430
  %v1631 = vpack.c.b16 %v1439, %v1431
  %v1632 = vpack.c.b16 %v1448, %v1440
  %v1633 = vpack.c.b16 %v1449, %v1441
  %v1634 = vpack.c.b16 %v1450, %v1442
  %v1635 = vpack.c.b16 %v1451, %v1443
  %v1636 = vpack.c.b16 %v1452, %v1444
  %v1637 = vpack.c.b16 %v1453, %v1445
  %v1638 = vpack.c.b16 %v1454, %v1446
  %v1639 = vpack.c.b16 %v1455, %v1447
  %v1640 = vpack.c.b16 %v1464, %v1456
  %v1641 = vpack.c.b16 %v1465, %v1457
  %v1642 = vpack.c.b16 %v1466, %v1458
  %v1643 = vpack.c.b16 %v1467, %v1459
  %v1644 = vpack.c.b16 %v1468, %v1460
  %v1645 = vpack.c.b16 %v1469, %v1461
  %v1646 = vpack.c.b16 %v1470, %v1462
  %v1647 = vpack.c.b16 %v1471, %v1463
  %v1648 = vpack.c.b16 %v1480, %v1472
  %v1649 = vpack.c.b16 %v1481, %v1473
  %v1650 = vpack.c.b16 %v1482, %v1474
  %v1651 = vpack.c.b16 %v1483, %v1475
  %v1652 = vpack.c.b16 %v1484, %v1476
  %v1653 = vpack.c.b16 %v1485, %v1477
  %v1654 = vpack.c.b16 %v1486, %v1478
  %v1655 = vpack.c.b16 %v1487, %v1479
  %v1656 = vpack.c.b16 %v1496, %v1488
  %v1657 = vpack.c.b16 %v1497, %v1489
  %v1658 = vpack.c.b16 %v1498, %v1490
  %v1659 = vpack.c.b16 %v1499, %v1491
  %v1660 = vpack.c.b16 %v1500, %v1492
  %v1661 = vpack.c.b16 %v1501, %v1493
  %v1662 = vpack.c.b16 %v1502, %v1494
  %v1663 = vpack.c.b16 %v1503, %v1495
  %v1664 = vpack.c.b16 %v1504, %v1504
  %v1665 = vpack.c.b16 %v1505, %v1505
  %v1666 = vpack.c.b16 %v1506, %v1506
  %v1667 = vpack.c.b16 %v1507, %v1507
  %v1668 = vpack.c.b16 %v1508, %v1508
  %v1669 = vpack.c.b16 %v1509, %v1509
  %v1670 = vpack.c.b16 %v1510, %v1510
  %v1671 = vpack.c.b16 %v1511, %v1511
  %v1825 = vsel %vm800, %v869, 0
  %v1828 = vsel %vm781, %v1664, 0
  %v1831 = vsel %vm781, %v1665, 0
  %v1834 = vsel %vm781, %v1666, 0
  %v1837 = vsel %vm781, %v1667, 0
  %v1840 = vsel %vm781, %v1668, 0
  %v1843 = vsel %vm781, %v1669, 0
  %v1846 = vsel %vm781, %v1670, 0
  %v1849 = vsel %vm781, %v1671, 0
  %1851 = vmatpush.bf16.msra.mxu0 %v1568
  %1852 = vmatpush.bf16.msra.mxu0 %v1560
  %1853 = vmatpush.bf16.msra.mxu0 %v1552
  %1854 = vmatpush.bf16.msra.mxu0 %v1544
  %1855 = vmatpush.bf16.msra.mxu0 %v1536
  %1856 = vmatpush.bf16.msra.mxu0 %v1528
  %1857 = vmatpush.bf16.msra.mxu0 %v1520
  %1858 = vmatpush.bf16.msra.mxu0 %v1512
  %1859 = vmatmul.bf16.gmra.mxu0 %v867
  %v1860 = vpop.f32.mrf.mxu0
  %v1861 = vadd.f32 %v1028, %v1860
  %v1862 = vpop.f32.mrf.mxu0
  %1863 = vdwg.mxu0
  %1864 = vmatpush.bf16.msra.mxu0 %v1632
  %1865 = vmatpush.bf16.msra.mxu0 %v1624
  %1866 = vmatpush.bf16.msra.mxu0 %v1616
  %1867 = vmatpush.bf16.msra.mxu0 %v1608
  %1868 = vmatpush.bf16.msra.mxu0 %v1600
  %1869 = vmatpush.bf16.msra.mxu0 %v1592
  %1870 = vmatpush.bf16.msra.mxu0 %v1584
  %1871 = vmatpush.bf16.msra.mxu0 %v1576
  %1872 = vmatmul.bf16.gmra.mxu0 %v868
  %v1873 = vpop.f32.mrf.mxu0
  %v1874 = vadd.f32 %v1861, %v1873
  %v1875 = vpop.f32.mrf.mxu0
  %1876 = vdwg.mxu0
  %1877 = vmatpush.bf16.msra.mxu0 0
  %1878 = vmatpush.bf16.msra.mxu0 0
  %1879 = vmatpush.bf16.msra.mxu0 0
  %1880 = vmatpush.bf16.msra.mxu0 0
  %1881 = vmatpush.bf16.msra.mxu0 %v1828
  %1882 = vmatpush.bf16.msra.mxu0 %v1656
  %1883 = vmatpush.bf16.msra.mxu0 %v1648
  %1884 = vmatpush.bf16.msra.mxu0 %v1640
  %1885 = vmatmul.bf16.gmra.mxu0 %v1825
  %v1886 = vpop.f32.mrf.mxu0
  %v1887 = vadd.f32 %v1874, %v1886
  %v1888 = vpop.f32.mrf.mxu0
  %1889 = vdwg.mxu0
  %1890 = vmatpush.bf16.msra.mxu0 %v1569
  %1891 = vmatpush.bf16.msra.mxu0 %v1561
  %1892 = vmatpush.bf16.msra.mxu0 %v1553
  %1893 = vmatpush.bf16.msra.mxu0 %v1545
  %1894 = vmatpush.bf16.msra.mxu0 %v1537
  %1895 = vmatpush.bf16.msra.mxu0 %v1529
  %1896 = vmatpush.bf16.msra.mxu0 %v1521
  %1897 = vmatpush.bf16.msra.mxu0 %v1513
  %1898 = vmatmul.bf16.gmra.mxu0 %v867
  %v1899 = vpop.f32.mrf.mxu0
  %v1900 = vadd.f32 %v1029, %v1899
  %v1901 = vpop.f32.mrf.mxu0
  %1902 = vdwg.mxu0
  %1903 = vmatpush.bf16.msra.mxu0 %v1633
  %1904 = vmatpush.bf16.msra.mxu0 %v1625
  %1905 = vmatpush.bf16.msra.mxu0 %v1617
  %1906 = vmatpush.bf16.msra.mxu0 %v1609
  %1907 = vmatpush.bf16.msra.mxu0 %v1601
  %1908 = vmatpush.bf16.msra.mxu0 %v1593
  %1909 = vmatpush.bf16.msra.mxu0 %v1585
  %1910 = vmatpush.bf16.msra.mxu0 %v1577
  %1911 = vmatmul.bf16.gmra.mxu0 %v868
  %v1912 = vpop.f32.mrf.mxu0
  %v1913 = vadd.f32 %v1900, %v1912
  %v1914 = vpop.f32.mrf.mxu0
  %1915 = vdwg.mxu0
  %1916 = vmatpush.bf16.msra.mxu0 0
  %1917 = vmatpush.bf16.msra.mxu0 0
  %1918 = vmatpush.bf16.msra.mxu0 0
  %1919 = vmatpush.bf16.msra.mxu0 0
  %1920 = vmatpush.bf16.msra.mxu0 %v1831
  %1921 = vmatpush.bf16.msra.mxu0 %v1657
  %1922 = vmatpush.bf16.msra.mxu0 %v1649
  %1923 = vmatpush.bf16.msra.mxu0 %v1641
  %1924 = vmatmul.bf16.gmra.mxu0 %v1825
  %v1925 = vpop.f32.mrf.mxu0
  %v1926 = vadd.f32 %v1913, %v1925
  %v1927 = vpop.f32.mrf.mxu0
  %1928 = vdwg.mxu0
  %1929 = vmatpush.bf16.msra.mxu0 %v1570
  %1930 = vmatpush.bf16.msra.mxu0 %v1562
  %1931 = vmatpush.bf16.msra.mxu0 %v1554
  %1932 = vmatpush.bf16.msra.mxu0 %v1546
  %1933 = vmatpush.bf16.msra.mxu0 %v1538
  %1934 = vmatpush.bf16.msra.mxu0 %v1530
  %1935 = vmatpush.bf16.msra.mxu0 %v1522
  %1936 = vmatpush.bf16.msra.mxu0 %v1514
  %1937 = vmatmul.bf16.gmra.mxu0 %v867
  %v1938 = vpop.f32.mrf.mxu0
  %v1939 = vadd.f32 %v1030, %v1938
  %v1940 = vpop.f32.mrf.mxu0
  %1941 = vdwg.mxu0
  %1942 = vmatpush.bf16.msra.mxu0 %v1634
  %1943 = vmatpush.bf16.msra.mxu0 %v1626
  %1944 = vmatpush.bf16.msra.mxu0 %v1618
  %1945 = vmatpush.bf16.msra.mxu0 %v1610
  %1946 = vmatpush.bf16.msra.mxu0 %v1602
  %1947 = vmatpush.bf16.msra.mxu0 %v1594
  %1948 = vmatpush.bf16.msra.mxu0 %v1586
  %1949 = vmatpush.bf16.msra.mxu0 %v1578
  %1950 = vmatmul.bf16.gmra.mxu0 %v868
  %v1951 = vpop.f32.mrf.mxu0
  %v1952 = vadd.f32 %v1939, %v1951
  %v1953 = vpop.f32.mrf.mxu0
  %1954 = vdwg.mxu0
  %1955 = vmatpush.bf16.msra.mxu0 0
  %1956 = vmatpush.bf16.msra.mxu0 0
  %1957 = vmatpush.bf16.msra.mxu0 0
  %1958 = vmatpush.bf16.msra.mxu0 0
  %1959 = vmatpush.bf16.msra.mxu0 %v1834
  %1960 = vmatpush.bf16.msra.mxu0 %v1658
  %1961 = vmatpush.bf16.msra.mxu0 %v1650
  %1962 = vmatpush.bf16.msra.mxu0 %v1642
  %1963 = vmatmul.bf16.gmra.mxu0 %v1825
  %v1964 = vpop.f32.mrf.mxu0
  %v1965 = vadd.f32 %v1952, %v1964
  %v1966 = vpop.f32.mrf.mxu0
  %1967 = vdwg.mxu0
  %1968 = vmatpush.bf16.msra.mxu0 %v1571
  %1969 = vmatpush.bf16.msra.mxu0 %v1563
  %1970 = vmatpush.bf16.msra.mxu0 %v1555
  %1971 = vmatpush.bf16.msra.mxu0 %v1547
  %1972 = vmatpush.bf16.msra.mxu0 %v1539
  %1973 = vmatpush.bf16.msra.mxu0 %v1531
  %1974 = vmatpush.bf16.msra.mxu0 %v1523
  %1975 = vmatpush.bf16.msra.mxu0 %v1515
  %1976 = vmatmul.bf16.gmra.mxu0 %v867
  %v1977 = vpop.f32.mrf.mxu0
  %v1978 = vadd.f32 %v1031, %v1977
  %v1979 = vpop.f32.mrf.mxu0
  %1980 = vdwg.mxu0
  %1981 = vmatpush.bf16.msra.mxu0 %v1635
  %1982 = vmatpush.bf16.msra.mxu0 %v1627
  %1983 = vmatpush.bf16.msra.mxu0 %v1619
  %1984 = vmatpush.bf16.msra.mxu0 %v1611
  %1985 = vmatpush.bf16.msra.mxu0 %v1603
  %1986 = vmatpush.bf16.msra.mxu0 %v1595
  %1987 = vmatpush.bf16.msra.mxu0 %v1587
  %1988 = vmatpush.bf16.msra.mxu0 %v1579
  %1989 = vmatmul.bf16.gmra.mxu0 %v868
  %v1990 = vpop.f32.mrf.mxu0
  %v1991 = vadd.f32 %v1978, %v1990
  %v1992 = vpop.f32.mrf.mxu0
  %1993 = vdwg.mxu0
  %1994 = vmatpush.bf16.msra.mxu0 0
  %1995 = vmatpush.bf16.msra.mxu0 0
  %1996 = vmatpush.bf16.msra.mxu0 0
  %1997 = vmatpush.bf16.msra.mxu0 0
  %1998 = vmatpush.bf16.msra.mxu0 %v1837
  %1999 = vmatpush.bf16.msra.mxu0 %v1659
  %2000 = vmatpush.bf16.msra.mxu0 %v1651
  %2001 = vmatpush.bf16.msra.mxu0 %v1643
  %2002 = vmatmul.bf16.gmra.mxu0 %v1825
  %v2003 = vpop.f32.mrf.mxu0
  %v2004 = vadd.f32 %v1991, %v2003
  %v2005 = vpop.f32.mrf.mxu0
  %2006 = vdwg.mxu0
  %2007 = vmatpush.bf16.msra.mxu0 %v1572
  %2008 = vmatpush.bf16.msra.mxu0 %v1564
  %2009 = vmatpush.bf16.msra.mxu0 %v1556
  %2010 = vmatpush.bf16.msra.mxu0 %v1548
  %2011 = vmatpush.bf16.msra.mxu0 %v1540
  %2012 = vmatpush.bf16.msra.mxu0 %v1532
  %2013 = vmatpush.bf16.msra.mxu0 %v1524
  %2014 = vmatpush.bf16.msra.mxu0 %v1516
  %2015 = vmatmul.bf16.gmra.mxu0 %v867
  %v2016 = vpop.f32.mrf.mxu0
  %v2017 = vadd.f32 %v1032, %v2016
  %v2018 = vpop.f32.mrf.mxu0
  %2019 = vdwg.mxu0
  %2020 = vmatpush.bf16.msra.mxu0 %v1636
  %2021 = vmatpush.bf16.msra.mxu0 %v1628
  %2022 = vmatpush.bf16.msra.mxu0 %v1620
  %2023 = vmatpush.bf16.msra.mxu0 %v1612
  %2024 = vmatpush.bf16.msra.mxu0 %v1604
  %2025 = vmatpush.bf16.msra.mxu0 %v1596
  %2026 = vmatpush.bf16.msra.mxu0 %v1588
  %2027 = vmatpush.bf16.msra.mxu0 %v1580
  %2028 = vmatmul.bf16.gmra.mxu0 %v868
  %v2029 = vpop.f32.mrf.mxu0
  %v2030 = vadd.f32 %v2017, %v2029
  %v2031 = vpop.f32.mrf.mxu0
  %2032 = vdwg.mxu0
  %2033 = vmatpush.bf16.msra.mxu0 0
  %2034 = vmatpush.bf16.msra.mxu0 0
  %2035 = vmatpush.bf16.msra.mxu0 0
  %2036 = vmatpush.bf16.msra.mxu0 0
  %2037 = vmatpush.bf16.msra.mxu0 %v1840
  %2038 = vmatpush.bf16.msra.mxu0 %v1660
  %2039 = vmatpush.bf16.msra.mxu0 %v1652
  %2040 = vmatpush.bf16.msra.mxu0 %v1644
  %2041 = vmatmul.bf16.gmra.mxu0 %v1825
  %v2042 = vpop.f32.mrf.mxu0
  %v2043 = vadd.f32 %v2030, %v2042
  %v2044 = vpop.f32.mrf.mxu0
  %2045 = vdwg.mxu0
  %2046 = vmatpush.bf16.msra.mxu0 %v1573
  %2047 = vmatpush.bf16.msra.mxu0 %v1565
  %2048 = vmatpush.bf16.msra.mxu0 %v1557
  %2049 = vmatpush.bf16.msra.mxu0 %v1549
  %2050 = vmatpush.bf16.msra.mxu0 %v1541
  %2051 = vmatpush.bf16.msra.mxu0 %v1533
  %2052 = vmatpush.bf16.msra.mxu0 %v1525
  %2053 = vmatpush.bf16.msra.mxu0 %v1517
  %2054 = vmatmul.bf16.gmra.mxu0 %v867
  %v2055 = vpop.f32.mrf.mxu0
  %v2056 = vadd.f32 %v1033, %v2055
  %v2057 = vpop.f32.mrf.mxu0
  %2058 = vdwg.mxu0
  %2059 = vmatpush.bf16.msra.mxu0 %v1637
  %2060 = vmatpush.bf16.msra.mxu0 %v1629
  %2061 = vmatpush.bf16.msra.mxu0 %v1621
  %2062 = vmatpush.bf16.msra.mxu0 %v1613
  %2063 = vmatpush.bf16.msra.mxu0 %v1605
  %2064 = vmatpush.bf16.msra.mxu0 %v1597
  %2065 = vmatpush.bf16.msra.mxu0 %v1589
  %2066 = vmatpush.bf16.msra.mxu0 %v1581
  %2067 = vmatmul.bf16.gmra.mxu0 %v868
  %v2068 = vpop.f32.mrf.mxu0
  %v2069 = vadd.f32 %v2056, %v2068
  %v2070 = vpop.f32.mrf.mxu0
  %2071 = vdwg.mxu0
  %2072 = vmatpush.bf16.msra.mxu0 0
  %2073 = vmatpush.bf16.msra.mxu0 0
  %2074 = vmatpush.bf16.msra.mxu0 0
  %2075 = vmatpush.bf16.msra.mxu0 0
  %2076 = vmatpush.bf16.msra.mxu0 %v1843
  %2077 = vmatpush.bf16.msra.mxu0 %v1661
  %2078 = vmatpush.bf16.msra.mxu0 %v1653
  %2079 = vmatpush.bf16.msra.mxu0 %v1645
  %2080 = vmatmul.bf16.gmra.mxu0 %v1825
  %v2081 = vpop.f32.mrf.mxu0
  %v2082 = vadd.f32 %v2069, %v2081
  %v2083 = vpop.f32.mrf.mxu0
  %2084 = vdwg.mxu0
  %2085 = vmatpush.bf16.msra.mxu0 %v1574
  %2086 = vmatpush.bf16.msra.mxu0 %v1566
  %2087 = vmatpush.bf16.msra.mxu0 %v1558
  %2088 = vmatpush.bf16.msra.mxu0 %v1550
  %2089 = vmatpush.bf16.msra.mxu0 %v1542
  %2090 = vmatpush.bf16.msra.mxu0 %v1534
  %2091 = vmatpush.bf16.msra.mxu0 %v1526
  %2092 = vmatpush.bf16.msra.mxu0 %v1518
  %2093 = vmatmul.bf16.gmra.mxu0 %v867
  %v2094 = vpop.f32.mrf.mxu0
  %v2095 = vadd.f32 %v1034, %v2094
  %v2096 = vpop.f32.mrf.mxu0
  %2097 = vdwg.mxu0
  %2098 = vmatpush.bf16.msra.mxu0 %v1638
  %2099 = vmatpush.bf16.msra.mxu0 %v1630
  %2100 = vmatpush.bf16.msra.mxu0 %v1622
  %2101 = vmatpush.bf16.msra.mxu0 %v1614
  %2102 = vmatpush.bf16.msra.mxu0 %v1606
  %2103 = vmatpush.bf16.msra.mxu0 %v1598
  %2104 = vmatpush.bf16.msra.mxu0 %v1590
  %2105 = vmatpush.bf16.msra.mxu0 %v1582
  %2106 = vmatmul.bf16.gmra.mxu0 %v868
  %v2107 = vpop.f32.mrf.mxu0
  %v2108 = vadd.f32 %v2095, %v2107
  %v2109 = vpop.f32.mrf.mxu0
  %2110 = vdwg.mxu0
  %2111 = vmatpush.bf16.msra.mxu0 0
  %2112 = vmatpush.bf16.msra.mxu0 0
  %2113 = vmatpush.bf16.msra.mxu0 0
  %2114 = vmatpush.bf16.msra.mxu0 0
  %2115 = vmatpush.bf16.msra.mxu0 %v1846
  %2116 = vmatpush.bf16.msra.mxu0 %v1662
  %2117 = vmatpush.bf16.msra.mxu0 %v1654
  %2118 = vmatpush.bf16.msra.mxu0 %v1646
  %2119 = vmatmul.bf16.gmra.mxu0 %v1825
  %v2120 = vpop.f32.mrf.mxu0
  %v2121 = vadd.f32 %v2108, %v2120
  %v2122 = vpop.f32.mrf.mxu0
  %2123 = vdwg.mxu0
  %2124 = vmatpush.bf16.msra.mxu0 %v1575
  %2125 = vmatpush.bf16.msra.mxu0 %v1567
  %2126 = vmatpush.bf16.msra.mxu0 %v1559
  %2127 = vmatpush.bf16.msra.mxu0 %v1551
  %2128 = vmatpush.bf16.msra.mxu0 %v1543
  %2129 = vmatpush.bf16.msra.mxu0 %v1535
  %2130 = vmatpush.bf16.msra.mxu0 %v1527
  %2131 = vmatpush.bf16.msra.mxu0 %v1519
  %2132 = vmatmul.bf16.gmra.mxu0 %v867
  %v2133 = vpop.f32.mrf.mxu0
  %v2134 = vadd.f32 %v1035, %v2133
  %v2135 = vpop.f32.mrf.mxu0
  %2136 = vdwg.mxu0
  %2137 = vmatpush.bf16.msra.mxu0 %v1639
  %2138 = vmatpush.bf16.msra.mxu0 %v1631
  %2139 = vmatpush.bf16.msra.mxu0 %v1623
  %2140 = vmatpush.bf16.msra.mxu0 %v1615
  %2141 = vmatpush.bf16.msra.mxu0 %v1607
  %2142 = vmatpush.bf16.msra.mxu0 %v1599
  %2143 = vmatpush.bf16.msra.mxu0 %v1591
  %2144 = vmatpush.bf16.msra.mxu0 %v1583
  %2145 = vmatmul.bf16.gmra.mxu0 %v868
  %v2146 = vpop.f32.mrf.mxu0
  %v2147 = vadd.f32 %v2134, %v2146
  %v2148 = vpop.f32.mrf.mxu0
  %2149 = vdwg.mxu0
  %2150 = vmatpush.bf16.msra.mxu0 0
  %2151 = vmatpush.bf16.msra.mxu0 0
  %2152 = vmatpush.bf16.msra.mxu0 0
  %2153 = vmatpush.bf16.msra.mxu0 0
  %2154 = vmatpush.bf16.msra.mxu0 %v1849
  %2155 = vmatpush.bf16.msra.mxu0 %v1663
  %2156 = vmatpush.bf16.msra.mxu0 %v1655
  %2157 = vmatpush.bf16.msra.mxu0 %v1647
  %2158 = vmatmul.bf16.gmra.mxu0 %v1825
  %v2159 = vpop.f32.mrf.mxu0
  %v2160 = vadd.f32 %v2147, %v2159
  %v2161 = vpop.f32.mrf.mxu0
  %2162 = vdwg.mxu0
  %v2163 = vmax.f32 %v1887, 0.0
  %v2164 = vmax.f32 %v1926, 0.0
  %v2165 = vmax.f32 %v1965, 0.0
  %v2166 = vmax.f32 %v2004, 0.0
  %v2167 = vmax.f32 %v2043, 0.0
  %v2168 = vmax.f32 %v2082, 0.0
  %v2169 = vmax.f32 %v2121, 0.0
  %v2170 = vmax.f32 %v2160, 0.0
  %v2171 = vpack.c.bf16 %v2163, %v2163
  %v2172 = vpack.c.bf16 %v2164, %v2164
  %v2173 = vpack.c.bf16 %v2165, %v2165
  %v2174 = vpack.c.bf16 %v2166, %v2166
  %v2175 = vpack.c.bf16 %v2167, %v2167
  %v2176 = vpack.c.bf16 %v2168, %v2168
  %v2177 = vpack.c.bf16 %v2169, %v2169
  %v2178 = vpack.c.bf16 %v2170, %v2170
  %v2179 = vld [vmem:[%s11] sm:$0xf]
  %v2180 = vld [vmem:[%s11 + $0x4] sm:$0xf]
  %v2181 = vld [vmem:[%s11 + $0x8] sm:$0xf]
  %v2182 = vld [vmem:[%s11 + $0xc] sm:$0xf]
  %v2183 = vld [vmem:[%s11 + $0x10] sm:$0xf]
  %v2184 = vld [vmem:[%s11 + $0x14] sm:$0xf]
  %v2185 = vld [vmem:[%s11 + $0x18] sm:$0xf]
  %v2186 = vld [vmem:[%s11 + $0x1c] sm:$0xf]
  %v2187 = vld [vmem:[%s11 + $0x20] sm:$0xf]
  %v2188 = vld [vmem:[%s11 + $0x24] sm:$0xf]
  %v2189 = vld [vmem:[%s11 + $0x28] sm:$0xf]
  %v2190 = vld [vmem:[%s11 + $0x2c] sm:$0xf]
  %v2191 = vld [vmem:[%s11 + $0x30] sm:$0xf]
  %v2192 = vld [vmem:[%s11 + $0x34] sm:$0xf]
  %v2193 = vld [vmem:[%s11 + $0x38] sm:$0xf]
  %v2194 = vld [vmem:[%s11 + $0x3c] sm:$0xf]
  %v2195 = vld [vmem:[%s11 + $0x40] sm:$0xf]
  %v2196 = vld [vmem:[%s11 + $0x44] sm:$0xf]
  %v2197 = vld [vmem:[%s11 + $0x48] sm:$0xf]
  %v2198 = vld [vmem:[%s11 + $0x4c] sm:$0xf]
  %v2199 = vld [vmem:[%s11 + $0x50] sm:$0xf]
  %v2200 = vld [vmem:[%s11 + $0x54] sm:$0xf]
  %v2201 = vld [vmem:[%s11 + $0x58] sm:$0xf]
  %v2202 = vld [vmem:[%s11 + $0x5c] sm:$0xf]
  %v2203 = vld [vmem:[%s11 + $0x60] sm:$0xf]
  %v2204 = vld [vmem:[%s11 + $0x64] sm:$0xf]
  %v2205 = vld [vmem:[%s11 + $0x68] sm:$0xf]
  %v2206 = vld [vmem:[%s11 + $0x6c] sm:$0xf]
  %v2207 = vld [vmem:[%s11 + $0x70] sm:$0xf]
  %v2208 = vld [vmem:[%s11 + $0x74] sm:$0xf]
  %v2209 = vld [vmem:[%s11 + $0x78] sm:$0xf]
  %v2210 = vld [vmem:[%s11 + $0x7c] sm:$0xf]
  %v2211 = vld [vmem:[%s11 + $0x80] sm:$0xf]
  %v2212 = vld [vmem:[%s11 + $0x84] sm:$0xf]
  %v2213 = vld [vmem:[%s11 + $0x88] sm:$0xf]
  %v2214 = vld [vmem:[%s11 + $0x8c] sm:$0xf]
  %v2215 = vld [vmem:[%s11 + $0x90] sm:$0xf]
  %v2216 = vld [vmem:[%s11 + $0x94] sm:$0xf]
  %v2217 = vld [vmem:[%s11 + $0x98] sm:$0xf]
  %v2218 = vld [vmem:[%s11 + $0x9c] sm:$0xf]
  %v2219 = vld [vmem:[%s11 + $0xa0] sm:$0xf]
  %v2220 = vld [vmem:[%s11 + $0xa4] sm:$0xf]
  %v2221 = vld [vmem:[%s11 + $0xa8] sm:$0xf]
  %v2222 = vld [vmem:[%s11 + $0xac] sm:$0xf]
  %v2223 = vld [vmem:[%s11 + $0xb0] sm:$0xf]
  %v2224 = vld [vmem:[%s11 + $0xb4] sm:$0xf]
  %v2225 = vld [vmem:[%s11 + $0xb8] sm:$0xf]
  %v2226 = vld [vmem:[%s11 + $0xbc] sm:$0xf]
  %v2227 = vld [vmem:[%s11 + $0xc0] sm:$0xf]
  %v2228 = vld [vmem:[%s11 + $0xc4] sm:$0xf]
  %v2229 = vld [vmem:[%s11 + $0xc8] sm:$0xf]
  %v2230 = vld [vmem:[%s11 + $0xcc] sm:$0xf]
  %v2231 = vld [vmem:[%s11 + $0xd0] sm:$0xf]
  %v2232 = vld [vmem:[%s11 + $0xd4] sm:$0xf]
  %v2233 = vld [vmem:[%s11 + $0xd8] sm:$0xf]
  %v2234 = vld [vmem:[%s11 + $0xdc] sm:$0xf]
  %v2235 = vld [vmem:[%s11 + $0xe0] sm:$0xf]
  %v2236 = vld [vmem:[%s11 + $0xe4] sm:$0xf]
  %v2237 = vld [vmem:[%s11 + $0xe8] sm:$0xf]
  %v2238 = vld [vmem:[%s11 + $0xec] sm:$0xf]
  %v2239 = vld [vmem:[%s11 + $0xf0] sm:$0xf]
  %v2240 = vld [vmem:[%s11 + $0xf4] sm:$0xf]
  %v2241 = vld [vmem:[%s11 + $0xf8] sm:$0xf]
  %v2242 = vld [vmem:[%s11 + $0xfc] sm:$0xf]
  %v2243 = vld [vmem:[%s11 + $0x100] sm:$0xf]
  %v2244 = vld [vmem:[%s11 + $0x104] sm:$0xf]
  %v2245 = vld [vmem:[%s11 + $0x108] sm:$0xf]
  %v2246 = vld [vmem:[%s11 + $0x10c] sm:$0xf]
  %v2247 = vld [vmem:[%s11 + $0x110] sm:$0xf]
  %v2248 = vld [vmem:[%s11 + $0x114] sm:$0xf]
  %v2249 = vld [vmem:[%s11 + $0x118] sm:$0xf]
  %v2250 = vld [vmem:[%s11 + $0x11c] sm:$0xf]
  %v2251 = vld [vmem:[%s11 + $0x120] sm:$0xf]
  %v2252 = vld [vmem:[%s11 + $0x124] sm:$0xf]
  %v2253 = vld [vmem:[%s11 + $0x128] sm:$0xf]
  %v2254 = vld [vmem:[%s11 + $0x12c] sm:$0xf]
  %v2255 = vld [vmem:[%s11 + $0x130] sm:$0xf]
  %v2256 = vld [vmem:[%s11 + $0x134] sm:$0xf]
  %v2257 = vld [vmem:[%s11 + $0x138] sm:$0xf]
  %v2258 = vld [vmem:[%s11 + $0x13c] sm:$0xf]
  %v2259 = vld [vmem:[%s11 + $0x140] sm:$0xf]
  %v2260 = vld [vmem:[%s11 + $0x144] sm:$0xf]
  %v2261 = vld [vmem:[%s11 + $0x148] sm:$0xf]
  %v2262 = vld [vmem:[%s11 + $0x14c] sm:$0xf]
  %v2263 = vld [vmem:[%s11 + $0x150] sm:$0xf]
  %v2264 = vld [vmem:[%s11 + $0x154] sm:$0xf]
  %v2265 = vld [vmem:[%s11 + $0x158] sm:$0xf]
  %v2266 = vld [vmem:[%s11 + $0x15c] sm:$0xf]
  %v2267 = vld [vmem:[%s11 + $0x160] sm:$0xf]
  %v2268 = vld [vmem:[%s11 + $0x164] sm:$0xf]
  %v2269 = vld [vmem:[%s11 + $0x168] sm:$0xf]
  %v2270 = vld [vmem:[%s11 + $0x16c] sm:$0xf]
  %v2271 = vld [vmem:[%s11 + $0x170] sm:$0xf]
  %v2272 = vld [vmem:[%s11 + $0x174] sm:$0xf]
  %v2273 = vld [vmem:[%s11 + $0x178] sm:$0xf]
  %v2274 = vld [vmem:[%s11 + $0x17c] sm:$0xf]
  %v2275 = vld [vmem:[%s11 + $0x180] sm:$0xf]
  %v2276 = vld [vmem:[%s11 + $0x184] sm:$0xf]
  %v2277 = vld [vmem:[%s11 + $0x188] sm:$0xf]
  %v2278 = vld [vmem:[%s11 + $0x18c] sm:$0xf]
  %v2279 = vld [vmem:[%s11 + $0x190] sm:$0xf]
  %v2280 = vld [vmem:[%s11 + $0x194] sm:$0xf]
  %v2281 = vld [vmem:[%s11 + $0x198] sm:$0xf]
  %v2282 = vld [vmem:[%s11 + $0x19c] sm:$0xf]
  %v2283 = vld [vmem:[%s11 + $0x1a0] sm:$0xf]
  %v2284 = vld [vmem:[%s11 + $0x1a4] sm:$0xf]
  %v2285 = vld [vmem:[%s11 + $0x1a8] sm:$0xf]
  %v2286 = vld [vmem:[%s11 + $0x1ac] sm:$0xf]
  %v2287 = vld [vmem:[%s11 + $0x1b0] sm:$0xf]
  %v2288 = vld [vmem:[%s11 + $0x1b4] sm:$0xf]
  %v2289 = vld [vmem:[%s11 + $0x1b8] sm:$0xf]
  %v2290 = vld [vmem:[%s11 + $0x1bc] sm:$0xf]
  %v2291 = vld [vmem:[%s11 + $0x1c0] sm:$0xf]
  %v2292 = vld [vmem:[%s11 + $0x1c4] sm:$0xf]
  %v2293 = vld [vmem:[%s11 + $0x1c8] sm:$0xf]
  %v2294 = vld [vmem:[%s11 + $0x1cc] sm:$0xf]
  %v2295 = vld [vmem:[%s11 + $0x1d0] sm:$0xf]
  %v2296 = vld [vmem:[%s11 + $0x1d4] sm:$0xf]
  %v2297 = vld [vmem:[%s11 + $0x1d8] sm:$0xf]
  %v2298 = vld [vmem:[%s11 + $0x1dc] sm:$0xf]
  %v2299 = vld [vmem:[%s11 + $0x1e0] sm:$0xf]
  %v2300 = vld [vmem:[%s11 + $0x1e4] sm:$0xf]
  %v2301 = vld [vmem:[%s11 + $0x1e8] sm:$0xf]
  %v2302 = vld [vmem:[%s11 + $0x1ec] sm:$0xf]
  %v2303 = vld [vmem:[%s11 + $0x1f0] sm:$0xf]
  %v2304 = vld [vmem:[%s11 + $0x1f4] sm:$0xf]
  %v2305 = vld [vmem:[%s11 + $0x1f8] sm:$0xf]
  %v2306 = vld [vmem:[%s11 + $0x1fc] sm:$0xf]
  %v2307 = vld [vmem:[%s12] sm:$0x1]
  %v2309 = vperm.slane %v2307, 0
  %v2439 = vunpack.c.l.b16 %v2179
  %v2440 = vunpack.c.l.b16 %v2180
  %v2441 = vunpack.c.l.b16 %v2181
  %v2442 = vunpack.c.l.b16 %v2182
  %v2443 = vunpack.c.l.b16 %v2183
  %v2444 = vunpack.c.l.b16 %v2184
  %v2445 = vunpack.c.l.b16 %v2185
  %v2446 = vunpack.c.l.b16 %v2186
  %v2447 = vunpack.c.l.b16 %v2187
  %v2448 = vunpack.c.l.b16 %v2188
  %v2449 = vunpack.c.l.b16 %v2189
  %v2450 = vunpack.c.l.b16 %v2190
  %v2451 = vunpack.c.l.b16 %v2191
  %v2452 = vunpack.c.l.b16 %v2192
  %v2453 = vunpack.c.l.b16 %v2193
  %v2454 = vunpack.c.l.b16 %v2194
  %v2455 = vunpack.c.l.b16 %v2195
  %v2456 = vunpack.c.l.b16 %v2196
  %v2457 = vunpack.c.l.b16 %v2197
  %v2458 = vunpack.c.l.b16 %v2198
  %v2459 = vunpack.c.l.b16 %v2199
  %v2460 = vunpack.c.l.b16 %v2200
  %v2461 = vunpack.c.l.b16 %v2201
  %v2462 = vunpack.c.l.b16 %v2202
  %v2463 = vunpack.c.l.b16 %v2203
  %v2464 = vunpack.c.l.b16 %v2204
  %v2465 = vunpack.c.l.b16 %v2205
  %v2466 = vunpack.c.l.b16 %v2206
  %v2467 = vunpack.c.l.b16 %v2207
  %v2468 = vunpack.c.l.b16 %v2208
  %v2469 = vunpack.c.l.b16 %v2209
  %v2470 = vunpack.c.l.b16 %v2210
  %v2471 = vunpack.c.l.b16 %v2211
  %v2472 = vunpack.c.l.b16 %v2212
  %v2473 = vunpack.c.l.b16 %v2213
  %v2474 = vunpack.c.l.b16 %v2214
  %v2475 = vunpack.c.l.b16 %v2215
  %v2476 = vunpack.c.l.b16 %v2216
  %v2477 = vunpack.c.l.b16 %v2217
  %v2478 = vunpack.c.l.b16 %v2218
  %v2479 = vunpack.c.l.b16 %v2219
  %v2480 = vunpack.c.l.b16 %v2220
  %v2481 = vunpack.c.l.b16 %v2221
  %v2482 = vunpack.c.l.b16 %v2222
  %v2483 = vunpack.c.l.b16 %v2223
  %v2484 = vunpack.c.l.b16 %v2224
  %v2485 = vunpack.c.l.b16 %v2225
  %v2486 = vunpack.c.l.b16 %v2226
  %v2487 = vunpack.c.l.b16 %v2227
  %v2488 = vunpack.c.l.b16 %v2228
  %v2489 = vunpack.c.l.b16 %v2229
  %v2490 = vunpack.c.l.b16 %v2230
  %v2491 = vunpack.c.l.b16 %v2231
  %v2492 = vunpack.c.l.b16 %v2232
  %v2493 = vunpack.c.l.b16 %v2233
  %v2494 = vunpack.c.l.b16 %v2234
  %v2495 = vunpack.c.l.b16 %v2235
  %v2496 = vunpack.c.l.b16 %v2236
  %v2497 = vunpack.c.l.b16 %v2237
  %v2498 = vunpack.c.l.b16 %v2238
  %v2499 = vunpack.c.l.b16 %v2239
  %v2500 = vunpack.c.l.b16 %v2240
  %v2501 = vunpack.c.l.b16 %v2241
  %v2502 = vunpack.c.l.b16 %v2242
  %v2503 = vunpack.c.l.b16 %v2243
  %v2504 = vunpack.c.l.b16 %v2244
  %v2505 = vunpack.c.l.b16 %v2245
  %v2506 = vunpack.c.l.b16 %v2246
  %v2507 = vunpack.c.l.b16 %v2247
  %v2508 = vunpack.c.l.b16 %v2248
  %v2509 = vunpack.c.l.b16 %v2249
  %v2510 = vunpack.c.l.b16 %v2250
  %v2511 = vunpack.c.l.b16 %v2251
  %v2512 = vunpack.c.l.b16 %v2252
  %v2513 = vunpack.c.l.b16 %v2253
  %v2514 = vunpack.c.l.b16 %v2254
  %v2515 = vunpack.c.l.b16 %v2255
  %v2516 = vunpack.c.l.b16 %v2256
  %v2517 = vunpack.c.l.b16 %v2257
  %v2518 = vunpack.c.l.b16 %v2258
  %v2519 = vunpack.c.l.b16 %v2259
  %v2520 = vunpack.c.l.b16 %v2260
  %v2521 = vunpack.c.l.b16 %v2261
  %v2522 = vunpack.c.l.b16 %v2262
  %v2523 = vunpack.c.l.b16 %v2263
  %v2524 = vunpack.c.l.b16 %v2264
  %v2525 = vunpack.c.l.b16 %v2265
  %v2526 = vunpack.c.l.b16 %v2266
  %v2527 = vunpack.c.l.b16 %v2267
  %v2528 = vunpack.c.l.b16 %v2268
  %v2529 = vunpack.c.l.b16 %v2269
  %v2530 = vunpack.c.l.b16 %v2270
  %v2531 = vunpack.c.l.b16 %v2271
  %v2532 = vunpack.c.l.b16 %v2272
  %v2533 = vunpack.c.l.b16 %v2273
  %v2534 = vunpack.c.l.b16 %v2274
  %v2535 = vunpack.c.l.b16 %v2275
  %v2536 = vunpack.c.l.b16 %v2276
  %v2537 = vunpack.c.l.b16 %v2277
  %v2538 = vunpack.c.l.b16 %v2278
  %v2539 = vunpack.c.l.b16 %v2279
  %v2540 = vunpack.c.l.b16 %v2280
  %v2541 = vunpack.c.l.b16 %v2281
  %v2542 = vunpack.c.l.b16 %v2282
  %v2543 = vunpack.c.l.b16 %v2283
  %v2544 = vunpack.c.l.b16 %v2284
  %v2545 = vunpack.c.l.b16 %v2285
  %v2546 = vunpack.c.l.b16 %v2286
  %v2547 = vunpack.c.l.b16 %v2287
  %v2548 = vunpack.c.l.b16 %v2288
  %v2549 = vunpack.c.l.b16 %v2289
  %v2550 = vunpack.c.l.b16 %v2290
  %v2551 = vunpack.c.l.b16 %v2291
  %v2552 = vunpack.c.l.b16 %v2292
  %v2553 = vunpack.c.l.b16 %v2293
  %v2554 = vunpack.c.l.b16 %v2294
  %v2555 = vunpack.c.l.b16 %v2295
  %v2556 = vunpack.c.l.b16 %v2296
  %v2557 = vunpack.c.l.b16 %v2297
  %v2558 = vunpack.c.l.b16 %v2298
  %v2559 = vunpack.c.l.b16 %v2299
  %v2560 = vunpack.c.l.b16 %v2300
  %v2561 = vunpack.c.l.b16 %v2301
  %v2562 = vunpack.c.l.b16 %v2302
  %v2563 = vunpack.c.l.b16 %v2303
  %v2564 = vunpack.c.l.b16 %v2304
  %v2565 = vunpack.c.l.b16 %v2305
  %v2566 = vunpack.c.l.b16 %v2306
  %v2567 = vpack.c.b16 %v2440, %v2439
  %v2568 = vpack.c.b16 %v2442, %v2441
  %v2569 = vpack.c.b16 %v2444, %v2443
  %v2570 = vpack.c.b16 %v2446, %v2445
  %v2571 = vpack.c.b16 %v2448, %v2447
  %v2572 = vpack.c.b16 %v2450, %v2449
  %v2573 = vpack.c.b16 %v2452, %v2451
  %v2574 = vpack.c.b16 %v2454, %v2453
  %v2575 = vpack.c.b16 %v2456, %v2455
  %v2576 = vpack.c.b16 %v2458, %v2457
  %v2577 = vpack.c.b16 %v2460, %v2459
  %v2578 = vpack.c.b16 %v2462, %v2461
  %v2579 = vpack.c.b16 %v2464, %v2463
  %v2580 = vpack.c.b16 %v2466, %v2465
  %v2581 = vpack.c.b16 %v2468, %v2467
  %v2582 = vpack.c.b16 %v2470, %v2469
  %v2583 = vpack.c.b16 %v2472, %v2471
  %v2584 = vpack.c.b16 %v2474, %v2473
  %v2585 = vpack.c.b16 %v2476, %v2475
  %v2586 = vpack.c.b16 %v2478, %v2477
  %v2587 = vpack.c.b16 %v2480, %v2479
  %v2588 = vpack.c.b16 %v2482, %v2481
  %v2589 = vpack.c.b16 %v2484, %v2483
  %v2590 = vpack.c.b16 %v2486, %v2485
  %v2591 = vpack.c.b16 %v2488, %v2487
  %v2592 = vpack.c.b16 %v2490, %v2489
  %v2593 = vpack.c.b16 %v2492, %v2491
  %v2594 = vpack.c.b16 %v2494, %v2493
  %v2595 = vpack.c.b16 %v2496, %v2495
  %v2596 = vpack.c.b16 %v2498, %v2497
  %v2597 = vpack.c.b16 %v2500, %v2499
  %v2598 = vpack.c.b16 %v2502, %v2501
  %v2599 = vpack.c.b16 %v2504, %v2503
  %v2600 = vpack.c.b16 %v2506, %v2505
  %v2601 = vpack.c.b16 %v2508, %v2507
  %v2602 = vpack.c.b16 %v2510, %v2509
  %v2603 = vpack.c.b16 %v2512, %v2511
  %v2604 = vpack.c.b16 %v2514, %v2513
  %v2605 = vpack.c.b16 %v2516, %v2515
  %v2606 = vpack.c.b16 %v2518, %v2517
  %v2607 = vpack.c.b16 %v2520, %v2519
  %v2608 = vpack.c.b16 %v2522, %v2521
  %v2609 = vpack.c.b16 %v2524, %v2523
  %v2610 = vpack.c.b16 %v2526, %v2525
  %v2611 = vpack.c.b16 %v2528, %v2527
  %v2612 = vpack.c.b16 %v2530, %v2529
  %v2613 = vpack.c.b16 %v2532, %v2531
  %v2614 = vpack.c.b16 %v2534, %v2533
  %v2615 = vpack.c.b16 %v2536, %v2535
  %v2616 = vpack.c.b16 %v2538, %v2537
  %v2617 = vpack.c.b16 %v2540, %v2539
  %v2618 = vpack.c.b16 %v2542, %v2541
  %v2619 = vpack.c.b16 %v2544, %v2543
  %v2620 = vpack.c.b16 %v2546, %v2545
  %v2621 = vpack.c.b16 %v2548, %v2547
  %v2622 = vpack.c.b16 %v2550, %v2549
  %v2623 = vpack.c.b16 %v2552, %v2551
  %v2624 = vpack.c.b16 %v2554, %v2553
  %v2625 = vpack.c.b16 %v2556, %v2555
  %v2626 = vpack.c.b16 %v2558, %v2557
  %v2627 = vpack.c.b16 %v2560, %v2559
  %v2628 = vpack.c.b16 %v2562, %v2561
  %v2629 = vpack.c.b16 %v2564, %v2563
  %v2630 = vpack.c.b16 %v2566, %v2565
  %2695 = vmatpush.bf16.msra.mxu0 %v2574
  %2696 = vmatpush.bf16.msra.mxu0 %v2573
  %2697 = vmatpush.bf16.msra.mxu0 %v2572
  %2698 = vmatpush.bf16.msra.mxu0 %v2571
  %2699 = vmatpush.bf16.msra.mxu0 %v2570
  %2700 = vmatpush.bf16.msra.mxu0 %v2569
  %2701 = vmatpush.bf16.msra.mxu0 %v2568
  %2702 = vmatpush.bf16.msra.mxu0 %v2567
  %2703 = vmatmul.bf16.gmra.mxu0 %v2171
  %v2704 = vpop.f32.mrf.mxu0
  %v2705 = vadd.f32 %v2309, %v2704
  %v2706 = vpop.f32.mrf.mxu0
  %2707 = vdwg.mxu0
  %2708 = vmatpush.bf16.msra.mxu0 %v2582
  %2709 = vmatpush.bf16.msra.mxu0 %v2581
  %2710 = vmatpush.bf16.msra.mxu0 %v2580
  %2711 = vmatpush.bf16.msra.mxu0 %v2579
  %2712 = vmatpush.bf16.msra.mxu0 %v2578
  %2713 = vmatpush.bf16.msra.mxu0 %v2577
  %2714 = vmatpush.bf16.msra.mxu0 %v2576
  %2715 = vmatpush.bf16.msra.mxu0 %v2575
  %2716 = vmatmul.bf16.gmra.mxu0 %v2172
  %v2717 = vpop.f32.mrf.mxu0
  %v2718 = vadd.f32 %v2705, %v2717
  %v2719 = vpop.f32.mrf.mxu0
  %2720 = vdwg.mxu0
  %2721 = vmatpush.bf16.msra.mxu0 %v2590
  %2722 = vmatpush.bf16.msra.mxu0 %v2589
  %2723 = vmatpush.bf16.msra.mxu0 %v2588
  %2724 = vmatpush.bf16.msra.mxu0 %v2587
  %2725 = vmatpush.bf16.msra.mxu0 %v2586
  %2726 = vmatpush.bf16.msra.mxu0 %v2585
  %2727 = vmatpush.bf16.msra.mxu0 %v2584
  %2728 = vmatpush.bf16.msra.mxu0 %v2583
  %2729 = vmatmul.bf16.gmra.mxu0 %v2173
  %v2730 = vpop.f32.mrf.mxu0
  %v2731 = vadd.f32 %v2718, %v2730
  %v2732 = vpop.f32.mrf.mxu0
  %2733 = vdwg.mxu0
  %2734 = vmatpush.bf16.msra.mxu0 %v2598
  %2735 = vmatpush.bf16.msra.mxu0 %v2597
  %2736 = vmatpush.bf16.msra.mxu0 %v2596
  %2737 = vmatpush.bf16.msra.mxu0 %v2595
  %2738 = vmatpush.bf16.msra.mxu0 %v2594
  %2739 = vmatpush.bf16.msra.mxu0 %v2593
  %2740 = vmatpush.bf16.msra.mxu0 %v2592
  %2741 = vmatpush.bf16.msra.mxu0 %v2591
  %2742 = vmatmul.bf16.gmra.mxu0 %v2174
  %v2743 = vpop.f32.mrf.mxu0
  %v2744 = vadd.f32 %v2731, %v2743
  %v2745 = vpop.f32.mrf.mxu0
  %2746 = vdwg.mxu0
  %2747 = vmatpush.bf16.msra.mxu0 %v2606
  %2748 = vmatpush.bf16.msra.mxu0 %v2605
  %2749 = vmatpush.bf16.msra.mxu0 %v2604
  %2750 = vmatpush.bf16.msra.mxu0 %v2603
  %2751 = vmatpush.bf16.msra.mxu0 %v2602
  %2752 = vmatpush.bf16.msra.mxu0 %v2601
  %2753 = vmatpush.bf16.msra.mxu0 %v2600
  %2754 = vmatpush.bf16.msra.mxu0 %v2599
  %2755 = vmatmul.bf16.gmra.mxu0 %v2175
  %v2756 = vpop.f32.mrf.mxu0
  %v2757 = vadd.f32 %v2744, %v2756
  %v2758 = vpop.f32.mrf.mxu0
  %2759 = vdwg.mxu0
  %2760 = vmatpush.bf16.msra.mxu0 %v2614
  %2761 = vmatpush.bf16.msra.mxu0 %v2613
  %2762 = vmatpush.bf16.msra.mxu0 %v2612
  %2763 = vmatpush.bf16.msra.mxu0 %v2611
  %2764 = vmatpush.bf16.msra.mxu0 %v2610
  %2765 = vmatpush.bf16.msra.mxu0 %v2609
  %2766 = vmatpush.bf16.msra.mxu0 %v2608
  %2767 = vmatpush.bf16.msra.mxu0 %v2607
  %2768 = vmatmul.bf16.gmra.mxu0 %v2176
  %v2769 = vpop.f32.mrf.mxu0
  %v2770 = vadd.f32 %v2757, %v2769
  %v2771 = vpop.f32.mrf.mxu0
  %2772 = vdwg.mxu0
  %2773 = vmatpush.bf16.msra.mxu0 %v2622
  %2774 = vmatpush.bf16.msra.mxu0 %v2621
  %2775 = vmatpush.bf16.msra.mxu0 %v2620
  %2776 = vmatpush.bf16.msra.mxu0 %v2619
  %2777 = vmatpush.bf16.msra.mxu0 %v2618
  %2778 = vmatpush.bf16.msra.mxu0 %v2617
  %2779 = vmatpush.bf16.msra.mxu0 %v2616
  %2780 = vmatpush.bf16.msra.mxu0 %v2615
  %2781 = vmatmul.bf16.gmra.mxu0 %v2177
  %v2782 = vpop.f32.mrf.mxu0
  %v2783 = vadd.f32 %v2770, %v2782
  %v2784 = vpop.f32.mrf.mxu0
  %2785 = vdwg.mxu0
  %2786 = vmatpush.bf16.msra.mxu0 %v2630
  %2787 = vmatpush.bf16.msra.mxu0 %v2629
  %2788 = vmatpush.bf16.msra.mxu0 %v2628
  %2789 = vmatpush.bf16.msra.mxu0 %v2627
  %2790 = vmatpush.bf16.msra.mxu0 %v2626
  %2791 = vmatpush.bf16.msra.mxu0 %v2625
  %2792 = vmatpush.bf16.msra.mxu0 %v2624
  %2793 = vmatpush.bf16.msra.mxu0 %v2623
  %2794 = vmatmul.bf16.gmra.mxu0 %v2178
  %v2795 = vpop.f32.mrf.mxu0
  %v2796 = vadd.f32 %v2783, %v2795
  %v2797 = vpop.f32.mrf.mxu0
  %2798 = vdwg.mxu0
  %2799 = vst [vmem:[%s13] sm:$0x3] %v2796
  // Predicated region
  $region54: #{gcnfg_forward.3} parent=0 // pred_check
    _
  $region55: #{gcnfg_forward.3} parent=0 // pred_check_branch
    %2801 = sbr.rel (0) target = $region57
  $region56: #{gcnfg_forward.3} parent=0 // pred_region
    _
  $region57: #{gcnfg_forward.3} parent=0 // pred_fallthru
    _
  // Predicated region
  $region58: #{gcnfg_forward.3} parent=0 // pred_check
    _
  $region59: #{gcnfg_forward.3} parent=0 // pred_check_branch
    %2803 = sbr.rel (0) target = $region61
  $region60: #{gcnfg_forward.3} parent=0 // pred_region
    _
  $region61: #{gcnfg_forward.3} parent=0 // pred_fallthru
    _

// kernel: gcnfg_forward.4
$region0: #{gcnfg_forward.4}
  #allocation0 [shape = 'u32[]', space=smem, size = 0x4, offset = 0x4, fixed_abs, tag = 'smem constant byte address 0x4 - core index']
  #allocation1 [shape = 'u32[72,128]{1,0:T(1,128)}', space=vmem, size = 0x9000, scoped, tag = 'internal scratch']
  %s0 = inlined_call_operand.vmem [shape: bf16[2,1024,128], index: 0, kind: input, shape index: {}]
  %s1 = inlined_call_operand.vmem [shape: bf16[256,1024], index: 1, kind: input, shape index: {}]
  %s2 = inlined_call_operand.vmem [shape: f32[32,1], index: 2, kind: input, shape index: {}]
  %s3 = inlined_call_operand.vmem [shape: bf16[32,121,128], index: 3, kind: input, shape index: {}]
  %s4 = inlined_call_operand.vmem [shape: f32[1,128], index: 4, kind: input, shape index: {}]
  %s5 = inlined_call_operand.vmem [shape: f32[2,1,128], index: 5, kind: output, shape index: {}]
  %s6 = sld [smem:[#allocation0]]
  $region53: #{gcnfg_forward.4} parent=0
    _
  %s8 = ssub.s32 1, %s6
  %s9 = scalar_select 0, %s8, %s6
  loop: start=0, step=1, limit=4
  $region2: #{gcnfg_forward.4} parent=0 // loop_pre_header
    _
  $region3: #{gcnfg_forward.4} parent=0 // loop_header
    %s11 = sphi 0, %s15
    %p12 = scmp.ge.s32.totalorder %s11, 4
    %s21 = sphi 0, %s23
    %s24 = sphi 0, %s21
    %s25 = sphi 0, %s24
    %s41 = sphi 0, %s25
    %s45 = sphi 0, %s45
    %s47 = sphi 0, %s45
    %s48 = sphi 0, %s47
    %s62 = sphi 0, %s48
    %s66 = sphi 0, %s66
    %s68 = sphi 0, %s66
    %s69 = sphi 0, %s68
    %s83 = sphi 0, %s69
    %s87 = sphi 0, %s87
    %s89 = sphi 0, %s87
    %s90 = sphi 0, %s89
    %s104 = sphi 0, %s90
    %s108 = sphi 0, %s108
    %s110 = sphi 0, %s108
    %s111 = sphi 0, %s110
    %s125 = sphi 0, %s111
    %s131 = sphi 0, %s133
    %s134 = sphi 0, %s131
    %s135 = sphi 0, %s134
    %s151 = sphi 0, %s135
  $region4: #{gcnfg_forward.4} parent=0 // loop_header_branch
    %14 = sbr.rel (%p12) target = $region8
  $region5: #{gcnfg_forward.4} parent=0 // loop_body
    %s16 = ssub.s32 %s11, 1
    %s17 = ssub.s32 %s11, 2
    %s18 = sadd.s32 %s11, 1
    %s19 = ssub.s32 %s11, %s18
    %p20 = scmp.eq.s32.totalorder %s19, 0
    %s22 = sadd.s32 %s21, 1
    %s23 = scalar_select %p20, %s21, %s22
    %p26 = pneg %p20
    %p27 = scmp.eq.s32.totalorder %s11, 1
    %p28 = por %p26, %p27
    %p29 = scmp.ne.s32.totalorder %s21, %s24
    %p30 = scmp.eq.s32.totalorder %s11, 0
    %p31 = por %p29, %p30
    %p32 = scmp.ne.s32.totalorder %s21, %s24
    %p33 = scmp.eq.s32.totalorder %s16, 1
    %p34 = por %p32, %p33
    %p35 = scmp.ne.s32.totalorder %s24, %s25
    %p36 = scmp.eq.s32.totalorder %s16, 0
    %p37 = por %p35, %p36
    %p38 = scmp.ne.s32.totalorder %s24, %s25
    %p39 = scmp.eq.s32.totalorder %s17, 1
    %p40 = por %p38, %p39
    %p42 = scmp.ne.s32.totalorder %s25, %s41
    %p43 = scmp.eq.s32.totalorder %s17, 0
    %p44 = por %p42, %p43
    %s46 = sadd.s32 %s45, 1
    %p49 = scmp.eq.s32.totalorder %s11, 1
    %p50 = scmp.ne.s32.totalorder %s45, %s47
    %p51 = scmp.eq.s32.totalorder %s11, 0
    %p52 = por %p50, %p51
    %p53 = scmp.ne.s32.totalorder %s45, %s47
    %p54 = scmp.eq.s32.totalorder %s16, 1
    %p55 = por %p53, %p54
    %p56 = scmp.ne.s32.totalorder %s47, %s48
    %p57 = scmp.eq.s32.totalorder %s16, 0
    %p58 = por %p56, %p57
    %p59 = scmp.ne.s32.totalorder %s47, %s48
    %p60 = scmp.eq.s32.totalorder %s17, 1
    %p61 = por %p59, %p60
    %p63 = scmp.ne.s32.totalorder %s48, %s62
    %p64 = scmp.eq.s32.totalorder %s17, 0
    %p65 = por %p63, %p64
    %s67 = sadd.s32 %s66, 1
    %p70 = scmp.eq.s32.totalorder %s11, 1
    %p71 = scmp.ne.s32.totalorder %s66, %s68
    %p72 = scmp.eq.s32.totalorder %s11, 0
    %p73 = por %p71, %p72
    %p74 = scmp.ne.s32.totalorder %s66, %s68
    %p75 = scmp.eq.s32.totalorder %s16, 1
    %p76 = por %p74, %p75
    %p77 = scmp.ne.s32.totalorder %s68, %s69
    %p78 = scmp.eq.s32.totalorder %s16, 0
    %p79 = por %p77, %p78
    %p80 = scmp.ne.s32.totalorder %s68, %s69
    %p81 = scmp.eq.s32.totalorder %s17, 1
    %p82 = por %p80, %p81
    %p84 = scmp.ne.s32.totalorder %s69, %s83
    %p85 = scmp.eq.s32.totalorder %s17, 0
    %p86 = por %p84, %p85
    %s88 = sadd.s32 %s87, 1
    %p91 = scmp.eq.s32.totalorder %s11, 1
    %p92 = scmp.ne.s32.totalorder %s87, %s89
    %p93 = scmp.eq.s32.totalorder %s11, 0
    %p94 = por %p92, %p93
    %p95 = scmp.ne.s32.totalorder %s87, %s89
    %p96 = scmp.eq.s32.totalorder %s16, 1
    %p97 = por %p95, %p96
    %p98 = scmp.ne.s32.totalorder %s89, %s90
    %p99 = scmp.eq.s32.totalorder %s16, 0
    %p100 = por %p98, %p99
    %p101 = scmp.ne.s32.totalorder %s89, %s90
    %p102 = scmp.eq.s32.totalorder %s17, 1
    %p103 = por %p101, %p102
    %p105 = scmp.ne.s32.totalorder %s90, %s104
    %p106 = scmp.eq.s32.totalorder %s17, 0
    %p107 = por %p105, %p106
    %s109 = sadd.s32 %s108, 1
    %p112 = scmp.eq.s32.totalorder %s11, 1
    %p113 = scmp.ne.s32.totalorder %s108, %s110
    %p114 = scmp.eq.s32.totalorder %s11, 0
    %p115 = por %p113, %p114
    %p116 = scmp.ne.s32.totalorder %s108, %s110
    %p117 = scmp.eq.s32.totalorder %s16, 1
    %p118 = por %p116, %p117
    %p119 = scmp.ne.s32.totalorder %s110, %s111
    %p120 = scmp.eq.s32.totalorder %s16, 0
    %p121 = por %p119, %p120
    %p122 = scmp.ne.s32.totalorder %s110, %s111
    %p123 = scmp.eq.s32.totalorder %s17, 1
    %p124 = por %p122, %p123
    %p126 = scmp.ne.s32.totalorder %s111, %s125
    %p127 = scmp.eq.s32.totalorder %s17, 0
    %p128 = por %p126, %p127
    %s129 = ssub.s32 %s11, %s18
    %p130 = scmp.eq.s32.totalorder %s129, 0
    %s132 = sadd.s32 %s131, 1
    %s133 = scalar_select %p130, %s131, %s132
    %p136 = pneg %p130
    %p137 = scmp.eq.s32.totalorder %s11, 1
    %p138 = por %p136, %p137
    %p139 = scmp.ne.s32.totalorder %s131, %s134
    %p140 = scmp.eq.s32.totalorder %s11, 0
    %p141 = por %p139, %p140
    %p142 = scmp.ne.s32.totalorder %s131, %s134
    %p143 = scmp.eq.s32.totalorder %s16, 1
    %p144 = por %p142, %p143
    %p145 = scmp.ne.s32.totalorder %s134, %s135
    %p146 = scmp.eq.s32.totalorder %s16, 0
    %p147 = por %p145, %p146
    %p148 = scmp.ne.s32.totalorder %s134, %s135
    %p149 = scmp.eq.s32.totalorder %s17, 1
    %p150 = por %p148, %p149
    %p152 = scmp.ne.s32.totalorder %s135, %s151
    %p153 = scmp.eq.s32.totalorder %s17, 0
    %p154 = por %p152, %p153
    %p155 = scmp.le.s32.totalorder 1, %s11
    %p156 = scmp.lt.s32.totalorder %s11, 3
    %p157 = pnand %p155, %p156
    %p158 = pneg %p157
    // Predicated region
    $region9: #{gcnfg_forward.4} parent=5 // pred_check
      _
    $region10: #{gcnfg_forward.4} parent=5 // pred_check_branch
      %160 = sbr.rel (%p157) target = $region12
    $region11: #{gcnfg_forward.4} parent=5 // pred_region
      %s161 = ssub.s32 %s11, 1
      // Predicated region
      $region13: #{gcnfg_forward.4} parent=11 // pred_check
        %p162 = pneg %p58
      $region14: #{gcnfg_forward.4} parent=11 // pred_check_branch
        %164 = sbr.rel (%p162) target = $region16
      $region15: #{gcnfg_forward.4} parent=11 // pred_region
        _
      $region16: #{gcnfg_forward.4} parent=11 // pred_fallthru
        _
      // Predicated region
      $region17: #{gcnfg_forward.4} parent=11 // pred_check
        %p165 = pneg %p79
      $region18: #{gcnfg_forward.4} parent=11 // pred_check_branch
        %167 = sbr.rel (%p165) target = $region20
      $region19: #{gcnfg_forward.4} parent=11 // pred_region
        _
      $region20: #{gcnfg_forward.4} parent=11 // pred_fallthru
        _
      // Predicated region
      $region21: #{gcnfg_forward.4} parent=11 // pred_check
        %p168 = pneg %p100
      $region22: #{gcnfg_forward.4} parent=11 // pred_check_branch
        %170 = sbr.rel (%p168) target = $region24
      $region23: #{gcnfg_forward.4} parent=11 // pred_region
        _
      $region24: #{gcnfg_forward.4} parent=11 // pred_fallthru
        _
      // Predicated region
      $region25: #{gcnfg_forward.4} parent=11 // pred_check
        %p171 = pneg %p121
      $region26: #{gcnfg_forward.4} parent=11 // pred_check_branch
        %173 = sbr.rel (%p171) target = $region28
      $region27: #{gcnfg_forward.4} parent=11 // pred_region
        _
      $region28: #{gcnfg_forward.4} parent=11 // pred_fallthru
        _
    $region12: #{gcnfg_forward.4} parent=5 // pred_fallthru
      _
    %p174 = scmp.lt.s32.totalorder %s11, 2
    // Predicated region
    $region29: #{gcnfg_forward.4} parent=5 // pred_check
      %p175 = pneg %p174
    $region30: #{gcnfg_forward.4} parent=5 // pred_check_branch
      %177 = sbr.rel (%p175) target = $region32
    $region31: #{gcnfg_forward.4} parent=5 // pred_region
      // Predicated region
      $region33: #{gcnfg_forward.4} parent=31 // pred_check
        %p178 = pneg %p31
      $region34: #{gcnfg_forward.4} parent=31 // pred_check_branch
        %180 = sbr.rel (%p178) target = $region36
      $region35: #{gcnfg_forward.4} parent=31 // pred_region
        %p181 = scmp.lt.s32.totalorder %s11, 1
        %s182 = scalar_select %p181, %s11, 1
        %s183 = smul.addr %s182, 128
        %s184 = smul.addr %s183, 4
        %s185 = scalar_lea.vmem %s0, %s184
      $region36: #{gcnfg_forward.4} parent=31 // pred_fallthru
        _
    $region32: #{gcnfg_forward.4} parent=5 // pred_fallthru
      _
    %p186 = scmp.le.s32.totalorder 1, %s11
    %p187 = scmp.lt.s32.totalorder %s11, 3
    %p188 = pnand %p186, %p187
    %p189 = pneg %p188
    // Predicated region
    $region37: #{gcnfg_forward.4} parent=5 // pred_check
      _
    $region38: #{gcnfg_forward.4} parent=5 // pred_check_branch
      %191 = sbr.rel (%p188) target = $region40
    $region39: #{gcnfg_forward.4} parent=5 // pred_region
      %s192 = ssub.s32 %s11, 1
      %p193 = scmp.lt.s32.totalorder %s16, 1
      %s194 = scalar_select %p193, %s16, 1
      %s195 = smul.addr %s194, 128
      %s196 = smul.addr %s195, 4
      %s197 = scalar_lea.vmem %s0, %s196
      %p198 = pneg %p37
      %p199 = pneg %p34
      %p200 = pneg %p58
      %p201 = pneg %p55
      %p202 = pneg %p79
      %p203 = pneg %p76
      %p204 = pneg %p100
      %p205 = pneg %p97
      %p206 = pneg %p121
      %p207 = pneg %p118
      %p208 = pneg %p147
      %p209 = pneg %p144
      %p210 = scmp.lt.s32.totalorder %s16, 1
      %s211 = scalar_select %p210, %s16, 1
      %s212 = scalar_lea.vmem %s5, %s211
      %p213 = scmp.lt.s32.totalorder %s16, 1
      %s214 = scalar_select %p213, %s16, 1
      %s215 = smul.addr %s214, 128
      %s216 = smul.addr %s215, 4
      %s217 = scalar_lea.vmem %s0, %s216
      %p218 = scmp.lt.s32.totalorder %s16, 1
      %s219 = scalar_select %p218, %s16, 1
      %s220 = scalar_lea.vmem %s5, %s219
      %v221 = vld [vmem:[%s217] sm:$0xf]
      %v222 = vld [vmem:[%s217 + $0x4] sm:$0xf]
      %v223 = vld [vmem:[%s217 + $0x8] sm:$0xf]
      %v224 = vld [vmem:[%s217 + $0xc] sm:$0xf]
      %v225 = vld [vmem:[%s217 + $0x10] sm:$0xf]
      %v226 = vld [vmem:[%s217 + $0x14] sm:$0xf]
      %v227 = vld [vmem:[%s217 + $0x18] sm:$0xf]
      %v228 = vld [vmem:[%s217 + $0x1c] sm:$0xf]
      %v229 = vld [vmem:[%s217 + $0x20] sm:$0xf]
      %v230 = vld [vmem:[%s217 + $0x24] sm:$0xf]
      %v231 = vld [vmem:[%s217 + $0x28] sm:$0xf]
      %v232 = vld [vmem:[%s217 + $0x2c] sm:$0xf]
      %v233 = vld [vmem:[%s217 + $0x30] sm:$0xf]
      %v234 = vld [vmem:[%s217 + $0x34] sm:$0xf]
      %v235 = vld [vmem:[%s217 + $0x38] sm:$0xf]
      %v236 = vld [vmem:[%s217 + $0x3c] sm:$0xf]
      %v237 = vld [vmem:[%s217 + $0x40] sm:$0xf]
      %v238 = vld [vmem:[%s217 + $0x44] sm:$0xf]
      %v239 = vld [vmem:[%s217 + $0x48] sm:$0xf]
      %v240 = vld [vmem:[%s217 + $0x4c] sm:$0xf]
      %v241 = vld [vmem:[%s217 + $0x50] sm:$0xf]
      %v242 = vld [vmem:[%s217 + $0x54] sm:$0xf]
      %v243 = vld [vmem:[%s217 + $0x58] sm:$0xf]
      %v244 = vld [vmem:[%s217 + $0x5c] sm:$0xf]
      %v245 = vld [vmem:[%s217 + $0x60] sm:$0xf]
      %v246 = vld [vmem:[%s217 + $0x64] sm:$0xf]
      %v247 = vld [vmem:[%s217 + $0x68] sm:$0xf]
      %v248 = vld [vmem:[%s217 + $0x6c] sm:$0xf]
      %v249 = vld [vmem:[%s217 + $0x70] sm:$0xf]
      %v250 = vld [vmem:[%s217 + $0x74] sm:$0xf]
      %v251 = vld [vmem:[%s217 + $0x78] sm:$0xf]
      %v252 = vld [vmem:[%s217 + $0x7c] sm:$0xf]
      %v253 = vld [vmem:[%s217 + $0x80] sm:$0xf]
      %v254 = vld [vmem:[%s217 + $0x84] sm:$0xf]
      %v255 = vld [vmem:[%s217 + $0x88] sm:$0xf]
      %v256 = vld [vmem:[%s217 + $0x8c] sm:$0xf]
      %v257 = vld [vmem:[%s217 + $0x90] sm:$0xf]
      %v258 = vld [vmem:[%s217 + $0x94] sm:$0xf]
      %v259 = vld [vmem:[%s217 + $0x98] sm:$0xf]
      %v260 = vld [vmem:[%s217 + $0x9c] sm:$0xf]
      %v261 = vld [vmem:[%s217 + $0xa0] sm:$0xf]
      %v262 = vld [vmem:[%s217 + $0xa4] sm:$0xf]
      %v263 = vld [vmem:[%s217 + $0xa8] sm:$0xf]
      %v264 = vld [vmem:[%s217 + $0xac] sm:$0xf]
      %v265 = vld [vmem:[%s217 + $0xb0] sm:$0xf]
      %v266 = vld [vmem:[%s217 + $0xb4] sm:$0xf]
      %v267 = vld [vmem:[%s217 + $0xb8] sm:$0xf]
      %v268 = vld [vmem:[%s217 + $0xbc] sm:$0xf]
      %v269 = vld [vmem:[%s217 + $0xc0] sm:$0xf]
      %v270 = vld [vmem:[%s217 + $0xc4] sm:$0xf]
      %v271 = vld [vmem:[%s217 + $0xc8] sm:$0xf]
      %v272 = vld [vmem:[%s217 + $0xcc] sm:$0xf]
      %v273 = vld [vmem:[%s217 + $0xd0] sm:$0xf]
      %v274 = vld [vmem:[%s217 + $0xd4] sm:$0xf]
      %v275 = vld [vmem:[%s217 + $0xd8] sm:$0xf]
      %v276 = vld [vmem:[%s217 + $0xdc] sm:$0xf]
      %v277 = vld [vmem:[%s217 + $0xe0] sm:$0xf]
      %v278 = vld [vmem:[%s217 + $0xe4] sm:$0xf]
      %v279 = vld [vmem:[%s217 + $0xe8] sm:$0xf]
      %v280 = vld [vmem:[%s217 + $0xec] sm:$0xf]
      %v281 = vld [vmem:[%s217 + $0xf0] sm:$0xf]
      %v282 = vld [vmem:[%s217 + $0xf4] sm:$0xf]
      %v283 = vld [vmem:[%s217 + $0xf8] sm:$0xf]
      %v284 = vld [vmem:[%s217 + $0xfc] sm:$0xf]
      %v285 = vld [vmem:[%s217 + $0x100] sm:$0xf]
      %v286 = vld [vmem:[%s217 + $0x104] sm:$0xf]
      %v287 = vld [vmem:[%s217 + $0x108] sm:$0xf]
      %v288 = vld [vmem:[%s217 + $0x10c] sm:$0xf]
      %v289 = vld [vmem:[%s217 + $0x110] sm:$0xf]
      %v290 = vld [vmem:[%s217 + $0x114] sm:$0xf]
      %v291 = vld [vmem:[%s217 + $0x118] sm:$0xf]
      %v292 = vld [vmem:[%s217 + $0x11c] sm:$0xf]
      %v293 = vld [vmem:[%s217 + $0x120] sm:$0xf]
      %v294 = vld [vmem:[%s217 + $0x124] sm:$0xf]
      %v295 = vld [vmem:[%s217 + $0x128] sm:$0xf]
      %v296 = vld [vmem:[%s217 + $0x12c] sm:$0xf]
      %v297 = vld [vmem:[%s217 + $0x130] sm:$0xf]
      %v298 = vld [vmem:[%s217 + $0x134] sm:$0xf]
      %v299 = vld [vmem:[%s217 + $0x138] sm:$0xf]
      %v300 = vld [vmem:[%s217 + $0x13c] sm:$0xf]
      %v301 = vld [vmem:[%s217 + $0x140] sm:$0xf]
      %v302 = vld [vmem:[%s217 + $0x144] sm:$0xf]
      %v303 = vld [vmem:[%s217 + $0x148] sm:$0xf]
      %v304 = vld [vmem:[%s217 + $0x14c] sm:$0xf]
      %v305 = vld [vmem:[%s217 + $0x150] sm:$0xf]
      %v306 = vld [vmem:[%s217 + $0x154] sm:$0xf]
      %v307 = vld [vmem:[%s217 + $0x158] sm:$0xf]
      %v308 = vld [vmem:[%s217 + $0x15c] sm:$0xf]
      %v309 = vld [vmem:[%s217 + $0x160] sm:$0xf]
      %v310 = vld [vmem:[%s217 + $0x164] sm:$0xf]
      %v311 = vld [vmem:[%s217 + $0x168] sm:$0xf]
      %v312 = vld [vmem:[%s217 + $0x16c] sm:$0xf]
      %v313 = vld [vmem:[%s217 + $0x170] sm:$0xf]
      %v314 = vld [vmem:[%s217 + $0x174] sm:$0xf]
      %v315 = vld [vmem:[%s217 + $0x178] sm:$0xf]
      %v316 = vld [vmem:[%s217 + $0x17c] sm:$0xf]
      %v317 = vld [vmem:[%s217 + $0x180] sm:$0xf]
      %v318 = vld [vmem:[%s217 + $0x184] sm:$0xf]
      %v319 = vld [vmem:[%s217 + $0x188] sm:$0xf]
      %v320 = vld [vmem:[%s217 + $0x18c] sm:$0xf]
      %v321 = vld [vmem:[%s217 + $0x190] sm:$0xf]
      %v322 = vld [vmem:[%s217 + $0x194] sm:$0xf]
      %v323 = vld [vmem:[%s217 + $0x198] sm:$0xf]
      %v324 = vld [vmem:[%s217 + $0x19c] sm:$0xf]
      %v325 = vld [vmem:[%s217 + $0x1a0] sm:$0xf]
      %v326 = vld [vmem:[%s217 + $0x1a4] sm:$0xf]
      %v327 = vld [vmem:[%s217 + $0x1a8] sm:$0xf]
      %v328 = vld [vmem:[%s217 + $0x1ac] sm:$0xf]
      %v329 = vld [vmem:[%s217 + $0x1b0] sm:$0xf]
      %v330 = vld [vmem:[%s217 + $0x1b4] sm:$0xf]
      %v331 = vld [vmem:[%s217 + $0x1b8] sm:$0xf]
      %v332 = vld [vmem:[%s217 + $0x1bc] sm:$0xf]
      %v333 = vld [vmem:[%s217 + $0x1c0] sm:$0xf]
      %v334 = vld [vmem:[%s217 + $0x1c4] sm:$0xf]
      %v335 = vld [vmem:[%s217 + $0x1c8] sm:$0xf]
      %v336 = vld [vmem:[%s217 + $0x1cc] sm:$0xf]
      %v337 = vld [vmem:[%s217 + $0x1d0] sm:$0xf]
      %v338 = vld [vmem:[%s217 + $0x1d4] sm:$0xf]
      %v339 = vld [vmem:[%s217 + $0x1d8] sm:$0xf]
      %v340 = vld [vmem:[%s217 + $0x1dc] sm:$0xf]
      %v341 = vld [vmem:[%s217 + $0x1e0] sm:$0xf]
      %v342 = vld [vmem:[%s217 + $0x1e4] sm:$0xf]
      %v343 = vld [vmem:[%s217 + $0x1e8] sm:$0xf]
      %v344 = vld [vmem:[%s217 + $0x1ec] sm:$0xf]
      %v345 = vld [vmem:[%s217 + $0x1f0] sm:$0xf]
      %v346 = vld [vmem:[%s217 + $0x1f4] sm:$0xf]
      %v347 = vld [vmem:[%s217 + $0x1f8] sm:$0xf]
      %v348 = vld [vmem:[%s217 + $0x1fc] sm:$0xf]
      %v349 = vld [vmem:[%s1] sm:$0xff]
      %v350 = vld [vmem:[%s1 + $0x8] sm:$0xff]
      %v351 = vld [vmem:[%s1 + $0x10] sm:$0xff]
      %v352 = vld [vmem:[%s1 + $0x18] sm:$0xff]
      %v353 = vld [vmem:[%s1 + $0x20] sm:$0xff]
      %v354 = vld [vmem:[%s1 + $0x28] sm:$0xff]
      %v355 = vld [vmem:[%s1 + $0x30] sm:$0xff]
      %v356 = vld [vmem:[%s1 + $0x38] sm:$0xff]
      %v357 = vld [vmem:[%s1 + $0x40] sm:$0xff]
      %v358 = vld [vmem:[%s1 + $0x48] sm:$0xff]
      %v359 = vld [vmem:[%s1 + $0x50] sm:$0xff]
      %v360 = vld [vmem:[%s1 + $0x58] sm:$0xff]
      %v361 = vld [vmem:[%s1 + $0x60] sm:$0xff]
      %v362 = vld [vmem:[%s1 + $0x68] sm:$0xff]
      %v363 = vld [vmem:[%s1 + $0x70] sm:$0xff]
      %v364 = vld [vmem:[%s1 + $0x78] sm:$0xff]
      %v365 = vld [vmem:[%s1 + $0x80] sm:$0xff]
      %v366 = vld [vmem:[%s1 + $0x88] sm:$0xff]
      %v367 = vld [vmem:[%s1 + $0x90] sm:$0xff]
      %v368 = vld [vmem:[%s1 + $0x98] sm:$0xff]
      %v369 = vld [vmem:[%s1 + $0xa0] sm:$0xff]
      %v370 = vld [vmem:[%s1 + $0xa8] sm:$0xff]
      %v371 = vld [vmem:[%s1 + $0xb0] sm:$0xff]
      %v372 = vld [vmem:[%s1 + $0xb8] sm:$0xff]
      %v373 = vld [vmem:[%s1 + $0xc0] sm:$0xff]
      %v374 = vld [vmem:[%s1 + $0xc8] sm:$0xff]
      %v375 = vld [vmem:[%s1 + $0xd0] sm:$0xff]
      %v376 = vld [vmem:[%s1 + $0xd8] sm:$0xff]
      %v377 = vld [vmem:[%s1 + $0xe0] sm:$0xff]
      %v378 = vld [vmem:[%s1 + $0xe8] sm:$0xff]
      %v379 = vld [vmem:[%s1 + $0xf0] sm:$0xff]
      %v380 = vld [vmem:[%s1 + $0xf8] sm:$0xff]
      %v381 = vld [vmem:[%s1 + $0x100] sm:$0xff]
      %v382 = vld [vmem:[%s1 + $0x108] sm:$0xff]
      %v383 = vld [vmem:[%s1 + $0x110] sm:$0xff]
      %v384 = vld [vmem:[%s1 + $0x118] sm:$0xff]
      %v385 = vld [vmem:[%s1 + $0x120] sm:$0xff]
      %v386 = vld [vmem:[%s1 + $0x128] sm:$0xff]
      %v387 = vld [vmem:[%s1 + $0x130] sm:$0xff]
      %v388 = vld [vmem:[%s1 + $0x138] sm:$0xff]
      %v389 = vld [vmem:[%s1 + $0x140] sm:$0xff]
      %v390 = vld [vmem:[%s1 + $0x148] sm:$0xff]
      %v391 = vld [vmem:[%s1 + $0x150] sm:$0xff]
      %v392 = vld [vmem:[%s1 + $0x158] sm:$0xff]
      %v393 = vld [vmem:[%s1 + $0x160] sm:$0xff]
      %v394 = vld [vmem:[%s1 + $0x168] sm:$0xff]
      %v395 = vld [vmem:[%s1 + $0x170] sm:$0xff]
      %v396 = vld [vmem:[%s1 + $0x178] sm:$0xff]
      %v397 = vld [vmem:[%s1 + $0x180] sm:$0xff]
      %v398 = vld [vmem:[%s1 + $0x188] sm:$0xff]
      %v399 = vld [vmem:[%s1 + $0x190] sm:$0xff]
      %v400 = vld [vmem:[%s1 + $0x198] sm:$0xff]
      %v401 = vld [vmem:[%s1 + $0x1a0] sm:$0xff]
      %v402 = vld [vmem:[%s1 + $0x1a8] sm:$0xff]
      %v403 = vld [vmem:[%s1 + $0x1b0] sm:$0xff]
      %v404 = vld [vmem:[%s1 + $0x1b8] sm:$0xff]
      %v405 = vld [vmem:[%s1 + $0x1c0] sm:$0xff]
      %v406 = vld [vmem:[%s1 + $0x1c8] sm:$0xff]
      %v407 = vld [vmem:[%s1 + $0x1d0] sm:$0xff]
      %v408 = vld [vmem:[%s1 + $0x1d8] sm:$0xff]
      %v409 = vld [vmem:[%s1 + $0x1e0] sm:$0xff]
      %v410 = vld [vmem:[%s1 + $0x1e8] sm:$0xff]
      %v411 = vld [vmem:[%s1 + $0x1f0] sm:$0xff]
      %v412 = vld [vmem:[%s1 + $0x1f8] sm:$0xff]
      %v413 = vld [vmem:[%s1 + $0x200] sm:$0xff]
      %v414 = vld [vmem:[%s1 + $0x208] sm:$0xff]
      %v415 = vld [vmem:[%s1 + $0x210] sm:$0xff]
      %v416 = vld [vmem:[%s1 + $0x218] sm:$0xff]
      %v417 = vld [vmem:[%s1 + $0x220] sm:$0xff]
      %v418 = vld [vmem:[%s1 + $0x228] sm:$0xff]
      %v419 = vld [vmem:[%s1 + $0x230] sm:$0xff]
      %v420 = vld [vmem:[%s1 + $0x238] sm:$0xff]
      %v421 = vld [vmem:[%s1 + $0x240] sm:$0xff]
      %v422 = vld [vmem:[%s1 + $0x248] sm:$0xff]
      %v423 = vld [vmem:[%s1 + $0x250] sm:$0xff]
      %v424 = vld [vmem:[%s1 + $0x258] sm:$0xff]
      %v425 = vld [vmem:[%s1 + $0x260] sm:$0xff]
      %v426 = vld [vmem:[%s1 + $0x268] sm:$0xff]
      %v427 = vld [vmem:[%s1 + $0x270] sm:$0xff]
      %v428 = vld [vmem:[%s1 + $0x278] sm:$0xff]
      %v429 = vld [vmem:[%s1 + $0x280] sm:$0xff]
      %v430 = vld [vmem:[%s1 + $0x288] sm:$0xff]
      %v431 = vld [vmem:[%s1 + $0x290] sm:$0xff]
      %v432 = vld [vmem:[%s1 + $0x298] sm:$0xff]
      %v433 = vld [vmem:[%s1 + $0x2a0] sm:$0xff]
      %v434 = vld [vmem:[%s1 + $0x2a8] sm:$0xff]
      %v435 = vld [vmem:[%s1 + $0x2b0] sm:$0xff]
      %v436 = vld [vmem:[%s1 + $0x2b8] sm:$0xff]
      %v437 = vld [vmem:[%s1 + $0x2c0] sm:$0xff]
      %v438 = vld [vmem:[%s1 + $0x2c8] sm:$0xff]
      %v439 = vld [vmem:[%s1 + $0x2d0] sm:$0xff]
      %v440 = vld [vmem:[%s1 + $0x2d8] sm:$0xff]
      %v441 = vld [vmem:[%s1 + $0x2e0] sm:$0xff]
      %v442 = vld [vmem:[%s1 + $0x2e8] sm:$0xff]
      %v443 = vld [vmem:[%s1 + $0x2f0] sm:$0xff]
      %v444 = vld [vmem:[%s1 + $0x2f8] sm:$0xff]
      %v445 = vld [vmem:[%s1 + $0x300] sm:$0xff]
      %v446 = vld [vmem:[%s1 + $0x308] sm:$0xff]
      %v447 = vld [vmem:[%s1 + $0x310] sm:$0xff]
      %v448 = vld [vmem:[%s1 + $0x318] sm:$0xff]
      %v449 = vld [vmem:[%s1 + $0x320] sm:$0xff]
      %v450 = vld [vmem:[%s1 + $0x328] sm:$0xff]
      %v451 = vld [vmem:[%s1 + $0x330] sm:$0xff]
      %v452 = vld [vmem:[%s1 + $0x338] sm:$0xff]
      %v453 = vld [vmem:[%s1 + $0x340] sm:$0xff]
      %v454 = vld [vmem:[%s1 + $0x348] sm:$0xff]
      %v455 = vld [vmem:[%s1 + $0x350] sm:$0xff]
      %v456 = vld [vmem:[%s1 + $0x358] sm:$0xff]
      %v457 = vld [vmem:[%s1 + $0x360] sm:$0xff]
      %v458 = vld [vmem:[%s1 + $0x368] sm:$0xff]
      %v459 = vld [vmem:[%s1 + $0x370] sm:$0xff]
      %v460 = vld [vmem:[%s1 + $0x378] sm:$0xff]
      %v461 = vld [vmem:[%s1 + $0x380] sm:$0xff]
      %v462 = vld [vmem:[%s1 + $0x388] sm:$0xff]
      %v463 = vld [vmem:[%s1 + $0x390] sm:$0xff]
      %v464 = vld [vmem:[%s1 + $0x398] sm:$0xff]
      %v465 = vld [vmem:[%s1 + $0x3a0] sm:$0xff]
      %v466 = vld [vmem:[%s1 + $0x3a8] sm:$0xff]
      %v467 = vld [vmem:[%s1 + $0x3b0] sm:$0xff]
      %v468 = vld [vmem:[%s1 + $0x3b8] sm:$0xff]
      %v469 = vld [vmem:[%s1 + $0x3c0] sm:$0xff]
      %v470 = vld [vmem:[%s1 + $0x3c8] sm:$0xff]
      %v471 = vld [vmem:[%s1 + $0x3d0] sm:$0xff]
      %v472 = vld [vmem:[%s1 + $0x3d8] sm:$0xff]
      %v473 = vld [vmem:[%s1 + $0x3e0] sm:$0xff]
      %v474 = vld [vmem:[%s1 + $0x3e8] sm:$0xff]
      %v475 = vld [vmem:[%s1 + $0x3f0] sm:$0xff]
      %v476 = vld [vmem:[%s1 + $0x3f8] sm:$0xff]
      %v605 = vunpack.c.l.b16 %v349
      %v606 = vunpack.c.h.b16 %v349
      %v607 = vunpack.c.l.b16 %v350
      %v608 = vunpack.c.h.b16 %v350
      %v609 = vunpack.c.l.b16 %v351
      %v610 = vunpack.c.h.b16 %v351
      %v611 = vunpack.c.l.b16 %v352
      %v612 = vunpack.c.h.b16 %v352
      %v613 = vunpack.c.l.b16 %v353
      %v614 = vunpack.c.h.b16 %v353
      %v615 = vunpack.c.l.b16 %v354
      %v616 = vunpack.c.h.b16 %v354
      %v617 = vunpack.c.l.b16 %v355
      %v618 = vunpack.c.h.b16 %v355
      %v619 = vunpack.c.l.b16 %v356
      %v620 = vunpack.c.h.b16 %v356
      %v621 = vunpack.c.l.b16 %v357
      %v622 = vunpack.c.h.b16 %v357
      %v623 = vunpack.c.l.b16 %v358
      %v624 = vunpack.c.h.b16 %v358
      %v625 = vunpack.c.l.b16 %v359
      %v626 = vunpack.c.h.b16 %v359
      %v627 = vunpack.c.l.b16 %v360
      %v628 = vunpack.c.h.b16 %v360
      %v629 = vunpack.c.l.b16 %v361
      %v630 = vunpack.c.h.b16 %v361
      %v631 = vunpack.c.l.b16 %v362
      %v632 = vunpack.c.h.b16 %v362
      %v633 = vunpack.c.l.b16 %v363
      %v634 = vunpack.c.h.b16 %v363
      %v635 = vunpack.c.l.b16 %v364
      %v636 = vunpack.c.h.b16 %v364
      %v637 = vunpack.c.l.b16 %v365
      %v638 = vunpack.c.h.b16 %v365
      %v639 = vunpack.c.l.b16 %v366
      %v640 = vunpack.c.h.b16 %v366
      %v641 = vunpack.c.l.b16 %v367
      %v642 = vunpack.c.h.b16 %v367
      %v643 = vunpack.c.l.b16 %v368
      %v644 = vunpack.c.h.b16 %v368
      %v645 = vunpack.c.l.b16 %v369
      %v646 = vunpack.c.h.b16 %v369
      %v647 = vunpack.c.l.b16 %v370
      %v648 = vunpack.c.h.b16 %v370
      %v649 = vunpack.c.l.b16 %v371
      %v650 = vunpack.c.h.b16 %v371
      %v651 = vunpack.c.l.b16 %v372
      %v652 = vunpack.c.h.b16 %v372
      %v653 = vunpack.c.l.b16 %v373
      %v654 = vunpack.c.h.b16 %v373
      %v655 = vunpack.c.l.b16 %v374
      %v656 = vunpack.c.h.b16 %v374
      %v657 = vunpack.c.l.b16 %v375
      %v658 = vunpack.c.h.b16 %v375
      %v659 = vunpack.c.l.b16 %v376
      %v660 = vunpack.c.h.b16 %v376
      %v661 = vunpack.c.l.b16 %v377
      %v662 = vunpack.c.h.b16 %v377
      %v663 = vunpack.c.l.b16 %v378
      %v664 = vunpack.c.h.b16 %v378
      %v665 = vunpack.c.l.b16 %v379
      %v666 = vunpack.c.h.b16 %v379
      %v667 = vunpack.c.l.b16 %v380
      %v668 = vunpack.c.h.b16 %v380
      %v669 = vunpack.c.l.b16 %v381
      %v670 = vunpack.c.h.b16 %v381
      %v671 = vunpack.c.l.b16 %v382
      %v672 = vunpack.c.h.b16 %v382
      %v673 = vunpack.c.l.b16 %v383
      %v674 = vunpack.c.h.b16 %v383
      %v675 = vunpack.c.l.b16 %v384
      %v676 = vunpack.c.h.b16 %v384
      %v677 = vunpack.c.l.b16 %v385
      %v678 = vunpack.c.h.b16 %v385
      %v679 = vunpack.c.l.b16 %v386
      %v680 = vunpack.c.h.b16 %v386
      %v681 = vunpack.c.l.b16 %v387
      %v682 = vunpack.c.h.b16 %v387
      %v683 = vunpack.c.l.b16 %v388
      %v684 = vunpack.c.h.b16 %v388
      %v685 = vunpack.c.l.b16 %v389
      %v686 = vunpack.c.h.b16 %v389
      %v687 = vunpack.c.l.b16 %v390
      %v688 = vunpack.c.h.b16 %v390
      %v689 = vunpack.c.l.b16 %v391
      %v690 = vunpack.c.h.b16 %v391
      %v691 = vunpack.c.l.b16 %v392
      %v692 = vunpack.c.h.b16 %v392
      %v693 = vunpack.c.l.b16 %v393
      %v694 = vunpack.c.h.b16 %v393
      %v695 = vunpack.c.l.b16 %v394
      %v696 = vunpack.c.h.b16 %v394
      %v697 = vunpack.c.l.b16 %v395
      %v698 = vunpack.c.h.b16 %v395
      %v699 = vunpack.c.l.b16 %v396
      %v700 = vunpack.c.h.b16 %v396
      %v701 = vunpack.c.l.b16 %v397
      %v702 = vunpack.c.h.b16 %v397
      %v703 = vunpack.c.l.b16 %v398
      %v704 = vunpack.c.h.b16 %v398
      %v705 = vunpack.c.l.b16 %v399
      %v706 = vunpack.c.h.b16 %v399
      %v707 = vunpack.c.l.b16 %v400
      %v708 = vunpack.c.h.b16 %v400
      %v709 = vunpack.c.l.b16 %v401
      %v710 = vunpack.c.h.b16 %v401
      %v711 = vunpack.c.l.b16 %v402
      %v712 = vunpack.c.h.b16 %v402
      %v713 = vunpack.c.l.b16 %v403
      %v714 = vunpack.c.h.b16 %v403
      %v715 = vunpack.c.l.b16 %v404
      %v716 = vunpack.c.h.b16 %v404
      %v717 = vunpack.c.l.b16 %v405
      %v718 = vunpack.c.h.b16 %v405
      %v719 = vunpack.c.l.b16 %v406
      %v720 = vunpack.c.h.b16 %v406
      %v721 = vunpack.c.l.b16 %v407
      %v722 = vunpack.c.h.b16 %v407
      %v723 = vunpack.c.l.b16 %v408
      %v724 = vunpack.c.h.b16 %v408
      %v725 = vunpack.c.l.b16 %v409
      %v726 = vunpack.c.h.b16 %v409
      %v727 = vunpack.c.l.b16 %v410
      %v728 = vunpack.c.h.b16 %v410
      %v729 = vunpack.c.l.b16 %v411
      %v730 = vunpack.c.h.b16 %v411
      %v731 = vunpack.c.l.b16 %v412
      %v732 = vunpack.c.h.b16 %v412
      %v733 = vunpack.c.l.b16 %v413
      %v734 = vunpack.c.h.b16 %v413
      %v735 = vunpack.c.l.b16 %v414
      %v736 = vunpack.c.h.b16 %v414
      %v737 = vunpack.c.l.b16 %v415
      %v738 = vunpack.c.h.b16 %v415
      %v739 = vunpack.c.l.b16 %v416
      %v740 = vunpack.c.h.b16 %v416
      %v741 = vunpack.c.l.b16 %v417
      %v742 = vunpack.c.h.b16 %v417
      %v743 = vunpack.c.l.b16 %v418
      %v744 = vunpack.c.h.b16 %v418
      %v745 = vunpack.c.l.b16 %v419
      %v746 = vunpack.c.h.b16 %v419
      %v747 = vunpack.c.l.b16 %v420
      %v748 = vunpack.c.h.b16 %v420
      %v749 = vunpack.c.l.b16 %v421
      %v750 = vunpack.c.h.b16 %v421
      %v751 = vunpack.c.l.b16 %v422
      %v752 = vunpack.c.h.b16 %v422
      %v753 = vunpack.c.l.b16 %v423
      %v754 = vunpack.c.h.b16 %v423
      %v755 = vunpack.c.l.b16 %v424
      %v756 = vunpack.c.h.b16 %v424
      %v757 = vunpack.c.l.b16 %v425
      %v758 = vunpack.c.h.b16 %v425
      %v759 = vunpack.c.l.b16 %v426
      %v760 = vunpack.c.h.b16 %v426
      %v761 = vunpack.c.l.b16 %v427
      %v762 = vunpack.c.h.b16 %v427
      %v763 = vunpack.c.l.b16 %v428
      %v764 = vunpack.c.h.b16 %v428
      %v765 = vunpack.c.l.b16 %v429
      %v766 = vunpack.c.h.b16 %v429
      %v767 = vunpack.c.l.b16 %v430
      %v768 = vunpack.c.h.b16 %v430
      %v769 = vunpack.c.l.b16 %v431
      %v770 = vunpack.c.h.b16 %v431
      %v771 = vunpack.c.l.b16 %v432
      %v772 = vunpack.c.h.b16 %v432
      %v773 = vunpack.c.l.b16 %v433
      %v774 = vunpack.c.h.b16 %v433
      %v775 = vunpack.c.l.b16 %v434
      %v776 = vunpack.c.h.b16 %v434
      %v777 = vunpack.c.l.b16 %v435
      %v778 = vunpack.c.h.b16 %v435
      %v779 = vunpack.c.l.b16 %v436
      %v780 = vunpack.c.h.b16 %v436
      %v781 = vunpack.c.l.b16 %v437
      %v782 = vunpack.c.h.b16 %v437
      %v783 = vunpack.c.l.b16 %v438
      %v784 = vunpack.c.h.b16 %v438
      %v785 = vunpack.c.l.b16 %v439
      %v786 = vunpack.c.h.b16 %v439
      %v787 = vunpack.c.l.b16 %v440
      %v788 = vunpack.c.h.b16 %v440
      %v789 = vunpack.c.l.b16 %v441
      %v790 = vunpack.c.h.b16 %v441
      %v791 = vunpack.c.l.b16 %v442
      %v792 = vunpack.c.h.b16 %v442
      %v793 = vunpack.c.l.b16 %v443
      %v794 = vunpack.c.h.b16 %v443
      %v795 = vunpack.c.l.b16 %v444
      %v796 = vunpack.c.h.b16 %v444
      %v797 = vunpack.c.l.b16 %v445
      %v798 = vunpack.c.h.b16 %v445
      %v799 = vunpack.c.l.b16 %v446
      %v800 = vunpack.c.h.b16 %v446
      %v801 = vunpack.c.l.b16 %v447
      %v802 = vunpack.c.h.b16 %v447
      %v803 = vunpack.c.l.b16 %v448
      %v804 = vunpack.c.h.b16 %v448
      %v805 = vunpack.c.l.b16 %v449
      %v806 = vunpack.c.h.b16 %v449
      %v807 = vunpack.c.l.b16 %v450
      %v808 = vunpack.c.h.b16 %v450
      %v809 = vunpack.c.l.b16 %v451
      %v810 = vunpack.c.h.b16 %v451
      %v811 = vunpack.c.l.b16 %v452
      %v812 = vunpack.c.h.b16 %v452
      %v813 = vunpack.c.l.b16 %v453
      %v814 = vunpack.c.h.b16 %v453
      %v815 = vunpack.c.l.b16 %v454
      %v816 = vunpack.c.h.b16 %v454
      %v817 = vunpack.c.l.b16 %v455
      %v818 = vunpack.c.h.b16 %v455
      %v819 = vunpack.c.l.b16 %v456
      %v820 = vunpack.c.h.b16 %v456
      %v821 = vunpack.c.l.b16 %v457
      %v822 = vunpack.c.h.b16 %v457
      %v823 = vunpack.c.l.b16 %v458
      %v824 = vunpack.c.h.b16 %v458
      %v825 = vunpack.c.l.b16 %v459
      %v826 = vunpack.c.h.b16 %v459
      %v827 = vunpack.c.l.b16 %v460
      %v828 = vunpack.c.h.b16 %v460
      %v829 = vunpack.c.l.b16 %v461
      %v830 = vunpack.c.h.b16 %v461
      %v831 = vunpack.c.l.b16 %v462
      %v832 = vunpack.c.h.b16 %v462
      %v833 = vunpack.c.l.b16 %v463
      %v834 = vunpack.c.h.b16 %v463
      %v835 = vunpack.c.l.b16 %v464
      %v836 = vunpack.c.h.b16 %v464
      %v837 = vunpack.c.l.b16 %v465
      %v838 = vunpack.c.h.b16 %v465
      %v839 = vunpack.c.l.b16 %v466
      %v840 = vunpack.c.h.b16 %v466
      %v841 = vunpack.c.l.b16 %v467
      %v842 = vunpack.c.h.b16 %v467
      %v843 = vunpack.c.l.b16 %v468
      %v844 = vunpack.c.h.b16 %v468
      %v845 = vunpack.c.l.b16 %v469
      %v846 = vunpack.c.h.b16 %v469
      %v847 = vunpack.c.l.b16 %v470
      %v848 = vunpack.c.h.b16 %v470
      %v849 = vunpack.c.l.b16 %v471
      %v850 = vunpack.c.h.b16 %v471
      %v851 = vunpack.c.l.b16 %v472
      %v852 = vunpack.c.h.b16 %v472
      %v853 = vunpack.c.l.b16 %v473
      %v854 = vunpack.c.h.b16 %v473
      %v855 = vunpack.c.l.b16 %v474
      %v856 = vunpack.c.h.b16 %v474
      %v857 = vunpack.c.l.b16 %v475
      %v858 = vunpack.c.h.b16 %v475
      %v859 = vunpack.c.l.b16 %v476
      %v860 = vunpack.c.h.b16 %v476
      %v861 = vpack.c.b16 %v613, %v605
      %v862 = vpack.c.b16 %v614, %v606
      %v863 = vpack.c.b16 %v615, %v607
      %v864 = vpack.c.b16 %v616, %v608
      %v865 = vpack.c.b16 %v617, %v609
      %v866 = vpack.c.b16 %v618, %v610
      %v867 = vpack.c.b16 %v619, %v611
      %v868 = vpack.c.b16 %v620, %v612
      %v869 = vpack.c.b16 %v629, %v621
      %v870 = vpack.c.b16 %v630, %v622
      %v871 = vpack.c.b16 %v631, %v623
      %v872 = vpack.c.b16 %v632, %v624
      %v873 = vpack.c.b16 %v633, %v625
      %v874 = vpack.c.b16 %v634, %v626
      %v875 = vpack.c.b16 %v635, %v627
      %v876 = vpack.c.b16 %v636, %v628
      %v877 = vpack.c.b16 %v645, %v637
      %v878 = vpack.c.b16 %v646, %v638
      %v879 = vpack.c.b16 %v647, %v639
      %v880 = vpack.c.b16 %v648, %v640
      %v881 = vpack.c.b16 %v649, %v641
      %v882 = vpack.c.b16 %v650, %v642
      %v883 = vpack.c.b16 %v651, %v643
      %v884 = vpack.c.b16 %v652, %v644
      %v885 = vpack.c.b16 %v661, %v653
      %v886 = vpack.c.b16 %v662, %v654
      %v887 = vpack.c.b16 %v663, %v655
      %v888 = vpack.c.b16 %v664, %v656
      %v889 = vpack.c.b16 %v665, %v657
      %v890 = vpack.c.b16 %v666, %v658
      %v891 = vpack.c.b16 %v667, %v659
      %v892 = vpack.c.b16 %v668, %v660
      %v893 = vpack.c.b16 %v677, %v669
      %v894 = vpack.c.b16 %v678, %v670
      %v895 = vpack.c.b16 %v679, %v671
      %v896 = vpack.c.b16 %v680, %v672
      %v897 = vpack.c.b16 %v681, %v673
      %v898 = vpack.c.b16 %v682, %v674
      %v899 = vpack.c.b16 %v683, %v675
      %v900 = vpack.c.b16 %v684, %v676
      %v901 = vpack.c.b16 %v693, %v685
      %v902 = vpack.c.b16 %v694, %v686
      %v903 = vpack.c.b16 %v695, %v687
      %v904 = vpack.c.b16 %v696, %v688
      %v905 = vpack.c.b16 %v697, %v689
      %v906 = vpack.c.b16 %v698, %v690
      %v907 = vpack.c.b16 %v699, %v691
      %v908 = vpack.c.b16 %v700, %v692
      %v909 = vpack.c.b16 %v709, %v701
      %v910 = vpack.c.b16 %v710, %v702
      %v911 = vpack.c.b16 %v711, %v703
      %v912 = vpack.c.b16 %v712, %v704
      %v913 = vpack.c.b16 %v713, %v705
      %v914 = vpack.c.b16 %v714, %v706
      %v915 = vpack.c.b16 %v715, %v707
      %v916 = vpack.c.b16 %v716, %v708
      %v917 = vpack.c.b16 %v725, %v717
      %v918 = vpack.c.b16 %v726, %v718
      %v919 = vpack.c.b16 %v727, %v719
      %v920 = vpack.c.b16 %v728, %v720
      %v921 = vpack.c.b16 %v729, %v721
      %v922 = vpack.c.b16 %v730, %v722
      %v923 = vpack.c.b16 %v731, %v723
      %v924 = vpack.c.b16 %v732, %v724
      %v925 = vpack.c.b16 %v741, %v733
      %v926 = vpack.c.b16 %v742, %v734
      %v927 = vpack.c.b16 %v743, %v735
      %v928 = vpack.c.b16 %v744, %v736
      %v929 = vpack.c.b16 %v745, %v737
      %v930 = vpack.c.b16 %v746, %v738
      %v931 = vpack.c.b16 %v747, %v739
      %v932 = vpack.c.b16 %v748, %v740
      %v933 = vpack.c.b16 %v757, %v749
      %v934 = vpack.c.b16 %v758, %v750
      %v935 = vpack.c.b16 %v759, %v751
      %v936 = vpack.c.b16 %v760, %v752
      %v937 = vpack.c.b16 %v761, %v753
      %v938 = vpack.c.b16 %v762, %v754
      %v939 = vpack.c.b16 %v763, %v755
      %v940 = vpack.c.b16 %v764, %v756
      %v941 = vpack.c.b16 %v773, %v765
      %v942 = vpack.c.b16 %v774, %v766
      %v943 = vpack.c.b16 %v775, %v767
      %v944 = vpack.c.b16 %v776, %v768
      %v945 = vpack.c.b16 %v777, %v769
      %v946 = vpack.c.b16 %v778, %v770
      %v947 = vpack.c.b16 %v779, %v771
      %v948 = vpack.c.b16 %v780, %v772
      %v949 = vpack.c.b16 %v789, %v781
      %v950 = vpack.c.b16 %v790, %v782
      %v951 = vpack.c.b16 %v791, %v783
      %v952 = vpack.c.b16 %v792, %v784
      %v953 = vpack.c.b16 %v793, %v785
      %v954 = vpack.c.b16 %v794, %v786
      %v955 = vpack.c.b16 %v795, %v787
      %v956 = vpack.c.b16 %v796, %v788
      %v957 = vpack.c.b16 %v805, %v797
      %v958 = vpack.c.b16 %v806, %v798
      %v959 = vpack.c.b16 %v807, %v799
      %v960 = vpack.c.b16 %v808, %v800
      %v961 = vpack.c.b16 %v809, %v801
      %v962 = vpack.c.b16 %v810, %v802
      %v963 = vpack.c.b16 %v811, %v803
      %v964 = vpack.c.b16 %v812, %v804
      %v965 = vpack.c.b16 %v821, %v813
      %v966 = vpack.c.b16 %v822, %v814
      %v967 = vpack.c.b16 %v823, %v815
      %v968 = vpack.c.b16 %v824, %v816
      %v969 = vpack.c.b16 %v825, %v817
      %v970 = vpack.c.b16 %v826, %v818
      %v971 = vpack.c.b16 %v827, %v819
      %v972 = vpack.c.b16 %v828, %v820
      %v973 = vpack.c.b16 %v837, %v829
      %v974 = vpack.c.b16 %v838, %v830
      %v975 = vpack.c.b16 %v839, %v831
      %v976 = vpack.c.b16 %v840, %v832
      %v977 = vpack.c.b16 %v841, %v833
      %v978 = vpack.c.b16 %v842, %v834
      %v979 = vpack.c.b16 %v843, %v835
      %v980 = vpack.c.b16 %v844, %v836
      %v981 = vpack.c.b16 %v853, %v845
      %v982 = vpack.c.b16 %v854, %v846
      %v983 = vpack.c.b16 %v855, %v847
      %v984 = vpack.c.b16 %v856, %v848
      %v985 = vpack.c.b16 %v857, %v849
      %v986 = vpack.c.b16 %v858, %v850
      %v987 = vpack.c.b16 %v859, %v851
      %v988 = vpack.c.b16 %v860, %v852
      %v1245 = vunpack.c.l.b16 %v221
      %v1246 = vunpack.c.l.b16 %v222
      %v1247 = vunpack.c.l.b16 %v223
      %v1248 = vunpack.c.l.b16 %v224
      %v1249 = vunpack.c.l.b16 %v225
      %v1250 = vunpack.c.l.b16 %v226
      %v1251 = vunpack.c.l.b16 %v227
      %v1252 = vunpack.c.l.b16 %v228
      %v1253 = vunpack.c.l.b16 %v229
      %v1254 = vunpack.c.l.b16 %v230
      %v1255 = vunpack.c.l.b16 %v231
      %v1256 = vunpack.c.l.b16 %v232
      %v1257 = vunpack.c.l.b16 %v233
      %v1258 = vunpack.c.l.b16 %v234
      %v1259 = vunpack.c.l.b16 %v235
      %v1260 = vunpack.c.l.b16 %v236
      %v1261 = vunpack.c.l.b16 %v237
      %v1262 = vunpack.c.l.b16 %v238
      %v1263 = vunpack.c.l.b16 %v239
      %v1264 = vunpack.c.l.b16 %v240
      %v1265 = vunpack.c.l.b16 %v241
      %v1266 = vunpack.c.l.b16 %v242
      %v1267 = vunpack.c.l.b16 %v243
      %v1268 = vunpack.c.l.b16 %v244
      %v1269 = vunpack.c.l.b16 %v245
      %v1270 = vunpack.c.l.b16 %v246
      %v1271 = vunpack.c.l.b16 %v247
      %v1272 = vunpack.c.l.b16 %v248
      %v1273 = vunpack.c.l.b16 %v249
      %v1274 = vunpack.c.l.b16 %v250
      %v1275 = vunpack.c.l.b16 %v251
      %v1276 = vunpack.c.l.b16 %v252
      %v1277 = vunpack.c.l.b16 %v253
      %v1278 = vunpack.c.l.b16 %v254
      %v1279 = vunpack.c.l.b16 %v255
      %v1280 = vunpack.c.l.b16 %v256
      %v1281 = vunpack.c.l.b16 %v257
      %v1282 = vunpack.c.l.b16 %v258
      %v1283 = vunpack.c.l.b16 %v259
      %v1284 = vunpack.c.l.b16 %v260
      %v1285 = vunpack.c.l.b16 %v261
      %v1286 = vunpack.c.l.b16 %v262
      %v1287 = vunpack.c.l.b16 %v263
      %v1288 = vunpack.c.l.b16 %v264
      %v1289 = vunpack.c.l.b16 %v265
      %v1290 = vunpack.c.l.b16 %v266
      %v1291 = vunpack.c.l.b16 %v267
      %v1292 = vunpack.c.l.b16 %v268
      %v1293 = vunpack.c.l.b16 %v269
      %v1294 = vunpack.c.l.b16 %v270
      %v1295 = vunpack.c.l.b16 %v271
      %v1296 = vunpack.c.l.b16 %v272
      %v1297 = vunpack.c.l.b16 %v273
      %v1298 = vunpack.c.l.b16 %v274
      %v1299 = vunpack.c.l.b16 %v275
      %v1300 = vunpack.c.l.b16 %v276
      %v1301 = vunpack.c.l.b16 %v277
      %v1302 = vunpack.c.l.b16 %v278
      %v1303 = vunpack.c.l.b16 %v279
      %v1304 = vunpack.c.l.b16 %v280
      %v1305 = vunpack.c.l.b16 %v281
      %v1306 = vunpack.c.l.b16 %v282
      %v1307 = vunpack.c.l.b16 %v283
      %v1308 = vunpack.c.l.b16 %v284
      %v1309 = vunpack.c.l.b16 %v285
      %v1310 = vunpack.c.l.b16 %v286
      %v1311 = vunpack.c.l.b16 %v287
      %v1312 = vunpack.c.l.b16 %v288
      %v1313 = vunpack.c.l.b16 %v289
      %v1314 = vunpack.c.l.b16 %v290
      %v1315 = vunpack.c.l.b16 %v291
      %v1316 = vunpack.c.l.b16 %v292
      %v1317 = vunpack.c.l.b16 %v293
      %v1318 = vunpack.c.l.b16 %v294
      %v1319 = vunpack.c.l.b16 %v295
      %v1320 = vunpack.c.l.b16 %v296
      %v1321 = vunpack.c.l.b16 %v297
      %v1322 = vunpack.c.l.b16 %v298
      %v1323 = vunpack.c.l.b16 %v299
      %v1324 = vunpack.c.l.b16 %v300
      %v1325 = vunpack.c.l.b16 %v301
      %v1326 = vunpack.c.l.b16 %v302
      %v1327 = vunpack.c.l.b16 %v303
      %v1328 = vunpack.c.l.b16 %v304
      %v1329 = vunpack.c.l.b16 %v305
      %v1330 = vunpack.c.l.b16 %v306
      %v1331 = vunpack.c.l.b16 %v307
      %v1332 = vunpack.c.l.b16 %v308
      %v1333 = vunpack.c.l.b16 %v309
      %v1334 = vunpack.c.l.b16 %v310
      %v1335 = vunpack.c.l.b16 %v311
      %v1336 = vunpack.c.l.b16 %v312
      %v1337 = vunpack.c.l.b16 %v313
      %v1338 = vunpack.c.l.b16 %v314
      %v1339 = vunpack.c.l.b16 %v315
      %v1340 = vunpack.c.l.b16 %v316
      %v1341 = vunpack.c.l.b16 %v317
      %v1342 = vunpack.c.l.b16 %v318
      %v1343 = vunpack.c.l.b16 %v319
      %v1344 = vunpack.c.l.b16 %v320
      %v1345 = vunpack.c.l.b16 %v321
      %v1346 = vunpack.c.l.b16 %v322
      %v1347 = vunpack.c.l.b16 %v323
      %v1348 = vunpack.c.l.b16 %v324
      %v1349 = vunpack.c.l.b16 %v325
      %v1350 = vunpack.c.l.b16 %v326
      %v1351 = vunpack.c.l.b16 %v327
      %v1352 = vunpack.c.l.b16 %v328
      %v1353 = vunpack.c.l.b16 %v329
      %v1354 = vunpack.c.l.b16 %v330
      %v1355 = vunpack.c.l.b16 %v331
      %v1356 = vunpack.c.l.b16 %v332
      %v1357 = vunpack.c.l.b16 %v333
      %v1358 = vunpack.c.l.b16 %v334
      %v1359 = vunpack.c.l.b16 %v335
      %v1360 = vunpack.c.l.b16 %v336
      %v1361 = vunpack.c.l.b16 %v337
      %v1362 = vunpack.c.l.b16 %v338
      %v1363 = vunpack.c.l.b16 %v339
      %v1364 = vunpack.c.l.b16 %v340
      %v1365 = vunpack.c.l.b16 %v341
      %v1366 = vunpack.c.l.b16 %v342
      %v1367 = vunpack.c.l.b16 %v343
      %v1368 = vunpack.c.l.b16 %v344
      %v1369 = vunpack.c.l.b16 %v345
      %v1370 = vunpack.c.l.b16 %v346
      %v1371 = vunpack.c.l.b16 %v347
      %v1372 = vunpack.c.l.b16 %v348
      %v1373 = vpack.c.b16 %v1246, %v1245
      %v1374 = vpack.c.b16 %v1248, %v1247
      %v1375 = vpack.c.b16 %v1250, %v1249
      %v1376 = vpack.c.b16 %v1252, %v1251
      %v1377 = vpack.c.b16 %v1254, %v1253
      %v1378 = vpack.c.b16 %v1256, %v1255
      %v1379 = vpack.c.b16 %v1258, %v1257
      %v1380 = vpack.c.b16 %v1260, %v1259
      %v1381 = vpack.c.b16 %v1262, %v1261
      %v1382 = vpack.c.b16 %v1264, %v1263
      %v1383 = vpack.c.b16 %v1266, %v1265
      %v1384 = vpack.c.b16 %v1268, %v1267
      %v1385 = vpack.c.b16 %v1270, %v1269
      %v1386 = vpack.c.b16 %v1272, %v1271
      %v1387 = vpack.c.b16 %v1274, %v1273
      %v1388 = vpack.c.b16 %v1276, %v1275
      %v1389 = vpack.c.b16 %v1278, %v1277
      %v1390 = vpack.c.b16 %v1280, %v1279
      %v1391 = vpack.c.b16 %v1282, %v1281
      %v1392 = vpack.c.b16 %v1284, %v1283
      %v1393 = vpack.c.b16 %v1286, %v1285
      %v1394 = vpack.c.b16 %v1288, %v1287
      %v1395 = vpack.c.b16 %v1290, %v1289
      %v1396 = vpack.c.b16 %v1292, %v1291
      %v1397 = vpack.c.b16 %v1294, %v1293
      %v1398 = vpack.c.b16 %v1296, %v1295
      %v1399 = vpack.c.b16 %v1298, %v1297
      %v1400 = vpack.c.b16 %v1300, %v1299
      %v1401 = vpack.c.b16 %v1302, %v1301
      %v1402 = vpack.c.b16 %v1304, %v1303
      %v1403 = vpack.c.b16 %v1306, %v1305
      %v1404 = vpack.c.b16 %v1308, %v1307
      %v1405 = vpack.c.b16 %v1310, %v1309
      %v1406 = vpack.c.b16 %v1312, %v1311
      %v1407 = vpack.c.b16 %v1314, %v1313
      %v1408 = vpack.c.b16 %v1316, %v1315
      %v1409 = vpack.c.b16 %v1318, %v1317
      %v1410 = vpack.c.b16 %v1320, %v1319
      %v1411 = vpack.c.b16 %v1322, %v1321
      %v1412 = vpack.c.b16 %v1324, %v1323
      %v1413 = vpack.c.b16 %v1326, %v1325
      %v1414 = vpack.c.b16 %v1328, %v1327
      %v1415 = vpack.c.b16 %v1330, %v1329
      %v1416 = vpack.c.b16 %v1332, %v1331
      %v1417 = vpack.c.b16 %v1334, %v1333
      %v1418 = vpack.c.b16 %v1336, %v1335
      %v1419 = vpack.c.b16 %v1338, %v1337
      %v1420 = vpack.c.b16 %v1340, %v1339
      %v1421 = vpack.c.b16 %v1342, %v1341
      %v1422 = vpack.c.b16 %v1344, %v1343
      %v1423 = vpack.c.b16 %v1346, %v1345
      %v1424 = vpack.c.b16 %v1348, %v1347
      %v1425 = vpack.c.b16 %v1350, %v1349
      %v1426 = vpack.c.b16 %v1352, %v1351
      %v1427 = vpack.c.b16 %v1354, %v1353
      %v1428 = vpack.c.b16 %v1356, %v1355
      %v1429 = vpack.c.b16 %v1358, %v1357
      %v1430 = vpack.c.b16 %v1360, %v1359
      %v1431 = vpack.c.b16 %v1362, %v1361
      %v1432 = vpack.c.b16 %v1364, %v1363
      %v1433 = vpack.c.b16 %v1366, %v1365
      %v1434 = vpack.c.b16 %v1368, %v1367
      %v1435 = vpack.c.b16 %v1370, %v1369
      %v1436 = vpack.c.b16 %v1372, %v1371
      %1501 = vmatpush.bf16.msra.mxu0 %v1380
      %1502 = vmatpush.bf16.msra.mxu0 %v1379
      %1503 = vmatpush.bf16.msra.mxu0 %v1378
      %1504 = vmatpush.bf16.msra.mxu0 %v1377
      %1505 = vmatpush.bf16.msra.mxu0 %v1376
      %1506 = vmatpush.bf16.msra.mxu0 %v1375
      %1507 = vmatpush.bf16.msra.mxu0 %v1374
      %1508 = vmatpush.bf16.msra.mxu0 %v1373
      %1509 = vmatmul.bf16.gmra.mxu0 %v861
      %v1510 = vpop.f32.mrf.mxu0
      %v1511 = vadd.f32 0.0, %v1510
      %v1512 = vpop.f32.mrf.mxu0
      %v1513 = vadd.f32 0.0, %v1512
      %1514 = vmatmul.bf16.gmra.mxu0 %v869
      %v1515 = vpop.f32.mrf.mxu0
      %v1516 = vadd.f32 0.0, %v1515
      %v1517 = vpop.f32.mrf.mxu0
      %v1518 = vadd.f32 0.0, %v1517
      %1519 = vmatmul.bf16.gmra.mxu0 %v877
      %v1520 = vpop.f32.mrf.mxu0
      %v1521 = vadd.f32 0.0, %v1520
      %v1522 = vpop.f32.mrf.mxu0
      %v1523 = vadd.f32 0.0, %v1522
      %1524 = vmatmul.bf16.gmra.mxu0 %v885
      %v1525 = vpop.f32.mrf.mxu0
      %v1526 = vadd.f32 0.0, %v1525
      %v1527 = vpop.f32.mrf.mxu0
      %v1528 = vadd.f32 0.0, %v1527
      %1529 = vmatmul.bf16.gmra.mxu0 %v893
      %v1530 = vpop.f32.mrf.mxu0
      %v1531 = vadd.f32 0.0, %v1530
      %v1532 = vpop.f32.mrf.mxu0
      %v1533 = vadd.f32 0.0, %v1532
      %1534 = vmatmul.bf16.gmra.mxu0 %v901
      %v1535 = vpop.f32.mrf.mxu0
      %v1536 = vadd.f32 0.0, %v1535
      %v1537 = vpop.f32.mrf.mxu0
      %v1538 = vadd.f32 0.0, %v1537
      %1539 = vmatmul.bf16.gmra.mxu0 %v909
      %v1540 = vpop.f32.mrf.mxu0
      %v1541 = vadd.f32 0.0, %v1540
      %v1542 = vpop.f32.mrf.mxu0
      %v1543 = vadd.f32 0.0, %v1542
      %1544 = vmatmul.bf16.gmra.mxu0 %v917
      %v1545 = vpop.f32.mrf.mxu0
      %v1546 = vadd.f32 0.0, %v1545
      %v1547 = vpop.f32.mrf.mxu0
      %v1548 = vadd.f32 0.0, %v1547
      %1549 = vmatmul.bf16.gmra.mxu0 %v925
      %v1550 = vpop.f32.mrf.mxu0
      %v1551 = vadd.f32 0.0, %v1550
      %v1552 = vpop.f32.mrf.mxu0
      %v1553 = vadd.f32 0.0, %v1552
      %1554 = vmatmul.bf16.gmra.mxu0 %v933
      %v1555 = vpop.f32.mrf.mxu0
      %v1556 = vadd.f32 0.0, %v1555
      %v1557 = vpop.f32.mrf.mxu0
      %v1558 = vadd.f32 0.0, %v1557
      %1559 = vmatmul.bf16.gmra.mxu0 %v941
      %v1560 = vpop.f32.mrf.mxu0
      %v1561 = vadd.f32 0.0, %v1560
      %v1562 = vpop.f32.mrf.mxu0
      %v1563 = vadd.f32 0.0, %v1562
      %1564 = vmatmul.bf16.gmra.mxu0 %v949
      %v1565 = vpop.f32.mrf.mxu0
      %v1566 = vadd.f32 0.0, %v1565
      %v1567 = vpop.f32.mrf.mxu0
      %v1568 = vadd.f32 0.0, %v1567
      %1569 = vmatmul.bf16.gmra.mxu0 %v957
      %v1570 = vpop.f32.mrf.mxu0
      %v1571 = vadd.f32 0.0, %v1570
      %v1572 = vpop.f32.mrf.mxu0
      %v1573 = vadd.f32 0.0, %v1572
      %1574 = vmatmul.bf16.gmra.mxu0 %v965
      %v1575 = vpop.f32.mrf.mxu0
      %v1576 = vadd.f32 0.0, %v1575
      %v1577 = vpop.f32.mrf.mxu0
      %v1578 = vadd.f32 0.0, %v1577
      %1579 = vmatmul.bf16.gmra.mxu0 %v973
      %v1580 = vpop.f32.mrf.mxu0
      %v1581 = vadd.f32 0.0, %v1580
      %v1582 = vpop.f32.mrf.mxu0
      %v1583 = vadd.f32 0.0, %v1582
      %1584 = vmatmul.bf16.gmra.mxu0 %v981
      %v1585 = vpop.f32.mrf.mxu0
      %v1586 = vadd.f32 0.0, %v1585
      %v1587 = vpop.f32.mrf.mxu0
      %v1588 = vadd.f32 0.0, %v1587
      %1589 = vdwg.mxu0
      %1590 = vmatpush.bf16.msra.mxu0 %v1388
      %1591 = vmatpush.bf16.msra.mxu0 %v1387
      %1592 = vmatpush.bf16.msra.mxu0 %v1386
      %1593 = vmatpush.bf16.msra.mxu0 %v1385
      %1594 = vmatpush.bf16.msra.mxu0 %v1384
      %1595 = vmatpush.bf16.msra.mxu0 %v1383
      %1596 = vmatpush.bf16.msra.mxu0 %v1382
      %1597 = vmatpush.bf16.msra.mxu0 %v1381
      %1598 = vmatmul.bf16.gmra.mxu0 %v862
      %v1599 = vpop.f32.mrf.mxu0
      %v1600 = vadd.f32 %v1511, %v1599
      %v1601 = vpop.f32.mrf.mxu0
      %v1602 = vadd.f32 %v1513, %v1601
      %1603 = vmatmul.bf16.gmra.mxu0 %v870
      %v1604 = vpop.f32.mrf.mxu0
      %v1605 = vadd.f32 %v1516, %v1604
      %v1606 = vpop.f32.mrf.mxu0
      %v1607 = vadd.f32 %v1518, %v1606
      %1608 = vmatmul.bf16.gmra.mxu0 %v878
      %v1609 = vpop.f32.mrf.mxu0
      %v1610 = vadd.f32 %v1521, %v1609
      %v1611 = vpop.f32.mrf.mxu0
      %v1612 = vadd.f32 %v1523, %v1611
      %1613 = vmatmul.bf16.gmra.mxu0 %v886
      %v1614 = vpop.f32.mrf.mxu0
      %v1615 = vadd.f32 %v1526, %v1614
      %v1616 = vpop.f32.mrf.mxu0
      %v1617 = vadd.f32 %v1528, %v1616
      %1618 = vmatmul.bf16.gmra.mxu0 %v894
      %v1619 = vpop.f32.mrf.mxu0
      %v1620 = vadd.f32 %v1531, %v1619
      %v1621 = vpop.f32.mrf.mxu0
      %v1622 = vadd.f32 %v1533, %v1621
      %1623 = vmatmul.bf16.gmra.mxu0 %v902
      %v1624 = vpop.f32.mrf.mxu0
      %v1625 = vadd.f32 %v1536, %v1624
      %v1626 = vpop.f32.mrf.mxu0
      %v1627 = vadd.f32 %v1538, %v1626
      %1628 = vmatmul.bf16.gmra.mxu0 %v910
      %v1629 = vpop.f32.mrf.mxu0
      %v1630 = vadd.f32 %v1541, %v1629
      %v1631 = vpop.f32.mrf.mxu0
      %v1632 = vadd.f32 %v1543, %v1631
      %1633 = vmatmul.bf16.gmra.mxu0 %v918
      %v1634 = vpop.f32.mrf.mxu0
      %v1635 = vadd.f32 %v1546, %v1634
      %v1636 = vpop.f32.mrf.mxu0
      %v1637 = vadd.f32 %v1548, %v1636
      %1638 = vmatmul.bf16.gmra.mxu0 %v926
      %v1639 = vpop.f32.mrf.mxu0
      %v1640 = vadd.f32 %v1551, %v1639
      %v1641 = vpop.f32.mrf.mxu0
      %v1642 = vadd.f32 %v1553, %v1641
      %1643 = vmatmul.bf16.gmra.mxu0 %v934
      %v1644 = vpop.f32.mrf.mxu0
      %v1645 = vadd.f32 %v1556, %v1644
      %v1646 = vpop.f32.mrf.mxu0
      %v1647 = vadd.f32 %v1558, %v1646
      %1648 = vmatmul.bf16.gmra.mxu0 %v942
      %v1649 = vpop.f32.mrf.mxu0
      %v1650 = vadd.f32 %v1561, %v1649
      %v1651 = vpop.f32.mrf.mxu0
      %v1652 = vadd.f32 %v1563, %v1651
      %1653 = vmatmul.bf16.gmra.mxu0 %v950
      %v1654 = vpop.f32.mrf.mxu0
      %v1655 = vadd.f32 %v1566, %v1654
      %v1656 = vpop.f32.mrf.mxu0
      %v1657 = vadd.f32 %v1568, %v1656
      %1658 = vmatmul.bf16.gmra.mxu0 %v958
      %v1659 = vpop.f32.mrf.mxu0
      %v1660 = vadd.f32 %v1571, %v1659
      %v1661 = vpop.f32.mrf.mxu0
      %v1662 = vadd.f32 %v1573, %v1661
      %1663 = vmatmul.bf16.gmra.mxu0 %v966
      %v1664 = vpop.f32.mrf.mxu0
      %v1665 = vadd.f32 %v1576, %v1664
      %v1666 = vpop.f32.mrf.mxu0
      %v1667 = vadd.f32 %v1578, %v1666
      %1668 = vmatmul.bf16.gmra.mxu0 %v974
      %v1669 = vpop.f32.mrf.mxu0
      %v1670 = vadd.f32 %v1581, %v1669
      %v1671 = vpop.f32.mrf.mxu0
      %v1672 = vadd.f32 %v1583, %v1671
      %1673 = vmatmul.bf16.gmra.mxu0 %v982
      %v1674 = vpop.f32.mrf.mxu0
      %v1675 = vadd.f32 %v1586, %v1674
      %v1676 = vpop.f32.mrf.mxu0
      %v1677 = vadd.f32 %v1588, %v1676
      %1678 = vdwg.mxu0
      %1679 = vmatpush.bf16.msra.mxu0 %v1396
      %1680 = vmatpush.bf16.msra.mxu0 %v1395
      %1681 = vmatpush.bf16.msra.mxu0 %v1394
      %1682 = vmatpush.bf16.msra.mxu0 %v1393
      %1683 = vmatpush.bf16.msra.mxu0 %v1392
      %1684 = vmatpush.bf16.msra.mxu0 %v1391
      %1685 = vmatpush.bf16.msra.mxu0 %v1390
      %1686 = vmatpush.bf16.msra.mxu0 %v1389
      %1687 = vmatmul.bf16.gmra.mxu0 %v863
      %v1688 = vpop.f32.mrf.mxu0
      %v1689 = vadd.f32 %v1600, %v1688
      %v1690 = vpop.f32.mrf.mxu0
      %v1691 = vadd.f32 %v1602, %v1690
      %1692 = vmatmul.bf16.gmra.mxu0 %v871
      %v1693 = vpop.f32.mrf.mxu0
      %v1694 = vadd.f32 %v1605, %v1693
      %v1695 = vpop.f32.mrf.mxu0
      %v1696 = vadd.f32 %v1607, %v1695
      %1697 = vmatmul.bf16.gmra.mxu0 %v879
      %v1698 = vpop.f32.mrf.mxu0
      %v1699 = vadd.f32 %v1610, %v1698
      %v1700 = vpop.f32.mrf.mxu0
      %v1701 = vadd.f32 %v1612, %v1700
      %1702 = vmatmul.bf16.gmra.mxu0 %v887
      %v1703 = vpop.f32.mrf.mxu0
      %v1704 = vadd.f32 %v1615, %v1703
      %v1705 = vpop.f32.mrf.mxu0
      %v1706 = vadd.f32 %v1617, %v1705
      %1707 = vmatmul.bf16.gmra.mxu0 %v895
      %v1708 = vpop.f32.mrf.mxu0
      %v1709 = vadd.f32 %v1620, %v1708
      %v1710 = vpop.f32.mrf.mxu0
      %v1711 = vadd.f32 %v1622, %v1710
      %1712 = vmatmul.bf16.gmra.mxu0 %v903
      %v1713 = vpop.f32.mrf.mxu0
      %v1714 = vadd.f32 %v1625, %v1713
      %v1715 = vpop.f32.mrf.mxu0
      %v1716 = vadd.f32 %v1627, %v1715
      %1717 = vmatmul.bf16.gmra.mxu0 %v911
      %v1718 = vpop.f32.mrf.mxu0
      %v1719 = vadd.f32 %v1630, %v1718
      %v1720 = vpop.f32.mrf.mxu0
      %v1721 = vadd.f32 %v1632, %v1720
      %1722 = vmatmul.bf16.gmra.mxu0 %v919
      %v1723 = vpop.f32.mrf.mxu0
      %v1724 = vadd.f32 %v1635, %v1723
      %v1725 = vpop.f32.mrf.mxu0
      %v1726 = vadd.f32 %v1637, %v1725
      %1727 = vmatmul.bf16.gmra.mxu0 %v927
      %v1728 = vpop.f32.mrf.mxu0
      %v1729 = vadd.f32 %v1640, %v1728
      %v1730 = vpop.f32.mrf.mxu0
      %v1731 = vadd.f32 %v1642, %v1730
      %1732 = vmatmul.bf16.gmra.mxu0 %v935
      %v1733 = vpop.f32.mrf.mxu0
      %v1734 = vadd.f32 %v1645, %v1733
      %v1735 = vpop.f32.mrf.mxu0
      %v1736 = vadd.f32 %v1647, %v1735
      %1737 = vmatmul.bf16.gmra.mxu0 %v943
      %v1738 = vpop.f32.mrf.mxu0
      %v1739 = vadd.f32 %v1650, %v1738
      %v1740 = vpop.f32.mrf.mxu0
      %v1741 = vadd.f32 %v1652, %v1740
      %1742 = vmatmul.bf16.gmra.mxu0 %v951
      %v1743 = vpop.f32.mrf.mxu0
      %v1744 = vadd.f32 %v1655, %v1743
      %v1745 = vpop.f32.mrf.mxu0
      %v1746 = vadd.f32 %v1657, %v1745
      %1747 = vmatmul.bf16.gmra.mxu0 %v959
      %v1748 = vpop.f32.mrf.mxu0
      %v1749 = vadd.f32 %v1660, %v1748
      %v1750 = vpop.f32.mrf.mxu0
      %v1751 = vadd.f32 %v1662, %v1750
      %1752 = vmatmul.bf16.gmra.mxu0 %v967
      %v1753 = vpop.f32.mrf.mxu0
      %v1754 = vadd.f32 %v1665, %v1753
      %v1755 = vpop.f32.mrf.mxu0
      %v1756 = vadd.f32 %v1667, %v1755
      %1757 = vmatmul.bf16.gmra.mxu0 %v975
      %v1758 = vpop.f32.mrf.mxu0
      %v1759 = vadd.f32 %v1670, %v1758
      %v1760 = vpop.f32.mrf.mxu0
      %v1761 = vadd.f32 %v1672, %v1760
      %1762 = vmatmul.bf16.gmra.mxu0 %v983
      %v1763 = vpop.f32.mrf.mxu0
      %v1764 = vadd.f32 %v1675, %v1763
      %v1765 = vpop.f32.mrf.mxu0
      %v1766 = vadd.f32 %v1677, %v1765
      %1767 = vdwg.mxu0
      %1768 = vmatpush.bf16.msra.mxu0 %v1404
      %1769 = vmatpush.bf16.msra.mxu0 %v1403
      %1770 = vmatpush.bf16.msra.mxu0 %v1402
      %1771 = vmatpush.bf16.msra.mxu0 %v1401
      %1772 = vmatpush.bf16.msra.mxu0 %v1400
      %1773 = vmatpush.bf16.msra.mxu0 %v1399
      %1774 = vmatpush.bf16.msra.mxu0 %v1398
      %1775 = vmatpush.bf16.msra.mxu0 %v1397
      %1776 = vmatmul.bf16.gmra.mxu0 %v864
      %v1777 = vpop.f32.mrf.mxu0
      %v1778 = vadd.f32 %v1689, %v1777
      %v1779 = vpop.f32.mrf.mxu0
      %v1780 = vadd.f32 %v1691, %v1779
      %1781 = vmatmul.bf16.gmra.mxu0 %v872
      %v1782 = vpop.f32.mrf.mxu0
      %v1783 = vadd.f32 %v1694, %v1782
      %v1784 = vpop.f32.mrf.mxu0
      %v1785 = vadd.f32 %v1696, %v1784
      %1786 = vmatmul.bf16.gmra.mxu0 %v880
      %v1787 = vpop.f32.mrf.mxu0
      %v1788 = vadd.f32 %v1699, %v1787
      %v1789 = vpop.f32.mrf.mxu0
      %v1790 = vadd.f32 %v1701, %v1789
      %1791 = vmatmul.bf16.gmra.mxu0 %v888
      %v1792 = vpop.f32.mrf.mxu0
      %v1793 = vadd.f32 %v1704, %v1792
      %v1794 = vpop.f32.mrf.mxu0
      %v1795 = vadd.f32 %v1706, %v1794
      %1796 = vmatmul.bf16.gmra.mxu0 %v896
      %v1797 = vpop.f32.mrf.mxu0
      %v1798 = vadd.f32 %v1709, %v1797
      %v1799 = vpop.f32.mrf.mxu0
      %v1800 = vadd.f32 %v1711, %v1799
      %1801 = vmatmul.bf16.gmra.mxu0 %v904
      %v1802 = vpop.f32.mrf.mxu0
      %v1803 = vadd.f32 %v1714, %v1802
      %v1804 = vpop.f32.mrf.mxu0
      %v1805 = vadd.f32 %v1716, %v1804
      %1806 = vmatmul.bf16.gmra.mxu0 %v912
      %v1807 = vpop.f32.mrf.mxu0
      %v1808 = vadd.f32 %v1719, %v1807
      %v1809 = vpop.f32.mrf.mxu0
      %v1810 = vadd.f32 %v1721, %v1809
      %1811 = vmatmul.bf16.gmra.mxu0 %v920
      %v1812 = vpop.f32.mrf.mxu0
      %v1813 = vadd.f32 %v1724, %v1812
      %v1814 = vpop.f32.mrf.mxu0
      %v1815 = vadd.f32 %v1726, %v1814
      %1816 = vmatmul.bf16.gmra.mxu0 %v928
      %v1817 = vpop.f32.mrf.mxu0
      %v1818 = vadd.f32 %v1729, %v1817
      %v1819 = vpop.f32.mrf.mxu0
      %v1820 = vadd.f32 %v1731, %v1819
      %1821 = vmatmul.bf16.gmra.mxu0 %v936
      %v1822 = vpop.f32.mrf.mxu0
      %v1823 = vadd.f32 %v1734, %v1822
      %v1824 = vpop.f32.mrf.mxu0
      %v1825 = vadd.f32 %v1736, %v1824
      %1826 = vmatmul.bf16.gmra.mxu0 %v944
      %v1827 = vpop.f32.mrf.mxu0
      %v1828 = vadd.f32 %v1739, %v1827
      %v1829 = vpop.f32.mrf.mxu0
      %v1830 = vadd.f32 %v1741, %v1829
      %1831 = vmatmul.bf16.gmra.mxu0 %v952
      %v1832 = vpop.f32.mrf.mxu0
      %v1833 = vadd.f32 %v1744, %v1832
      %v1834 = vpop.f32.mrf.mxu0
      %v1835 = vadd.f32 %v1746, %v1834
      %1836 = vmatmul.bf16.gmra.mxu0 %v960
      %v1837 = vpop.f32.mrf.mxu0
      %v1838 = vadd.f32 %v1749, %v1837
      %v1839 = vpop.f32.mrf.mxu0
      %v1840 = vadd.f32 %v1751, %v1839
      %1841 = vmatmul.bf16.gmra.mxu0 %v968
      %v1842 = vpop.f32.mrf.mxu0
      %v1843 = vadd.f32 %v1754, %v1842
      %v1844 = vpop.f32.mrf.mxu0
      %v1845 = vadd.f32 %v1756, %v1844
      %1846 = vmatmul.bf16.gmra.mxu0 %v976
      %v1847 = vpop.f32.mrf.mxu0
      %v1848 = vadd.f32 %v1759, %v1847
      %v1849 = vpop.f32.mrf.mxu0
      %v1850 = vadd.f32 %v1761, %v1849
      %1851 = vmatmul.bf16.gmra.mxu0 %v984
      %v1852 = vpop.f32.mrf.mxu0
      %v1853 = vadd.f32 %v1764, %v1852
      %v1854 = vpop.f32.mrf.mxu0
      %v1855 = vadd.f32 %v1766, %v1854
      %1856 = vdwg.mxu0
      %1857 = vmatpush.bf16.msra.mxu0 %v1412
      %1858 = vmatpush.bf16.msra.mxu0 %v1411
      %1859 = vmatpush.bf16.msra.mxu0 %v1410
      %1860 = vmatpush.bf16.msra.mxu0 %v1409
      %1861 = vmatpush.bf16.msra.mxu0 %v1408
      %1862 = vmatpush.bf16.msra.mxu0 %v1407
      %1863 = vmatpush.bf16.msra.mxu0 %v1406
      %1864 = vmatpush.bf16.msra.mxu0 %v1405
      %1865 = vmatmul.bf16.gmra.mxu0 %v865
      %v1866 = vpop.f32.mrf.mxu0
      %v1867 = vadd.f32 %v1778, %v1866
      %v1868 = vpop.f32.mrf.mxu0
      %v1869 = vadd.f32 %v1780, %v1868
      %1870 = vmatmul.bf16.gmra.mxu0 %v873
      %v1871 = vpop.f32.mrf.mxu0
      %v1872 = vadd.f32 %v1783, %v1871
      %v1873 = vpop.f32.mrf.mxu0
      %v1874 = vadd.f32 %v1785, %v1873
      %1875 = vmatmul.bf16.gmra.mxu0 %v881
      %v1876 = vpop.f32.mrf.mxu0
      %v1877 = vadd.f32 %v1788, %v1876
      %v1878 = vpop.f32.mrf.mxu0
      %v1879 = vadd.f32 %v1790, %v1878
      %1880 = vmatmul.bf16.gmra.mxu0 %v889
      %v1881 = vpop.f32.mrf.mxu0
      %v1882 = vadd.f32 %v1793, %v1881
      %v1883 = vpop.f32.mrf.mxu0
      %v1884 = vadd.f32 %v1795, %v1883
      %1885 = vmatmul.bf16.gmra.mxu0 %v897
      %v1886 = vpop.f32.mrf.mxu0
      %v1887 = vadd.f32 %v1798, %v1886
      %v1888 = vpop.f32.mrf.mxu0
      %v1889 = vadd.f32 %v1800, %v1888
      %1890 = vmatmul.bf16.gmra.mxu0 %v905
      %v1891 = vpop.f32.mrf.mxu0
      %v1892 = vadd.f32 %v1803, %v1891
      %v1893 = vpop.f32.mrf.mxu0
      %v1894 = vadd.f32 %v1805, %v1893
      %1895 = vmatmul.bf16.gmra.mxu0 %v913
      %v1896 = vpop.f32.mrf.mxu0
      %v1897 = vadd.f32 %v1808, %v1896
      %v1898 = vpop.f32.mrf.mxu0
      %v1899 = vadd.f32 %v1810, %v1898
      %1900 = vmatmul.bf16.gmra.mxu0 %v921
      %v1901 = vpop.f32.mrf.mxu0
      %v1902 = vadd.f32 %v1813, %v1901
      %v1903 = vpop.f32.mrf.mxu0
      %v1904 = vadd.f32 %v1815, %v1903
      %1905 = vmatmul.bf16.gmra.mxu0 %v929
      %v1906 = vpop.f32.mrf.mxu0
      %v1907 = vadd.f32 %v1818, %v1906
      %v1908 = vpop.f32.mrf.mxu0
      %v1909 = vadd.f32 %v1820, %v1908
      %1910 = vmatmul.bf16.gmra.mxu0 %v937
      %v1911 = vpop.f32.mrf.mxu0
      %v1912 = vadd.f32 %v1823, %v1911
      %v1913 = vpop.f32.mrf.mxu0
      %v1914 = vadd.f32 %v1825, %v1913
      %1915 = vmatmul.bf16.gmra.mxu0 %v945
      %v1916 = vpop.f32.mrf.mxu0
      %v1917 = vadd.f32 %v1828, %v1916
      %v1918 = vpop.f32.mrf.mxu0
      %v1919 = vadd.f32 %v1830, %v1918
      %1920 = vmatmul.bf16.gmra.mxu0 %v953
      %v1921 = vpop.f32.mrf.mxu0
      %v1922 = vadd.f32 %v1833, %v1921
      %v1923 = vpop.f32.mrf.mxu0
      %v1924 = vadd.f32 %v1835, %v1923
      %1925 = vmatmul.bf16.gmra.mxu0 %v961
      %v1926 = vpop.f32.mrf.mxu0
      %v1927 = vadd.f32 %v1838, %v1926
      %v1928 = vpop.f32.mrf.mxu0
      %v1929 = vadd.f32 %v1840, %v1928
      %1930 = vmatmul.bf16.gmra.mxu0 %v969
      %v1931 = vpop.f32.mrf.mxu0
      %v1932 = vadd.f32 %v1843, %v1931
      %v1933 = vpop.f32.mrf.mxu0
      %v1934 = vadd.f32 %v1845, %v1933
      %1935 = vmatmul.bf16.gmra.mxu0 %v977
      %v1936 = vpop.f32.mrf.mxu0
      %v1937 = vadd.f32 %v1848, %v1936
      %v1938 = vpop.f32.mrf.mxu0
      %v1939 = vadd.f32 %v1850, %v1938
      %1940 = vmatmul.bf16.gmra.mxu0 %v985
      %v1941 = vpop.f32.mrf.mxu0
      %v1942 = vadd.f32 %v1853, %v1941
      %v1943 = vpop.f32.mrf.mxu0
      %v1944 = vadd.f32 %v1855, %v1943
      %1945 = vdwg.mxu0
      %1946 = vmatpush.bf16.msra.mxu0 %v1420
      %1947 = vmatpush.bf16.msra.mxu0 %v1419
      %1948 = vmatpush.bf16.msra.mxu0 %v1418
      %1949 = vmatpush.bf16.msra.mxu0 %v1417
      %1950 = vmatpush.bf16.msra.mxu0 %v1416
      %1951 = vmatpush.bf16.msra.mxu0 %v1415
      %1952 = vmatpush.bf16.msra.mxu0 %v1414
      %1953 = vmatpush.bf16.msra.mxu0 %v1413
      %1954 = vmatmul.bf16.gmra.mxu0 %v866
      %v1955 = vpop.f32.mrf.mxu0
      %v1956 = vadd.f32 %v1867, %v1955
      %v1957 = vpop.f32.mrf.mxu0
      %v1958 = vadd.f32 %v1869, %v1957
      %1959 = vmatmul.bf16.gmra.mxu0 %v874
      %v1960 = vpop.f32.mrf.mxu0
      %v1961 = vadd.f32 %v1872, %v1960
      %v1962 = vpop.f32.mrf.mxu0
      %v1963 = vadd.f32 %v1874, %v1962
      %1964 = vmatmul.bf16.gmra.mxu0 %v882
      %v1965 = vpop.f32.mrf.mxu0
      %v1966 = vadd.f32 %v1877, %v1965
      %v1967 = vpop.f32.mrf.mxu0
      %v1968 = vadd.f32 %v1879, %v1967
      %1969 = vmatmul.bf16.gmra.mxu0 %v890
      %v1970 = vpop.f32.mrf.mxu0
      %v1971 = vadd.f32 %v1882, %v1970
      %v1972 = vpop.f32.mrf.mxu0
      %v1973 = vadd.f32 %v1884, %v1972
      %1974 = vmatmul.bf16.gmra.mxu0 %v898
      %v1975 = vpop.f32.mrf.mxu0
      %v1976 = vadd.f32 %v1887, %v1975
      %v1977 = vpop.f32.mrf.mxu0
      %v1978 = vadd.f32 %v1889, %v1977
      %1979 = vmatmul.bf16.gmra.mxu0 %v906
      %v1980 = vpop.f32.mrf.mxu0
      %v1981 = vadd.f32 %v1892, %v1980
      %v1982 = vpop.f32.mrf.mxu0
      %v1983 = vadd.f32 %v1894, %v1982
      %1984 = vmatmul.bf16.gmra.mxu0 %v914
      %v1985 = vpop.f32.mrf.mxu0
      %v1986 = vadd.f32 %v1897, %v1985
      %v1987 = vpop.f32.mrf.mxu0
      %v1988 = vadd.f32 %v1899, %v1987
      %1989 = vmatmul.bf16.gmra.mxu0 %v922
      %v1990 = vpop.f32.mrf.mxu0
      %v1991 = vadd.f32 %v1902, %v1990
      %v1992 = vpop.f32.mrf.mxu0
      %v1993 = vadd.f32 %v1904, %v1992
      %1994 = vmatmul.bf16.gmra.mxu0 %v930
      %v1995 = vpop.f32.mrf.mxu0
      %v1996 = vadd.f32 %v1907, %v1995
      %v1997 = vpop.f32.mrf.mxu0
      %v1998 = vadd.f32 %v1909, %v1997
      %1999 = vmatmul.bf16.gmra.mxu0 %v938
      %v2000 = vpop.f32.mrf.mxu0
      %v2001 = vadd.f32 %v1912, %v2000
      %v2002 = vpop.f32.mrf.mxu0
      %v2003 = vadd.f32 %v1914, %v2002
      %2004 = vmatmul.bf16.gmra.mxu0 %v946
      %v2005 = vpop.f32.mrf.mxu0
      %v2006 = vadd.f32 %v1917, %v2005
      %v2007 = vpop.f32.mrf.mxu0
      %v2008 = vadd.f32 %v1919, %v2007
      %2009 = vmatmul.bf16.gmra.mxu0 %v954
      %v2010 = vpop.f32.mrf.mxu0
      %v2011 = vadd.f32 %v1922, %v2010
      %v2012 = vpop.f32.mrf.mxu0
      %v2013 = vadd.f32 %v1924, %v2012
      %2014 = vmatmul.bf16.gmra.mxu0 %v962
      %v2015 = vpop.f32.mrf.mxu0
      %v2016 = vadd.f32 %v1927, %v2015
      %v2017 = vpop.f32.mrf.mxu0
      %v2018 = vadd.f32 %v1929, %v2017
      %2019 = vmatmul.bf16.gmra.mxu0 %v970
      %v2020 = vpop.f32.mrf.mxu0
      %v2021 = vadd.f32 %v1932, %v2020
      %v2022 = vpop.f32.mrf.mxu0
      %v2023 = vadd.f32 %v1934, %v2022
      %2024 = vmatmul.bf16.gmra.mxu0 %v978
      %v2025 = vpop.f32.mrf.mxu0
      %v2026 = vadd.f32 %v1937, %v2025
      %v2027 = vpop.f32.mrf.mxu0
      %v2028 = vadd.f32 %v1939, %v2027
      %2029 = vmatmul.bf16.gmra.mxu0 %v986
      %v2030 = vpop.f32.mrf.mxu0
      %v2031 = vadd.f32 %v1942, %v2030
      %v2032 = vpop.f32.mrf.mxu0
      %v2033 = vadd.f32 %v1944, %v2032
      %2034 = vdwg.mxu0
      %2035 = vmatpush.bf16.msra.mxu0 %v1428
      %2036 = vmatpush.bf16.msra.mxu0 %v1427
      %2037 = vmatpush.bf16.msra.mxu0 %v1426
      %2038 = vmatpush.bf16.msra.mxu0 %v1425
      %2039 = vmatpush.bf16.msra.mxu0 %v1424
      %2040 = vmatpush.bf16.msra.mxu0 %v1423
      %2041 = vmatpush.bf16.msra.mxu0 %v1422
      %2042 = vmatpush.bf16.msra.mxu0 %v1421
      %2043 = vmatmul.bf16.gmra.mxu0 %v867
      %v2044 = vpop.f32.mrf.mxu0
      %v2045 = vadd.f32 %v1956, %v2044
      %v2046 = vpop.f32.mrf.mxu0
      %v2047 = vadd.f32 %v1958, %v2046
      %2048 = vmatmul.bf16.gmra.mxu0 %v875
      %v2049 = vpop.f32.mrf.mxu0
      %v2050 = vadd.f32 %v1961, %v2049
      %v2051 = vpop.f32.mrf.mxu0
      %v2052 = vadd.f32 %v1963, %v2051
      %2053 = vmatmul.bf16.gmra.mxu0 %v883
      %v2054 = vpop.f32.mrf.mxu0
      %v2055 = vadd.f32 %v1966, %v2054
      %v2056 = vpop.f32.mrf.mxu0
      %v2057 = vadd.f32 %v1968, %v2056
      %2058 = vmatmul.bf16.gmra.mxu0 %v891
      %v2059 = vpop.f32.mrf.mxu0
      %v2060 = vadd.f32 %v1971, %v2059
      %v2061 = vpop.f32.mrf.mxu0
      %v2062 = vadd.f32 %v1973, %v2061
      %2063 = vmatmul.bf16.gmra.mxu0 %v899
      %v2064 = vpop.f32.mrf.mxu0
      %v2065 = vadd.f32 %v1976, %v2064
      %v2066 = vpop.f32.mrf.mxu0
      %v2067 = vadd.f32 %v1978, %v2066
      %2068 = vmatmul.bf16.gmra.mxu0 %v907
      %v2069 = vpop.f32.mrf.mxu0
      %v2070 = vadd.f32 %v1981, %v2069
      %v2071 = vpop.f32.mrf.mxu0
      %v2072 = vadd.f32 %v1983, %v2071
      %2073 = vmatmul.bf16.gmra.mxu0 %v915
      %v2074 = vpop.f32.mrf.mxu0
      %v2075 = vadd.f32 %v1986, %v2074
      %v2076 = vpop.f32.mrf.mxu0
      %v2077 = vadd.f32 %v1988, %v2076
      %2078 = vmatmul.bf16.gmra.mxu0 %v923
      %v2079 = vpop.f32.mrf.mxu0
      %v2080 = vadd.f32 %v1991, %v2079
      %v2081 = vpop.f32.mrf.mxu0
      %v2082 = vadd.f32 %v1993, %v2081
      %2083 = vmatmul.bf16.gmra.mxu0 %v931
      %v2084 = vpop.f32.mrf.mxu0
      %v2085 = vadd.f32 %v1996, %v2084
      %v2086 = vpop.f32.mrf.mxu0
      %v2087 = vadd.f32 %v1998, %v2086
      %2088 = vmatmul.bf16.gmra.mxu0 %v939
      %v2089 = vpop.f32.mrf.mxu0
      %v2090 = vadd.f32 %v2001, %v2089
      %v2091 = vpop.f32.mrf.mxu0
      %v2092 = vadd.f32 %v2003, %v2091
      %2093 = vmatmul.bf16.gmra.mxu0 %v947
      %v2094 = vpop.f32.mrf.mxu0
      %v2095 = vadd.f32 %v2006, %v2094
      %v2096 = vpop.f32.mrf.mxu0
      %v2097 = vadd.f32 %v2008, %v2096
      %2098 = vmatmul.bf16.gmra.mxu0 %v955
      %v2099 = vpop.f32.mrf.mxu0
      %v2100 = vadd.f32 %v2011, %v2099
      %v2101 = vpop.f32.mrf.mxu0
      %v2102 = vadd.f32 %v2013, %v2101
      %2103 = vmatmul.bf16.gmra.mxu0 %v963
      %v2104 = vpop.f32.mrf.mxu0
      %v2105 = vadd.f32 %v2016, %v2104
      %v2106 = vpop.f32.mrf.mxu0
      %v2107 = vadd.f32 %v2018, %v2106
      %2108 = vmatmul.bf16.gmra.mxu0 %v971
      %v2109 = vpop.f32.mrf.mxu0
      %v2110 = vadd.f32 %v2021, %v2109
      %v2111 = vpop.f32.mrf.mxu0
      %v2112 = vadd.f32 %v2023, %v2111
      %2113 = vmatmul.bf16.gmra.mxu0 %v979
      %v2114 = vpop.f32.mrf.mxu0
      %v2115 = vadd.f32 %v2026, %v2114
      %v2116 = vpop.f32.mrf.mxu0
      %v2117 = vadd.f32 %v2028, %v2116
      %2118 = vmatmul.bf16.gmra.mxu0 %v987
      %v2119 = vpop.f32.mrf.mxu0
      %v2120 = vadd.f32 %v2031, %v2119
      %v2121 = vpop.f32.mrf.mxu0
      %v2122 = vadd.f32 %v2033, %v2121
      %2123 = vdwg.mxu0
      %2124 = vmatpush.bf16.msra.mxu0 %v1436
      %2125 = vmatpush.bf16.msra.mxu0 %v1435
      %2126 = vmatpush.bf16.msra.mxu0 %v1434
      %2127 = vmatpush.bf16.msra.mxu0 %v1433
      %2128 = vmatpush.bf16.msra.mxu0 %v1432
      %2129 = vmatpush.bf16.msra.mxu0 %v1431
      %2130 = vmatpush.bf16.msra.mxu0 %v1430
      %2131 = vmatpush.bf16.msra.mxu0 %v1429
      %2132 = vmatmul.bf16.gmra.mxu0 %v868
      %v2133 = vpop.f32.mrf.mxu0
      %v2134 = vadd.f32 %v2045, %v2133
      %v2135 = vpop.f32.mrf.mxu0
      %v2136 = vadd.f32 %v2047, %v2135
      %2137 = vmatmul.bf16.gmra.mxu0 %v876
      %v2138 = vpop.f32.mrf.mxu0
      %v2139 = vadd.f32 %v2050, %v2138
      %v2140 = vpop.f32.mrf.mxu0
      %v2141 = vadd.f32 %v2052, %v2140
      %2142 = vmatmul.bf16.gmra.mxu0 %v884
      %v2143 = vpop.f32.mrf.mxu0
      %v2144 = vadd.f32 %v2055, %v2143
      %v2145 = vpop.f32.mrf.mxu0
      %v2146 = vadd.f32 %v2057, %v2145
      %2147 = vmatmul.bf16.gmra.mxu0 %v892
      %v2148 = vpop.f32.mrf.mxu0
      %v2149 = vadd.f32 %v2060, %v2148
      %v2150 = vpop.f32.mrf.mxu0
      %v2151 = vadd.f32 %v2062, %v2150
      %2152 = vmatmul.bf16.gmra.mxu0 %v900
      %v2153 = vpop.f32.mrf.mxu0
      %v2154 = vadd.f32 %v2065, %v2153
      %v2155 = vpop.f32.mrf.mxu0
      %v2156 = vadd.f32 %v2067, %v2155
      %2157 = vmatmul.bf16.gmra.mxu0 %v908
      %v2158 = vpop.f32.mrf.mxu0
      %v2159 = vadd.f32 %v2070, %v2158
      %v2160 = vpop.f32.mrf.mxu0
      %v2161 = vadd.f32 %v2072, %v2160
      %2162 = vmatmul.bf16.gmra.mxu0 %v916
      %v2163 = vpop.f32.mrf.mxu0
      %v2164 = vadd.f32 %v2075, %v2163
      %v2165 = vpop.f32.mrf.mxu0
      %v2166 = vadd.f32 %v2077, %v2165
      %2167 = vmatmul.bf16.gmra.mxu0 %v924
      %v2168 = vpop.f32.mrf.mxu0
      %v2169 = vadd.f32 %v2080, %v2168
      %v2170 = vpop.f32.mrf.mxu0
      %v2171 = vadd.f32 %v2082, %v2170
      %2172 = vmatmul.bf16.gmra.mxu0 %v932
      %v2173 = vpop.f32.mrf.mxu0
      %v2174 = vadd.f32 %v2085, %v2173
      %v2175 = vpop.f32.mrf.mxu0
      %v2176 = vadd.f32 %v2087, %v2175
      %2177 = vmatmul.bf16.gmra.mxu0 %v940
      %v2178 = vpop.f32.mrf.mxu0
      %v2179 = vadd.f32 %v2090, %v2178
      %v2180 = vpop.f32.mrf.mxu0
      %v2181 = vadd.f32 %v2092, %v2180
      %2182 = vmatmul.bf16.gmra.mxu0 %v948
      %v2183 = vpop.f32.mrf.mxu0
      %v2184 = vadd.f32 %v2095, %v2183
      %v2185 = vpop.f32.mrf.mxu0
      %v2186 = vadd.f32 %v2097, %v2185
      %2187 = vmatmul.bf16.gmra.mxu0 %v956
      %v2188 = vpop.f32.mrf.mxu0
      %v2189 = vadd.f32 %v2100, %v2188
      %v2190 = vpop.f32.mrf.mxu0
      %v2191 = vadd.f32 %v2102, %v2190
      %2192 = vmatmul.bf16.gmra.mxu0 %v964
      %v2193 = vpop.f32.mrf.mxu0
      %v2194 = vadd.f32 %v2105, %v2193
      %v2195 = vpop.f32.mrf.mxu0
      %v2196 = vadd.f32 %v2107, %v2195
      %2197 = vmatmul.bf16.gmra.mxu0 %v972
      %v2198 = vpop.f32.mrf.mxu0
      %v2199 = vadd.f32 %v2110, %v2198
      %v2200 = vpop.f32.mrf.mxu0
      %v2201 = vadd.f32 %v2112, %v2200
      %2202 = vmatmul.bf16.gmra.mxu0 %v980
      %v2203 = vpop.f32.mrf.mxu0
      %v2204 = vadd.f32 %v2115, %v2203
      %v2205 = vpop.f32.mrf.mxu0
      %v2206 = vadd.f32 %v2117, %v2205
      %2207 = vmatmul.bf16.gmra.mxu0 %v988
      %v2208 = vpop.f32.mrf.mxu0
      %v2209 = vadd.f32 %v2120, %v2208
      %v2210 = vpop.f32.mrf.mxu0
      %v2211 = vadd.f32 %v2122, %v2210
      %2212 = vdwg.mxu0
      %2217 = vrot.lane.b32.xlu0 %v2144, 127
      %v2218 = vpop.permute.xlu0 %2217
      %2219 = vrot.lane.b32.xlu0 %v2146, 127
      %v2220 = vpop.permute.xlu0 %2219
      %2221 = vrot.lane.b32.xlu0 %v2149, 127
      %v2222 = vpop.permute.xlu0 %2221
      %2223 = vrot.lane.b32.xlu0 %v2151, 127
      %v2224 = vpop.permute.xlu0 %2223
      %v2229 = vadd.f32 %v2134, %v2218
      %v2230 = vadd.f32 %v2136, %v2220
      %v2231 = vadd.f32 %v2139, %v2222
      %v2232 = vadd.f32 %v2141, %v2224
      %2237 = vrot.lane.b32.xlu0 %v2154, 126
      %v2238 = vpop.permute.xlu0 %2237
      %2239 = vrot.lane.b32.xlu0 %v2156, 126
      %v2240 = vpop.permute.xlu0 %2239
      %2241 = vrot.lane.b32.xlu0 %v2159, 126
      %v2242 = vpop.permute.xlu0 %2241
      %2243 = vrot.lane.b32.xlu0 %v2161, 126
      %v2244 = vpop.permute.xlu0 %2243
      %v2249 = vadd.f32 %v2229, %v2238
      %v2250 = vadd.f32 %v2230, %v2240
      %v2251 = vadd.f32 %v2231, %v2242
      %v2252 = vadd.f32 %v2232, %v2244
      %2257 = vrot.lane.b32.xlu0 %v2164, 125
      %v2258 = vpop.permute.xlu0 %2257
      %2259 = vrot.lane.b32.xlu0 %v2166, 125
      %v2260 = vpop.permute.xlu0 %2259
      %2261 = vrot.lane.b32.xlu0 %v2169, 125
      %v2262 = vpop.permute.xlu0 %2261
      %2263 = vrot.lane.b32.xlu0 %v2171, 125
      %v2264 = vpop.permute.xlu0 %2263
      %v2269 = vadd.f32 %v2249, %v2258
      %v2270 = vadd.f32 %v2250, %v2260
      %v2271 = vadd.f32 %v2251, %v2262
      %v2272 = vadd.f32 %v2252, %v2264
      %2277 = vrot.lane.b32.xlu0 %v2174, 124
      %v2278 = vpop.permute.xlu0 %2277
      %2279 = vrot.lane.b32.xlu0 %v2176, 124
      %v2280 = vpop.permute.xlu0 %2279
      %2281 = vrot.lane.b32.xlu0 %v2179, 124
      %v2282 = vpop.permute.xlu0 %2281
      %2283 = vrot.lane.b32.xlu0 %v2181, 124
      %v2284 = vpop.permute.xlu0 %2283
      %v2289 = vadd.f32 %v2269, %v2278
      %v2290 = vadd.f32 %v2270, %v2280
      %v2291 = vadd.f32 %v2271, %v2282
      %v2292 = vadd.f32 %v2272, %v2284
      %2297 = vrot.lane.b32.xlu0 %v2184, 123
      %v2298 = vpop.permute.xlu0 %2297
      %2299 = vrot.lane.b32.xlu0 %v2186, 123
      %v2300 = vpop.permute.xlu0 %2299
      %2301 = vrot.lane.b32.xlu0 %v2189, 123
      %v2302 = vpop.permute.xlu0 %2301
      %2303 = vrot.lane.b32.xlu0 %v2191, 123
      %v2304 = vpop.permute.xlu0 %2303
      %v2309 = vadd.f32 %v2289, %v2298
      %v2310 = vadd.f32 %v2290, %v2300
      %v2311 = vadd.f32 %v2291, %v2302
      %v2312 = vadd.f32 %v2292, %v2304
      %2317 = vrot.lane.b32.xlu0 %v2194, 122
      %v2318 = vpop.permute.xlu0 %2317
      %2319 = vrot.lane.b32.xlu0 %v2196, 122
      %v2320 = vpop.permute.xlu0 %2319
      %2321 = vrot.lane.b32.xlu0 %v2199, 122
      %v2322 = vpop.permute.xlu0 %2321
      %2323 = vrot.lane.b32.xlu0 %v2201, 122
      %v2324 = vpop.permute.xlu0 %2323
      %v2329 = vadd.f32 %v2309, %v2318
      %v2330 = vadd.f32 %v2310, %v2320
      %v2331 = vadd.f32 %v2311, %v2322
      %v2332 = vadd.f32 %v2312, %v2324
      %2337 = vrot.lane.b32.xlu0 %v2204, 121
      %v2338 = vpop.permute.xlu0 %2337
      %2339 = vrot.lane.b32.xlu0 %v2206, 121
      %v2340 = vpop.permute.xlu0 %2339
      %2341 = vrot.lane.b32.xlu0 %v2209, 121
      %v2342 = vpop.permute.xlu0 %2341
      %2343 = vrot.lane.b32.xlu0 %v2211, 121
      %v2344 = vpop.permute.xlu0 %2343
      %v2349 = vadd.f32 %v2329, %v2338
      %v2350 = vadd.f32 %v2330, %v2340
      %v2351 = vadd.f32 %v2331, %v2342
      %v2352 = vadd.f32 %v2332, %v2344
      %v2353 = vld [vmem:[%s2] sm:$0xff]
      %v2354 = vld [vmem:[%s2 + $0x8] sm:$0xff]
      %v2355 = vld [vmem:[%s2 + $0x10] sm:$0xff]
      %v2356 = vld [vmem:[%s2 + $0x18] sm:$0xff]
      %2358 = vset.pattern.permute.xlu0 0
      %2359 = vperm.xlu0 %2358, %v2353
      %v2360 = vpop.permute.xlu0 %2359
      %2363 = vset.pattern.permute.xlu0 0
      %2364 = vperm.xlu0 %2363, %v2354
      %v2365 = vpop.permute.xlu0 %2364
      %2368 = vset.pattern.permute.xlu0 0
      %2369 = vperm.xlu0 %2368, %v2355
      %v2370 = vpop.permute.xlu0 %2369
      %2373 = vset.pattern.permute.xlu0 0
      %2374 = vperm.xlu0 %2373, %v2356
      %v2375 = vpop.permute.xlu0 %2374
      %v2377 = vadd.f32 %v2349, %v2360
      %v2378 = vadd.f32 %v2350, %v2365
      %v2379 = vadd.f32 %v2351, %v2370
      %v2380 = vadd.f32 %v2352, %v2375
      %v2381 = vpack.c.bf16 %v2377, %v2377
      %v2382 = vpack.c.bf16 %v2378, %v2378
      %v2383 = vpack.c.bf16 %v2379, %v2379
      %v2384 = vpack.c.bf16 %v2380, %v2380
      %v2385 = vld [vmem:[%s3] sm:$0xf]
      %v2386 = vld [vmem:[%s3 + $0x4] sm:$0xf]
      %v2387 = vld [vmem:[%s3 + $0x8] sm:$0xf]
      %v2388 = vld [vmem:[%s3 + $0xc] sm:$0xf]
      %v2389 = vld [vmem:[%s3 + $0x10] sm:$0xf]
      %v2390 = vld [vmem:[%s3 + $0x14] sm:$0xf]
      %v2391 = vld [vmem:[%s3 + $0x18] sm:$0xf]
      %v2392 = vld [vmem:[%s3 + $0x1c] sm:$0xf]
      %v2393 = vld [vmem:[%s3 + $0x20] sm:$0xf]
      %v2394 = vld [vmem:[%s3 + $0x24] sm:$0xf]
      %v2395 = vld [vmem:[%s3 + $0x28] sm:$0xf]
      %v2396 = vld [vmem:[%s3 + $0x2c] sm:$0xf]
      %v2397 = vld [vmem:[%s3 + $0x30] sm:$0xf]
      %v2398 = vld [vmem:[%s3 + $0x34] sm:$0xf]
      %v2399 = vld [vmem:[%s3 + $0x38] sm:$0xf]
      %v2400 = vld [vmem:[%s3 + $0x3c] sm:$0x1]
      %s2401 = scalar_lea.vmem %s3, 64
      %v2402 = vld [vmem:[%s2401] sm:$0xf]
      %v2403 = vld [vmem:[%s2401 + $0x4] sm:$0xf]
      %v2404 = vld [vmem:[%s2401 + $0x8] sm:$0xf]
      %v2405 = vld [vmem:[%s2401 + $0xc] sm:$0xf]
      %v2406 = vld [vmem:[%s2401 + $0x10] sm:$0xf]
      %v2407 = vld [vmem:[%s2401 + $0x14] sm:$0xf]
      %v2408 = vld [vmem:[%s2401 + $0x18] sm:$0xf]
      %v2409 = vld [vmem:[%s2401 + $0x1c] sm:$0xf]
      %v2410 = vld [vmem:[%s2401 + $0x20] sm:$0xf]
      %v2411 = vld [vmem:[%s2401 + $0x24] sm:$0xf]
      %v2412 = vld [vmem:[%s2401 + $0x28] sm:$0xf]
      %v2413 = vld [vmem:[%s2401 + $0x2c] sm:$0xf]
      %v2414 = vld [vmem:[%s2401 + $0x30] sm:$0xf]
      %v2415 = vld [vmem:[%s2401 + $0x34] sm:$0xf]
      %v2416 = vld [vmem:[%s2401 + $0x38] sm:$0xf]
      %v2417 = vld [vmem:[%s2401 + $0x3c] sm:$0x1]
      %v2419 = vunpack.c.l.b16 %v2381
      %v2420 = vpack.c.b16 %v2419, %v2419
      %v2422 = vshrl.u32 %v2420, 16
      %v2440 = vunpack.c.l.b16 %v2402
      %v2441 = vunpack.c.l.b16 %v2403
      %v2442 = vunpack.c.l.b16 %v2404
      %v2443 = vunpack.c.l.b16 %v2405
      %v2444 = vunpack.c.l.b16 %v2406
      %v2445 = vunpack.c.l.b16 %v2407
      %v2446 = vunpack.c.l.b16 %v2408
      %v2447 = vunpack.c.l.b16 %v2409
      %v2448 = vunpack.c.l.b16 %v2410
      %v2449 = vunpack.c.l.b16 %v2411
      %v2450 = vunpack.c.l.b16 %v2412
      %v2451 = vunpack.c.l.b16 %v2413
      %v2452 = vunpack.c.l.b16 %v2414
      %v2453 = vunpack.c.l.b16 %v2415
      %v2454 = vunpack.c.l.b16 %v2416
      %v2455 = vunpack.c.l.b16 %v2417
      %v2456 = vpack.c.b16 %v2441, %v2440
      %v2457 = vpack.c.b16 %v2443, %v2442
      %v2458 = vpack.c.b16 %v2445, %v2444
      %v2459 = vpack.c.b16 %v2447, %v2446
      %v2460 = vpack.c.b16 %v2449, %v2448
      %v2461 = vpack.c.b16 %v2451, %v2450
      %v2462 = vpack.c.b16 %v2453, %v2452
      %v2463 = vpack.c.b16 %v2455, %v2454
      %vm2471 = vcmask 990208
      %v2473 = vsel %vm2471, %v2422, 0
      %vm2475 = vcmask 1043456
      %vm2476 = vcmask 1044480
      %v2477 = vsel %vm2475, 4294967295, 65535
      %v2478 = vsel %vm2476, %v2477, 0
      %v2480 = vand.u32 %v2463, %v2478
      %2482 = vmatpush.bf16.msra.mxu0 %v2480
      %2483 = vmatpush.bf16.msra.mxu0 %v2462
      %2484 = vmatpush.bf16.msra.mxu0 %v2461
      %2485 = vmatpush.bf16.msra.mxu0 %v2460
      %2486 = vmatpush.bf16.msra.mxu0 %v2459
      %2487 = vmatpush.bf16.msra.mxu0 %v2458
      %2488 = vmatpush.bf16.msra.mxu0 %v2457
      %2489 = vmatpush.bf16.msra.mxu0 %v2456
      %2490 = vmatmul.bf16.gmra.mxu0 %v2473
      %v2491 = vpop.f32.mrf.mxu0
      %v2492 = vadd.f32 0.0, %v2491
      %v2493 = vpop.f32.mrf.mxu0
      %2494 = vdwg.mxu0
      %v2511 = vunpack.c.l.b16 %v2385
      %v2512 = vunpack.c.l.b16 %v2386
      %v2513 = vunpack.c.l.b16 %v2387
      %v2514 = vunpack.c.l.b16 %v2388
      %v2515 = vunpack.c.l.b16 %v2389
      %v2516 = vunpack.c.l.b16 %v2390
      %v2517 = vunpack.c.l.b16 %v2391
      %v2518 = vunpack.c.l.b16 %v2392
      %v2519 = vunpack.c.l.b16 %v2393
      %v2520 = vunpack.c.l.b16 %v2394
      %v2521 = vunpack.c.l.b16 %v2395
      %v2522 = vunpack.c.l.b16 %v2396
      %v2523 = vunpack.c.l.b16 %v2397
      %v2524 = vunpack.c.l.b16 %v2398
      %v2525 = vunpack.c.l.b16 %v2399
      %v2526 = vunpack.c.l.b16 %v2400
      %v2527 = vpack.c.b16 %v2512, %v2511
      %v2528 = vpack.c.b16 %v2514, %v2513
      %v2529 = vpack.c.b16 %v2516, %v2515
      %v2530 = vpack.c.b16 %v2518, %v2517
      %v2531 = vpack.c.b16 %v2520, %v2519
      %v2532 = vpack.c.b16 %v2522, %v2521
      %v2533 = vpack.c.b16 %v2524, %v2523
      %v2534 = vpack.c.b16 %v2526, %v2525
      %v2543 = vsel %vm2471, %v2381, 0
      %v2546 = vand.u32 %v2534, %v2478
      %2548 = vmatpush.bf16.msra.mxu0 %v2546
      %2549 = vmatpush.bf16.msra.mxu0 %v2533
      %2550 = vmatpush.bf16.msra.mxu0 %v2532
      %2551 = vmatpush.bf16.msra.mxu0 %v2531
      %2552 = vmatpush.bf16.msra.mxu0 %v2530
      %2553 = vmatpush.bf16.msra.mxu0 %v2529
      %2554 = vmatpush.bf16.msra.mxu0 %v2528
      %2555 = vmatpush.bf16.msra.mxu0 %v2527
      %2556 = vmatmul.bf16.gmra.mxu0 %v2543
      %v2557 = vpop.f32.mrf.mxu0
      %v2558 = vadd.f32 %v2492, %v2557
      %v2559 = vpop.f32.mrf.mxu0
      %2560 = vdwg.mxu0
      %s2561 = scalar_lea.vmem %s3, 128
      %v2562 = vld [vmem:[%s2561] sm:$0xf]
      %v2563 = vld [vmem:[%s2561 + $0x4] sm:$0xf]
      %v2564 = vld [vmem:[%s2561 + $0x8] sm:$0xf]
      %v2565 = vld [vmem:[%s2561 + $0xc] sm:$0xf]
      %v2566 = vld [vmem:[%s2561 + $0x10] sm:$0xf]
      %v2567 = vld [vmem:[%s2561 + $0x14] sm:$0xf]
      %v2568 = vld [vmem:[%s2561 + $0x18] sm:$0xf]
      %v2569 = vld [vmem:[%s2561 + $0x1c] sm:$0xf]
      %v2570 = vld [vmem:[%s2561 + $0x20] sm:$0xf]
      %v2571 = vld [vmem:[%s2561 + $0x24] sm:$0xf]
      %v2572 = vld [vmem:[%s2561 + $0x28] sm:$0xf]
      %v2573 = vld [vmem:[%s2561 + $0x2c] sm:$0xf]
      %v2574 = vld [vmem:[%s2561 + $0x30] sm:$0xf]
      %v2575 = vld [vmem:[%s2561 + $0x34] sm:$0xf]
      %v2576 = vld [vmem:[%s2561 + $0x38] sm:$0xf]
      %v2577 = vld [vmem:[%s2561 + $0x3c] sm:$0x1]
      %v2578 = vrot.slane %v2420, 1
      %v2595 = vunpack.c.l.b16 %v2562
      %v2596 = vunpack.c.l.b16 %v2563
      %v2597 = vunpack.c.l.b16 %v2564
      %v2598 = vunpack.c.l.b16 %v2565
      %v2599 = vunpack.c.l.b16 %v2566
      %v2600 = vunpack.c.l.b16 %v2567
      %v2601 = vunpack.c.l.b16 %v2568
      %v2602 = vunpack.c.l.b16 %v2569
      %v2603 = vunpack.c.l.b16 %v2570
      %v2604 = vunpack.c.l.b16 %v2571
      %v2605 = vunpack.c.l.b16 %v2572
      %v2606 = vunpack.c.l.b16 %v2573
      %v2607 = vunpack.c.l.b16 %v2574
      %v2608 = vunpack.c.l.b16 %v2575
      %v2609 = vunpack.c.l.b16 %v2576
      %v2610 = vunpack.c.l.b16 %v2577
      %v2611 = vpack.c.b16 %v2596, %v2595
      %v2612 = vpack.c.b16 %v2598, %v2597
      %v2613 = vpack.c.b16 %v2600, %v2599
      %v2614 = vpack.c.b16 %v2602, %v2601
      %v2615 = vpack.c.b16 %v2604, %v2603
      %v2616 = vpack.c.b16 %v2606, %v2605
      %v2617 = vpack.c.b16 %v2608, %v2607
      %v2618 = vpack.c.b16 %v2610, %v2609
      %v2627 = vsel %vm2471, %v2578, 0
      %v2630 = vand.u32 %v2618, %v2478
      %2632 = vmatpush.bf16.msra.mxu0 %v2630
      %2633 = vmatpush.bf16.msra.mxu0 %v2617
      %2634 = vmatpush.bf16.msra.mxu0 %v2616
      %2635 = vmatpush.bf16.msra.mxu0 %v2615
      %2636 = vmatpush.bf16.msra.mxu0 %v2614
      %2637 = vmatpush.bf16.msra.mxu0 %v2613
      %2638 = vmatpush.bf16.msra.mxu0 %v2612
      %2639 = vmatpush.bf16.msra.mxu0 %v2611
      %2640 = vmatmul.bf16.gmra.mxu0 %v2627
      %v2641 = vpop.f32.mrf.mxu0
      %v2642 = vadd.f32 0.0, %v2641
      %v2643 = vpop.f32.mrf.mxu0
      %2644 = vdwg.mxu0
      %v2645 = vadd.f32 %v2558, %v2642
      %s2646 = scalar_lea.vmem %s3, 192
      %v2647 = vld [vmem:[%s2646] sm:$0xf]
      %v2648 = vld [vmem:[%s2646 + $0x4] sm:$0xf]
      %v2649 = vld [vmem:[%s2646 + $0x8] sm:$0xf]
      %v2650 = vld [vmem:[%s2646 + $0xc] sm:$0xf]
      %v2651 = vld [vmem:[%s2646 + $0x10] sm:$0xf]
      %v2652 = vld [vmem:[%s2646 + $0x14] sm:$0xf]
      %v2653 = vld [vmem:[%s2646 + $0x18] sm:$0xf]
      %v2654 = vld [vmem:[%s2646 + $0x1c] sm:$0xf]
      %v2655 = vld [vmem:[%s2646 + $0x20] sm:$0xf]
      %v2656 = vld [vmem:[%s2646 + $0x24] sm:$0xf]
      %v2657 = vld [vmem:[%s2646 + $0x28] sm:$0xf]
      %v2658 = vld [vmem:[%s2646 + $0x2c] sm:$0xf]
      %v2659 = vld [vmem:[%s2646 + $0x30] sm:$0xf]
      %v2660 = vld [vmem:[%s2646 + $0x34] sm:$0xf]
      %v2661 = vld [vmem:[%s2646 + $0x38] sm:$0xf]
      %v2662 = vld [vmem:[%s2646 + $0x3c] sm:$0x1]
      %v2663 = vrot.slane %v2422, 1
      %v2680 = vunpack.c.l.b16 %v2647
      %v2681 = vunpack.c.l.b16 %v2648
      %v2682 = vunpack.c.l.b16 %v2649
      %v2683 = vunpack.c.l.b16 %v2650
      %v2684 = vunpack.c.l.b16 %v2651
      %v2685 = vunpack.c.l.b16 %v2652
      %v2686 = vunpack.c.l.b16 %v2653
      %v2687 = vunpack.c.l.b16 %v2654
      %v2688 = vunpack.c.l.b16 %v2655
      %v2689 = vunpack.c.l.b16 %v2656
      %v2690 = vunpack.c.l.b16 %v2657
      %v2691 = vunpack.c.l.b16 %v2658
      %v2692 = vunpack.c.l.b16 %v2659
      %v2693 = vunpack.c.l.b16 %v2660
      %v2694 = vunpack.c.l.b16 %v2661
      %v2695 = vunpack.c.l.b16 %v2662
      %v2696 = vpack.c.b16 %v2681, %v2680
      %v2697 = vpack.c.b16 %v2683, %v2682
      %v2698 = vpack.c.b16 %v2685, %v2684
      %v2699 = vpack.c.b16 %v2687, %v2686
      %v2700 = vpack.c.b16 %v2689, %v2688
      %v2701 = vpack.c.b16 %v2691, %v2690
      %v2702 = vpack.c.b16 %v2693, %v2692
      %v2703 = vpack.c.b16 %v2695, %v2694
      %v2712 = vsel %vm2471, %v2663, 0
      %v2715 = vand.u32 %v2703, %v2478
      %2717 = vmatpush.bf16.msra.mxu0 %v2715
      %2718 = vmatpush.bf16.msra.mxu0 %v2702
      %2719 = vmatpush.bf16.msra.mxu0 %v2701
      %2720 = vmatpush.bf16.msra.mxu0 %v2700
      %2721 = vmatpush.bf16.msra.mxu0 %v2699
      %2722 = vmatpush.bf16.msra.mxu0 %v2698
      %2723 = vmatpush.bf16.msra.mxu0 %v2697
      %2724 = vmatpush.bf16.msra.mxu0 %v2696
      %2725 = vmatmul.bf16.gmra.mxu0 %v2712
      %v2726 = vpop.f32.mrf.mxu0
      %v2727 = vadd.f32 0.0, %v2726
      %v2728 = vpop.f32.mrf.mxu0
      %2729 = vdwg.mxu0
      %v2730 = vadd.f32 %v2645, %v2727
      %s2731 = scalar_lea.vmem %s3, 256
      %v2732 = vld [vmem:[%s2731] sm:$0xf]
      %v2733 = vld [vmem:[%s2731 + $0x4] sm:$0xf]
      %v2734 = vld [vmem:[%s2731 + $0x8] sm:$0xf]
      %v2735 = vld [vmem:[%s2731 + $0xc] sm:$0xf]
      %v2736 = vld [vmem:[%s2731 + $0x10] sm:$0xf]
      %v2737 = vld [vmem:[%s2731 + $0x14] sm:$0xf]
      %v2738 = vld [vmem:[%s2731 + $0x18] sm:$0xf]
      %v2739 = vld [vmem:[%s2731 + $0x1c] sm:$0xf]
      %v2740 = vld [vmem:[%s2731 + $0x20] sm:$0xf]
      %v2741 = vld [vmem:[%s2731 + $0x24] sm:$0xf]
      %v2742 = vld [vmem:[%s2731 + $0x28] sm:$0xf]
      %v2743 = vld [vmem:[%s2731 + $0x2c] sm:$0xf]
      %v2744 = vld [vmem:[%s2731 + $0x30] sm:$0xf]
      %v2745 = vld [vmem:[%s2731 + $0x34] sm:$0xf]
      %v2746 = vld [vmem:[%s2731 + $0x38] sm:$0xf]
      %v2747 = vld [vmem:[%s2731 + $0x3c] sm:$0x1]
      %v2748 = vrot.slane %v2420, 2
      %v2765 = vunpack.c.l.b16 %v2732
      %v2766 = vunpack.c.l.b16 %v2733
      %v2767 = vunpack.c.l.b16 %v2734
      %v2768 = vunpack.c.l.b16 %v2735
      %v2769 = vunpack.c.l.b16 %v2736
      %v2770 = vunpack.c.l.b16 %v2737
      %v2771 = vunpack.c.l.b16 %v2738
      %v2772 = vunpack.c.l.b16 %v2739
      %v2773 = vunpack.c.l.b16 %v2740
      %v2774 = vunpack.c.l.b16 %v2741
      %v2775 = vunpack.c.l.b16 %v2742
      %v2776 = vunpack.c.l.b16 %v2743
      %v2777 = vunpack.c.l.b16 %v2744
      %v2778 = vunpack.c.l.b16 %v2745
      %v2779 = vunpack.c.l.b16 %v2746
      %v2780 = vunpack.c.l.b16 %v2747
      %v2781 = vpack.c.b16 %v2766, %v2765
      %v2782 = vpack.c.b16 %v2768, %v2767
      %v2783 = vpack.c.b16 %v2770, %v2769
      %v2784 = vpack.c.b16 %v2772, %v2771
      %v2785 = vpack.c.b16 %v2774, %v2773
      %v2786 = vpack.c.b16 %v2776, %v2775
      %v2787 = vpack.c.b16 %v2778, %v2777
      %v2788 = vpack.c.b16 %v2780, %v2779
      %v2797 = vsel %vm2471, %v2748, 0
      %v2800 = vand.u32 %v2788, %v2478
      %2802 = vmatpush.bf16.msra.mxu0 %v2800
      %2803 = vmatpush.bf16.msra.mxu0 %v2787
      %2804 = vmatpush.bf16.msra.mxu0 %v2786
      %2805 = vmatpush.bf16.msra.mxu0 %v2785
      %2806 = vmatpush.bf16.msra.mxu0 %v2784
      %2807 = vmatpush.bf16.msra.mxu0 %v2783
      %2808 = vmatpush.bf16.msra.mxu0 %v2782
      %2809 = vmatpush.bf16.msra.mxu0 %v2781
      %2810 = vmatmul.bf16.gmra.mxu0 %v2797
      %v2811 = vpop.f32.mrf.mxu0
      %v2812 = vadd.f32 0.0, %v2811
      %v2813 = vpop.f32.mrf.mxu0
      %2814 = vdwg.mxu0
      %v2815 = vadd.f32 %v2730, %v2812
      %s2816 = scalar_lea.vmem %s3, 320
      %v2817 = vld [vmem:[%s2816] sm:$0xf]
      %v2818 = vld [vmem:[%s2816 + $0x4] sm:$0xf]
      %v2819 = vld [vmem:[%s2816 + $0x8] sm:$0xf]
      %v2820 = vld [vmem:[%s2816 + $0xc] sm:$0xf]
      %v2821 = vld [vmem:[%s2816 + $0x10] sm:$0xf]
      %v2822 = vld [vmem:[%s2816 + $0x14] sm:$0xf]
      %v2823 = vld [vmem:[%s2816 + $0x18] sm:$0xf]
      %v2824 = vld [vmem:[%s2816 + $0x1c] sm:$0xf]
      %v2825 = vld [vmem:[%s2816 + $0x20] sm:$0xf]
      %v2826 = vld [vmem:[%s2816 + $0x24] sm:$0xf]
      %v2827 = vld [vmem:[%s2816 + $0x28] sm:$0xf]
      %v2828 = vld [vmem:[%s2816 + $0x2c] sm:$0xf]
      %v2829 = vld [vmem:[%s2816 + $0x30] sm:$0xf]
      %v2830 = vld [vmem:[%s2816 + $0x34] sm:$0xf]
      %v2831 = vld [vmem:[%s2816 + $0x38] sm:$0xf]
      %v2832 = vld [vmem:[%s2816 + $0x3c] sm:$0x1]
      %v2833 = vrot.slane %v2422, 2
      %v2850 = vunpack.c.l.b16 %v2817
      %v2851 = vunpack.c.l.b16 %v2818
      %v2852 = vunpack.c.l.b16 %v2819
      %v2853 = vunpack.c.l.b16 %v2820
      %v2854 = vunpack.c.l.b16 %v2821
      %v2855 = vunpack.c.l.b16 %v2822
      %v2856 = vunpack.c.l.b16 %v2823
      %v2857 = vunpack.c.l.b16 %v2824
      %v2858 = vunpack.c.l.b16 %v2825
      %v2859 = vunpack.c.l.b16 %v2826
      %v2860 = vunpack.c.l.b16 %v2827
      %v2861 = vunpack.c.l.b16 %v2828
      %v2862 = vunpack.c.l.b16 %v2829
      %v2863 = vunpack.c.l.b16 %v2830
      %v2864 = vunpack.c.l.b16 %v2831
      %v2865 = vunpack.c.l.b16 %v2832
      %v2866 = vpack.c.b16 %v2851, %v2850
      %v2867 = vpack.c.b16 %v2853, %v2852
      %v2868 = vpack.c.b16 %v2855, %v2854
      %v2869 = vpack.c.b16 %v2857, %v2856
      %v2870 = vpack.c.b16 %v2859, %v2858
      %v2871 = vpack.c.b16 %v2861, %v2860
      %v2872 = vpack.c.b16 %v2863, %v2862
      %v2873 = vpack.c.b16 %v2865, %v2864
      %v2882 = vsel %vm2471, %v2833, 0
      %v2885 = vand.u32 %v2873, %v2478
      %2887 = vmatpush.bf16.msra.mxu0 %v2885
      %2888 = vmatpush.bf16.msra.mxu0 %v2872
      %2889 = vmatpush.bf16.msra.mxu0 %v2871
      %2890 = vmatpush.bf16.msra.mxu0 %v2870
      %2891 = vmatpush.bf16.msra.mxu0 %v2869
      %2892 = vmatpush.bf16.msra.mxu0 %v2868
      %2893 = vmatpush.bf16.msra.mxu0 %v2867
      %2894 = vmatpush.bf16.msra.mxu0 %v2866
      %2895 = vmatmul.bf16.gmra.mxu0 %v2882
      %v2896 = vpop.f32.mrf.mxu0
      %v2897 = vadd.f32 0.0, %v2896
      %v2898 = vpop.f32.mrf.mxu0
      %2899 = vdwg.mxu0
      %v2900 = vadd.f32 %v2815, %v2897
      %s2901 = scalar_lea.vmem %s3, 384
      %v2902 = vld [vmem:[%s2901] sm:$0xf]
      %v2903 = vld [vmem:[%s2901 + $0x4] sm:$0xf]
      %v2904 = vld [vmem:[%s2901 + $0x8] sm:$0xf]
      %v2905 = vld [vmem:[%s2901 + $0xc] sm:$0xf]
      %v2906 = vld [vmem:[%s2901 + $0x10] sm:$0xf]
      %v2907 = vld [vmem:[%s2901 + $0x14] sm:$0xf]
      %v2908 = vld [vmem:[%s2901 + $0x18] sm:$0xf]
      %v2909 = vld [vmem:[%s2901 + $0x1c] sm:$0xf]
      %v2910 = vld [vmem:[%s2901 + $0x20] sm:$0xf]
      %v2911 = vld [vmem:[%s2901 + $0x24] sm:$0xf]
      %v2912 = vld [vmem:[%s2901 + $0x28] sm:$0xf]
      %v2913 = vld [vmem:[%s2901 + $0x2c] sm:$0xf]
      %v2914 = vld [vmem:[%s2901 + $0x30] sm:$0xf]
      %v2915 = vld [vmem:[%s2901 + $0x34] sm:$0xf]
      %v2916 = vld [vmem:[%s2901 + $0x38] sm:$0xf]
      %v2917 = vld [vmem:[%s2901 + $0x3c] sm:$0x1]
      %v2918 = vrot.slane %v2420, 3
      %v2935 = vunpack.c.l.b16 %v2902
      %v2936 = vunpack.c.l.b16 %v2903
      %v2937 = vunpack.c.l.b16 %v2904
      %v2938 = vunpack.c.l.b16 %v2905
      %v2939 = vunpack.c.l.b16 %v2906
      %v2940 = vunpack.c.l.b16 %v2907
      %v2941 = vunpack.c.l.b16 %v2908
      %v2942 = vunpack.c.l.b16 %v2909
      %v2943 = vunpack.c.l.b16 %v2910
      %v2944 = vunpack.c.l.b16 %v2911
      %v2945 = vunpack.c.l.b16 %v2912
      %v2946 = vunpack.c.l.b16 %v2913
      %v2947 = vunpack.c.l.b16 %v2914
      %v2948 = vunpack.c.l.b16 %v2915
      %v2949 = vunpack.c.l.b16 %v2916
      %v2950 = vunpack.c.l.b16 %v2917
      %v2951 = vpack.c.b16 %v2936, %v2935
      %v2952 = vpack.c.b16 %v2938, %v2937
      %v2953 = vpack.c.b16 %v2940, %v2939
      %v2954 = vpack.c.b16 %v2942, %v2941
      %v2955 = vpack.c.b16 %v2944, %v2943
      %v2956 = vpack.c.b16 %v2946, %v2945
      %v2957 = vpack.c.b16 %v2948, %v2947
      %v2958 = vpack.c.b16 %v2950, %v2949
      %v2967 = vsel %vm2471, %v2918, 0
      %v2970 = vand.u32 %v2958, %v2478
      %2972 = vmatpush.bf16.msra.mxu0 %v2970
      %2973 = vmatpush.bf16.msra.mxu0 %v2957
      %2974 = vmatpush.bf16.msra.mxu0 %v2956
      %2975 = vmatpush.bf16.msra.mxu0 %v2955
      %2976 = vmatpush.bf16.msra.mxu0 %v2954
      %2977 = vmatpush.bf16.msra.mxu0 %v2953
      %2978 = vmatpush.bf16.msra.mxu0 %v2952
      %2979 = vmatpush.bf16.msra.mxu0 %v2951
      %2980 = vmatmul.bf16.gmra.mxu0 %v2967
      %v2981 = vpop.f32.mrf.mxu0
      %v2982 = vadd.f32 0.0, %v2981
      %v2983 = vpop.f32.mrf.mxu0
      %2984 = vdwg.mxu0
      %v2985 = vadd.f32 %v2900, %v2982
      %s2986 = scalar_lea.vmem %s3, 448
      %v2987 = vld [vmem:[%s2986] sm:$0xf]
      %v2988 = vld [vmem:[%s2986 + $0x4] sm:$0xf]
      %v2989 = vld [vmem:[%s2986 + $0x8] sm:$0xf]
      %v2990 = vld [vmem:[%s2986 + $0xc] sm:$0xf]
      %v2991 = vld [vmem:[%s2986 + $0x10] sm:$0xf]
      %v2992 = vld [vmem:[%s2986 + $0x14] sm:$0xf]
      %v2993 = vld [vmem:[%s2986 + $0x18] sm:$0xf]
      %v2994 = vld [vmem:[%s2986 + $0x1c] sm:$0xf]
      %v2995 = vld [vmem:[%s2986 + $0x20] sm:$0xf]
      %v2996 = vld [vmem:[%s2986 + $0x24] sm:$0xf]
      %v2997 = vld [vmem:[%s2986 + $0x28] sm:$0xf]
      %v2998 = vld [vmem:[%s2986 + $0x2c] sm:$0xf]
      %v2999 = vld [vmem:[%s2986 + $0x30] sm:$0xf]
      %v3000 = vld [vmem:[%s2986 + $0x34] sm:$0xf]
      %v3001 = vld [vmem:[%s2986 + $0x38] sm:$0xf]
      %v3002 = vld [vmem:[%s2986 + $0x3c] sm:$0x1]
      %v3003 = vrot.slane %v2422, 3
      %v3020 = vunpack.c.l.b16 %v2987
      %v3021 = vunpack.c.l.b16 %v2988
      %v3022 = vunpack.c.l.b16 %v2989
      %v3023 = vunpack.c.l.b16 %v2990
      %v3024 = vunpack.c.l.b16 %v2991
      %v3025 = vunpack.c.l.b16 %v2992
      %v3026 = vunpack.c.l.b16 %v2993
      %v3027 = vunpack.c.l.b16 %v2994
      %v3028 = vunpack.c.l.b16 %v2995
      %v3029 = vunpack.c.l.b16 %v2996
      %v3030 = vunpack.c.l.b16 %v2997
      %v3031 = vunpack.c.l.b16 %v2998
      %v3032 = vunpack.c.l.b16 %v2999
      %v3033 = vunpack.c.l.b16 %v3000
      %v3034 = vunpack.c.l.b16 %v3001
      %v3035 = vunpack.c.l.b16 %v3002
      %v3036 = vpack.c.b16 %v3021, %v3020
      %v3037 = vpack.c.b16 %v3023, %v3022
      %v3038 = vpack.c.b16 %v3025, %v3024
      %v3039 = vpack.c.b16 %v3027, %v3026
      %v3040 = vpack.c.b16 %v3029, %v3028
      %v3041 = vpack.c.b16 %v3031, %v3030
      %v3042 = vpack.c.b16 %v3033, %v3032
      %v3043 = vpack.c.b16 %v3035, %v3034
      %v3052 = vsel %vm2471, %v3003, 0
      %v3055 = vand.u32 %v3043, %v2478
      %3057 = vmatpush.bf16.msra.mxu0 %v3055
      %3058 = vmatpush.bf16.msra.mxu0 %v3042
      %3059 = vmatpush.bf16.msra.mxu0 %v3041
      %3060 = vmatpush.bf16.msra.mxu0 %v3040
      %3061 = vmatpush.bf16.msra.mxu0 %v3039
      %3062 = vmatpush.bf16.msra.mxu0 %v3038
      %3063 = vmatpush.bf16.msra.mxu0 %v3037
      %3064 = vmatpush.bf16.msra.mxu0 %v3036
      %3065 = vmatmul.bf16.gmra.mxu0 %v3052
      %v3066 = vpop.f32.mrf.mxu0
      %v3067 = vadd.f32 0.0, %v3066
      %v3068 = vpop.f32.mrf.mxu0
      %3069 = vdwg.mxu0
      %v3070 = vadd.f32 %v2985, %v3067
      %s3071 = scalar_lea.vmem %s3, 512
      %v3072 = vld [vmem:[%s3071] sm:$0xf]
      %v3073 = vld [vmem:[%s3071 + $0x4] sm:$0xf]
      %v3074 = vld [vmem:[%s3071 + $0x8] sm:$0xf]
      %v3075 = vld [vmem:[%s3071 + $0xc] sm:$0xf]
      %v3076 = vld [vmem:[%s3071 + $0x10] sm:$0xf]
      %v3077 = vld [vmem:[%s3071 + $0x14] sm:$0xf]
      %v3078 = vld [vmem:[%s3071 + $0x18] sm:$0xf]
      %v3079 = vld [vmem:[%s3071 + $0x1c] sm:$0xf]
      %v3080 = vld [vmem:[%s3071 + $0x20] sm:$0xf]
      %v3081 = vld [vmem:[%s3071 + $0x24] sm:$0xf]
      %v3082 = vld [vmem:[%s3071 + $0x28] sm:$0xf]
      %v3083 = vld [vmem:[%s3071 + $0x2c] sm:$0xf]
      %v3084 = vld [vmem:[%s3071 + $0x30] sm:$0xf]
      %v3085 = vld [vmem:[%s3071 + $0x34] sm:$0xf]
      %v3086 = vld [vmem:[%s3071 + $0x38] sm:$0xf]
      %v3087 = vld [vmem:[%s3071 + $0x3c] sm:$0x1]
      %v3104 = vunpack.c.l.b16 %v3072
      %v3105 = vunpack.c.l.b16 %v3073
      %v3106 = vunpack.c.l.b16 %v3074
      %v3107 = vunpack.c.l.b16 %v3075
      %v3108 = vunpack.c.l.b16 %v3076
      %v3109 = vunpack.c.l.b16 %v3077
      %v3110 = vunpack.c.l.b16 %v3078
      %v3111 = vunpack.c.l.b16 %v3079
      %v3112 = vunpack.c.l.b16 %v3080
      %v3113 = vunpack.c.l.b16 %v3081
      %v3114 = vunpack.c.l.b16 %v3082
      %v3115 = vunpack.c.l.b16 %v3083
      %v3116 = vunpack.c.l.b16 %v3084
      %v3117 = vunpack.c.l.b16 %v3085
      %v3118 = vunpack.c.l.b16 %v3086
      %v3119 = vunpack.c.l.b16 %v3087
      %v3120 = vpack.c.b16 %v3105, %v3104
      %v3121 = vpack.c.b16 %v3107, %v3106
      %v3122 = vpack.c.b16 %v3109, %v3108
      %v3123 = vpack.c.b16 %v3111, %v3110
      %v3124 = vpack.c.b16 %v3113, %v3112
      %v3125 = vpack.c.b16 %v3115, %v3114
      %v3126 = vpack.c.b16 %v3117, %v3116
      %v3127 = vpack.c.b16 %v3119, %v3118
      %v3136 = vsel %vm2471, %v2382, 0
      %v3139 = vand.u32 %v3127, %v2478
      %3141 = vmatpush.bf16.msra.mxu0 %v3139
      %3142 = vmatpush.bf16.msra.mxu0 %v3126
      %3143 = vmatpush.bf16.msra.mxu0 %v3125
      %3144 = vmatpush.bf16.msra.mxu0 %v3124
      %3145 = vmatpush.bf16.msra.mxu0 %v3123
      %3146 = vmatpush.bf16.msra.mxu0 %v3122
      %3147 = vmatpush.bf16.msra.mxu0 %v3121
      %3148 = vmatpush.bf16.msra.mxu0 %v3120
      %3149 = vmatmul.bf16.gmra.mxu0 %v3136
      %v3150 = vpop.f32.mrf.mxu0
      %v3151 = vadd.f32 0.0, %v3150
      %v3152 = vpop.f32.mrf.mxu0
      %3153 = vdwg.mxu0
      %v3154 = vadd.f32 %v3070, %v3151
      %s3155 = scalar_lea.vmem %s3, 576
      %v3156 = vld [vmem:[%s3155] sm:$0xf]
      %v3157 = vld [vmem:[%s3155 + $0x4] sm:$0xf]
      %v3158 = vld [vmem:[%s3155 + $0x8] sm:$0xf]
      %v3159 = vld [vmem:[%s3155 + $0xc] sm:$0xf]
      %v3160 = vld [vmem:[%s3155 + $0x10] sm:$0xf]
      %v3161 = vld [vmem:[%s3155 + $0x14] sm:$0xf]
      %v3162 = vld [vmem:[%s3155 + $0x18] sm:$0xf]
      %v3163 = vld [vmem:[%s3155 + $0x1c] sm:$0xf]
      %v3164 = vld [vmem:[%s3155 + $0x20] sm:$0xf]
      %v3165 = vld [vmem:[%s3155 + $0x24] sm:$0xf]
      %v3166 = vld [vmem:[%s3155 + $0x28] sm:$0xf]
      %v3167 = vld [vmem:[%s3155 + $0x2c] sm:$0xf]
      %v3168 = vld [vmem:[%s3155 + $0x30] sm:$0xf]
      %v3169 = vld [vmem:[%s3155 + $0x34] sm:$0xf]
      %v3170 = vld [vmem:[%s3155 + $0x38] sm:$0xf]
      %v3171 = vld [vmem:[%s3155 + $0x3c] sm:$0x1]
      %v3173 = vunpack.c.l.b16 %v2382
      %v3174 = vpack.c.b16 %v3173, %v3173
      %v3176 = vshrl.u32 %v3174, 16
      %v3194 = vunpack.c.l.b16 %v3156
      %v3195 = vunpack.c.l.b16 %v3157
      %v3196 = vunpack.c.l.b16 %v3158
      %v3197 = vunpack.c.l.b16 %v3159
      %v3198 = vunpack.c.l.b16 %v3160
      %v3199 = vunpack.c.l.b16 %v3161
      %v3200 = vunpack.c.l.b16 %v3162
      %v3201 = vunpack.c.l.b16 %v3163
      %v3202 = vunpack.c.l.b16 %v3164
      %v3203 = vunpack.c.l.b16 %v3165
      %v3204 = vunpack.c.l.b16 %v3166
      %v3205 = vunpack.c.l.b16 %v3167
      %v3206 = vunpack.c.l.b16 %v3168
      %v3207 = vunpack.c.l.b16 %v3169
      %v3208 = vunpack.c.l.b16 %v3170
      %v3209 = vunpack.c.l.b16 %v3171
      %v3210 = vpack.c.b16 %v3195, %v3194
      %v3211 = vpack.c.b16 %v3197, %v3196
      %v3212 = vpack.c.b16 %v3199, %v3198
      %v3213 = vpack.c.b16 %v3201, %v3200
      %v3214 = vpack.c.b16 %v3203, %v3202
      %v3215 = vpack.c.b16 %v3205, %v3204
      %v3216 = vpack.c.b16 %v3207, %v3206
      %v3217 = vpack.c.b16 %v3209, %v3208
      %v3226 = vsel %vm2471, %v3176, 0
      %v3229 = vand.u32 %v3217, %v2478
      %3231 = vmatpush.bf16.msra.mxu0 %v3229
      %3232 = vmatpush.bf16.msra.mxu0 %v3216
      %3233 = vmatpush.bf16.msra.mxu0 %v3215
      %3234 = vmatpush.bf16.msra.mxu0 %v3214
      %3235 = vmatpush.bf16.msra.mxu0 %v3213
      %3236 = vmatpush.bf16.msra.mxu0 %v3212
      %3237 = vmatpush.bf16.msra.mxu0 %v3211
      %3238 = vmatpush.bf16.msra.mxu0 %v3210
      %3239 = vmatmul.bf16.gmra.mxu0 %v3226
      %v3240 = vpop.f32.mrf.mxu0
      %v3241 = vadd.f32 0.0, %v3240
      %v3242 = vpop.f32.mrf.mxu0
      %3243 = vdwg.mxu0
      %v3244 = vadd.f32 %v3154, %v3241
      %s3245 = scalar_lea.vmem %s3, 640
      %v3246 = vld [vmem:[%s3245] sm:$0xf]
      %v3247 = vld [vmem:[%s3245 + $0x4] sm:$0xf]
      %v3248 = vld [vmem:[%s3245 + $0x8] sm:$0xf]
      %v3249 = vld [vmem:[%s3245 + $0xc] sm:$0xf]
      %v3250 = vld [vmem:[%s3245 + $0x10] sm:$0xf]
      %v3251 = vld [vmem:[%s3245 + $0x14] sm:$0xf]
      %v3252 = vld [vmem:[%s3245 + $0x18] sm:$0xf]
      %v3253 = vld [vmem:[%s3245 + $0x1c] sm:$0xf]
      %v3254 = vld [vmem:[%s3245 + $0x20] sm:$0xf]
      %v3255 = vld [vmem:[%s3245 + $0x24] sm:$0xf]
      %v3256 = vld [vmem:[%s3245 + $0x28] sm:$0xf]
      %v3257 = vld [vmem:[%s3245 + $0x2c] sm:$0xf]
      %v3258 = vld [vmem:[%s3245 + $0x30] sm:$0xf]
      %v3259 = vld [vmem:[%s3245 + $0x34] sm:$0xf]
      %v3260 = vld [vmem:[%s3245 + $0x38] sm:$0xf]
      %v3261 = vld [vmem:[%s3245 + $0x3c] sm:$0x1]
      %v3262 = vrot.slane %v3174, 1
      %v3279 = vunpack.c.l.b16 %v3246
      %v3280 = vunpack.c.l.b16 %v3247
      %v3281 = vunpack.c.l.b16 %v3248
      %v3282 = vunpack.c.l.b16 %v3249
      %v3283 = vunpack.c.l.b16 %v3250
      %v3284 = vunpack.c.l.b16 %v3251
      %v3285 = vunpack.c.l.b16 %v3252
      %v3286 = vunpack.c.l.b16 %v3253
      %v3287 = vunpack.c.l.b16 %v3254
      %v3288 = vunpack.c.l.b16 %v3255
      %v3289 = vunpack.c.l.b16 %v3256
      %v3290 = vunpack.c.l.b16 %v3257
      %v3291 = vunpack.c.l.b16 %v3258
      %v3292 = vunpack.c.l.b16 %v3259
      %v3293 = vunpack.c.l.b16 %v3260
      %v3294 = vunpack.c.l.b16 %v3261
      %v3295 = vpack.c.b16 %v3280, %v3279
      %v3296 = vpack.c.b16 %v3282, %v3281
      %v3297 = vpack.c.b16 %v3284, %v3283
      %v3298 = vpack.c.b16 %v3286, %v3285
      %v3299 = vpack.c.b16 %v3288, %v3287
      %v3300 = vpack.c.b16 %v3290, %v3289
      %v3301 = vpack.c.b16 %v3292, %v3291
      %v3302 = vpack.c.b16 %v3294, %v3293
      %v3311 = vsel %vm2471, %v3262, 0
      %v3314 = vand.u32 %v3302, %v2478
      %3316 = vmatpush.bf16.msra.mxu0 %v3314
      %3317 = vmatpush.bf16.msra.mxu0 %v3301
      %3318 = vmatpush.bf16.msra.mxu0 %v3300
      %3319 = vmatpush.bf16.msra.mxu0 %v3299
      %3320 = vmatpush.bf16.msra.mxu0 %v3298
      %3321 = vmatpush.bf16.msra.mxu0 %v3297
      %3322 = vmatpush.bf16.msra.mxu0 %v3296
      %3323 = vmatpush.bf16.msra.mxu0 %v3295
      %3324 = vmatmul.bf16.gmra.mxu0 %v3311
      %v3325 = vpop.f32.mrf.mxu0
      %v3326 = vadd.f32 0.0, %v3325
      %v3327 = vpop.f32.mrf.mxu0
      %3328 = vdwg.mxu0
      %v3329 = vadd.f32 %v3244, %v3326
      %s3330 = scalar_lea.vmem %s3, 704
      %v3331 = vld [vmem:[%s3330] sm:$0xf]
      %v3332 = vld [vmem:[%s3330 + $0x4] sm:$0xf]
      %v3333 = vld [vmem:[%s3330 + $0x8] sm:$0xf]
      %v3334 = vld [vmem:[%s3330 + $0xc] sm:$0xf]
      %v3335 = vld [vmem:[%s3330 + $0x10] sm:$0xf]
      %v3336 = vld [vmem:[%s3330 + $0x14] sm:$0xf]
      %v3337 = vld [vmem:[%s3330 + $0x18] sm:$0xf]
      %v3338 = vld [vmem:[%s3330 + $0x1c] sm:$0xf]
      %v3339 = vld [vmem:[%s3330 + $0x20] sm:$0xf]
      %v3340 = vld [vmem:[%s3330 + $0x24] sm:$0xf]
      %v3341 = vld [vmem:[%s3330 + $0x28] sm:$0xf]
      %v3342 = vld [vmem:[%s3330 + $0x2c] sm:$0xf]
      %v3343 = vld [vmem:[%s3330 + $0x30] sm:$0xf]
      %v3344 = vld [vmem:[%s3330 + $0x34] sm:$0xf]
      %v3345 = vld [vmem:[%s3330 + $0x38] sm:$0xf]
      %v3346 = vld [vmem:[%s3330 + $0x3c] sm:$0x1]
      %v3347 = vrot.slane %v3176, 1
      %v3364 = vunpack.c.l.b16 %v3331
      %v3365 = vunpack.c.l.b16 %v3332
      %v3366 = vunpack.c.l.b16 %v3333
      %v3367 = vunpack.c.l.b16 %v3334
      %v3368 = vunpack.c.l.b16 %v3335
      %v3369 = vunpack.c.l.b16 %v3336
      %v3370 = vunpack.c.l.b16 %v3337
      %v3371 = vunpack.c.l.b16 %v3338
      %v3372 = vunpack.c.l.b16 %v3339
      %v3373 = vunpack.c.l.b16 %v3340
      %v3374 = vunpack.c.l.b16 %v3341
      %v3375 = vunpack.c.l.b16 %v3342
      %v3376 = vunpack.c.l.b16 %v3343
      %v3377 = vunpack.c.l.b16 %v3344
      %v3378 = vunpack.c.l.b16 %v3345
      %v3379 = vunpack.c.l.b16 %v3346
      %v3380 = vpack.c.b16 %v3365, %v3364
      %v3381 = vpack.c.b16 %v3367, %v3366
      %v3382 = vpack.c.b16 %v3369, %v3368
      %v3383 = vpack.c.b16 %v3371, %v3370
      %v3384 = vpack.c.b16 %v3373, %v3372
      %v3385 = vpack.c.b16 %v3375, %v3374
      %v3386 = vpack.c.b16 %v3377, %v3376
      %v3387 = vpack.c.b16 %v3379, %v3378
      %v3396 = vsel %vm2471, %v3347, 0
      %v3399 = vand.u32 %v3387, %v2478
      %3401 = vmatpush.bf16.msra.mxu0 %v3399
      %3402 = vmatpush.bf16.msra.mxu0 %v3386
      %3403 = vmatpush.bf16.msra.mxu0 %v3385
      %3404 = vmatpush.bf16.msra.mxu0 %v3384
      %3405 = vmatpush.bf16.msra.mxu0 %v3383
      %3406 = vmatpush.bf16.msra.mxu0 %v3382
      %3407 = vmatpush.bf16.msra.mxu0 %v3381
      %3408 = vmatpush.bf16.msra.mxu0 %v3380
      %3409 = vmatmul.bf16.gmra.mxu0 %v3396
      %v3410 = vpop.f32.mrf.mxu0
      %v3411 = vadd.f32 0.0, %v3410
      %v3412 = vpop.f32.mrf.mxu0
      %3413 = vdwg.mxu0
      %v3414 = vadd.f32 %v3329, %v3411
      %s3415 = scalar_lea.vmem %s3, 768
      %v3416 = vld [vmem:[%s3415] sm:$0xf]
      %v3417 = vld [vmem:[%s3415 + $0x4] sm:$0xf]
      %v3418 = vld [vmem:[%s3415 + $0x8] sm:$0xf]
      %v3419 = vld [vmem:[%s3415 + $0xc] sm:$0xf]
      %v3420 = vld [vmem:[%s3415 + $0x10] sm:$0xf]
      %v3421 = vld [vmem:[%s3415 + $0x14] sm:$0xf]
      %v3422 = vld [vmem:[%s3415 + $0x18] sm:$0xf]
      %v3423 = vld [vmem:[%s3415 + $0x1c] sm:$0xf]
      %v3424 = vld [vmem:[%s3415 + $0x20] sm:$0xf]
      %v3425 = vld [vmem:[%s3415 + $0x24] sm:$0xf]
      %v3426 = vld [vmem:[%s3415 + $0x28] sm:$0xf]
      %v3427 = vld [vmem:[%s3415 + $0x2c] sm:$0xf]
      %v3428 = vld [vmem:[%s3415 + $0x30] sm:$0xf]
      %v3429 = vld [vmem:[%s3415 + $0x34] sm:$0xf]
      %v3430 = vld [vmem:[%s3415 + $0x38] sm:$0xf]
      %v3431 = vld [vmem:[%s3415 + $0x3c] sm:$0x1]
      %v3432 = vrot.slane %v3174, 2
      %v3449 = vunpack.c.l.b16 %v3416
      %v3450 = vunpack.c.l.b16 %v3417
      %v3451 = vunpack.c.l.b16 %v3418
      %v3452 = vunpack.c.l.b16 %v3419
      %v3453 = vunpack.c.l.b16 %v3420
      %v3454 = vunpack.c.l.b16 %v3421
      %v3455 = vunpack.c.l.b16 %v3422
      %v3456 = vunpack.c.l.b16 %v3423
      %v3457 = vunpack.c.l.b16 %v3424
      %v3458 = vunpack.c.l.b16 %v3425
      %v3459 = vunpack.c.l.b16 %v3426
      %v3460 = vunpack.c.l.b16 %v3427
      %v3461 = vunpack.c.l.b16 %v3428
      %v3462 = vunpack.c.l.b16 %v3429
      %v3463 = vunpack.c.l.b16 %v3430
      %v3464 = vunpack.c.l.b16 %v3431
      %v3465 = vpack.c.b16 %v3450, %v3449
      %v3466 = vpack.c.b16 %v3452, %v3451
      %v3467 = vpack.c.b16 %v3454, %v3453
      %v3468 = vpack.c.b16 %v3456, %v3455
      %v3469 = vpack.c.b16 %v3458, %v3457
      %v3470 = vpack.c.b16 %v3460, %v3459
      %v3471 = vpack.c.b16 %v3462, %v3461
      %v3472 = vpack.c.b16 %v3464, %v3463
      %v3481 = vsel %vm2471, %v3432, 0
      %v3484 = vand.u32 %v3472, %v2478
      %3486 = vmatpush.bf16.msra.mxu0 %v3484
      %3487 = vmatpush.bf16.msra.mxu0 %v3471
      %3488 = vmatpush.bf16.msra.mxu0 %v3470
      %3489 = vmatpush.bf16.msra.mxu0 %v3469
      %3490 = vmatpush.bf16.msra.mxu0 %v3468
      %3491 = vmatpush.bf16.msra.mxu0 %v3467
      %3492 = vmatpush.bf16.msra.mxu0 %v3466
      %3493 = vmatpush.bf16.msra.mxu0 %v3465
      %3494 = vmatmul.bf16.gmra.mxu0 %v3481
      %v3495 = vpop.f32.mrf.mxu0
      %v3496 = vadd.f32 0.0, %v3495
      %v3497 = vpop.f32.mrf.mxu0
      %3498 = vdwg.mxu0
      %v3499 = vadd.f32 %v3414, %v3496
      %s3500 = scalar_lea.vmem %s3, 832
      %v3501 = vld [vmem:[%s3500] sm:$0xf]
      %v3502 = vld [vmem:[%s3500 + $0x4] sm:$0xf]
      %v3503 = vld [vmem:[%s3500 + $0x8] sm:$0xf]
      %v3504 = vld [vmem:[%s3500 + $0xc] sm:$0xf]
      %v3505 = vld [vmem:[%s3500 + $0x10] sm:$0xf]
      %v3506 = vld [vmem:[%s3500 + $0x14] sm:$0xf]
      %v3507 = vld [vmem:[%s3500 + $0x18] sm:$0xf]
      %v3508 = vld [vmem:[%s3500 + $0x1c] sm:$0xf]
      %v3509 = vld [vmem:[%s3500 + $0x20] sm:$0xf]
      %v3510 = vld [vmem:[%s3500 + $0x24] sm:$0xf]
      %v3511 = vld [vmem:[%s3500 + $0x28] sm:$0xf]
      %v3512 = vld [vmem:[%s3500 + $0x2c] sm:$0xf]
      %v3513 = vld [vmem:[%s3500 + $0x30] sm:$0xf]
      %v3514 = vld [vmem:[%s3500 + $0x34] sm:$0xf]
      %v3515 = vld [vmem:[%s3500 + $0x38] sm:$0xf]
      %v3516 = vld [vmem:[%s3500 + $0x3c] sm:$0x1]
      %v3517 = vrot.slane %v3176, 2
      %v3534 = vunpack.c.l.b16 %v3501
      %v3535 = vunpack.c.l.b16 %v3502
      %v3536 = vunpack.c.l.b16 %v3503
      %v3537 = vunpack.c.l.b16 %v3504
      %v3538 = vunpack.c.l.b16 %v3505
      %v3539 = vunpack.c.l.b16 %v3506
      %v3540 = vunpack.c.l.b16 %v3507
      %v3541 = vunpack.c.l.b16 %v3508
      %v3542 = vunpack.c.l.b16 %v3509
      %v3543 = vunpack.c.l.b16 %v3510
      %v3544 = vunpack.c.l.b16 %v3511
      %v3545 = vunpack.c.l.b16 %v3512
      %v3546 = vunpack.c.l.b16 %v3513
      %v3547 = vunpack.c.l.b16 %v3514
      %v3548 = vunpack.c.l.b16 %v3515
      %v3549 = vunpack.c.l.b16 %v3516
      %v3550 = vpack.c.b16 %v3535, %v3534
      %v3551 = vpack.c.b16 %v3537, %v3536
      %v3552 = vpack.c.b16 %v3539, %v3538
      %v3553 = vpack.c.b16 %v3541, %v3540
      %v3554 = vpack.c.b16 %v3543, %v3542
      %v3555 = vpack.c.b16 %v3545, %v3544
      %v3556 = vpack.c.b16 %v3547, %v3546
      %v3557 = vpack.c.b16 %v3549, %v3548
      %v3566 = vsel %vm2471, %v3517, 0
      %v3569 = vand.u32 %v3557, %v2478
      %3571 = vmatpush.bf16.msra.mxu0 %v3569
      %3572 = vmatpush.bf16.msra.mxu0 %v3556
      %3573 = vmatpush.bf16.msra.mxu0 %v3555
      %3574 = vmatpush.bf16.msra.mxu0 %v3554
      %3575 = vmatpush.bf16.msra.mxu0 %v3553
      %3576 = vmatpush.bf16.msra.mxu0 %v3552
      %3577 = vmatpush.bf16.msra.mxu0 %v3551
      %3578 = vmatpush.bf16.msra.mxu0 %v3550
      %3579 = vmatmul.bf16.gmra.mxu0 %v3566
      %v3580 = vpop.f32.mrf.mxu0
      %v3581 = vadd.f32 0.0, %v3580
      %v3582 = vpop.f32.mrf.mxu0
      %3583 = vdwg.mxu0
      %v3584 = vadd.f32 %v3499, %v3581
      %s3585 = scalar_lea.vmem %s3, 896
      %v3586 = vld [vmem:[%s3585] sm:$0xf]
      %v3587 = vld [vmem:[%s3585 + $0x4] sm:$0xf]
      %v3588 = vld [vmem:[%s3585 + $0x8] sm:$0xf]
      %v3589 = vld [vmem:[%s3585 + $0xc] sm:$0xf]
      %v3590 = vld [vmem:[%s3585 + $0x10] sm:$0xf]
      %v3591 = vld [vmem:[%s3585 + $0x14] sm:$0xf]
      %v3592 = vld [vmem:[%s3585 + $0x18] sm:$0xf]
      %v3593 = vld [vmem:[%s3585 + $0x1c] sm:$0xf]
      %v3594 = vld [vmem:[%s3585 + $0x20] sm:$0xf]
      %v3595 = vld [vmem:[%s3585 + $0x24] sm:$0xf]
      %v3596 = vld [vmem:[%s3585 + $0x28] sm:$0xf]
      %v3597 = vld [vmem:[%s3585 + $0x2c] sm:$0xf]
      %v3598 = vld [vmem:[%s3585 + $0x30] sm:$0xf]
      %v3599 = vld [vmem:[%s3585 + $0x34] sm:$0xf]
      %v3600 = vld [vmem:[%s3585 + $0x38] sm:$0xf]
      %v3601 = vld [vmem:[%s3585 + $0x3c] sm:$0x1]
      %v3602 = vrot.slane %v3174, 3
      %v3619 = vunpack.c.l.b16 %v3586
      %v3620 = vunpack.c.l.b16 %v3587
      %v3621 = vunpack.c.l.b16 %v3588
      %v3622 = vunpack.c.l.b16 %v3589
      %v3623 = vunpack.c.l.b16 %v3590
      %v3624 = vunpack.c.l.b16 %v3591
      %v3625 = vunpack.c.l.b16 %v3592
      %v3626 = vunpack.c.l.b16 %v3593
      %v3627 = vunpack.c.l.b16 %v3594
      %v3628 = vunpack.c.l.b16 %v3595
      %v3629 = vunpack.c.l.b16 %v3596
      %v3630 = vunpack.c.l.b16 %v3597
      %v3631 = vunpack.c.l.b16 %v3598
      %v3632 = vunpack.c.l.b16 %v3599
      %v3633 = vunpack.c.l.b16 %v3600
      %v3634 = vunpack.c.l.b16 %v3601
      %v3635 = vpack.c.b16 %v3620, %v3619
      %v3636 = vpack.c.b16 %v3622, %v3621
      %v3637 = vpack.c.b16 %v3624, %v3623
      %v3638 = vpack.c.b16 %v3626, %v3625
      %v3639 = vpack.c.b16 %v3628, %v3627
      %v3640 = vpack.c.b16 %v3630, %v3629
      %v3641 = vpack.c.b16 %v3632, %v3631
      %v3642 = vpack.c.b16 %v3634, %v3633
      %v3651 = vsel %vm2471, %v3602, 0
      %v3654 = vand.u32 %v3642, %v2478
      %3656 = vmatpush.bf16.msra.mxu0 %v3654
      %3657 = vmatpush.bf16.msra.mxu0 %v3641
      %3658 = vmatpush.bf16.msra.mxu0 %v3640
      %3659 = vmatpush.bf16.msra.mxu0 %v3639
      %3660 = vmatpush.bf16.msra.mxu0 %v3638
      %3661 = vmatpush.bf16.msra.mxu0 %v3637
      %3662 = vmatpush.bf16.msra.mxu0 %v3636
      %3663 = vmatpush.bf16.msra.mxu0 %v3635
      %3664 = vmatmul.bf16.gmra.mxu0 %v3651
      %v3665 = vpop.f32.mrf.mxu0
      %v3666 = vadd.f32 0.0, %v3665
      %v3667 = vpop.f32.mrf.mxu0
      %3668 = vdwg.mxu0
      %v3669 = vadd.f32 %v3584, %v3666
      %s3670 = scalar_lea.vmem %s3, 960
      %v3671 = vld [vmem:[%s3670] sm:$0xf]
      %v3672 = vld [vmem:[%s3670 + $0x4] sm:$0xf]
      %v3673 = vld [vmem:[%s3670 + $0x8] sm:$0xf]
      %v3674 = vld [vmem:[%s3670 + $0xc] sm:$0xf]
      %v3675 = vld [vmem:[%s3670 + $0x10] sm:$0xf]
      %v3676 = vld [vmem:[%s3670 + $0x14] sm:$0xf]
      %v3677 = vld [vmem:[%s3670 + $0x18] sm:$0xf]
      %v3678 = vld [vmem:[%s3670 + $0x1c] sm:$0xf]
      %v3679 = vld [vmem:[%s3670 + $0x20] sm:$0xf]
      %v3680 = vld [vmem:[%s3670 + $0x24] sm:$0xf]
      %v3681 = vld [vmem:[%s3670 + $0x28] sm:$0xf]
      %v3682 = vld [vmem:[%s3670 + $0x2c] sm:$0xf]
      %v3683 = vld [vmem:[%s3670 + $0x30] sm:$0xf]
      %v3684 = vld [vmem:[%s3670 + $0x34] sm:$0xf]
      %v3685 = vld [vmem:[%s3670 + $0x38] sm:$0xf]
      %v3686 = vld [vmem:[%s3670 + $0x3c] sm:$0x1]
      %v3687 = vrot.slane %v3176, 3
      %v3704 = vunpack.c.l.b16 %v3671
      %v3705 = vunpack.c.l.b16 %v3672
      %v3706 = vunpack.c.l.b16 %v3673
      %v3707 = vunpack.c.l.b16 %v3674
      %v3708 = vunpack.c.l.b16 %v3675
      %v3709 = vunpack.c.l.b16 %v3676
      %v3710 = vunpack.c.l.b16 %v3677
      %v3711 = vunpack.c.l.b16 %v3678
      %v3712 = vunpack.c.l.b16 %v3679
      %v3713 = vunpack.c.l.b16 %v3680
      %v3714 = vunpack.c.l.b16 %v3681
      %v3715 = vunpack.c.l.b16 %v3682
      %v3716 = vunpack.c.l.b16 %v3683
      %v3717 = vunpack.c.l.b16 %v3684
      %v3718 = vunpack.c.l.b16 %v3685
      %v3719 = vunpack.c.l.b16 %v3686
      %v3720 = vpack.c.b16 %v3705, %v3704
      %v3721 = vpack.c.b16 %v3707, %v3706
      %v3722 = vpack.c.b16 %v3709, %v3708
      %v3723 = vpack.c.b16 %v3711, %v3710
      %v3724 = vpack.c.b16 %v3713, %v3712
      %v3725 = vpack.c.b16 %v3715, %v3714
      %v3726 = vpack.c.b16 %v3717, %v3716
      %v3727 = vpack.c.b16 %v3719, %v3718
      %v3736 = vsel %vm2471, %v3687, 0
      %v3739 = vand.u32 %v3727, %v2478
      %3741 = vmatpush.bf16.msra.mxu0 %v3739
      %3742 = vmatpush.bf16.msra.mxu0 %v3726
      %3743 = vmatpush.bf16.msra.mxu0 %v3725
      %3744 = vmatpush.bf16.msra.mxu0 %v3724
      %3745 = vmatpush.bf16.msra.mxu0 %v3723
      %3746 = vmatpush.bf16.msra.mxu0 %v3722
      %3747 = vmatpush.bf16.msra.mxu0 %v3721
      %3748 = vmatpush.bf16.msra.mxu0 %v3720
      %3749 = vmatmul.bf16.gmra.mxu0 %v3736
      %v3750 = vpop.f32.mrf.mxu0
      %v3751 = vadd.f32 0.0, %v3750
      %v3752 = vpop.f32.mrf.mxu0
      %3753 = vdwg.mxu0
      %v3754 = vadd.f32 %v3669, %v3751
      %s3755 = scalar_lea.vmem %s3, 1024
      %v3756 = vld [vmem:[%s3755] sm:$0xf]
      %v3757 = vld [vmem:[%s3755 + $0x4] sm:$0xf]
      %v3758 = vld [vmem:[%s3755 + $0x8] sm:$0xf]
      %v3759 = vld [vmem:[%s3755 + $0xc] sm:$0xf]
      %v3760 = vld [vmem:[%s3755 + $0x10] sm:$0xf]
      %v3761 = vld [vmem:[%s3755 + $0x14] sm:$0xf]
      %v3762 = vld [vmem:[%s3755 + $0x18] sm:$0xf]
      %v3763 = vld [vmem:[%s3755 + $0x1c] sm:$0xf]
      %v3764 = vld [vmem:[%s3755 + $0x20] sm:$0xf]
      %v3765 = vld [vmem:[%s3755 + $0x24] sm:$0xf]
      %v3766 = vld [vmem:[%s3755 + $0x28] sm:$0xf]
      %v3767 = vld [vmem:[%s3755 + $0x2c] sm:$0xf]
      %v3768 = vld [vmem:[%s3755 + $0x30] sm:$0xf]
      %v3769 = vld [vmem:[%s3755 + $0x34] sm:$0xf]
      %v3770 = vld [vmem:[%s3755 + $0x38] sm:$0xf]
      %v3771 = vld [vmem:[%s3755 + $0x3c] sm:$0x1]
      %v3788 = vunpack.c.l.b16 %v3756
      %v3789 = vunpack.c.l.b16 %v3757
      %v3790 = vunpack.c.l.b16 %v3758
      %v3791 = vunpack.c.l.b16 %v3759
      %v3792 = vunpack.c.l.b16 %v3760
      %v3793 = vunpack.c.l.b16 %v3761
      %v3794 = vunpack.c.l.b16 %v3762
      %v3795 = vunpack.c.l.b16 %v3763
      %v3796 = vunpack.c.l.b16 %v3764
      %v3797 = vunpack.c.l.b16 %v3765
      %v3798 = vunpack.c.l.b16 %v3766
      %v3799 = vunpack.c.l.b16 %v3767
      %v3800 = vunpack.c.l.b16 %v3768
      %v3801 = vunpack.c.l.b16 %v3769
      %v3802 = vunpack.c.l.b16 %v3770
      %v3803 = vunpack.c.l.b16 %v3771
      %v3804 = vpack.c.b16 %v3789, %v3788
      %v3805 = vpack.c.b16 %v3791, %v3790
      %v3806 = vpack.c.b16 %v3793, %v3792
      %v3807 = vpack.c.b16 %v3795, %v3794
      %v3808 = vpack.c.b16 %v3797, %v3796
      %v3809 = vpack.c.b16 %v3799, %v3798
      %v3810 = vpack.c.b16 %v3801, %v3800
      %v3811 = vpack.c.b16 %v3803, %v3802
      %v3820 = vsel %vm2471, %v2383, 0
      %v3823 = vand.u32 %v3811, %v2478
      %3825 = vmatpush.bf16.msra.mxu0 %v3823
      %3826 = vmatpush.bf16.msra.mxu0 %v3810
      %3827 = vmatpush.bf16.msra.mxu0 %v3809
      %3828 = vmatpush.bf16.msra.mxu0 %v3808
      %3829 = vmatpush.bf16.msra.mxu0 %v3807
      %3830 = vmatpush.bf16.msra.mxu0 %v3806
      %3831 = vmatpush.bf16.msra.mxu0 %v3805
      %3832 = vmatpush.bf16.msra.mxu0 %v3804
      %3833 = vmatmul.bf16.gmra.mxu0 %v3820
      %v3834 = vpop.f32.mrf.mxu0
      %v3835 = vadd.f32 0.0, %v3834
      %v3836 = vpop.f32.mrf.mxu0
      %3837 = vdwg.mxu0
      %v3838 = vadd.f32 %v3754, %v3835
      %s3839 = scalar_lea.vmem %s3, 1088
      %v3840 = vld [vmem:[%s3839] sm:$0xf]
      %v3841 = vld [vmem:[%s3839 + $0x4] sm:$0xf]
      %v3842 = vld [vmem:[%s3839 + $0x8] sm:$0xf]
      %v3843 = vld [vmem:[%s3839 + $0xc] sm:$0xf]
      %v3844 = vld [vmem:[%s3839 + $0x10] sm:$0xf]
      %v3845 = vld [vmem:[%s3839 + $0x14] sm:$0xf]
      %v3846 = vld [vmem:[%s3839 + $0x18] sm:$0xf]
      %v3847 = vld [vmem:[%s3839 + $0x1c] sm:$0xf]
      %v3848 = vld [vmem:[%s3839 + $0x20] sm:$0xf]
      %v3849 = vld [vmem:[%s3839 + $0x24] sm:$0xf]
      %v3850 = vld [vmem:[%s3839 + $0x28] sm:$0xf]
      %v3851 = vld [vmem:[%s3839 + $0x2c] sm:$0xf]
      %v3852 = vld [vmem:[%s3839 + $0x30] sm:$0xf]
      %v3853 = vld [vmem:[%s3839 + $0x34] sm:$0xf]
      %v3854 = vld [vmem:[%s3839 + $0x38] sm:$0xf]
      %v3855 = vld [vmem:[%s3839 + $0x3c] sm:$0x1]
      %v3857 = vunpack.c.l.b16 %v2383
      %v3858 = vpack.c.b16 %v3857, %v3857
      %v3860 = vshrl.u32 %v3858, 16
      %v3878 = vunpack.c.l.b16 %v3840
      %v3879 = vunpack.c.l.b16 %v3841
      %v3880 = vunpack.c.l.b16 %v3842
      %v3881 = vunpack.c.l.b16 %v3843
      %v3882 = vunpack.c.l.b16 %v3844
      %v3883 = vunpack.c.l.b16 %v3845
      %v3884 = vunpack.c.l.b16 %v3846
      %v3885 = vunpack.c.l.b16 %v3847
      %v3886 = vunpack.c.l.b16 %v3848
      %v3887 = vunpack.c.l.b16 %v3849
      %v3888 = vunpack.c.l.b16 %v3850
      %v3889 = vunpack.c.l.b16 %v3851
      %v3890 = vunpack.c.l.b16 %v3852
      %v3891 = vunpack.c.l.b16 %v3853
      %v3892 = vunpack.c.l.b16 %v3854
      %v3893 = vunpack.c.l.b16 %v3855
      %v3894 = vpack.c.b16 %v3879, %v3878
      %v3895 = vpack.c.b16 %v3881, %v3880
      %v3896 = vpack.c.b16 %v3883, %v3882
      %v3897 = vpack.c.b16 %v3885, %v3884
      %v3898 = vpack.c.b16 %v3887, %v3886
      %v3899 = vpack.c.b16 %v3889, %v3888
      %v3900 = vpack.c.b16 %v3891, %v3890
      %v3901 = vpack.c.b16 %v3893, %v3892
      %v3910 = vsel %vm2471, %v3860, 0
      %v3913 = vand.u32 %v3901, %v2478
      %3915 = vmatpush.bf16.msra.mxu0 %v3913
      %3916 = vmatpush.bf16.msra.mxu0 %v3900
      %3917 = vmatpush.bf16.msra.mxu0 %v3899
      %3918 = vmatpush.bf16.msra.mxu0 %v3898
      %3919 = vmatpush.bf16.msra.mxu0 %v3897
      %3920 = vmatpush.bf16.msra.mxu0 %v3896
      %3921 = vmatpush.bf16.msra.mxu0 %v3895
      %3922 = vmatpush.bf16.msra.mxu0 %v3894
      %3923 = vmatmul.bf16.gmra.mxu0 %v3910
      %v3924 = vpop.f32.mrf.mxu0
      %v3925 = vadd.f32 0.0, %v3924
      %v3926 = vpop.f32.mrf.mxu0
      %3927 = vdwg.mxu0
      %v3928 = vadd.f32 %v3838, %v3925
      %s3929 = scalar_lea.vmem %s3, 1152
      %v3930 = vld [vmem:[%s3929] sm:$0xf]
      %v3931 = vld [vmem:[%s3929 + $0x4] sm:$0xf]
      %v3932 = vld [vmem:[%s3929 + $0x8] sm:$0xf]
      %v3933 = vld [vmem:[%s3929 + $0xc] sm:$0xf]
      %v3934 = vld [vmem:[%s3929 + $0x10] sm:$0xf]
      %v3935 = vld [vmem:[%s3929 + $0x14] sm:$0xf]
      %v3936 = vld [vmem:[%s3929 + $0x18] sm:$0xf]
      %v3937 = vld [vmem:[%s3929 + $0x1c] sm:$0xf]
      %v3938 = vld [vmem:[%s3929 + $0x20] sm:$0xf]
      %v3939 = vld [vmem:[%s3929 + $0x24] sm:$0xf]
      %v3940 = vld [vmem:[%s3929 + $0x28] sm:$0xf]
      %v3941 = vld [vmem:[%s3929 + $0x2c] sm:$0xf]
      %v3942 = vld [vmem:[%s3929 + $0x30] sm:$0xf]
      %v3943 = vld [vmem:[%s3929 + $0x34] sm:$0xf]
      %v3944 = vld [vmem:[%s3929 + $0x38] sm:$0xf]
      %v3945 = vld [vmem:[%s3929 + $0x3c] sm:$0x1]
      %v3946 = vrot.slane %v3858, 1
      %v3963 = vunpack.c.l.b16 %v3930
      %v3964 = vunpack.c.l.b16 %v3931
      %v3965 = vunpack.c.l.b16 %v3932
      %v3966 = vunpack.c.l.b16 %v3933
      %v3967 = vunpack.c.l.b16 %v3934
      %v3968 = vunpack.c.l.b16 %v3935
      %v3969 = vunpack.c.l.b16 %v3936
      %v3970 = vunpack.c.l.b16 %v3937
      %v3971 = vunpack.c.l.b16 %v3938
      %v3972 = vunpack.c.l.b16 %v3939
      %v3973 = vunpack.c.l.b16 %v3940
      %v3974 = vunpack.c.l.b16 %v3941
      %v3975 = vunpack.c.l.b16 %v3942
      %v3976 = vunpack.c.l.b16 %v3943
      %v3977 = vunpack.c.l.b16 %v3944
      %v3978 = vunpack.c.l.b16 %v3945
      %v3979 = vpack.c.b16 %v3964, %v3963
      %v3980 = vpack.c.b16 %v3966, %v3965
      %v3981 = vpack.c.b16 %v3968, %v3967
      %v3982 = vpack.c.b16 %v3970, %v3969
      %v3983 = vpack.c.b16 %v3972, %v3971
      %v3984 = vpack.c.b16 %v3974, %v3973
      %v3985 = vpack.c.b16 %v3976, %v3975
      %v3986 = vpack.c.b16 %v3978, %v3977
      %v3995 = vsel %vm2471, %v3946, 0
      %v3998 = vand.u32 %v3986, %v2478
      %4000 = vmatpush.bf16.msra.mxu0 %v3998
      %4001 = vmatpush.bf16.msra.mxu0 %v3985
      %4002 = vmatpush.bf16.msra.mxu0 %v3984
      %4003 = vmatpush.bf16.msra.mxu0 %v3983
      %4004 = vmatpush.bf16.msra.mxu0 %v3982
      %4005 = vmatpush.bf16.msra.mxu0 %v3981
      %4006 = vmatpush.bf16.msra.mxu0 %v3980
      %4007 = vmatpush.bf16.msra.mxu0 %v3979
      %4008 = vmatmul.bf16.gmra.mxu0 %v3995
      %v4009 = vpop.f32.mrf.mxu0
      %v4010 = vadd.f32 0.0, %v4009
      %v4011 = vpop.f32.mrf.mxu0
      %4012 = vdwg.mxu0
      %v4013 = vadd.f32 %v3928, %v4010
      %s4014 = scalar_lea.vmem %s3, 1216
      %v4015 = vld [vmem:[%s4014] sm:$0xf]
      %v4016 = vld [vmem:[%s4014 + $0x4] sm:$0xf]
      %v4017 = vld [vmem:[%s4014 + $0x8] sm:$0xf]
      %v4018 = vld [vmem:[%s4014 + $0xc] sm:$0xf]
      %v4019 = vld [vmem:[%s4014 + $0x10] sm:$0xf]
      %v4020 = vld [vmem:[%s4014 + $0x14] sm:$0xf]
      %v4021 = vld [vmem:[%s4014 + $0x18] sm:$0xf]
      %v4022 = vld [vmem:[%s4014 + $0x1c] sm:$0xf]
      %v4023 = vld [vmem:[%s4014 + $0x20] sm:$0xf]
      %v4024 = vld [vmem:[%s4014 + $0x24] sm:$0xf]
      %v4025 = vld [vmem:[%s4014 + $0x28] sm:$0xf]
      %v4026 = vld [vmem:[%s4014 + $0x2c] sm:$0xf]
      %v4027 = vld [vmem:[%s4014 + $0x30] sm:$0xf]
      %v4028 = vld [vmem:[%s4014 + $0x34] sm:$0xf]
      %v4029 = vld [vmem:[%s4014 + $0x38] sm:$0xf]
      %v4030 = vld [vmem:[%s4014 + $0x3c] sm:$0x1]
      %v4031 = vrot.slane %v3860, 1
      %v4048 = vunpack.c.l.b16 %v4015
      %v4049 = vunpack.c.l.b16 %v4016
      %v4050 = vunpack.c.l.b16 %v4017
      %v4051 = vunpack.c.l.b16 %v4018
      %v4052 = vunpack.c.l.b16 %v4019
      %v4053 = vunpack.c.l.b16 %v4020
      %v4054 = vunpack.c.l.b16 %v4021
      %v4055 = vunpack.c.l.b16 %v4022
      %v4056 = vunpack.c.l.b16 %v4023
      %v4057 = vunpack.c.l.b16 %v4024
      %v4058 = vunpack.c.l.b16 %v4025
      %v4059 = vunpack.c.l.b16 %v4026
      %v4060 = vunpack.c.l.b16 %v4027
      %v4061 = vunpack.c.l.b16 %v4028
      %v4062 = vunpack.c.l.b16 %v4029
      %v4063 = vunpack.c.l.b16 %v4030
      %v4064 = vpack.c.b16 %v4049, %v4048
      %v4065 = vpack.c.b16 %v4051, %v4050
      %v4066 = vpack.c.b16 %v4053, %v4052
      %v4067 = vpack.c.b16 %v4055, %v4054
      %v4068 = vpack.c.b16 %v4057, %v4056
      %v4069 = vpack.c.b16 %v4059, %v4058
      %v4070 = vpack.c.b16 %v4061, %v4060
      %v4071 = vpack.c.b16 %v4063, %v4062
      %v4080 = vsel %vm2471, %v4031, 0
      %v4083 = vand.u32 %v4071, %v2478
      %4085 = vmatpush.bf16.msra.mxu0 %v4083
      %4086 = vmatpush.bf16.msra.mxu0 %v4070
      %4087 = vmatpush.bf16.msra.mxu0 %v4069
      %4088 = vmatpush.bf16.msra.mxu0 %v4068
      %4089 = vmatpush.bf16.msra.mxu0 %v4067
      %4090 = vmatpush.bf16.msra.mxu0 %v4066
      %4091 = vmatpush.bf16.msra.mxu0 %v4065
      %4092 = vmatpush.bf16.msra.mxu0 %v4064
      %4093 = vmatmul.bf16.gmra.mxu0 %v4080
      %v4094 = vpop.f32.mrf.mxu0
      %v4095 = vadd.f32 0.0, %v4094
      %v4096 = vpop.f32.mrf.mxu0
      %4097 = vdwg.mxu0
      %v4098 = vadd.f32 %v4013, %v4095
      %s4099 = scalar_lea.vmem %s3, 1280
      %v4100 = vld [vmem:[%s4099] sm:$0xf]
      %v4101 = vld [vmem:[%s4099 + $0x4] sm:$0xf]
      %v4102 = vld [vmem:[%s4099 + $0x8] sm:$0xf]
      %v4103 = vld [vmem:[%s4099 + $0xc] sm:$0xf]
      %v4104 = vld [vmem:[%s4099 + $0x10] sm:$0xf]
      %v4105 = vld [vmem:[%s4099 + $0x14] sm:$0xf]
      %v4106 = vld [vmem:[%s4099 + $0x18] sm:$0xf]
      %v4107 = vld [vmem:[%s4099 + $0x1c] sm:$0xf]
      %v4108 = vld [vmem:[%s4099 + $0x20] sm:$0xf]
      %v4109 = vld [vmem:[%s4099 + $0x24] sm:$0xf]
      %v4110 = vld [vmem:[%s4099 + $0x28] sm:$0xf]
      %v4111 = vld [vmem:[%s4099 + $0x2c] sm:$0xf]
      %v4112 = vld [vmem:[%s4099 + $0x30] sm:$0xf]
      %v4113 = vld [vmem:[%s4099 + $0x34] sm:$0xf]
      %v4114 = vld [vmem:[%s4099 + $0x38] sm:$0xf]
      %v4115 = vld [vmem:[%s4099 + $0x3c] sm:$0x1]
      %v4116 = vrot.slane %v3858, 2
      %v4133 = vunpack.c.l.b16 %v4100
      %v4134 = vunpack.c.l.b16 %v4101
      %v4135 = vunpack.c.l.b16 %v4102
      %v4136 = vunpack.c.l.b16 %v4103
      %v4137 = vunpack.c.l.b16 %v4104
      %v4138 = vunpack.c.l.b16 %v4105
      %v4139 = vunpack.c.l.b16 %v4106
      %v4140 = vunpack.c.l.b16 %v4107
      %v4141 = vunpack.c.l.b16 %v4108
      %v4142 = vunpack.c.l.b16 %v4109
      %v4143 = vunpack.c.l.b16 %v4110
      %v4144 = vunpack.c.l.b16 %v4111
      %v4145 = vunpack.c.l.b16 %v4112
      %v4146 = vunpack.c.l.b16 %v4113
      %v4147 = vunpack.c.l.b16 %v4114
      %v4148 = vunpack.c.l.b16 %v4115
      %v4149 = vpack.c.b16 %v4134, %v4133
      %v4150 = vpack.c.b16 %v4136, %v4135
      %v4151 = vpack.c.b16 %v4138, %v4137
      %v4152 = vpack.c.b16 %v4140, %v4139
      %v4153 = vpack.c.b16 %v4142, %v4141
      %v4154 = vpack.c.b16 %v4144, %v4143
      %v4155 = vpack.c.b16 %v4146, %v4145
      %v4156 = vpack.c.b16 %v4148, %v4147
      %v4165 = vsel %vm2471, %v4116, 0
      %v4168 = vand.u32 %v4156, %v2478
      %4170 = vmatpush.bf16.msra.mxu0 %v4168
      %4171 = vmatpush.bf16.msra.mxu0 %v4155
      %4172 = vmatpush.bf16.msra.mxu0 %v4154
      %4173 = vmatpush.bf16.msra.mxu0 %v4153
      %4174 = vmatpush.bf16.msra.mxu0 %v4152
      %4175 = vmatpush.bf16.msra.mxu0 %v4151
      %4176 = vmatpush.bf16.msra.mxu0 %v4150
      %4177 = vmatpush.bf16.msra.mxu0 %v4149
      %4178 = vmatmul.bf16.gmra.mxu0 %v4165
      %v4179 = vpop.f32.mrf.mxu0
      %v4180 = vadd.f32 0.0, %v4179
      %v4181 = vpop.f32.mrf.mxu0
      %4182 = vdwg.mxu0
      %v4183 = vadd.f32 %v4098, %v4180
      %s4184 = scalar_lea.vmem %s3, 1344
      %v4185 = vld [vmem:[%s4184] sm:$0xf]
      %v4186 = vld [vmem:[%s4184 + $0x4] sm:$0xf]
      %v4187 = vld [vmem:[%s4184 + $0x8] sm:$0xf]
      %v4188 = vld [vmem:[%s4184 + $0xc] sm:$0xf]
      %v4189 = vld [vmem:[%s4184 + $0x10] sm:$0xf]
      %v4190 = vld [vmem:[%s4184 + $0x14] sm:$0xf]
      %v4191 = vld [vmem:[%s4184 + $0x18] sm:$0xf]
      %v4192 = vld [vmem:[%s4184 + $0x1c] sm:$0xf]
      %v4193 = vld [vmem:[%s4184 + $0x20] sm:$0xf]
      %v4194 = vld [vmem:[%s4184 + $0x24] sm:$0xf]
      %v4195 = vld [vmem:[%s4184 + $0x28] sm:$0xf]
      %v4196 = vld [vmem:[%s4184 + $0x2c] sm:$0xf]
      %v4197 = vld [vmem:[%s4184 + $0x30] sm:$0xf]
      %v4198 = vld [vmem:[%s4184 + $0x34] sm:$0xf]
      %v4199 = vld [vmem:[%s4184 + $0x38] sm:$0xf]
      %v4200 = vld [vmem:[%s4184 + $0x3c] sm:$0x1]
      %v4201 = vrot.slane %v3860, 2
      %v4218 = vunpack.c.l.b16 %v4185
      %v4219 = vunpack.c.l.b16 %v4186
      %v4220 = vunpack.c.l.b16 %v4187
      %v4221 = vunpack.c.l.b16 %v4188
      %v4222 = vunpack.c.l.b16 %v4189
      %v4223 = vunpack.c.l.b16 %v4190
      %v4224 = vunpack.c.l.b16 %v4191
      %v4225 = vunpack.c.l.b16 %v4192
      %v4226 = vunpack.c.l.b16 %v4193
      %v4227 = vunpack.c.l.b16 %v4194
      %v4228 = vunpack.c.l.b16 %v4195
      %v4229 = vunpack.c.l.b16 %v4196
      %v4230 = vunpack.c.l.b16 %v4197
      %v4231 = vunpack.c.l.b16 %v4198
      %v4232 = vunpack.c.l.b16 %v4199
      %v4233 = vunpack.c.l.b16 %v4200
      %v4234 = vpack.c.b16 %v4219, %v4218
      %v4235 = vpack.c.b16 %v4221, %v4220
      %v4236 = vpack.c.b16 %v4223, %v4222
      %v4237 = vpack.c.b16 %v4225, %v4224
      %v4238 = vpack.c.b16 %v4227, %v4226
      %v4239 = vpack.c.b16 %v4229, %v4228
      %v4240 = vpack.c.b16 %v4231, %v4230
      %v4241 = vpack.c.b16 %v4233, %v4232
      %v4250 = vsel %vm2471, %v4201, 0
      %v4253 = vand.u32 %v4241, %v2478
      %4255 = vmatpush.bf16.msra.mxu0 %v4253
      %4256 = vmatpush.bf16.msra.mxu0 %v4240
      %4257 = vmatpush.bf16.msra.mxu0 %v4239
      %4258 = vmatpush.bf16.msra.mxu0 %v4238
      %4259 = vmatpush.bf16.msra.mxu0 %v4237
      %4260 = vmatpush.bf16.msra.mxu0 %v4236
      %4261 = vmatpush.bf16.msra.mxu0 %v4235
      %4262 = vmatpush.bf16.msra.mxu0 %v4234
      %4263 = vmatmul.bf16.gmra.mxu0 %v4250
      %v4264 = vpop.f32.mrf.mxu0
      %v4265 = vadd.f32 0.0, %v4264
      %v4266 = vpop.f32.mrf.mxu0
      %4267 = vdwg.mxu0
      %v4268 = vadd.f32 %v4183, %v4265
      %s4269 = scalar_lea.vmem %s3, 1408
      %v4270 = vld [vmem:[%s4269] sm:$0xf]
      %v4271 = vld [vmem:[%s4269 + $0x4] sm:$0xf]
      %v4272 = vld [vmem:[%s4269 + $0x8] sm:$0xf]
      %v4273 = vld [vmem:[%s4269 + $0xc] sm:$0xf]
      %v4274 = vld [vmem:[%s4269 + $0x10] sm:$0xf]
      %v4275 = vld [vmem:[%s4269 + $0x14] sm:$0xf]
      %v4276 = vld [vmem:[%s4269 + $0x18] sm:$0xf]
      %v4277 = vld [vmem:[%s4269 + $0x1c] sm:$0xf]
      %v4278 = vld [vmem:[%s4269 + $0x20] sm:$0xf]
      %v4279 = vld [vmem:[%s4269 + $0x24] sm:$0xf]
      %v4280 = vld [vmem:[%s4269 + $0x28] sm:$0xf]
      %v4281 = vld [vmem:[%s4269 + $0x2c] sm:$0xf]
      %v4282 = vld [vmem:[%s4269 + $0x30] sm:$0xf]
      %v4283 = vld [vmem:[%s4269 + $0x34] sm:$0xf]
      %v4284 = vld [vmem:[%s4269 + $0x38] sm:$0xf]
      %v4285 = vld [vmem:[%s4269 + $0x3c] sm:$0x1]
      %v4286 = vrot.slane %v3858, 3
      %v4303 = vunpack.c.l.b16 %v4270
      %v4304 = vunpack.c.l.b16 %v4271
      %v4305 = vunpack.c.l.b16 %v4272
      %v4306 = vunpack.c.l.b16 %v4273
      %v4307 = vunpack.c.l.b16 %v4274
      %v4308 = vunpack.c.l.b16 %v4275
      %v4309 = vunpack.c.l.b16 %v4276
      %v4310 = vunpack.c.l.b16 %v4277
      %v4311 = vunpack.c.l.b16 %v4278
      %v4312 = vunpack.c.l.b16 %v4279
      %v4313 = vunpack.c.l.b16 %v4280
      %v4314 = vunpack.c.l.b16 %v4281
      %v4315 = vunpack.c.l.b16 %v4282
      %v4316 = vunpack.c.l.b16 %v4283
      %v4317 = vunpack.c.l.b16 %v4284
      %v4318 = vunpack.c.l.b16 %v4285
      %v4319 = vpack.c.b16 %v4304, %v4303
      %v4320 = vpack.c.b16 %v4306, %v4305
      %v4321 = vpack.c.b16 %v4308, %v4307
      %v4322 = vpack.c.b16 %v4310, %v4309
      %v4323 = vpack.c.b16 %v4312, %v4311
      %v4324 = vpack.c.b16 %v4314, %v4313
      %v4325 = vpack.c.b16 %v4316, %v4315
      %v4326 = vpack.c.b16 %v4318, %v4317
      %v4335 = vsel %vm2471, %v4286, 0
      %v4338 = vand.u32 %v4326, %v2478
      %4340 = vmatpush.bf16.msra.mxu0 %v4338
      %4341 = vmatpush.bf16.msra.mxu0 %v4325
      %4342 = vmatpush.bf16.msra.mxu0 %v4324
      %4343 = vmatpush.bf16.msra.mxu0 %v4323
      %4344 = vmatpush.bf16.msra.mxu0 %v4322
      %4345 = vmatpush.bf16.msra.mxu0 %v4321
      %4346 = vmatpush.bf16.msra.mxu0 %v4320
      %4347 = vmatpush.bf16.msra.mxu0 %v4319
      %4348 = vmatmul.bf16.gmra.mxu0 %v4335
      %v4349 = vpop.f32.mrf.mxu0
      %v4350 = vadd.f32 0.0, %v4349
      %v4351 = vpop.f32.mrf.mxu0
      %4352 = vdwg.mxu0
      %v4353 = vadd.f32 %v4268, %v4350
      %s4354 = scalar_lea.vmem %s3, 1472
      %v4355 = vld [vmem:[%s4354] sm:$0xf]
      %v4356 = vld [vmem:[%s4354 + $0x4] sm:$0xf]
      %v4357 = vld [vmem:[%s4354 + $0x8] sm:$0xf]
      %v4358 = vld [vmem:[%s4354 + $0xc] sm:$0xf]
      %v4359 = vld [vmem:[%s4354 + $0x10] sm:$0xf]
      %v4360 = vld [vmem:[%s4354 + $0x14] sm:$0xf]
      %v4361 = vld [vmem:[%s4354 + $0x18] sm:$0xf]
      %v4362 = vld [vmem:[%s4354 + $0x1c] sm:$0xf]
      %v4363 = vld [vmem:[%s4354 + $0x20] sm:$0xf]
      %v4364 = vld [vmem:[%s4354 + $0x24] sm:$0xf]
      %v4365 = vld [vmem:[%s4354 + $0x28] sm:$0xf]
      %v4366 = vld [vmem:[%s4354 + $0x2c] sm:$0xf]
      %v4367 = vld [vmem:[%s4354 + $0x30] sm:$0xf]
      %v4368 = vld [vmem:[%s4354 + $0x34] sm:$0xf]
      %v4369 = vld [vmem:[%s4354 + $0x38] sm:$0xf]
      %v4370 = vld [vmem:[%s4354 + $0x3c] sm:$0x1]
      %v4371 = vrot.slane %v3860, 3
      %v4388 = vunpack.c.l.b16 %v4355
      %v4389 = vunpack.c.l.b16 %v4356
      %v4390 = vunpack.c.l.b16 %v4357
      %v4391 = vunpack.c.l.b16 %v4358
      %v4392 = vunpack.c.l.b16 %v4359
      %v4393 = vunpack.c.l.b16 %v4360
      %v4394 = vunpack.c.l.b16 %v4361
      %v4395 = vunpack.c.l.b16 %v4362
      %v4396 = vunpack.c.l.b16 %v4363
      %v4397 = vunpack.c.l.b16 %v4364
      %v4398 = vunpack.c.l.b16 %v4365
      %v4399 = vunpack.c.l.b16 %v4366
      %v4400 = vunpack.c.l.b16 %v4367
      %v4401 = vunpack.c.l.b16 %v4368
      %v4402 = vunpack.c.l.b16 %v4369
      %v4403 = vunpack.c.l.b16 %v4370
      %v4404 = vpack.c.b16 %v4389, %v4388
      %v4405 = vpack.c.b16 %v4391, %v4390
      %v4406 = vpack.c.b16 %v4393, %v4392
      %v4407 = vpack.c.b16 %v4395, %v4394
      %v4408 = vpack.c.b16 %v4397, %v4396
      %v4409 = vpack.c.b16 %v4399, %v4398
      %v4410 = vpack.c.b16 %v4401, %v4400
      %v4411 = vpack.c.b16 %v4403, %v4402
      %v4420 = vsel %vm2471, %v4371, 0
      %v4423 = vand.u32 %v4411, %v2478
      %4425 = vmatpush.bf16.msra.mxu0 %v4423
      %4426 = vmatpush.bf16.msra.mxu0 %v4410
      %4427 = vmatpush.bf16.msra.mxu0 %v4409
      %4428 = vmatpush.bf16.msra.mxu0 %v4408
      %4429 = vmatpush.bf16.msra.mxu0 %v4407
      %4430 = vmatpush.bf16.msra.mxu0 %v4406
      %4431 = vmatpush.bf16.msra.mxu0 %v4405
      %4432 = vmatpush.bf16.msra.mxu0 %v4404
      %4433 = vmatmul.bf16.gmra.mxu0 %v4420
      %v4434 = vpop.f32.mrf.mxu0
      %v4435 = vadd.f32 0.0, %v4434
      %v4436 = vpop.f32.mrf.mxu0
      %4437 = vdwg.mxu0
      %v4438 = vadd.f32 %v4353, %v4435
      %s4439 = scalar_lea.vmem %s3, 1536
      %v4440 = vld [vmem:[%s4439] sm:$0xf]
      %v4441 = vld [vmem:[%s4439 + $0x4] sm:$0xf]
      %v4442 = vld [vmem:[%s4439 + $0x8] sm:$0xf]
      %v4443 = vld [vmem:[%s4439 + $0xc] sm:$0xf]
      %v4444 = vld [vmem:[%s4439 + $0x10] sm:$0xf]
      %v4445 = vld [vmem:[%s4439 + $0x14] sm:$0xf]
      %v4446 = vld [vmem:[%s4439 + $0x18] sm:$0xf]
      %v4447 = vld [vmem:[%s4439 + $0x1c] sm:$0xf]
      %v4448 = vld [vmem:[%s4439 + $0x20] sm:$0xf]
      %v4449 = vld [vmem:[%s4439 + $0x24] sm:$0xf]
      %v4450 = vld [vmem:[%s4439 + $0x28] sm:$0xf]
      %v4451 = vld [vmem:[%s4439 + $0x2c] sm:$0xf]
      %v4452 = vld [vmem:[%s4439 + $0x30] sm:$0xf]
      %v4453 = vld [vmem:[%s4439 + $0x34] sm:$0xf]
      %v4454 = vld [vmem:[%s4439 + $0x38] sm:$0xf]
      %v4455 = vld [vmem:[%s4439 + $0x3c] sm:$0x1]
      %v4472 = vunpack.c.l.b16 %v4440
      %v4473 = vunpack.c.l.b16 %v4441
      %v4474 = vunpack.c.l.b16 %v4442
      %v4475 = vunpack.c.l.b16 %v4443
      %v4476 = vunpack.c.l.b16 %v4444
      %v4477 = vunpack.c.l.b16 %v4445
      %v4478 = vunpack.c.l.b16 %v4446
      %v4479 = vunpack.c.l.b16 %v4447
      %v4480 = vunpack.c.l.b16 %v4448
      %v4481 = vunpack.c.l.b16 %v4449
      %v4482 = vunpack.c.l.b16 %v4450
      %v4483 = vunpack.c.l.b16 %v4451
      %v4484 = vunpack.c.l.b16 %v4452
      %v4485 = vunpack.c.l.b16 %v4453
      %v4486 = vunpack.c.l.b16 %v4454
      %v4487 = vunpack.c.l.b16 %v4455
      %v4488 = vpack.c.b16 %v4473, %v4472
      %v4489 = vpack.c.b16 %v4475, %v4474
      %v4490 = vpack.c.b16 %v4477, %v4476
      %v4491 = vpack.c.b16 %v4479, %v4478
      %v4492 = vpack.c.b16 %v4481, %v4480
      %v4493 = vpack.c.b16 %v4483, %v4482
      %v4494 = vpack.c.b16 %v4485, %v4484
      %v4495 = vpack.c.b16 %v4487, %v4486
      %v4504 = vsel %vm2471, %v2384, 0
      %v4507 = vand.u32 %v4495, %v2478
      %4509 = vmatpush.bf16.msra.mxu0 %v4507
      %4510 = vmatpush.bf16.msra.mxu0 %v4494
      %4511 = vmatpush.bf16.msra.mxu0 %v4493
      %4512 = vmatpush.bf16.msra.mxu0 %v4492
      %4513 = vmatpush.bf16.msra.mxu0 %v4491
      %4514 = vmatpush.bf16.msra.mxu0 %v4490
      %4515 = vmatpush.bf16.msra.mxu0 %v4489
      %4516 = vmatpush.bf16.msra.mxu0 %v4488
      %4517 = vmatmul.bf16.gmra.mxu0 %v4504
      %v4518 = vpop.f32.mrf.mxu0
      %v4519 = vadd.f32 0.0, %v4518
      %v4520 = vpop.f32.mrf.mxu0
      %4521 = vdwg.mxu0
      %v4522 = vadd.f32 %v4438, %v4519
      %s4523 = scalar_lea.vmem %s3, 1600
      %v4524 = vld [vmem:[%s4523] sm:$0xf]
      %v4525 = vld [vmem:[%s4523 + $0x4] sm:$0xf]
      %v4526 = vld [vmem:[%s4523 + $0x8] sm:$0xf]
      %v4527 = vld [vmem:[%s4523 + $0xc] sm:$0xf]
      %v4528 = vld [vmem:[%s4523 + $0x10] sm:$0xf]
      %v4529 = vld [vmem:[%s4523 + $0x14] sm:$0xf]
      %v4530 = vld [vmem:[%s4523 + $0x18] sm:$0xf]
      %v4531 = vld [vmem:[%s4523 + $0x1c] sm:$0xf]
      %v4532 = vld [vmem:[%s4523 + $0x20] sm:$0xf]
      %v4533 = vld [vmem:[%s4523 + $0x24] sm:$0xf]
      %v4534 = vld [vmem:[%s4523 + $0x28] sm:$0xf]
      %v4535 = vld [vmem:[%s4523 + $0x2c] sm:$0xf]
      %v4536 = vld [vmem:[%s4523 + $0x30] sm:$0xf]
      %v4537 = vld [vmem:[%s4523 + $0x34] sm:$0xf]
      %v4538 = vld [vmem:[%s4523 + $0x38] sm:$0xf]
      %v4539 = vld [vmem:[%s4523 + $0x3c] sm:$0x1]
      %v4541 = vunpack.c.l.b16 %v2384
      %v4542 = vpack.c.b16 %v4541, %v4541
      %v4544 = vshrl.u32 %v4542, 16
      %v4562 = vunpack.c.l.b16 %v4524
      %v4563 = vunpack.c.l.b16 %v4525
      %v4564 = vunpack.c.l.b16 %v4526
      %v4565 = vunpack.c.l.b16 %v4527
      %v4566 = vunpack.c.l.b16 %v4528
      %v4567 = vunpack.c.l.b16 %v4529
      %v4568 = vunpack.c.l.b16 %v4530
      %v4569 = vunpack.c.l.b16 %v4531
      %v4570 = vunpack.c.l.b16 %v4532
      %v4571 = vunpack.c.l.b16 %v4533
      %v4572 = vunpack.c.l.b16 %v4534
      %v4573 = vunpack.c.l.b16 %v4535
      %v4574 = vunpack.c.l.b16 %v4536
      %v4575 = vunpack.c.l.b16 %v4537
      %v4576 = vunpack.c.l.b16 %v4538
      %v4577 = vunpack.c.l.b16 %v4539
      %v4578 = vpack.c.b16 %v4563, %v4562
      %v4579 = vpack.c.b16 %v4565, %v4564
      %v4580 = vpack.c.b16 %v4567, %v4566
      %v4581 = vpack.c.b16 %v4569, %v4568
      %v4582 = vpack.c.b16 %v4571, %v4570
      %v4583 = vpack.c.b16 %v4573, %v4572
      %v4584 = vpack.c.b16 %v4575, %v4574
      %v4585 = vpack.c.b16 %v4577, %v4576
      %v4594 = vsel %vm2471, %v4544, 0
      %v4597 = vand.u32 %v4585, %v2478
      %4599 = vmatpush.bf16.msra.mxu0 %v4597
      %4600 = vmatpush.bf16.msra.mxu0 %v4584
      %4601 = vmatpush.bf16.msra.mxu0 %v4583
      %4602 = vmatpush.bf16.msra.mxu0 %v4582
      %4603 = vmatpush.bf16.msra.mxu0 %v4581
      %4604 = vmatpush.bf16.msra.mxu0 %v4580
      %4605 = vmatpush.bf16.msra.mxu0 %v4579
      %4606 = vmatpush.bf16.msra.mxu0 %v4578
      %4607 = vmatmul.bf16.gmra.mxu0 %v4594
      %v4608 = vpop.f32.mrf.mxu0
      %v4609 = vadd.f32 0.0, %v4608
      %v4610 = vpop.f32.mrf.mxu0
      %4611 = vdwg.mxu0
      %v4612 = vadd.f32 %v4522, %v4609
      %s4613 = scalar_lea.vmem %s3, 1664
      %v4614 = vld [vmem:[%s4613] sm:$0xf]
      %v4615 = vld [vmem:[%s4613 + $0x4] sm:$0xf]
      %v4616 = vld [vmem:[%s4613 + $0x8] sm:$0xf]
      %v4617 = vld [vmem:[%s4613 + $0xc] sm:$0xf]
      %v4618 = vld [vmem:[%s4613 + $0x10] sm:$0xf]
      %v4619 = vld [vmem:[%s4613 + $0x14] sm:$0xf]
      %v4620 = vld [vmem:[%s4613 + $0x18] sm:$0xf]
      %v4621 = vld [vmem:[%s4613 + $0x1c] sm:$0xf]
      %v4622 = vld [vmem:[%s4613 + $0x20] sm:$0xf]
      %v4623 = vld [vmem:[%s4613 + $0x24] sm:$0xf]
      %v4624 = vld [vmem:[%s4613 + $0x28] sm:$0xf]
      %v4625 = vld [vmem:[%s4613 + $0x2c] sm:$0xf]
      %v4626 = vld [vmem:[%s4613 + $0x30] sm:$0xf]
      %v4627 = vld [vmem:[%s4613 + $0x34] sm:$0xf]
      %v4628 = vld [vmem:[%s4613 + $0x38] sm:$0xf]
      %v4629 = vld [vmem:[%s4613 + $0x3c] sm:$0x1]
      %v4630 = vrot.slane %v4542, 1
      %v4647 = vunpack.c.l.b16 %v4614
      %v4648 = vunpack.c.l.b16 %v4615
      %v4649 = vunpack.c.l.b16 %v4616
      %v4650 = vunpack.c.l.b16 %v4617
      %v4651 = vunpack.c.l.b16 %v4618
      %v4652 = vunpack.c.l.b16 %v4619
      %v4653 = vunpack.c.l.b16 %v4620
      %v4654 = vunpack.c.l.b16 %v4621
      %v4655 = vunpack.c.l.b16 %v4622
      %v4656 = vunpack.c.l.b16 %v4623
      %v4657 = vunpack.c.l.b16 %v4624
      %v4658 = vunpack.c.l.b16 %v4625
      %v4659 = vunpack.c.l.b16 %v4626
      %v4660 = vunpack.c.l.b16 %v4627
      %v4661 = vunpack.c.l.b16 %v4628
      %v4662 = vunpack.c.l.b16 %v4629
      %v4663 = vpack.c.b16 %v4648, %v4647
      %v4664 = vpack.c.b16 %v4650, %v4649
      %v4665 = vpack.c.b16 %v4652, %v4651
      %v4666 = vpack.c.b16 %v4654, %v4653
      %v4667 = vpack.c.b16 %v4656, %v4655
      %v4668 = vpack.c.b16 %v4658, %v4657
      %v4669 = vpack.c.b16 %v4660, %v4659
      %v4670 = vpack.c.b16 %v4662, %v4661
      %v4679 = vsel %vm2471, %v4630, 0
      %v4682 = vand.u32 %v4670, %v2478
      %4684 = vmatpush.bf16.msra.mxu0 %v4682
      %4685 = vmatpush.bf16.msra.mxu0 %v4669
      %4686 = vmatpush.bf16.msra.mxu0 %v4668
      %4687 = vmatpush.bf16.msra.mxu0 %v4667
      %4688 = vmatpush.bf16.msra.mxu0 %v4666
      %4689 = vmatpush.bf16.msra.mxu0 %v4665
      %4690 = vmatpush.bf16.msra.mxu0 %v4664
      %4691 = vmatpush.bf16.msra.mxu0 %v4663
      %4692 = vmatmul.bf16.gmra.mxu0 %v4679
      %v4693 = vpop.f32.mrf.mxu0
      %v4694 = vadd.f32 0.0, %v4693
      %v4695 = vpop.f32.mrf.mxu0
      %4696 = vdwg.mxu0
      %v4697 = vadd.f32 %v4612, %v4694
      %s4698 = scalar_lea.vmem %s3, 1728
      %v4699 = vld [vmem:[%s4698] sm:$0xf]
      %v4700 = vld [vmem:[%s4698 + $0x4] sm:$0xf]
      %v4701 = vld [vmem:[%s4698 + $0x8] sm:$0xf]
      %v4702 = vld [vmem:[%s4698 + $0xc] sm:$0xf]
      %v4703 = vld [vmem:[%s4698 + $0x10] sm:$0xf]
      %v4704 = vld [vmem:[%s4698 + $0x14] sm:$0xf]
      %v4705 = vld [vmem:[%s4698 + $0x18] sm:$0xf]
      %v4706 = vld [vmem:[%s4698 + $0x1c] sm:$0xf]
      %v4707 = vld [vmem:[%s4698 + $0x20] sm:$0xf]
      %v4708 = vld [vmem:[%s4698 + $0x24] sm:$0xf]
      %v4709 = vld [vmem:[%s4698 + $0x28] sm:$0xf]
      %v4710 = vld [vmem:[%s4698 + $0x2c] sm:$0xf]
      %v4711 = vld [vmem:[%s4698 + $0x30] sm:$0xf]
      %v4712 = vld [vmem:[%s4698 + $0x34] sm:$0xf]
      %v4713 = vld [vmem:[%s4698 + $0x38] sm:$0xf]
      %v4714 = vld [vmem:[%s4698 + $0x3c] sm:$0x1]
      %v4715 = vrot.slane %v4544, 1
      %v4732 = vunpack.c.l.b16 %v4699
      %v4733 = vunpack.c.l.b16 %v4700
      %v4734 = vunpack.c.l.b16 %v4701
      %v4735 = vunpack.c.l.b16 %v4702
      %v4736 = vunpack.c.l.b16 %v4703
      %v4737 = vunpack.c.l.b16 %v4704
      %v4738 = vunpack.c.l.b16 %v4705
      %v4739 = vunpack.c.l.b16 %v4706
      %v4740 = vunpack.c.l.b16 %v4707
      %v4741 = vunpack.c.l.b16 %v4708
      %v4742 = vunpack.c.l.b16 %v4709
      %v4743 = vunpack.c.l.b16 %v4710
      %v4744 = vunpack.c.l.b16 %v4711
      %v4745 = vunpack.c.l.b16 %v4712
      %v4746 = vunpack.c.l.b16 %v4713
      %v4747 = vunpack.c.l.b16 %v4714
      %v4748 = vpack.c.b16 %v4733, %v4732
      %v4749 = vpack.c.b16 %v4735, %v4734
      %v4750 = vpack.c.b16 %v4737, %v4736
      %v4751 = vpack.c.b16 %v4739, %v4738
      %v4752 = vpack.c.b16 %v4741, %v4740
      %v4753 = vpack.c.b16 %v4743, %v4742
      %v4754 = vpack.c.b16 %v4745, %v4744
      %v4755 = vpack.c.b16 %v4747, %v4746
      %v4764 = vsel %vm2471, %v4715, 0
      %v4767 = vand.u32 %v4755, %v2478
      %4769 = vmatpush.bf16.msra.mxu0 %v4767
      %4770 = vmatpush.bf16.msra.mxu0 %v4754
      %4771 = vmatpush.bf16.msra.mxu0 %v4753
      %4772 = vmatpush.bf16.msra.mxu0 %v4752
      %4773 = vmatpush.bf16.msra.mxu0 %v4751
      %4774 = vmatpush.bf16.msra.mxu0 %v4750
      %4775 = vmatpush.bf16.msra.mxu0 %v4749
      %4776 = vmatpush.bf16.msra.mxu0 %v4748
      %4777 = vmatmul.bf16.gmra.mxu0 %v4764
      %v4778 = vpop.f32.mrf.mxu0
      %v4779 = vadd.f32 0.0, %v4778
      %v4780 = vpop.f32.mrf.mxu0
      %4781 = vdwg.mxu0
      %v4782 = vadd.f32 %v4697, %v4779
      %s4783 = scalar_lea.vmem %s3, 1792
      %v4784 = vld [vmem:[%s4783] sm:$0xf]
      %v4785 = vld [vmem:[%s4783 + $0x4] sm:$0xf]
      %v4786 = vld [vmem:[%s4783 + $0x8] sm:$0xf]
      %v4787 = vld [vmem:[%s4783 + $0xc] sm:$0xf]
      %v4788 = vld [vmem:[%s4783 + $0x10] sm:$0xf]
      %v4789 = vld [vmem:[%s4783 + $0x14] sm:$0xf]
      %v4790 = vld [vmem:[%s4783 + $0x18] sm:$0xf]
      %v4791 = vld [vmem:[%s4783 + $0x1c] sm:$0xf]
      %v4792 = vld [vmem:[%s4783 + $0x20] sm:$0xf]
      %v4793 = vld [vmem:[%s4783 + $0x24] sm:$0xf]
      %v4794 = vld [vmem:[%s4783 + $0x28] sm:$0xf]
      %v4795 = vld [vmem:[%s4783 + $0x2c] sm:$0xf]
      %v4796 = vld [vmem:[%s4783 + $0x30] sm:$0xf]
      %v4797 = vld [vmem:[%s4783 + $0x34] sm:$0xf]
      %v4798 = vld [vmem:[%s4783 + $0x38] sm:$0xf]
      %v4799 = vld [vmem:[%s4783 + $0x3c] sm:$0x1]
      %v4800 = vrot.slane %v4542, 2
      %v4817 = vunpack.c.l.b16 %v4784
      %v4818 = vunpack.c.l.b16 %v4785
      %v4819 = vunpack.c.l.b16 %v4786
      %v4820 = vunpack.c.l.b16 %v4787
      %v4821 = vunpack.c.l.b16 %v4788
      %v4822 = vunpack.c.l.b16 %v4789
      %v4823 = vunpack.c.l.b16 %v4790
      %v4824 = vunpack.c.l.b16 %v4791
      %v4825 = vunpack.c.l.b16 %v4792
      %v4826 = vunpack.c.l.b16 %v4793
      %v4827 = vunpack.c.l.b16 %v4794
      %v4828 = vunpack.c.l.b16 %v4795
      %v4829 = vunpack.c.l.b16 %v4796
      %v4830 = vunpack.c.l.b16 %v4797
      %v4831 = vunpack.c.l.b16 %v4798
      %v4832 = vunpack.c.l.b16 %v4799
      %v4833 = vpack.c.b16 %v4818, %v4817
      %v4834 = vpack.c.b16 %v4820, %v4819
      %v4835 = vpack.c.b16 %v4822, %v4821
      %v4836 = vpack.c.b16 %v4824, %v4823
      %v4837 = vpack.c.b16 %v4826, %v4825
      %v4838 = vpack.c.b16 %v4828, %v4827
      %v4839 = vpack.c.b16 %v4830, %v4829
      %v4840 = vpack.c.b16 %v4832, %v4831
      %v4849 = vsel %vm2471, %v4800, 0
      %v4852 = vand.u32 %v4840, %v2478
      %4854 = vmatpush.bf16.msra.mxu0 %v4852
      %4855 = vmatpush.bf16.msra.mxu0 %v4839
      %4856 = vmatpush.bf16.msra.mxu0 %v4838
      %4857 = vmatpush.bf16.msra.mxu0 %v4837
      %4858 = vmatpush.bf16.msra.mxu0 %v4836
      %4859 = vmatpush.bf16.msra.mxu0 %v4835
      %4860 = vmatpush.bf16.msra.mxu0 %v4834
      %4861 = vmatpush.bf16.msra.mxu0 %v4833
      %4862 = vmatmul.bf16.gmra.mxu0 %v4849
      %v4863 = vpop.f32.mrf.mxu0
      %v4864 = vadd.f32 0.0, %v4863
      %v4865 = vpop.f32.mrf.mxu0
      %4866 = vdwg.mxu0
      %v4867 = vadd.f32 %v4782, %v4864
      %s4868 = scalar_lea.vmem %s3, 1856
      %v4869 = vld [vmem:[%s4868] sm:$0xf]
      %v4870 = vld [vmem:[%s4868 + $0x4] sm:$0xf]
      %v4871 = vld [vmem:[%s4868 + $0x8] sm:$0xf]
      %v4872 = vld [vmem:[%s4868 + $0xc] sm:$0xf]
      %v4873 = vld [vmem:[%s4868 + $0x10] sm:$0xf]
      %v4874 = vld [vmem:[%s4868 + $0x14] sm:$0xf]
      %v4875 = vld [vmem:[%s4868 + $0x18] sm:$0xf]
      %v4876 = vld [vmem:[%s4868 + $0x1c] sm:$0xf]
      %v4877 = vld [vmem:[%s4868 + $0x20] sm:$0xf]
      %v4878 = vld [vmem:[%s4868 + $0x24] sm:$0xf]
      %v4879 = vld [vmem:[%s4868 + $0x28] sm:$0xf]
      %v4880 = vld [vmem:[%s4868 + $0x2c] sm:$0xf]
      %v4881 = vld [vmem:[%s4868 + $0x30] sm:$0xf]
      %v4882 = vld [vmem:[%s4868 + $0x34] sm:$0xf]
      %v4883 = vld [vmem:[%s4868 + $0x38] sm:$0xf]
      %v4884 = vld [vmem:[%s4868 + $0x3c] sm:$0x1]
      %v4885 = vrot.slane %v4544, 2
      %v4902 = vunpack.c.l.b16 %v4869
      %v4903 = vunpack.c.l.b16 %v4870
      %v4904 = vunpack.c.l.b16 %v4871
      %v4905 = vunpack.c.l.b16 %v4872
      %v4906 = vunpack.c.l.b16 %v4873
      %v4907 = vunpack.c.l.b16 %v4874
      %v4908 = vunpack.c.l.b16 %v4875
      %v4909 = vunpack.c.l.b16 %v4876
      %v4910 = vunpack.c.l.b16 %v4877
      %v4911 = vunpack.c.l.b16 %v4878
      %v4912 = vunpack.c.l.b16 %v4879
      %v4913 = vunpack.c.l.b16 %v4880
      %v4914 = vunpack.c.l.b16 %v4881
      %v4915 = vunpack.c.l.b16 %v4882
      %v4916 = vunpack.c.l.b16 %v4883
      %v4917 = vunpack.c.l.b16 %v4884
      %v4918 = vpack.c.b16 %v4903, %v4902
      %v4919 = vpack.c.b16 %v4905, %v4904
      %v4920 = vpack.c.b16 %v4907, %v4906
      %v4921 = vpack.c.b16 %v4909, %v4908
      %v4922 = vpack.c.b16 %v4911, %v4910
      %v4923 = vpack.c.b16 %v4913, %v4912
      %v4924 = vpack.c.b16 %v4915, %v4914
      %v4925 = vpack.c.b16 %v4917, %v4916
      %v4934 = vsel %vm2471, %v4885, 0
      %v4937 = vand.u32 %v4925, %v2478
      %4939 = vmatpush.bf16.msra.mxu0 %v4937
      %4940 = vmatpush.bf16.msra.mxu0 %v4924
      %4941 = vmatpush.bf16.msra.mxu0 %v4923
      %4942 = vmatpush.bf16.msra.mxu0 %v4922
      %4943 = vmatpush.bf16.msra.mxu0 %v4921
      %4944 = vmatpush.bf16.msra.mxu0 %v4920
      %4945 = vmatpush.bf16.msra.mxu0 %v4919
      %4946 = vmatpush.bf16.msra.mxu0 %v4918
      %4947 = vmatmul.bf16.gmra.mxu0 %v4934
      %v4948 = vpop.f32.mrf.mxu0
      %v4949 = vadd.f32 0.0, %v4948
      %v4950 = vpop.f32.mrf.mxu0
      %4951 = vdwg.mxu0
      %v4952 = vadd.f32 %v4867, %v4949
      %s4953 = scalar_lea.vmem %s3, 1920
      %v4954 = vld [vmem:[%s4953] sm:$0xf]
      %v4955 = vld [vmem:[%s4953 + $0x4] sm:$0xf]
      %v4956 = vld [vmem:[%s4953 + $0x8] sm:$0xf]
      %v4957 = vld [vmem:[%s4953 + $0xc] sm:$0xf]
      %v4958 = vld [vmem:[%s4953 + $0x10] sm:$0xf]
      %v4959 = vld [vmem:[%s4953 + $0x14] sm:$0xf]
      %v4960 = vld [vmem:[%s4953 + $0x18] sm:$0xf]
      %v4961 = vld [vmem:[%s4953 + $0x1c] sm:$0xf]
      %v4962 = vld [vmem:[%s4953 + $0x20] sm:$0xf]
      %v4963 = vld [vmem:[%s4953 + $0x24] sm:$0xf]
      %v4964 = vld [vmem:[%s4953 + $0x28] sm:$0xf]
      %v4965 = vld [vmem:[%s4953 + $0x2c] sm:$0xf]
      %v4966 = vld [vmem:[%s4953 + $0x30] sm:$0xf]
      %v4967 = vld [vmem:[%s4953 + $0x34] sm:$0xf]
      %v4968 = vld [vmem:[%s4953 + $0x38] sm:$0xf]
      %v4969 = vld [vmem:[%s4953 + $0x3c] sm:$0x1]
      %v4970 = vrot.slane %v4542, 3
      %v4987 = vunpack.c.l.b16 %v4954
      %v4988 = vunpack.c.l.b16 %v4955
      %v4989 = vunpack.c.l.b16 %v4956
      %v4990 = vunpack.c.l.b16 %v4957
      %v4991 = vunpack.c.l.b16 %v4958
      %v4992 = vunpack.c.l.b16 %v4959
      %v4993 = vunpack.c.l.b16 %v4960
      %v4994 = vunpack.c.l.b16 %v4961
      %v4995 = vunpack.c.l.b16 %v4962
      %v4996 = vunpack.c.l.b16 %v4963
      %v4997 = vunpack.c.l.b16 %v4964
      %v4998 = vunpack.c.l.b16 %v4965
      %v4999 = vunpack.c.l.b16 %v4966
      %v5000 = vunpack.c.l.b16 %v4967
      %v5001 = vunpack.c.l.b16 %v4968
      %v5002 = vunpack.c.l.b16 %v4969
      %v5003 = vpack.c.b16 %v4988, %v4987
      %v5004 = vpack.c.b16 %v4990, %v4989
      %v5005 = vpack.c.b16 %v4992, %v4991
      %v5006 = vpack.c.b16 %v4994, %v4993
      %v5007 = vpack.c.b16 %v4996, %v4995
      %v5008 = vpack.c.b16 %v4998, %v4997
      %v5009 = vpack.c.b16 %v5000, %v4999
      %v5010 = vpack.c.b16 %v5002, %v5001
      %v5019 = vsel %vm2471, %v4970, 0
      %v5022 = vand.u32 %v5010, %v2478
      %5024 = vmatpush.bf16.msra.mxu0 %v5022
      %5025 = vmatpush.bf16.msra.mxu0 %v5009
      %5026 = vmatpush.bf16.msra.mxu0 %v5008
      %5027 = vmatpush.bf16.msra.mxu0 %v5007
      %5028 = vmatpush.bf16.msra.mxu0 %v5006
      %5029 = vmatpush.bf16.msra.mxu0 %v5005
      %5030 = vmatpush.bf16.msra.mxu0 %v5004
      %5031 = vmatpush.bf16.msra.mxu0 %v5003
      %5032 = vmatmul.bf16.gmra.mxu0 %v5019
      %v5033 = vpop.f32.mrf.mxu0
      %v5034 = vadd.f32 0.0, %v5033
      %v5035 = vpop.f32.mrf.mxu0
      %5036 = vdwg.mxu0
      %v5037 = vadd.f32 %v4952, %v5034
      %s5038 = scalar_lea.vmem %s3, 1984
      %v5039 = vld [vmem:[%s5038] sm:$0xf]
      %v5040 = vld [vmem:[%s5038 + $0x4] sm:$0xf]
      %v5041 = vld [vmem:[%s5038 + $0x8] sm:$0xf]
      %v5042 = vld [vmem:[%s5038 + $0xc] sm:$0xf]
      %v5043 = vld [vmem:[%s5038 + $0x10] sm:$0xf]
      %v5044 = vld [vmem:[%s5038 + $0x14] sm:$0xf]
      %v5045 = vld [vmem:[%s5038 + $0x18] sm:$0xf]
      %v5046 = vld [vmem:[%s5038 + $0x1c] sm:$0xf]
      %v5047 = vld [vmem:[%s5038 + $0x20] sm:$0xf]
      %v5048 = vld [vmem:[%s5038 + $0x24] sm:$0xf]
      %v5049 = vld [vmem:[%s5038 + $0x28] sm:$0xf]
      %v5050 = vld [vmem:[%s5038 + $0x2c] sm:$0xf]
      %v5051 = vld [vmem:[%s5038 + $0x30] sm:$0xf]
      %v5052 = vld [vmem:[%s5038 + $0x34] sm:$0xf]
      %v5053 = vld [vmem:[%s5038 + $0x38] sm:$0xf]
      %v5054 = vld [vmem:[%s5038 + $0x3c] sm:$0x1]
      %v5055 = vrot.slane %v4544, 3
      %v5072 = vunpack.c.l.b16 %v5039
      %v5073 = vunpack.c.l.b16 %v5040
      %v5074 = vunpack.c.l.b16 %v5041
      %v5075 = vunpack.c.l.b16 %v5042
      %v5076 = vunpack.c.l.b16 %v5043
      %v5077 = vunpack.c.l.b16 %v5044
      %v5078 = vunpack.c.l.b16 %v5045
      %v5079 = vunpack.c.l.b16 %v5046
      %v5080 = vunpack.c.l.b16 %v5047
      %v5081 = vunpack.c.l.b16 %v5048
      %v5082 = vunpack.c.l.b16 %v5049
      %v5083 = vunpack.c.l.b16 %v5050
      %v5084 = vunpack.c.l.b16 %v5051
      %v5085 = vunpack.c.l.b16 %v5052
      %v5086 = vunpack.c.l.b16 %v5053
      %v5087 = vunpack.c.l.b16 %v5054
      %v5088 = vpack.c.b16 %v5073, %v5072
      %v5089 = vpack.c.b16 %v5075, %v5074
      %v5090 = vpack.c.b16 %v5077, %v5076
      %v5091 = vpack.c.b16 %v5079, %v5078
      %v5092 = vpack.c.b16 %v5081, %v5080
      %v5093 = vpack.c.b16 %v5083, %v5082
      %v5094 = vpack.c.b16 %v5085, %v5084
      %v5095 = vpack.c.b16 %v5087, %v5086
      %v5104 = vsel %vm2471, %v5055, 0
      %v5107 = vand.u32 %v5095, %v2478
      %5109 = vmatpush.bf16.msra.mxu0 %v5107
      %5110 = vmatpush.bf16.msra.mxu0 %v5094
      %5111 = vmatpush.bf16.msra.mxu0 %v5093
      %5112 = vmatpush.bf16.msra.mxu0 %v5092
      %5113 = vmatpush.bf16.msra.mxu0 %v5091
      %5114 = vmatpush.bf16.msra.mxu0 %v5090
      %5115 = vmatpush.bf16.msra.mxu0 %v5089
      %5116 = vmatpush.bf16.msra.mxu0 %v5088
      %5117 = vmatmul.bf16.gmra.mxu0 %v5104
      %v5118 = vpop.f32.mrf.mxu0
      %v5119 = vadd.f32 0.0, %v5118
      %v5120 = vpop.f32.mrf.mxu0
      %5121 = vdwg.mxu0
      %v5122 = vadd.f32 %v5037, %v5119
      %v5123 = vld [vmem:[%s4] sm:$0x1]
      %v5124 = vadd.f32 %v5122, %v5123
      %5125 = vst [vmem:[%s220] sm:$0x1] %v5124
      %p5126 = scmp.lt.s32.totalorder %s16, 1
      %s5127 = scalar_select %p5126, %s16, 1
      %s5128 = scalar_lea.vmem %s5, %s5127
      // Predicated region
      $region41: #{gcnfg_forward.4} parent=39 // pred_check
        %p5129 = pneg %p144
      $region42: #{gcnfg_forward.4} parent=39 // pred_check_branch
        %5131 = sbr.rel (%p5129) target = $region44
      $region43: #{gcnfg_forward.4} parent=39 // pred_region
        _
      $region44: #{gcnfg_forward.4} parent=39 // pred_fallthru
        _
    $region40: #{gcnfg_forward.4} parent=5 // pred_fallthru
      _
    %p5132 = scmp.le.s32.totalorder 2, %s11
    // Predicated region
    $region45: #{gcnfg_forward.4} parent=5 // pred_check
      %p5133 = pneg %p5132
    $region46: #{gcnfg_forward.4} parent=5 // pred_check_branch
      %5135 = sbr.rel (%p5133) target = $region48
    $region47: #{gcnfg_forward.4} parent=5 // pred_region
      %s5136 = ssub.s32 %s11, 2
      // Predicated region
      $region49: #{gcnfg_forward.4} parent=47 // pred_check
        %p5137 = pneg %p150
      $region50: #{gcnfg_forward.4} parent=47 // pred_check_branch
        %5139 = sbr.rel (%p5137) target = $region52
      $region51: #{gcnfg_forward.4} parent=47 // pred_region
        %p5140 = scmp.lt.s32.totalorder %s17, 1
        %s5141 = scalar_select %p5140, %s17, 1
        %s5142 = scalar_lea.vmem %s5, %s5141
      $region52: #{gcnfg_forward.4} parent=47 // pred_fallthru
        _
    $region48: #{gcnfg_forward.4} parent=5 // pred_fallthru
      _
  $region6: #{gcnfg_forward.4} parent=0 // loop_footer
    %s15 = sadd.s32 1, %s11
  $region7: #{gcnfg_forward.4} parent=0 // loop_footer_branch
    %10 = sbr.rel target = $region3
  $region8: #{gcnfg_forward.4} parent=0 // loop_exit
    _

// kernel: gcnfg_forward.5
$region0: #{gcnfg_forward.5}
  #allocation0 [shape = 'u32[]', space=smem, size = 0x4, offset = 0x4, fixed_abs, tag = 'smem constant byte address 0x4 - core index']
  #allocation1 [shape = 'u32[72,128]{1,0:T(1,128)}', space=vmem, size = 0x9000, scoped, tag = 'internal scratch']
  #allocation2 [shape = 'f32[1,1]{1,0:T(1,128)S(1)}', space=vmem, size = 0x200, scoped, tag = 'scoped memory for gcnfg_forward.5']
  %s0 = inlined_call_operand.vmem [shape: f32[2,128], index: 0, kind: input, shape index: {}]
  %s1 = inlined_call_operand.vmem [shape: f32[2,128], index: 1, kind: input, shape index: {}]
  %s2 = inlined_call_operand.vmem [shape: f32[2,300], index: 2, kind: input, shape index: {}]
  %s3 = inlined_call_operand.vmem [shape: bf16[300,128], index: 3, kind: input, shape index: {}]
  %s4 = inlined_call_operand.vmem [shape: f32[1,128], index: 4, kind: input, shape index: {}]
  %s5 = inlined_call_operand.vmem [shape: bf16[128,1024], index: 5, kind: input, shape index: {}]
  %s6 = inlined_call_operand.vmem [shape: bf16[128,1024], index: 6, kind: input, shape index: {}]
  %s7 = inlined_call_operand.vmem [shape: bf16[128,1024], index: 7, kind: input, shape index: {}]
  %s8 = inlined_call_operand.vmem [shape: f32[1,1024], index: 8, kind: input, shape index: {}]
  %s9 = inlined_call_operand.vmem [shape: bf16[1024,512], index: 9, kind: input, shape index: {}]
  %s10 = inlined_call_operand.vmem [shape: f32[1,512], index: 10, kind: input, shape index: {}]
  %s11 = inlined_call_operand.vmem [shape: bf16[512,1], index: 11, kind: input, shape index: {}]
  %s12 = inlined_call_operand.<no memory space> [shape: f32[1,1], index: 12, kind: input, shape index: {}]
  %s13 = inlined_call_operand.vmem [shape: f32[2,1], index: 13, kind: output, shape index: {}]
  %s14 = sld [smem:[#allocation0]]
  $region62: #{gcnfg_forward.5} parent=0
    _
  %s16 = ssub.s32 1, %s14
  %s17 = scalar_select 0, %s16, %s14
  %v18 = vstv %s12
  %19 = vst [vmem:[#allocation2] sm:$0x1] %v18
  // Predicated region
  $region2: #{gcnfg_forward.5} parent=0 // pred_check
    _
  $region3: #{gcnfg_forward.5} parent=0 // pred_check_branch
    %21 = sbr.rel (0) target = $region5
  $region4: #{gcnfg_forward.5} parent=0 // pred_region
    _
  $region5: #{gcnfg_forward.5} parent=0 // pred_fallthru
    _
  // Predicated region
  $region6: #{gcnfg_forward.5} parent=0 // pred_check
    _
  $region7: #{gcnfg_forward.5} parent=0 // pred_check_branch
    %23 = sbr.rel (0) target = $region9
  $region8: #{gcnfg_forward.5} parent=0 // pred_region
    _
  $region9: #{gcnfg_forward.5} parent=0 // pred_fallthru
    _
  // Predicated region
  $region10: #{gcnfg_forward.5} parent=0 // pred_check
    _
  $region11: #{gcnfg_forward.5} parent=0 // pred_check_branch
    %25 = sbr.rel (0) target = $region13
  $region12: #{gcnfg_forward.5} parent=0 // pred_region
    _
  $region13: #{gcnfg_forward.5} parent=0 // pred_fallthru
    _
  // Predicated region
  $region14: #{gcnfg_forward.5} parent=0 // pred_check
    _
  $region15: #{gcnfg_forward.5} parent=0 // pred_check_branch
    %27 = sbr.rel (0) target = $region17
  $region16: #{gcnfg_forward.5} parent=0 // pred_region
    _
  $region17: #{gcnfg_forward.5} parent=0 // pred_fallthru
    _
  // Predicated region
  $region18: #{gcnfg_forward.5} parent=0 // pred_check
    _
  $region19: #{gcnfg_forward.5} parent=0 // pred_check_branch
    %29 = sbr.rel (0) target = $region21
  $region20: #{gcnfg_forward.5} parent=0 // pred_region
    _
  $region21: #{gcnfg_forward.5} parent=0 // pred_fallthru
    _
  // Predicated region
  $region22: #{gcnfg_forward.5} parent=0 // pred_check
    _
  $region23: #{gcnfg_forward.5} parent=0 // pred_check_branch
    %31 = sbr.rel (0) target = $region25
  $region24: #{gcnfg_forward.5} parent=0 // pred_region
    _
  $region25: #{gcnfg_forward.5} parent=0 // pred_fallthru
    _
  // Predicated region
  $region26: #{gcnfg_forward.5} parent=0 // pred_check
    _
  $region27: #{gcnfg_forward.5} parent=0 // pred_check_branch
    %33 = sbr.rel (0) target = $region29
  $region28: #{gcnfg_forward.5} parent=0 // pred_region
    _
  $region29: #{gcnfg_forward.5} parent=0 // pred_fallthru
    _
  // Predicated region
  $region30: #{gcnfg_forward.5} parent=0 // pred_check
    _
  $region31: #{gcnfg_forward.5} parent=0 // pred_check_branch
    %35 = sbr.rel (0) target = $region33
  $region32: #{gcnfg_forward.5} parent=0 // pred_region
    _
  $region33: #{gcnfg_forward.5} parent=0 // pred_fallthru
    _
  // Predicated region
  $region34: #{gcnfg_forward.5} parent=0 // pred_check
    _
  $region35: #{gcnfg_forward.5} parent=0 // pred_check_branch
    %37 = sbr.rel (0) target = $region37
  $region36: #{gcnfg_forward.5} parent=0 // pred_region
    _
  $region37: #{gcnfg_forward.5} parent=0 // pred_fallthru
    _
  // Predicated region
  $region38: #{gcnfg_forward.5} parent=0 // pred_check
    _
  $region39: #{gcnfg_forward.5} parent=0 // pred_check_branch
    %39 = sbr.rel (0) target = $region41
  $region40: #{gcnfg_forward.5} parent=0 // pred_region
    _
  $region41: #{gcnfg_forward.5} parent=0 // pred_fallthru
    _
  // Predicated region
  $region42: #{gcnfg_forward.5} parent=0 // pred_check
    _
  $region43: #{gcnfg_forward.5} parent=0 // pred_check_branch
    %41 = sbr.rel (0) target = $region45
  $region44: #{gcnfg_forward.5} parent=0 // pred_region
    _
  $region45: #{gcnfg_forward.5} parent=0 // pred_fallthru
    _
  // Predicated region
  $region46: #{gcnfg_forward.5} parent=0 // pred_check
    _
  $region47: #{gcnfg_forward.5} parent=0 // pred_check_branch
    %43 = sbr.rel (0) target = $region49
  $region48: #{gcnfg_forward.5} parent=0 // pred_region
    _
  $region49: #{gcnfg_forward.5} parent=0 // pred_fallthru
    _
  // Predicated region
  $region50: #{gcnfg_forward.5} parent=0 // pred_check
    _
  $region51: #{gcnfg_forward.5} parent=0 // pred_check_branch
    %45 = sbr.rel (0) target = $region53
  $region52: #{gcnfg_forward.5} parent=0 // pred_region
    _
  $region53: #{gcnfg_forward.5} parent=0 // pred_fallthru
    _
  %v47 = vld [vmem:[%s2] sm:$0x3f]
  %49 = vst [vmem:[#allocation1] ss:$4 sm:$0xff] %v47
  %v50 = vld.sshfl [vmem:[#allocation1] sm:$0xff pattern:$0x73625140]
  %v51 = vld.sshfl [vmem:[#allocation1 + $0x8] sm:$0xff pattern:$0x73625140]
  %v52 = vld.sshfl [vmem:[#allocation1 + $0x10] sm:$0xff pattern:$0x73625140]
  %v56 = vpack.c.bf16 %v50, %v50
  %v57 = vpack.c.bf16 %v51, %v51
  %v58 = vpack.c.bf16 %v52, %v52
  %v59 = vld [vmem:[%s3] sm:$0xf]
  %v60 = vld [vmem:[%s3 + $0x4] sm:$0xf]
  %v61 = vld [vmem:[%s3 + $0x8] sm:$0xf]
  %v62 = vld [vmem:[%s3 + $0xc] sm:$0xf]
  %v63 = vld [vmem:[%s3 + $0x10] sm:$0xf]
  %v64 = vld [vmem:[%s3 + $0x14] sm:$0xf]
  %v65 = vld [vmem:[%s3 + $0x18] sm:$0xf]
  %v66 = vld [vmem:[%s3 + $0x1c] sm:$0xf]
  %v67 = vld [vmem:[%s3 + $0x20] sm:$0xf]
  %v68 = vld [vmem:[%s3 + $0x24] sm:$0xf]
  %v69 = vld [vmem:[%s3 + $0x28] sm:$0xf]
  %v70 = vld [vmem:[%s3 + $0x2c] sm:$0xf]
  %v71 = vld [vmem:[%s3 + $0x30] sm:$0xf]
  %v72 = vld [vmem:[%s3 + $0x34] sm:$0xf]
  %v73 = vld [vmem:[%s3 + $0x38] sm:$0xf]
  %v74 = vld [vmem:[%s3 + $0x3c] sm:$0xf]
  %v75 = vld [vmem:[%s3 + $0x40] sm:$0xf]
  %v76 = vld [vmem:[%s3 + $0x44] sm:$0xf]
  %v77 = vld [vmem:[%s3 + $0x48] sm:$0xf]
  %v78 = vld [vmem:[%s3 + $0x4c] sm:$0xf]
  %v79 = vld [vmem:[%s3 + $0x50] sm:$0xf]
  %v80 = vld [vmem:[%s3 + $0x54] sm:$0xf]
  %v81 = vld [vmem:[%s3 + $0x58] sm:$0xf]
  %v82 = vld [vmem:[%s3 + $0x5c] sm:$0xf]
  %v83 = vld [vmem:[%s3 + $0x60] sm:$0xf]
  %v84 = vld [vmem:[%s3 + $0x64] sm:$0xf]
  %v85 = vld [vmem:[%s3 + $0x68] sm:$0xf]
  %v86 = vld [vmem:[%s3 + $0x6c] sm:$0xf]
  %v87 = vld [vmem:[%s3 + $0x70] sm:$0xf]
  %v88 = vld [vmem:[%s3 + $0x74] sm:$0xf]
  %v89 = vld [vmem:[%s3 + $0x78] sm:$0xf]
  %v90 = vld [vmem:[%s3 + $0x7c] sm:$0xf]
  %v91 = vld [vmem:[%s3 + $0x80] sm:$0xf]
  %v92 = vld [vmem:[%s3 + $0x84] sm:$0xf]
  %v93 = vld [vmem:[%s3 + $0x88] sm:$0xf]
  %v94 = vld [vmem:[%s3 + $0x8c] sm:$0xf]
  %v95 = vld [vmem:[%s3 + $0x90] sm:$0xf]
  %v96 = vld [vmem:[%s3 + $0x94] sm:$0x3]
  %v97 = vld [vmem:[%s4] sm:$0x1]
  %v99 = vperm.slane %v97, 0
  %v139 = vunpack.c.l.b16 %v59
  %v140 = vunpack.c.l.b16 %v60
  %v141 = vunpack.c.l.b16 %v61
  %v142 = vunpack.c.l.b16 %v62
  %v143 = vunpack.c.l.b16 %v63
  %v144 = vunpack.c.l.b16 %v64
  %v145 = vunpack.c.l.b16 %v65
  %v146 = vunpack.c.l.b16 %v66
  %v147 = vunpack.c.l.b16 %v67
  %v148 = vunpack.c.l.b16 %v68
  %v149 = vunpack.c.l.b16 %v69
  %v150 = vunpack.c.l.b16 %v70
  %v151 = vunpack.c.l.b16 %v71
  %v152 = vunpack.c.l.b16 %v72
  %v153 = vunpack.c.l.b16 %v73
  %v154 = vunpack.c.l.b16 %v74
  %v155 = vunpack.c.l.b16 %v75
  %v156 = vunpack.c.l.b16 %v76
  %v157 = vunpack.c.l.b16 %v77
  %v158 = vunpack.c.l.b16 %v78
  %v159 = vunpack.c.l.b16 %v79
  %v160 = vunpack.c.l.b16 %v80
  %v161 = vunpack.c.l.b16 %v81
  %v162 = vunpack.c.l.b16 %v82
  %v163 = vunpack.c.l.b16 %v83
  %v164 = vunpack.c.l.b16 %v84
  %v165 = vunpack.c.l.b16 %v85
  %v166 = vunpack.c.l.b16 %v86
  %v167 = vunpack.c.l.b16 %v87
  %v168 = vunpack.c.l.b16 %v88
  %v169 = vunpack.c.l.b16 %v89
  %v170 = vunpack.c.l.b16 %v90
  %v171 = vunpack.c.l.b16 %v91
  %v172 = vunpack.c.l.b16 %v92
  %v173 = vunpack.c.l.b16 %v93
  %v174 = vunpack.c.l.b16 %v94
  %v175 = vunpack.c.l.b16 %v95
  %v176 = vunpack.c.l.b16 %v96
  %v177 = vpack.c.b16 %v140, %v139
  %v178 = vpack.c.b16 %v142, %v141
  %v179 = vpack.c.b16 %v144, %v143
  %v180 = vpack.c.b16 %v146, %v145
  %v181 = vpack.c.b16 %v148, %v147
  %v182 = vpack.c.b16 %v150, %v149
  %v183 = vpack.c.b16 %v152, %v151
  %v184 = vpack.c.b16 %v154, %v153
  %v185 = vpack.c.b16 %v156, %v155
  %v186 = vpack.c.b16 %v158, %v157
  %v187 = vpack.c.b16 %v160, %v159
  %v188 = vpack.c.b16 %v162, %v161
  %v189 = vpack.c.b16 %v164, %v163
  %v190 = vpack.c.b16 %v166, %v165
  %v191 = vpack.c.b16 %v168, %v167
  %v192 = vpack.c.b16 %v170, %v169
  %v193 = vpack.c.b16 %v172, %v171
  %v194 = vpack.c.b16 %v174, %v173
  %v195 = vpack.c.b16 %v176, %v175
  %vm214 = vcmask 359424
  %v216 = vsel %vm214, %v58, 0
  %vm218 = vcmask 1045504
  %v220 = vsel %vm218, %v195, 0
  %222 = vmatpush.bf16.msra.mxu0 %v184
  %223 = vmatpush.bf16.msra.mxu0 %v183
  %224 = vmatpush.bf16.msra.mxu0 %v182
  %225 = vmatpush.bf16.msra.mxu0 %v181
  %226 = vmatpush.bf16.msra.mxu0 %v180
  %227 = vmatpush.bf16.msra.mxu0 %v179
  %228 = vmatpush.bf16.msra.mxu0 %v178
  %229 = vmatpush.bf16.msra.mxu0 %v177
  %230 = vmatmul.bf16.gmra.mxu0 %v56
  %v231 = vpop.f32.mrf.mxu0
  %v232 = vadd.f32 %v99, %v231
  %v233 = vpop.f32.mrf.mxu0
  %234 = vdwg.mxu0
  %235 = vmatpush.bf16.msra.mxu0 %v192
  %236 = vmatpush.bf16.msra.mxu0 %v191
  %237 = vmatpush.bf16.msra.mxu0 %v190
  %238 = vmatpush.bf16.msra.mxu0 %v189
  %239 = vmatpush.bf16.msra.mxu0 %v188
  %240 = vmatpush.bf16.msra.mxu0 %v187
  %241 = vmatpush.bf16.msra.mxu0 %v186
  %242 = vmatpush.bf16.msra.mxu0 %v185
  %243 = vmatmul.bf16.gmra.mxu0 %v57
  %v244 = vpop.f32.mrf.mxu0
  %v245 = vadd.f32 %v232, %v244
  %v246 = vpop.f32.mrf.mxu0
  %247 = vdwg.mxu0
  %248 = vmatpush.bf16.msra.mxu0 0
  %249 = vmatpush.bf16.msra.mxu0 0
  %250 = vmatpush.bf16.msra.mxu0 0
  %251 = vmatpush.bf16.msra.mxu0 0
  %252 = vmatpush.bf16.msra.mxu0 0
  %253 = vmatpush.bf16.msra.mxu0 %v220
  %254 = vmatpush.bf16.msra.mxu0 %v194
  %255 = vmatpush.bf16.msra.mxu0 %v193
  %256 = vmatmul.bf16.gmra.mxu0 %v216
  %v257 = vpop.f32.mrf.mxu0
  %v258 = vadd.f32 %v245, %v257
  %v259 = vpop.f32.mrf.mxu0
  %260 = vdwg.mxu0
  %v261 = vld [vmem:[%s0] sm:$0x3]
  %v262 = vpack.c.bf16 %v261, %v261
  %v263 = vld [vmem:[%s5] sm:$0xff]
  %v264 = vld [vmem:[%s5 + $0x8] sm:$0xff]
  %v265 = vld [vmem:[%s5 + $0x10] sm:$0xff]
  %v266 = vld [vmem:[%s5 + $0x18] sm:$0xff]
  %v267 = vld [vmem:[%s5 + $0x20] sm:$0xff]
  %v268 = vld [vmem:[%s5 + $0x28] sm:$0xff]
  %v269 = vld [vmem:[%s5 + $0x30] sm:$0xff]
  %v270 = vld [vmem:[%s5 + $0x38] sm:$0xff]
  %v271 = vld [vmem:[%s5 + $0x40] sm:$0xff]
  %v272 = vld [vmem:[%s5 + $0x48] sm:$0xff]
  %v273 = vld [vmem:[%s5 + $0x50] sm:$0xff]
  %v274 = vld [vmem:[%s5 + $0x58] sm:$0xff]
  %v275 = vld [vmem:[%s5 + $0x60] sm:$0xff]
  %v276 = vld [vmem:[%s5 + $0x68] sm:$0xff]
  %v277 = vld [vmem:[%s5 + $0x70] sm:$0xff]
  %v278 = vld [vmem:[%s5 + $0x78] sm:$0xff]
  %v279 = vld [vmem:[%s5 + $0x80] sm:$0xff]
  %v280 = vld [vmem:[%s5 + $0x88] sm:$0xff]
  %v281 = vld [vmem:[%s5 + $0x90] sm:$0xff]
  %v282 = vld [vmem:[%s5 + $0x98] sm:$0xff]
  %v283 = vld [vmem:[%s5 + $0xa0] sm:$0xff]
  %v284 = vld [vmem:[%s5 + $0xa8] sm:$0xff]
  %v285 = vld [vmem:[%s5 + $0xb0] sm:$0xff]
  %v286 = vld [vmem:[%s5 + $0xb8] sm:$0xff]
  %v287 = vld [vmem:[%s5 + $0xc0] sm:$0xff]
  %v288 = vld [vmem:[%s5 + $0xc8] sm:$0xff]
  %v289 = vld [vmem:[%s5 + $0xd0] sm:$0xff]
  %v290 = vld [vmem:[%s5 + $0xd8] sm:$0xff]
  %v291 = vld [vmem:[%s5 + $0xe0] sm:$0xff]
  %v292 = vld [vmem:[%s5 + $0xe8] sm:$0xff]
  %v293 = vld [vmem:[%s5 + $0xf0] sm:$0xff]
  %v294 = vld [vmem:[%s5 + $0xf8] sm:$0xff]
  %v295 = vld [vmem:[%s5 + $0x100] sm:$0xff]
  %v296 = vld [vmem:[%s5 + $0x108] sm:$0xff]
  %v297 = vld [vmem:[%s5 + $0x110] sm:$0xff]
  %v298 = vld [vmem:[%s5 + $0x118] sm:$0xff]
  %v299 = vld [vmem:[%s5 + $0x120] sm:$0xff]
  %v300 = vld [vmem:[%s5 + $0x128] sm:$0xff]
  %v301 = vld [vmem:[%s5 + $0x130] sm:$0xff]
  %v302 = vld [vmem:[%s5 + $0x138] sm:$0xff]
  %v303 = vld [vmem:[%s5 + $0x140] sm:$0xff]
  %v304 = vld [vmem:[%s5 + $0x148] sm:$0xff]
  %v305 = vld [vmem:[%s5 + $0x150] sm:$0xff]
  %v306 = vld [vmem:[%s5 + $0x158] sm:$0xff]
  %v307 = vld [vmem:[%s5 + $0x160] sm:$0xff]
  %v308 = vld [vmem:[%s5 + $0x168] sm:$0xff]
  %v309 = vld [vmem:[%s5 + $0x170] sm:$0xff]
  %v310 = vld [vmem:[%s5 + $0x178] sm:$0xff]
  %v311 = vld [vmem:[%s5 + $0x180] sm:$0xff]
  %v312 = vld [vmem:[%s5 + $0x188] sm:$0xff]
  %v313 = vld [vmem:[%s5 + $0x190] sm:$0xff]
  %v314 = vld [vmem:[%s5 + $0x198] sm:$0xff]
  %v315 = vld [vmem:[%s5 + $0x1a0] sm:$0xff]
  %v316 = vld [vmem:[%s5 + $0x1a8] sm:$0xff]
  %v317 = vld [vmem:[%s5 + $0x1b0] sm:$0xff]
  %v318 = vld [vmem:[%s5 + $0x1b8] sm:$0xff]
  %v319 = vld [vmem:[%s5 + $0x1c0] sm:$0xff]
  %v320 = vld [vmem:[%s5 + $0x1c8] sm:$0xff]
  %v321 = vld [vmem:[%s5 + $0x1d0] sm:$0xff]
  %v322 = vld [vmem:[%s5 + $0x1d8] sm:$0xff]
  %v323 = vld [vmem:[%s5 + $0x1e0] sm:$0xff]
  %v324 = vld [vmem:[%s5 + $0x1e8] sm:$0xff]
  %v325 = vld [vmem:[%s5 + $0x1f0] sm:$0xff]
  %v326 = vld [vmem:[%s5 + $0x1f8] sm:$0xff]
  %v327 = vld [vmem:[%s1] sm:$0x3]
  %v328 = vpack.c.bf16 %v327, %v327
  %v329 = vld [vmem:[%s6] sm:$0xff]
  %v330 = vld [vmem:[%s6 + $0x8] sm:$0xff]
  %v331 = vld [vmem:[%s6 + $0x10] sm:$0xff]
  %v332 = vld [vmem:[%s6 + $0x18] sm:$0xff]
  %v333 = vld [vmem:[%s6 + $0x20] sm:$0xff]
  %v334 = vld [vmem:[%s6 + $0x28] sm:$0xff]
  %v335 = vld [vmem:[%s6 + $0x30] sm:$0xff]
  %v336 = vld [vmem:[%s6 + $0x38] sm:$0xff]
  %v337 = vld [vmem:[%s6 + $0x40] sm:$0xff]
  %v338 = vld [vmem:[%s6 + $0x48] sm:$0xff]
  %v339 = vld [vmem:[%s6 + $0x50] sm:$0xff]
  %v340 = vld [vmem:[%s6 + $0x58] sm:$0xff]
  %v341 = vld [vmem:[%s6 + $0x60] sm:$0xff]
  %v342 = vld [vmem:[%s6 + $0x68] sm:$0xff]
  %v343 = vld [vmem:[%s6 + $0x70] sm:$0xff]
  %v344 = vld [vmem:[%s6 + $0x78] sm:$0xff]
  %v345 = vld [vmem:[%s6 + $0x80] sm:$0xff]
  %v346 = vld [vmem:[%s6 + $0x88] sm:$0xff]
  %v347 = vld [vmem:[%s6 + $0x90] sm:$0xff]
  %v348 = vld [vmem:[%s6 + $0x98] sm:$0xff]
  %v349 = vld [vmem:[%s6 + $0xa0] sm:$0xff]
  %v350 = vld [vmem:[%s6 + $0xa8] sm:$0xff]
  %v351 = vld [vmem:[%s6 + $0xb0] sm:$0xff]
  %v352 = vld [vmem:[%s6 + $0xb8] sm:$0xff]
  %v353 = vld [vmem:[%s6 + $0xc0] sm:$0xff]
  %v354 = vld [vmem:[%s6 + $0xc8] sm:$0xff]
  %v355 = vld [vmem:[%s6 + $0xd0] sm:$0xff]
  %v356 = vld [vmem:[%s6 + $0xd8] sm:$0xff]
  %v357 = vld [vmem:[%s6 + $0xe0] sm:$0xff]
  %v358 = vld [vmem:[%s6 + $0xe8] sm:$0xff]
  %v359 = vld [vmem:[%s6 + $0xf0] sm:$0xff]
  %v360 = vld [vmem:[%s6 + $0xf8] sm:$0xff]
  %v361 = vld [vmem:[%s6 + $0x100] sm:$0xff]
  %v362 = vld [vmem:[%s6 + $0x108] sm:$0xff]
  %v363 = vld [vmem:[%s6 + $0x110] sm:$0xff]
  %v364 = vld [vmem:[%s6 + $0x118] sm:$0xff]
  %v365 = vld [vmem:[%s6 + $0x120] sm:$0xff]
  %v366 = vld [vmem:[%s6 + $0x128] sm:$0xff]
  %v367 = vld [vmem:[%s6 + $0x130] sm:$0xff]
  %v368 = vld [vmem:[%s6 + $0x138] sm:$0xff]
  %v369 = vld [vmem:[%s6 + $0x140] sm:$0xff]
  %v370 = vld [vmem:[%s6 + $0x148] sm:$0xff]
  %v371 = vld [vmem:[%s6 + $0x150] sm:$0xff]
  %v372 = vld [vmem:[%s6 + $0x158] sm:$0xff]
  %v373 = vld [vmem:[%s6 + $0x160] sm:$0xff]
  %v374 = vld [vmem:[%s6 + $0x168] sm:$0xff]
  %v375 = vld [vmem:[%s6 + $0x170] sm:$0xff]
  %v376 = vld [vmem:[%s6 + $0x178] sm:$0xff]
  %v377 = vld [vmem:[%s6 + $0x180] sm:$0xff]
  %v378 = vld [vmem:[%s6 + $0x188] sm:$0xff]
  %v379 = vld [vmem:[%s6 + $0x190] sm:$0xff]
  %v380 = vld [vmem:[%s6 + $0x198] sm:$0xff]
  %v381 = vld [vmem:[%s6 + $0x1a0] sm:$0xff]
  %v382 = vld [vmem:[%s6 + $0x1a8] sm:$0xff]
  %v383 = vld [vmem:[%s6 + $0x1b0] sm:$0xff]
  %v384 = vld [vmem:[%s6 + $0x1b8] sm:$0xff]
  %v385 = vld [vmem:[%s6 + $0x1c0] sm:$0xff]
  %v386 = vld [vmem:[%s6 + $0x1c8] sm:$0xff]
  %v387 = vld [vmem:[%s6 + $0x1d0] sm:$0xff]
  %v388 = vld [vmem:[%s6 + $0x1d8] sm:$0xff]
  %v389 = vld [vmem:[%s6 + $0x1e0] sm:$0xff]
  %v390 = vld [vmem:[%s6 + $0x1e8] sm:$0xff]
  %v391 = vld [vmem:[%s6 + $0x1f0] sm:$0xff]
  %v392 = vld [vmem:[%s6 + $0x1f8] sm:$0xff]
  %v457 = vunpack.c.l.b16 %v329
  %v458 = vunpack.c.h.b16 %v329
  %v459 = vunpack.c.l.b16 %v330
  %v460 = vunpack.c.h.b16 %v330
  %v461 = vunpack.c.l.b16 %v331
  %v462 = vunpack.c.h.b16 %v331
  %v463 = vunpack.c.l.b16 %v332
  %v464 = vunpack.c.h.b16 %v332
  %v465 = vunpack.c.l.b16 %v333
  %v466 = vunpack.c.h.b16 %v333
  %v467 = vunpack.c.l.b16 %v334
  %v468 = vunpack.c.h.b16 %v334
  %v469 = vunpack.c.l.b16 %v335
  %v470 = vunpack.c.h.b16 %v335
  %v471 = vunpack.c.l.b16 %v336
  %v472 = vunpack.c.h.b16 %v336
  %v473 = vunpack.c.l.b16 %v337
  %v474 = vunpack.c.h.b16 %v337
  %v475 = vunpack.c.l.b16 %v338
  %v476 = vunpack.c.h.b16 %v338
  %v477 = vunpack.c.l.b16 %v339
  %v478 = vunpack.c.h.b16 %v339
  %v479 = vunpack.c.l.b16 %v340
  %v480 = vunpack.c.h.b16 %v340
  %v481 = vunpack.c.l.b16 %v341
  %v482 = vunpack.c.h.b16 %v341
  %v483 = vunpack.c.l.b16 %v342
  %v484 = vunpack.c.h.b16 %v342
  %v485 = vunpack.c.l.b16 %v343
  %v486 = vunpack.c.h.b16 %v343
  %v487 = vunpack.c.l.b16 %v344
  %v488 = vunpack.c.h.b16 %v344
  %v489 = vunpack.c.l.b16 %v345
  %v490 = vunpack.c.h.b16 %v345
  %v491 = vunpack.c.l.b16 %v346
  %v492 = vunpack.c.h.b16 %v346
  %v493 = vunpack.c.l.b16 %v347
  %v494 = vunpack.c.h.b16 %v347
  %v495 = vunpack.c.l.b16 %v348
  %v496 = vunpack.c.h.b16 %v348
  %v497 = vunpack.c.l.b16 %v349
  %v498 = vunpack.c.h.b16 %v349
  %v499 = vunpack.c.l.b16 %v350
  %v500 = vunpack.c.h.b16 %v350
  %v501 = vunpack.c.l.b16 %v351
  %v502 = vunpack.c.h.b16 %v351
  %v503 = vunpack.c.l.b16 %v352
  %v504 = vunpack.c.h.b16 %v352
  %v505 = vunpack.c.l.b16 %v353
  %v506 = vunpack.c.h.b16 %v353
  %v507 = vunpack.c.l.b16 %v354
  %v508 = vunpack.c.h.b16 %v354
  %v509 = vunpack.c.l.b16 %v355
  %v510 = vunpack.c.h.b16 %v355
  %v511 = vunpack.c.l.b16 %v356
  %v512 = vunpack.c.h.b16 %v356
  %v513 = vunpack.c.l.b16 %v357
  %v514 = vunpack.c.h.b16 %v357
  %v515 = vunpack.c.l.b16 %v358
  %v516 = vunpack.c.h.b16 %v358
  %v517 = vunpack.c.l.b16 %v359
  %v518 = vunpack.c.h.b16 %v359
  %v519 = vunpack.c.l.b16 %v360
  %v520 = vunpack.c.h.b16 %v360
  %v521 = vunpack.c.l.b16 %v361
  %v522 = vunpack.c.h.b16 %v361
  %v523 = vunpack.c.l.b16 %v362
  %v524 = vunpack.c.h.b16 %v362
  %v525 = vunpack.c.l.b16 %v363
  %v526 = vunpack.c.h.b16 %v363
  %v527 = vunpack.c.l.b16 %v364
  %v528 = vunpack.c.h.b16 %v364
  %v529 = vunpack.c.l.b16 %v365
  %v530 = vunpack.c.h.b16 %v365
  %v531 = vunpack.c.l.b16 %v366
  %v532 = vunpack.c.h.b16 %v366
  %v533 = vunpack.c.l.b16 %v367
  %v534 = vunpack.c.h.b16 %v367
  %v535 = vunpack.c.l.b16 %v368
  %v536 = vunpack.c.h.b16 %v368
  %v537 = vunpack.c.l.b16 %v369
  %v538 = vunpack.c.h.b16 %v369
  %v539 = vunpack.c.l.b16 %v370
  %v540 = vunpack.c.h.b16 %v370
  %v541 = vunpack.c.l.b16 %v371
  %v542 = vunpack.c.h.b16 %v371
  %v543 = vunpack.c.l.b16 %v372
  %v544 = vunpack.c.h.b16 %v372
  %v545 = vunpack.c.l.b16 %v373
  %v546 = vunpack.c.h.b16 %v373
  %v547 = vunpack.c.l.b16 %v374
  %v548 = vunpack.c.h.b16 %v374
  %v549 = vunpack.c.l.b16 %v375
  %v550 = vunpack.c.h.b16 %v375
  %v551 = vunpack.c.l.b16 %v376
  %v552 = vunpack.c.h.b16 %v376
  %v553 = vunpack.c.l.b16 %v377
  %v554 = vunpack.c.h.b16 %v377
  %v555 = vunpack.c.l.b16 %v378
  %v556 = vunpack.c.h.b16 %v378
  %v557 = vunpack.c.l.b16 %v379
  %v558 = vunpack.c.h.b16 %v379
  %v559 = vunpack.c.l.b16 %v380
  %v560 = vunpack.c.h.b16 %v380
  %v561 = vunpack.c.l.b16 %v381
  %v562 = vunpack.c.h.b16 %v381
  %v563 = vunpack.c.l.b16 %v382
  %v564 = vunpack.c.h.b16 %v382
  %v565 = vunpack.c.l.b16 %v383
  %v566 = vunpack.c.h.b16 %v383
  %v567 = vunpack.c.l.b16 %v384
  %v568 = vunpack.c.h.b16 %v384
  %v569 = vunpack.c.l.b16 %v385
  %v570 = vunpack.c.h.b16 %v385
  %v571 = vunpack.c.l.b16 %v386
  %v572 = vunpack.c.h.b16 %v386
  %v573 = vunpack.c.l.b16 %v387
  %v574 = vunpack.c.h.b16 %v387
  %v575 = vunpack.c.l.b16 %v388
  %v576 = vunpack.c.h.b16 %v388
  %v577 = vunpack.c.l.b16 %v389
  %v578 = vunpack.c.h.b16 %v389
  %v579 = vunpack.c.l.b16 %v390
  %v580 = vunpack.c.h.b16 %v390
  %v581 = vunpack.c.l.b16 %v391
  %v582 = vunpack.c.h.b16 %v391
  %v583 = vunpack.c.l.b16 %v392
  %v584 = vunpack.c.h.b16 %v392
  %v585 = vpack.c.b16 %v465, %v457
  %v586 = vpack.c.b16 %v466, %v458
  %v587 = vpack.c.b16 %v467, %v459
  %v588 = vpack.c.b16 %v468, %v460
  %v589 = vpack.c.b16 %v469, %v461
  %v590 = vpack.c.b16 %v470, %v462
  %v591 = vpack.c.b16 %v471, %v463
  %v592 = vpack.c.b16 %v472, %v464
  %v593 = vpack.c.b16 %v481, %v473
  %v594 = vpack.c.b16 %v482, %v474
  %v595 = vpack.c.b16 %v483, %v475
  %v596 = vpack.c.b16 %v484, %v476
  %v597 = vpack.c.b16 %v485, %v477
  %v598 = vpack.c.b16 %v486, %v478
  %v599 = vpack.c.b16 %v487, %v479
  %v600 = vpack.c.b16 %v488, %v480
  %v601 = vpack.c.b16 %v497, %v489
  %v602 = vpack.c.b16 %v498, %v490
  %v603 = vpack.c.b16 %v499, %v491
  %v604 = vpack.c.b16 %v500, %v492
  %v605 = vpack.c.b16 %v501, %v493
  %v606 = vpack.c.b16 %v502, %v494
  %v607 = vpack.c.b16 %v503, %v495
  %v608 = vpack.c.b16 %v504, %v496
  %v609 = vpack.c.b16 %v513, %v505
  %v610 = vpack.c.b16 %v514, %v506
  %v611 = vpack.c.b16 %v515, %v507
  %v612 = vpack.c.b16 %v516, %v508
  %v613 = vpack.c.b16 %v517, %v509
  %v614 = vpack.c.b16 %v518, %v510
  %v615 = vpack.c.b16 %v519, %v511
  %v616 = vpack.c.b16 %v520, %v512
  %v617 = vpack.c.b16 %v529, %v521
  %v618 = vpack.c.b16 %v530, %v522
  %v619 = vpack.c.b16 %v531, %v523
  %v620 = vpack.c.b16 %v532, %v524
  %v621 = vpack.c.b16 %v533, %v525
  %v622 = vpack.c.b16 %v534, %v526
  %v623 = vpack.c.b16 %v535, %v527
  %v624 = vpack.c.b16 %v536, %v528
  %v625 = vpack.c.b16 %v545, %v537
  %v626 = vpack.c.b16 %v546, %v538
  %v627 = vpack.c.b16 %v547, %v539
  %v628 = vpack.c.b16 %v548, %v540
  %v629 = vpack.c.b16 %v549, %v541
  %v630 = vpack.c.b16 %v550, %v542
  %v631 = vpack.c.b16 %v551, %v543
  %v632 = vpack.c.b16 %v552, %v544
  %v633 = vpack.c.b16 %v561, %v553
  %v634 = vpack.c.b16 %v562, %v554
  %v635 = vpack.c.b16 %v563, %v555
  %v636 = vpack.c.b16 %v564, %v556
  %v637 = vpack.c.b16 %v565, %v557
  %v638 = vpack.c.b16 %v566, %v558
  %v639 = vpack.c.b16 %v567, %v559
  %v640 = vpack.c.b16 %v568, %v560
  %v641 = vpack.c.b16 %v577, %v569
  %v642 = vpack.c.b16 %v578, %v570
  %v643 = vpack.c.b16 %v579, %v571
  %v644 = vpack.c.b16 %v580, %v572
  %v645 = vpack.c.b16 %v581, %v573
  %v646 = vpack.c.b16 %v582, %v574
  %v647 = vpack.c.b16 %v583, %v575
  %v648 = vpack.c.b16 %v584, %v576
  %713 = vmatpush.bf16.msra.mxu0 %v641
  %714 = vmatpush.bf16.msra.mxu0 %v633
  %715 = vmatpush.bf16.msra.mxu0 %v625
  %716 = vmatpush.bf16.msra.mxu0 %v617
  %717 = vmatpush.bf16.msra.mxu0 %v609
  %718 = vmatpush.bf16.msra.mxu0 %v601
  %719 = vmatpush.bf16.msra.mxu0 %v593
  %720 = vmatpush.bf16.msra.mxu0 %v585
  %721 = vmatmul.bf16.gmra.mxu0 %v328
  %v722 = vpop.f32.mrf.mxu0
  %v723 = vadd.f32 0.0, %v722
  %v724 = vpop.f32.mrf.mxu0
  %725 = vdwg.mxu0
  %726 = vmatpush.bf16.msra.mxu0 %v642
  %727 = vmatpush.bf16.msra.mxu0 %v634
  %728 = vmatpush.bf16.msra.mxu0 %v626
  %729 = vmatpush.bf16.msra.mxu0 %v618
  %730 = vmatpush.bf16.msra.mxu0 %v610
  %731 = vmatpush.bf16.msra.mxu0 %v602
  %732 = vmatpush.bf16.msra.mxu0 %v594
  %733 = vmatpush.bf16.msra.mxu0 %v586
  %734 = vmatmul.bf16.gmra.mxu0 %v328
  %v735 = vpop.f32.mrf.mxu0
  %v736 = vadd.f32 0.0, %v735
  %v737 = vpop.f32.mrf.mxu0
  %738 = vdwg.mxu0
  %739 = vmatpush.bf16.msra.mxu0 %v643
  %740 = vmatpush.bf16.msra.mxu0 %v635
  %741 = vmatpush.bf16.msra.mxu0 %v627
  %742 = vmatpush.bf16.msra.mxu0 %v619
  %743 = vmatpush.bf16.msra.mxu0 %v611
  %744 = vmatpush.bf16.msra.mxu0 %v603
  %745 = vmatpush.bf16.msra.mxu0 %v595
  %746 = vmatpush.bf16.msra.mxu0 %v587
  %747 = vmatmul.bf16.gmra.mxu0 %v328
  %v748 = vpop.f32.mrf.mxu0
  %v749 = vadd.f32 0.0, %v748
  %v750 = vpop.f32.mrf.mxu0
  %751 = vdwg.mxu0
  %752 = vmatpush.bf16.msra.mxu0 %v644
  %753 = vmatpush.bf16.msra.mxu0 %v636
  %754 = vmatpush.bf16.msra.mxu0 %v628
  %755 = vmatpush.bf16.msra.mxu0 %v620
  %756 = vmatpush.bf16.msra.mxu0 %v612
  %757 = vmatpush.bf16.msra.mxu0 %v604
  %758 = vmatpush.bf16.msra.mxu0 %v596
  %759 = vmatpush.bf16.msra.mxu0 %v588
  %760 = vmatmul.bf16.gmra.mxu0 %v328
  %v761 = vpop.f32.mrf.mxu0
  %v762 = vadd.f32 0.0, %v761
  %v763 = vpop.f32.mrf.mxu0
  %764 = vdwg.mxu0
  %765 = vmatpush.bf16.msra.mxu0 %v645
  %766 = vmatpush.bf16.msra.mxu0 %v637
  %767 = vmatpush.bf16.msra.mxu0 %v629
  %768 = vmatpush.bf16.msra.mxu0 %v621
  %769 = vmatpush.bf16.msra.mxu0 %v613
  %770 = vmatpush.bf16.msra.mxu0 %v605
  %771 = vmatpush.bf16.msra.mxu0 %v597
  %772 = vmatpush.bf16.msra.mxu0 %v589
  %773 = vmatmul.bf16.gmra.mxu0 %v328
  %v774 = vpop.f32.mrf.mxu0
  %v775 = vadd.f32 0.0, %v774
  %v776 = vpop.f32.mrf.mxu0
  %777 = vdwg.mxu0
  %778 = vmatpush.bf16.msra.mxu0 %v646
  %779 = vmatpush.bf16.msra.mxu0 %v638
  %780 = vmatpush.bf16.msra.mxu0 %v630
  %781 = vmatpush.bf16.msra.mxu0 %v622
  %782 = vmatpush.bf16.msra.mxu0 %v614
  %783 = vmatpush.bf16.msra.mxu0 %v606
  %784 = vmatpush.bf16.msra.mxu0 %v598
  %785 = vmatpush.bf16.msra.mxu0 %v590
  %786 = vmatmul.bf16.gmra.mxu0 %v328
  %v787 = vpop.f32.mrf.mxu0
  %v788 = vadd.f32 0.0, %v787
  %v789 = vpop.f32.mrf.mxu0
  %790 = vdwg.mxu0
  %791 = vmatpush.bf16.msra.mxu0 %v647
  %792 = vmatpush.bf16.msra.mxu0 %v639
  %793 = vmatpush.bf16.msra.mxu0 %v631
  %794 = vmatpush.bf16.msra.mxu0 %v623
  %795 = vmatpush.bf16.msra.mxu0 %v615
  %796 = vmatpush.bf16.msra.mxu0 %v607
  %797 = vmatpush.bf16.msra.mxu0 %v599
  %798 = vmatpush.bf16.msra.mxu0 %v591
  %799 = vmatmul.bf16.gmra.mxu0 %v328
  %v800 = vpop.f32.mrf.mxu0
  %v801 = vadd.f32 0.0, %v800
  %v802 = vpop.f32.mrf.mxu0
  %803 = vdwg.mxu0
  %804 = vmatpush.bf16.msra.mxu0 %v648
  %805 = vmatpush.bf16.msra.mxu0 %v640
  %806 = vmatpush.bf16.msra.mxu0 %v632
  %807 = vmatpush.bf16.msra.mxu0 %v624
  %808 = vmatpush.bf16.msra.mxu0 %v616
  %809 = vmatpush.bf16.msra.mxu0 %v608
  %810 = vmatpush.bf16.msra.mxu0 %v600
  %811 = vmatpush.bf16.msra.mxu0 %v592
  %812 = vmatmul.bf16.gmra.mxu0 %v328
  %v813 = vpop.f32.mrf.mxu0
  %v814 = vadd.f32 0.0, %v813
  %v815 = vpop.f32.mrf.mxu0
  %816 = vdwg.mxu0
  %v881 = vunpack.c.l.b16 %v263
  %v882 = vunpack.c.h.b16 %v263
  %v883 = vunpack.c.l.b16 %v264
  %v884 = vunpack.c.h.b16 %v264
  %v885 = vunpack.c.l.b16 %v265
  %v886 = vunpack.c.h.b16 %v265
  %v887 = vunpack.c.l.b16 %v266
  %v888 = vunpack.c.h.b16 %v266
  %v889 = vunpack.c.l.b16 %v267
  %v890 = vunpack.c.h.b16 %v267
  %v891 = vunpack.c.l.b16 %v268
  %v892 = vunpack.c.h.b16 %v268
  %v893 = vunpack.c.l.b16 %v269
  %v894 = vunpack.c.h.b16 %v269
  %v895 = vunpack.c.l.b16 %v270
  %v896 = vunpack.c.h.b16 %v270
  %v897 = vunpack.c.l.b16 %v271
  %v898 = vunpack.c.h.b16 %v271
  %v899 = vunpack.c.l.b16 %v272
  %v900 = vunpack.c.h.b16 %v272
  %v901 = vunpack.c.l.b16 %v273
  %v902 = vunpack.c.h.b16 %v273
  %v903 = vunpack.c.l.b16 %v274
  %v904 = vunpack.c.h.b16 %v274
  %v905 = vunpack.c.l.b16 %v275
  %v906 = vunpack.c.h.b16 %v275
  %v907 = vunpack.c.l.b16 %v276
  %v908 = vunpack.c.h.b16 %v276
  %v909 = vunpack.c.l.b16 %v277
  %v910 = vunpack.c.h.b16 %v277
  %v911 = vunpack.c.l.b16 %v278
  %v912 = vunpack.c.h.b16 %v278
  %v913 = vunpack.c.l.b16 %v279
  %v914 = vunpack.c.h.b16 %v279
  %v915 = vunpack.c.l.b16 %v280
  %v916 = vunpack.c.h.b16 %v280
  %v917 = vunpack.c.l.b16 %v281
  %v918 = vunpack.c.h.b16 %v281
  %v919 = vunpack.c.l.b16 %v282
  %v920 = vunpack.c.h.b16 %v282
  %v921 = vunpack.c.l.b16 %v283
  %v922 = vunpack.c.h.b16 %v283
  %v923 = vunpack.c.l.b16 %v284
  %v924 = vunpack.c.h.b16 %v284
  %v925 = vunpack.c.l.b16 %v285
  %v926 = vunpack.c.h.b16 %v285
  %v927 = vunpack.c.l.b16 %v286
  %v928 = vunpack.c.h.b16 %v286
  %v929 = vunpack.c.l.b16 %v287
  %v930 = vunpack.c.h.b16 %v287
  %v931 = vunpack.c.l.b16 %v288
  %v932 = vunpack.c.h.b16 %v288
  %v933 = vunpack.c.l.b16 %v289
  %v934 = vunpack.c.h.b16 %v289
  %v935 = vunpack.c.l.b16 %v290
  %v936 = vunpack.c.h.b16 %v290
  %v937 = vunpack.c.l.b16 %v291
  %v938 = vunpack.c.h.b16 %v291
  %v939 = vunpack.c.l.b16 %v292
  %v940 = vunpack.c.h.b16 %v292
  %v941 = vunpack.c.l.b16 %v293
  %v942 = vunpack.c.h.b16 %v293
  %v943 = vunpack.c.l.b16 %v294
  %v944 = vunpack.c.h.b16 %v294
  %v945 = vunpack.c.l.b16 %v295
  %v946 = vunpack.c.h.b16 %v295
  %v947 = vunpack.c.l.b16 %v296
  %v948 = vunpack.c.h.b16 %v296
  %v949 = vunpack.c.l.b16 %v297
  %v950 = vunpack.c.h.b16 %v297
  %v951 = vunpack.c.l.b16 %v298
  %v952 = vunpack.c.h.b16 %v298
  %v953 = vunpack.c.l.b16 %v299
  %v954 = vunpack.c.h.b16 %v299
  %v955 = vunpack.c.l.b16 %v300
  %v956 = vunpack.c.h.b16 %v300
  %v957 = vunpack.c.l.b16 %v301
  %v958 = vunpack.c.h.b16 %v301
  %v959 = vunpack.c.l.b16 %v302
  %v960 = vunpack.c.h.b16 %v302
  %v961 = vunpack.c.l.b16 %v303
  %v962 = vunpack.c.h.b16 %v303
  %v963 = vunpack.c.l.b16 %v304
  %v964 = vunpack.c.h.b16 %v304
  %v965 = vunpack.c.l.b16 %v305
  %v966 = vunpack.c.h.b16 %v305
  %v967 = vunpack.c.l.b16 %v306
  %v968 = vunpack.c.h.b16 %v306
  %v969 = vunpack.c.l.b16 %v307
  %v970 = vunpack.c.h.b16 %v307
  %v971 = vunpack.c.l.b16 %v308
  %v972 = vunpack.c.h.b16 %v308
  %v973 = vunpack.c.l.b16 %v309
  %v974 = vunpack.c.h.b16 %v309
  %v975 = vunpack.c.l.b16 %v310
  %v976 = vunpack.c.h.b16 %v310
  %v977 = vunpack.c.l.b16 %v311
  %v978 = vunpack.c.h.b16 %v311
  %v979 = vunpack.c.l.b16 %v312
  %v980 = vunpack.c.h.b16 %v312
  %v981 = vunpack.c.l.b16 %v313
  %v982 = vunpack.c.h.b16 %v313
  %v983 = vunpack.c.l.b16 %v314
  %v984 = vunpack.c.h.b16 %v314
  %v985 = vunpack.c.l.b16 %v315
  %v986 = vunpack.c.h.b16 %v315
  %v987 = vunpack.c.l.b16 %v316
  %v988 = vunpack.c.h.b16 %v316
  %v989 = vunpack.c.l.b16 %v317
  %v990 = vunpack.c.h.b16 %v317
  %v991 = vunpack.c.l.b16 %v318
  %v992 = vunpack.c.h.b16 %v318
  %v993 = vunpack.c.l.b16 %v319
  %v994 = vunpack.c.h.b16 %v319
  %v995 = vunpack.c.l.b16 %v320
  %v996 = vunpack.c.h.b16 %v320
  %v997 = vunpack.c.l.b16 %v321
  %v998 = vunpack.c.h.b16 %v321
  %v999 = vunpack.c.l.b16 %v322
  %v1000 = vunpack.c.h.b16 %v322
  %v1001 = vunpack.c.l.b16 %v323
  %v1002 = vunpack.c.h.b16 %v323
  %v1003 = vunpack.c.l.b16 %v324
  %v1004 = vunpack.c.h.b16 %v324
  %v1005 = vunpack.c.l.b16 %v325
  %v1006 = vunpack.c.h.b16 %v325
  %v1007 = vunpack.c.l.b16 %v326
  %v1008 = vunpack.c.h.b16 %v326
  %v1009 = vpack.c.b16 %v889, %v881
  %v1010 = vpack.c.b16 %v890, %v882
  %v1011 = vpack.c.b16 %v891, %v883
  %v1012 = vpack.c.b16 %v892, %v884
  %v1013 = vpack.c.b16 %v893, %v885
  %v1014 = vpack.c.b16 %v894, %v886
  %v1015 = vpack.c.b16 %v895, %v887
  %v1016 = vpack.c.b16 %v896, %v888
  %v1017 = vpack.c.b16 %v905, %v897
  %v1018 = vpack.c.b16 %v906, %v898
  %v1019 = vpack.c.b16 %v907, %v899
  %v1020 = vpack.c.b16 %v908, %v900
  %v1021 = vpack.c.b16 %v909, %v901
  %v1022 = vpack.c.b16 %v910, %v902
  %v1023 = vpack.c.b16 %v911, %v903
  %v1024 = vpack.c.b16 %v912, %v904
  %v1025 = vpack.c.b16 %v921, %v913
  %v1026 = vpack.c.b16 %v922, %v914
  %v1027 = vpack.c.b16 %v923, %v915
  %v1028 = vpack.c.b16 %v924, %v916
  %v1029 = vpack.c.b16 %v925, %v917
  %v1030 = vpack.c.b16 %v926, %v918
  %v1031 = vpack.c.b16 %v927, %v919
  %v1032 = vpack.c.b16 %v928, %v920
  %v1033 = vpack.c.b16 %v937, %v929
  %v1034 = vpack.c.b16 %v938, %v930
  %v1035 = vpack.c.b16 %v939, %v931
  %v1036 = vpack.c.b16 %v940, %v932
  %v1037 = vpack.c.b16 %v941, %v933
  %v1038 = vpack.c.b16 %v942, %v934
  %v1039 = vpack.c.b16 %v943, %v935
  %v1040 = vpack.c.b16 %v944, %v936
  %v1041 = vpack.c.b16 %v953, %v945
  %v1042 = vpack.c.b16 %v954, %v946
  %v1043 = vpack.c.b16 %v955, %v947
  %v1044 = vpack.c.b16 %v956, %v948
  %v1045 = vpack.c.b16 %v957, %v949
  %v1046 = vpack.c.b16 %v958, %v950
  %v1047 = vpack.c.b16 %v959, %v951
  %v1048 = vpack.c.b16 %v960, %v952
  %v1049 = vpack.c.b16 %v969, %v961
  %v1050 = vpack.c.b16 %v970, %v962
  %v1051 = vpack.c.b16 %v971, %v963
  %v1052 = vpack.c.b16 %v972, %v964
  %v1053 = vpack.c.b16 %v973, %v965
  %v1054 = vpack.c.b16 %v974, %v966
  %v1055 = vpack.c.b16 %v975, %v967
  %v1056 = vpack.c.b16 %v976, %v968
  %v1057 = vpack.c.b16 %v985, %v977
  %v1058 = vpack.c.b16 %v986, %v978
  %v1059 = vpack.c.b16 %v987, %v979
  %v1060 = vpack.c.b16 %v988, %v980
  %v1061 = vpack.c.b16 %v989, %v981
  %v1062 = vpack.c.b16 %v990, %v982
  %v1063 = vpack.c.b16 %v991, %v983
  %v1064 = vpack.c.b16 %v992, %v984
  %v1065 = vpack.c.b16 %v1001, %v993
  %v1066 = vpack.c.b16 %v1002, %v994
  %v1067 = vpack.c.b16 %v1003, %v995
  %v1068 = vpack.c.b16 %v1004, %v996
  %v1069 = vpack.c.b16 %v1005, %v997
  %v1070 = vpack.c.b16 %v1006, %v998
  %v1071 = vpack.c.b16 %v1007, %v999
  %v1072 = vpack.c.b16 %v1008, %v1000
  %1137 = vmatpush.bf16.msra.mxu0 %v1065
  %1138 = vmatpush.bf16.msra.mxu0 %v1057
  %1139 = vmatpush.bf16.msra.mxu0 %v1049
  %1140 = vmatpush.bf16.msra.mxu0 %v1041
  %1141 = vmatpush.bf16.msra.mxu0 %v1033
  %1142 = vmatpush.bf16.msra.mxu0 %v1025
  %1143 = vmatpush.bf16.msra.mxu0 %v1017
  %1144 = vmatpush.bf16.msra.mxu0 %v1009
  %1145 = vmatmul.bf16.gmra.mxu0 %v262
  %v1146 = vpop.f32.mrf.mxu0
  %v1147 = vadd.f32 %v723, %v1146
  %v1148 = vpop.f32.mrf.mxu0
  %1149 = vdwg.mxu0
  %1150 = vmatpush.bf16.msra.mxu0 %v1066
  %1151 = vmatpush.bf16.msra.mxu0 %v1058
  %1152 = vmatpush.bf16.msra.mxu0 %v1050
  %1153 = vmatpush.bf16.msra.mxu0 %v1042
  %1154 = vmatpush.bf16.msra.mxu0 %v1034
  %1155 = vmatpush.bf16.msra.mxu0 %v1026
  %1156 = vmatpush.bf16.msra.mxu0 %v1018
  %1157 = vmatpush.bf16.msra.mxu0 %v1010
  %1158 = vmatmul.bf16.gmra.mxu0 %v262
  %v1159 = vpop.f32.mrf.mxu0
  %v1160 = vadd.f32 %v736, %v1159
  %v1161 = vpop.f32.mrf.mxu0
  %1162 = vdwg.mxu0
  %1163 = vmatpush.bf16.msra.mxu0 %v1067
  %1164 = vmatpush.bf16.msra.mxu0 %v1059
  %1165 = vmatpush.bf16.msra.mxu0 %v1051
  %1166 = vmatpush.bf16.msra.mxu0 %v1043
  %1167 = vmatpush.bf16.msra.mxu0 %v1035
  %1168 = vmatpush.bf16.msra.mxu0 %v1027
  %1169 = vmatpush.bf16.msra.mxu0 %v1019
  %1170 = vmatpush.bf16.msra.mxu0 %v1011
  %1171 = vmatmul.bf16.gmra.mxu0 %v262
  %v1172 = vpop.f32.mrf.mxu0
  %v1173 = vadd.f32 %v749, %v1172
  %v1174 = vpop.f32.mrf.mxu0
  %1175 = vdwg.mxu0
  %1176 = vmatpush.bf16.msra.mxu0 %v1068
  %1177 = vmatpush.bf16.msra.mxu0 %v1060
  %1178 = vmatpush.bf16.msra.mxu0 %v1052
  %1179 = vmatpush.bf16.msra.mxu0 %v1044
  %1180 = vmatpush.bf16.msra.mxu0 %v1036
  %1181 = vmatpush.bf16.msra.mxu0 %v1028
  %1182 = vmatpush.bf16.msra.mxu0 %v1020
  %1183 = vmatpush.bf16.msra.mxu0 %v1012
  %1184 = vmatmul.bf16.gmra.mxu0 %v262
  %v1185 = vpop.f32.mrf.mxu0
  %v1186 = vadd.f32 %v762, %v1185
  %v1187 = vpop.f32.mrf.mxu0
  %1188 = vdwg.mxu0
  %1189 = vmatpush.bf16.msra.mxu0 %v1069
  %1190 = vmatpush.bf16.msra.mxu0 %v1061
  %1191 = vmatpush.bf16.msra.mxu0 %v1053
  %1192 = vmatpush.bf16.msra.mxu0 %v1045
  %1193 = vmatpush.bf16.msra.mxu0 %v1037
  %1194 = vmatpush.bf16.msra.mxu0 %v1029
  %1195 = vmatpush.bf16.msra.mxu0 %v1021
  %1196 = vmatpush.bf16.msra.mxu0 %v1013
  %1197 = vmatmul.bf16.gmra.mxu0 %v262
  %v1198 = vpop.f32.mrf.mxu0
  %v1199 = vadd.f32 %v775, %v1198
  %v1200 = vpop.f32.mrf.mxu0
  %1201 = vdwg.mxu0
  %1202 = vmatpush.bf16.msra.mxu0 %v1070
  %1203 = vmatpush.bf16.msra.mxu0 %v1062
  %1204 = vmatpush.bf16.msra.mxu0 %v1054
  %1205 = vmatpush.bf16.msra.mxu0 %v1046
  %1206 = vmatpush.bf16.msra.mxu0 %v1038
  %1207 = vmatpush.bf16.msra.mxu0 %v1030
  %1208 = vmatpush.bf16.msra.mxu0 %v1022
  %1209 = vmatpush.bf16.msra.mxu0 %v1014
  %1210 = vmatmul.bf16.gmra.mxu0 %v262
  %v1211 = vpop.f32.mrf.mxu0
  %v1212 = vadd.f32 %v788, %v1211
  %v1213 = vpop.f32.mrf.mxu0
  %1214 = vdwg.mxu0
  %1215 = vmatpush.bf16.msra.mxu0 %v1071
  %1216 = vmatpush.bf16.msra.mxu0 %v1063
  %1217 = vmatpush.bf16.msra.mxu0 %v1055
  %1218 = vmatpush.bf16.msra.mxu0 %v1047
  %1219 = vmatpush.bf16.msra.mxu0 %v1039
  %1220 = vmatpush.bf16.msra.mxu0 %v1031
  %1221 = vmatpush.bf16.msra.mxu0 %v1023
  %1222 = vmatpush.bf16.msra.mxu0 %v1015
  %1223 = vmatmul.bf16.gmra.mxu0 %v262
  %v1224 = vpop.f32.mrf.mxu0
  %v1225 = vadd.f32 %v801, %v1224
  %v1226 = vpop.f32.mrf.mxu0
  %1227 = vdwg.mxu0
  %1228 = vmatpush.bf16.msra.mxu0 %v1072
  %1229 = vmatpush.bf16.msra.mxu0 %v1064
  %1230 = vmatpush.bf16.msra.mxu0 %v1056
  %1231 = vmatpush.bf16.msra.mxu0 %v1048
  %1232 = vmatpush.bf16.msra.mxu0 %v1040
  %1233 = vmatpush.bf16.msra.mxu0 %v1032
  %1234 = vmatpush.bf16.msra.mxu0 %v1024
  %1235 = vmatpush.bf16.msra.mxu0 %v1016
  %1236 = vmatmul.bf16.gmra.mxu0 %v262
  %v1237 = vpop.f32.mrf.mxu0
  %v1238 = vadd.f32 %v814, %v1237
  %v1239 = vpop.f32.mrf.mxu0
  %1240 = vdwg.mxu0
  %v1241 = vpack.c.bf16 %v258, %v258
  %v1242 = vld [vmem:[%s7] sm:$0xff]
  %v1243 = vld [vmem:[%s7 + $0x8] sm:$0xff]
  %v1244 = vld [vmem:[%s7 + $0x10] sm:$0xff]
  %v1245 = vld [vmem:[%s7 + $0x18] sm:$0xff]
  %v1246 = vld [vmem:[%s7 + $0x20] sm:$0xff]
  %v1247 = vld [vmem:[%s7 + $0x28] sm:$0xff]
  %v1248 = vld [vmem:[%s7 + $0x30] sm:$0xff]
  %v1249 = vld [vmem:[%s7 + $0x38] sm:$0xff]
  %v1250 = vld [vmem:[%s7 + $0x40] sm:$0xff]
  %v1251 = vld [vmem:[%s7 + $0x48] sm:$0xff]
  %v1252 = vld [vmem:[%s7 + $0x50] sm:$0xff]
  %v1253 = vld [vmem:[%s7 + $0x58] sm:$0xff]
  %v1254 = vld [vmem:[%s7 + $0x60] sm:$0xff]
  %v1255 = vld [vmem:[%s7 + $0x68] sm:$0xff]
  %v1256 = vld [vmem:[%s7 + $0x70] sm:$0xff]
  %v1257 = vld [vmem:[%s7 + $0x78] sm:$0xff]
  %v1258 = vld [vmem:[%s7 + $0x80] sm:$0xff]
  %v1259 = vld [vmem:[%s7 + $0x88] sm:$0xff]
  %v1260 = vld [vmem:[%s7 + $0x90] sm:$0xff]
  %v1261 = vld [vmem:[%s7 + $0x98] sm:$0xff]
  %v1262 = vld [vmem:[%s7 + $0xa0] sm:$0xff]
  %v1263 = vld [vmem:[%s7 + $0xa8] sm:$0xff]
  %v1264 = vld [vmem:[%s7 + $0xb0] sm:$0xff]
  %v1265 = vld [vmem:[%s7 + $0xb8] sm:$0xff]
  %v1266 = vld [vmem:[%s7 + $0xc0] sm:$0xff]
  %v1267 = vld [vmem:[%s7 + $0xc8] sm:$0xff]
  %v1268 = vld [vmem:[%s7 + $0xd0] sm:$0xff]
  %v1269 = vld [vmem:[%s7 + $0xd8] sm:$0xff]
  %v1270 = vld [vmem:[%s7 + $0xe0] sm:$0xff]
  %v1271 = vld [vmem:[%s7 + $0xe8] sm:$0xff]
  %v1272 = vld [vmem:[%s7 + $0xf0] sm:$0xff]
  %v1273 = vld [vmem:[%s7 + $0xf8] sm:$0xff]
  %v1274 = vld [vmem:[%s7 + $0x100] sm:$0xff]
  %v1275 = vld [vmem:[%s7 + $0x108] sm:$0xff]
  %v1276 = vld [vmem:[%s7 + $0x110] sm:$0xff]
  %v1277 = vld [vmem:[%s7 + $0x118] sm:$0xff]
  %v1278 = vld [vmem:[%s7 + $0x120] sm:$0xff]
  %v1279 = vld [vmem:[%s7 + $0x128] sm:$0xff]
  %v1280 = vld [vmem:[%s7 + $0x130] sm:$0xff]
  %v1281 = vld [vmem:[%s7 + $0x138] sm:$0xff]
  %v1282 = vld [vmem:[%s7 + $0x140] sm:$0xff]
  %v1283 = vld [vmem:[%s7 + $0x148] sm:$0xff]
  %v1284 = vld [vmem:[%s7 + $0x150] sm:$0xff]
  %v1285 = vld [vmem:[%s7 + $0x158] sm:$0xff]
  %v1286 = vld [vmem:[%s7 + $0x160] sm:$0xff]
  %v1287 = vld [vmem:[%s7 + $0x168] sm:$0xff]
  %v1288 = vld [vmem:[%s7 + $0x170] sm:$0xff]
  %v1289 = vld [vmem:[%s7 + $0x178] sm:$0xff]
  %v1290 = vld [vmem:[%s7 + $0x180] sm:$0xff]
  %v1291 = vld [vmem:[%s7 + $0x188] sm:$0xff]
  %v1292 = vld [vmem:[%s7 + $0x190] sm:$0xff]
  %v1293 = vld [vmem:[%s7 + $0x198] sm:$0xff]
  %v1294 = vld [vmem:[%s7 + $0x1a0] sm:$0xff]
  %v1295 = vld [vmem:[%s7 + $0x1a8] sm:$0xff]
  %v1296 = vld [vmem:[%s7 + $0x1b0] sm:$0xff]
  %v1297 = vld [vmem:[%s7 + $0x1b8] sm:$0xff]
  %v1298 = vld [vmem:[%s7 + $0x1c0] sm:$0xff]
  %v1299 = vld [vmem:[%s7 + $0x1c8] sm:$0xff]
  %v1300 = vld [vmem:[%s7 + $0x1d0] sm:$0xff]
  %v1301 = vld [vmem:[%s7 + $0x1d8] sm:$0xff]
  %v1302 = vld [vmem:[%s7 + $0x1e0] sm:$0xff]
  %v1303 = vld [vmem:[%s7 + $0x1e8] sm:$0xff]
  %v1304 = vld [vmem:[%s7 + $0x1f0] sm:$0xff]
  %v1305 = vld [vmem:[%s7 + $0x1f8] sm:$0xff]
  %v1370 = vunpack.c.l.b16 %v1242
  %v1371 = vunpack.c.h.b16 %v1242
  %v1372 = vunpack.c.l.b16 %v1243
  %v1373 = vunpack.c.h.b16 %v1243
  %v1374 = vunpack.c.l.b16 %v1244
  %v1375 = vunpack.c.h.b16 %v1244
  %v1376 = vunpack.c.l.b16 %v1245
  %v1377 = vunpack.c.h.b16 %v1245
  %v1378 = vunpack.c.l.b16 %v1246
  %v1379 = vunpack.c.h.b16 %v1246
  %v1380 = vunpack.c.l.b16 %v1247
  %v1381 = vunpack.c.h.b16 %v1247
  %v1382 = vunpack.c.l.b16 %v1248
  %v1383 = vunpack.c.h.b16 %v1248
  %v1384 = vunpack.c.l.b16 %v1249
  %v1385 = vunpack.c.h.b16 %v1249
  %v1386 = vunpack.c.l.b16 %v1250
  %v1387 = vunpack.c.h.b16 %v1250
  %v1388 = vunpack.c.l.b16 %v1251
  %v1389 = vunpack.c.h.b16 %v1251
  %v1390 = vunpack.c.l.b16 %v1252
  %v1391 = vunpack.c.h.b16 %v1252
  %v1392 = vunpack.c.l.b16 %v1253
  %v1393 = vunpack.c.h.b16 %v1253
  %v1394 = vunpack.c.l.b16 %v1254
  %v1395 = vunpack.c.h.b16 %v1254
  %v1396 = vunpack.c.l.b16 %v1255
  %v1397 = vunpack.c.h.b16 %v1255
  %v1398 = vunpack.c.l.b16 %v1256
  %v1399 = vunpack.c.h.b16 %v1256
  %v1400 = vunpack.c.l.b16 %v1257
  %v1401 = vunpack.c.h.b16 %v1257
  %v1402 = vunpack.c.l.b16 %v1258
  %v1403 = vunpack.c.h.b16 %v1258
  %v1404 = vunpack.c.l.b16 %v1259
  %v1405 = vunpack.c.h.b16 %v1259
  %v1406 = vunpack.c.l.b16 %v1260
  %v1407 = vunpack.c.h.b16 %v1260
  %v1408 = vunpack.c.l.b16 %v1261
  %v1409 = vunpack.c.h.b16 %v1261
  %v1410 = vunpack.c.l.b16 %v1262
  %v1411 = vunpack.c.h.b16 %v1262
  %v1412 = vunpack.c.l.b16 %v1263
  %v1413 = vunpack.c.h.b16 %v1263
  %v1414 = vunpack.c.l.b16 %v1264
  %v1415 = vunpack.c.h.b16 %v1264
  %v1416 = vunpack.c.l.b16 %v1265
  %v1417 = vunpack.c.h.b16 %v1265
  %v1418 = vunpack.c.l.b16 %v1266
  %v1419 = vunpack.c.h.b16 %v1266
  %v1420 = vunpack.c.l.b16 %v1267
  %v1421 = vunpack.c.h.b16 %v1267
  %v1422 = vunpack.c.l.b16 %v1268
  %v1423 = vunpack.c.h.b16 %v1268
  %v1424 = vunpack.c.l.b16 %v1269
  %v1425 = vunpack.c.h.b16 %v1269
  %v1426 = vunpack.c.l.b16 %v1270
  %v1427 = vunpack.c.h.b16 %v1270
  %v1428 = vunpack.c.l.b16 %v1271
  %v1429 = vunpack.c.h.b16 %v1271
  %v1430 = vunpack.c.l.b16 %v1272
  %v1431 = vunpack.c.h.b16 %v1272
  %v1432 = vunpack.c.l.b16 %v1273
  %v1433 = vunpack.c.h.b16 %v1273
  %v1434 = vunpack.c.l.b16 %v1274
  %v1435 = vunpack.c.h.b16 %v1274
  %v1436 = vunpack.c.l.b16 %v1275
  %v1437 = vunpack.c.h.b16 %v1275
  %v1438 = vunpack.c.l.b16 %v1276
  %v1439 = vunpack.c.h.b16 %v1276
  %v1440 = vunpack.c.l.b16 %v1277
  %v1441 = vunpack.c.h.b16 %v1277
  %v1442 = vunpack.c.l.b16 %v1278
  %v1443 = vunpack.c.h.b16 %v1278
  %v1444 = vunpack.c.l.b16 %v1279
  %v1445 = vunpack.c.h.b16 %v1279
  %v1446 = vunpack.c.l.b16 %v1280
  %v1447 = vunpack.c.h.b16 %v1280
  %v1448 = vunpack.c.l.b16 %v1281
  %v1449 = vunpack.c.h.b16 %v1281
  %v1450 = vunpack.c.l.b16 %v1282
  %v1451 = vunpack.c.h.b16 %v1282
  %v1452 = vunpack.c.l.b16 %v1283
  %v1453 = vunpack.c.h.b16 %v1283
  %v1454 = vunpack.c.l.b16 %v1284
  %v1455 = vunpack.c.h.b16 %v1284
  %v1456 = vunpack.c.l.b16 %v1285
  %v1457 = vunpack.c.h.b16 %v1285
  %v1458 = vunpack.c.l.b16 %v1286
  %v1459 = vunpack.c.h.b16 %v1286
  %v1460 = vunpack.c.l.b16 %v1287
  %v1461 = vunpack.c.h.b16 %v1287
  %v1462 = vunpack.c.l.b16 %v1288
  %v1463 = vunpack.c.h.b16 %v1288
  %v1464 = vunpack.c.l.b16 %v1289
  %v1465 = vunpack.c.h.b16 %v1289
  %v1466 = vunpack.c.l.b16 %v1290
  %v1467 = vunpack.c.h.b16 %v1290
  %v1468 = vunpack.c.l.b16 %v1291
  %v1469 = vunpack.c.h.b16 %v1291
  %v1470 = vunpack.c.l.b16 %v1292
  %v1471 = vunpack.c.h.b16 %v1292
  %v1472 = vunpack.c.l.b16 %v1293
  %v1473 = vunpack.c.h.b16 %v1293
  %v1474 = vunpack.c.l.b16 %v1294
  %v1475 = vunpack.c.h.b16 %v1294
  %v1476 = vunpack.c.l.b16 %v1295
  %v1477 = vunpack.c.h.b16 %v1295
  %v1478 = vunpack.c.l.b16 %v1296
  %v1479 = vunpack.c.h.b16 %v1296
  %v1480 = vunpack.c.l.b16 %v1297
  %v1481 = vunpack.c.h.b16 %v1297
  %v1482 = vunpack.c.l.b16 %v1298
  %v1483 = vunpack.c.h.b16 %v1298
  %v1484 = vunpack.c.l.b16 %v1299
  %v1485 = vunpack.c.h.b16 %v1299
  %v1486 = vunpack.c.l.b16 %v1300
  %v1487 = vunpack.c.h.b16 %v1300
  %v1488 = vunpack.c.l.b16 %v1301
  %v1489 = vunpack.c.h.b16 %v1301
  %v1490 = vunpack.c.l.b16 %v1302
  %v1491 = vunpack.c.h.b16 %v1302
  %v1492 = vunpack.c.l.b16 %v1303
  %v1493 = vunpack.c.h.b16 %v1303
  %v1494 = vunpack.c.l.b16 %v1304
  %v1495 = vunpack.c.h.b16 %v1304
  %v1496 = vunpack.c.l.b16 %v1305
  %v1497 = vunpack.c.h.b16 %v1305
  %v1498 = vpack.c.b16 %v1378, %v1370
  %v1499 = vpack.c.b16 %v1379, %v1371
  %v1500 = vpack.c.b16 %v1380, %v1372
  %v1501 = vpack.c.b16 %v1381, %v1373
  %v1502 = vpack.c.b16 %v1382, %v1374
  %v1503 = vpack.c.b16 %v1383, %v1375
  %v1504 = vpack.c.b16 %v1384, %v1376
  %v1505 = vpack.c.b16 %v1385, %v1377
  %v1506 = vpack.c.b16 %v1394, %v1386
  %v1507 = vpack.c.b16 %v1395, %v1387
  %v1508 = vpack.c.b16 %v1396, %v1388
  %v1509 = vpack.c.b16 %v1397, %v1389
  %v1510 = vpack.c.b16 %v1398, %v1390
  %v1511 = vpack.c.b16 %v1399, %v1391
  %v1512 = vpack.c.b16 %v1400, %v1392
  %v1513 = vpack.c.b16 %v1401, %v1393
  %v1514 = vpack.c.b16 %v1410, %v1402
  %v1515 = vpack.c.b16 %v1411, %v1403
  %v1516 = vpack.c.b16 %v1412, %v1404
  %v1517 = vpack.c.b16 %v1413, %v1405
  %v1518 = vpack.c.b16 %v1414, %v1406
  %v1519 = vpack.c.b16 %v1415, %v1407
  %v1520 = vpack.c.b16 %v1416, %v1408
  %v1521 = vpack.c.b16 %v1417, %v1409
  %v1522 = vpack.c.b16 %v1426, %v1418
  %v1523 = vpack.c.b16 %v1427, %v1419
  %v1524 = vpack.c.b16 %v1428, %v1420
  %v1525 = vpack.c.b16 %v1429, %v1421
  %v1526 = vpack.c.b16 %v1430, %v1422
  %v1527 = vpack.c.b16 %v1431, %v1423
  %v1528 = vpack.c.b16 %v1432, %v1424
  %v1529 = vpack.c.b16 %v1433, %v1425
  %v1530 = vpack.c.b16 %v1442, %v1434
  %v1531 = vpack.c.b16 %v1443, %v1435
  %v1532 = vpack.c.b16 %v1444, %v1436
  %v1533 = vpack.c.b16 %v1445, %v1437
  %v1534 = vpack.c.b16 %v1446, %v1438
  %v1535 = vpack.c.b16 %v1447, %v1439
  %v1536 = vpack.c.b16 %v1448, %v1440
  %v1537 = vpack.c.b16 %v1449, %v1441
  %v1538 = vpack.c.b16 %v1458, %v1450
  %v1539 = vpack.c.b16 %v1459, %v1451
  %v1540 = vpack.c.b16 %v1460, %v1452
  %v1541 = vpack.c.b16 %v1461, %v1453
  %v1542 = vpack.c.b16 %v1462, %v1454
  %v1543 = vpack.c.b16 %v1463, %v1455
  %v1544 = vpack.c.b16 %v1464, %v1456
  %v1545 = vpack.c.b16 %v1465, %v1457
  %v1546 = vpack.c.b16 %v1474, %v1466
  %v1547 = vpack.c.b16 %v1475, %v1467
  %v1548 = vpack.c.b16 %v1476, %v1468
  %v1549 = vpack.c.b16 %v1477, %v1469
  %v1550 = vpack.c.b16 %v1478, %v1470
  %v1551 = vpack.c.b16 %v1479, %v1471
  %v1552 = vpack.c.b16 %v1480, %v1472
  %v1553 = vpack.c.b16 %v1481, %v1473
  %v1554 = vpack.c.b16 %v1490, %v1482
  %v1555 = vpack.c.b16 %v1491, %v1483
  %v1556 = vpack.c.b16 %v1492, %v1484
  %v1557 = vpack.c.b16 %v1493, %v1485
  %v1558 = vpack.c.b16 %v1494, %v1486
  %v1559 = vpack.c.b16 %v1495, %v1487
  %v1560 = vpack.c.b16 %v1496, %v1488
  %v1561 = vpack.c.b16 %v1497, %v1489
  %1626 = vmatpush.bf16.msra.mxu0 %v1554
  %1627 = vmatpush.bf16.msra.mxu0 %v1546
  %1628 = vmatpush.bf16.msra.mxu0 %v1538
  %1629 = vmatpush.bf16.msra.mxu0 %v1530
  %1630 = vmatpush.bf16.msra.mxu0 %v1522
  %1631 = vmatpush.bf16.msra.mxu0 %v1514
  %1632 = vmatpush.bf16.msra.mxu0 %v1506
  %1633 = vmatpush.bf16.msra.mxu0 %v1498
  %1634 = vmatmul.bf16.gmra.mxu0 %v1241
  %v1635 = vpop.f32.mrf.mxu0
  %v1636 = vadd.f32 0.0, %v1635
  %v1637 = vpop.f32.mrf.mxu0
  %1638 = vdwg.mxu0
  %1639 = vmatpush.bf16.msra.mxu0 %v1555
  %1640 = vmatpush.bf16.msra.mxu0 %v1547
  %1641 = vmatpush.bf16.msra.mxu0 %v1539
  %1642 = vmatpush.bf16.msra.mxu0 %v1531
  %1643 = vmatpush.bf16.msra.mxu0 %v1523
  %1644 = vmatpush.bf16.msra.mxu0 %v1515
  %1645 = vmatpush.bf16.msra.mxu0 %v1507
  %1646 = vmatpush.bf16.msra.mxu0 %v1499
  %1647 = vmatmul.bf16.gmra.mxu0 %v1241
  %v1648 = vpop.f32.mrf.mxu0
  %v1649 = vadd.f32 0.0, %v1648
  %v1650 = vpop.f32.mrf.mxu0
  %1651 = vdwg.mxu0
  %1652 = vmatpush.bf16.msra.mxu0 %v1556
  %1653 = vmatpush.bf16.msra.mxu0 %v1548
  %1654 = vmatpush.bf16.msra.mxu0 %v1540
  %1655 = vmatpush.bf16.msra.mxu0 %v1532
  %1656 = vmatpush.bf16.msra.mxu0 %v1524
  %1657 = vmatpush.bf16.msra.mxu0 %v1516
  %1658 = vmatpush.bf16.msra.mxu0 %v1508
  %1659 = vmatpush.bf16.msra.mxu0 %v1500
  %1660 = vmatmul.bf16.gmra.mxu0 %v1241
  %v1661 = vpop.f32.mrf.mxu0
  %v1662 = vadd.f32 0.0, %v1661
  %v1663 = vpop.f32.mrf.mxu0
  %1664 = vdwg.mxu0
  %1665 = vmatpush.bf16.msra.mxu0 %v1557
  %1666 = vmatpush.bf16.msra.mxu0 %v1549
  %1667 = vmatpush.bf16.msra.mxu0 %v1541
  %1668 = vmatpush.bf16.msra.mxu0 %v1533
  %1669 = vmatpush.bf16.msra.mxu0 %v1525
  %1670 = vmatpush.bf16.msra.mxu0 %v1517
  %1671 = vmatpush.bf16.msra.mxu0 %v1509
  %1672 = vmatpush.bf16.msra.mxu0 %v1501
  %1673 = vmatmul.bf16.gmra.mxu0 %v1241
  %v1674 = vpop.f32.mrf.mxu0
  %v1675 = vadd.f32 0.0, %v1674
  %v1676 = vpop.f32.mrf.mxu0
  %1677 = vdwg.mxu0
  %1678 = vmatpush.bf16.msra.mxu0 %v1558
  %1679 = vmatpush.bf16.msra.mxu0 %v1550
  %1680 = vmatpush.bf16.msra.mxu0 %v1542
  %1681 = vmatpush.bf16.msra.mxu0 %v1534
  %1682 = vmatpush.bf16.msra.mxu0 %v1526
  %1683 = vmatpush.bf16.msra.mxu0 %v1518
  %1684 = vmatpush.bf16.msra.mxu0 %v1510
  %1685 = vmatpush.bf16.msra.mxu0 %v1502
  %1686 = vmatmul.bf16.gmra.mxu0 %v1241
  %v1687 = vpop.f32.mrf.mxu0
  %v1688 = vadd.f32 0.0, %v1687
  %v1689 = vpop.f32.mrf.mxu0
  %1690 = vdwg.mxu0
  %1691 = vmatpush.bf16.msra.mxu0 %v1559
  %1692 = vmatpush.bf16.msra.mxu0 %v1551
  %1693 = vmatpush.bf16.msra.mxu0 %v1543
  %1694 = vmatpush.bf16.msra.mxu0 %v1535
  %1695 = vmatpush.bf16.msra.mxu0 %v1527
  %1696 = vmatpush.bf16.msra.mxu0 %v1519
  %1697 = vmatpush.bf16.msra.mxu0 %v1511
  %1698 = vmatpush.bf16.msra.mxu0 %v1503
  %1699 = vmatmul.bf16.gmra.mxu0 %v1241
  %v1700 = vpop.f32.mrf.mxu0
  %v1701 = vadd.f32 0.0, %v1700
  %v1702 = vpop.f32.mrf.mxu0
  %1703 = vdwg.mxu0
  %1704 = vmatpush.bf16.msra.mxu0 %v1560
  %1705 = vmatpush.bf16.msra.mxu0 %v1552
  %1706 = vmatpush.bf16.msra.mxu0 %v1544
  %1707 = vmatpush.bf16.msra.mxu0 %v1536
  %1708 = vmatpush.bf16.msra.mxu0 %v1528
  %1709 = vmatpush.bf16.msra.mxu0 %v1520
  %1710 = vmatpush.bf16.msra.mxu0 %v1512
  %1711 = vmatpush.bf16.msra.mxu0 %v1504
  %1712 = vmatmul.bf16.gmra.mxu0 %v1241
  %v1713 = vpop.f32.mrf.mxu0
  %v1714 = vadd.f32 0.0, %v1713
  %v1715 = vpop.f32.mrf.mxu0
  %1716 = vdwg.mxu0
  %1717 = vmatpush.bf16.msra.mxu0 %v1561
  %1718 = vmatpush.bf16.msra.mxu0 %v1553
  %1719 = vmatpush.bf16.msra.mxu0 %v1545
  %1720 = vmatpush.bf16.msra.mxu0 %v1537
  %1721 = vmatpush.bf16.msra.mxu0 %v1529
  %1722 = vmatpush.bf16.msra.mxu0 %v1521
  %1723 = vmatpush.bf16.msra.mxu0 %v1513
  %1724 = vmatpush.bf16.msra.mxu0 %v1505
  %1725 = vmatmul.bf16.gmra.mxu0 %v1241
  %v1726 = vpop.f32.mrf.mxu0
  %v1727 = vadd.f32 0.0, %v1726
  %v1728 = vpop.f32.mrf.mxu0
  %1729 = vdwg.mxu0
  %v1730 = vadd.f32 %v1147, %v1636
  %v1731 = vadd.f32 %v1160, %v1649
  %v1732 = vadd.f32 %v1173, %v1662
  %v1733 = vadd.f32 %v1186, %v1675
  %v1734 = vadd.f32 %v1199, %v1688
  %v1735 = vadd.f32 %v1212, %v1701
  %v1736 = vadd.f32 %v1225, %v1714
  %v1737 = vadd.f32 %v1238, %v1727
  %v1738 = vld [vmem:[%s8] sm:$0xff]
  %v1740 = vperm.slane %v1738, 0
  %v1741 = vperm.slane %v1738, 1
  %v1742 = vperm.slane %v1738, 2
  %v1743 = vperm.slane %v1738, 3
  %v1744 = vperm.slane %v1738, 4
  %v1745 = vperm.slane %v1738, 5
  %v1746 = vperm.slane %v1738, 6
  %v1747 = vperm.slane %v1738, 7
  %v1756 = vadd.f32 %v1730, %v1740
  %v1757 = vadd.f32 %v1731, %v1741
  %v1758 = vadd.f32 %v1732, %v1742
  %v1759 = vadd.f32 %v1733, %v1743
  %v1760 = vadd.f32 %v1734, %v1744
  %v1761 = vadd.f32 %v1735, %v1745
  %v1762 = vadd.f32 %v1736, %v1746
  %v1763 = vadd.f32 %v1737, %v1747
  %v1764 = vmax.f32 %v1756, 0.0
  %v1765 = vmax.f32 %v1757, 0.0
  %v1766 = vmax.f32 %v1758, 0.0
  %v1767 = vmax.f32 %v1759, 0.0
  %v1768 = vmax.f32 %v1760, 0.0
  %v1769 = vmax.f32 %v1761, 0.0
  %v1770 = vmax.f32 %v1762, 0.0
  %v1771 = vmax.f32 %v1763, 0.0
  %v1772 = vpack.c.bf16 %v1764, %v1764
  %v1773 = vpack.c.bf16 %v1765, %v1765
  %v1774 = vpack.c.bf16 %v1766, %v1766
  %v1775 = vpack.c.bf16 %v1767, %v1767
  %v1776 = vpack.c.bf16 %v1768, %v1768
  %v1777 = vpack.c.bf16 %v1769, %v1769
  %v1778 = vpack.c.bf16 %v1770, %v1770
  %v1779 = vpack.c.bf16 %v1771, %v1771
  %v1780 = vld [vmem:[%s9] sm:$0xff]
  %v1781 = vld [vmem:[%s9 + $0x8] sm:$0xff]
  %v1782 = vld [vmem:[%s9 + $0x10] sm:$0xff]
  %v1783 = vld [vmem:[%s9 + $0x18] sm:$0xff]
  %v1784 = vld [vmem:[%s9 + $0x20] sm:$0xff]
  %v1785 = vld [vmem:[%s9 + $0x28] sm:$0xff]
  %v1786 = vld [vmem:[%s9 + $0x30] sm:$0xff]
  %v1787 = vld [vmem:[%s9 + $0x38] sm:$0xff]
  %v1788 = vld [vmem:[%s9 + $0x40] sm:$0xff]
  %v1789 = vld [vmem:[%s9 + $0x48] sm:$0xff]
  %v1790 = vld [vmem:[%s9 + $0x50] sm:$0xff]
  %v1791 = vld [vmem:[%s9 + $0x58] sm:$0xff]
  %v1792 = vld [vmem:[%s9 + $0x60] sm:$0xff]
  %v1793 = vld [vmem:[%s9 + $0x68] sm:$0xff]
  %v1794 = vld [vmem:[%s9 + $0x70] sm:$0xff]
  %v1795 = vld [vmem:[%s9 + $0x78] sm:$0xff]
  %v1796 = vld [vmem:[%s9 + $0x80] sm:$0xff]
  %v1797 = vld [vmem:[%s9 + $0x88] sm:$0xff]
  %v1798 = vld [vmem:[%s9 + $0x90] sm:$0xff]
  %v1799 = vld [vmem:[%s9 + $0x98] sm:$0xff]
  %v1800 = vld [vmem:[%s9 + $0xa0] sm:$0xff]
  %v1801 = vld [vmem:[%s9 + $0xa8] sm:$0xff]
  %v1802 = vld [vmem:[%s9 + $0xb0] sm:$0xff]
  %v1803 = vld [vmem:[%s9 + $0xb8] sm:$0xff]
  %v1804 = vld [vmem:[%s9 + $0xc0] sm:$0xff]
  %v1805 = vld [vmem:[%s9 + $0xc8] sm:$0xff]
  %v1806 = vld [vmem:[%s9 + $0xd0] sm:$0xff]
  %v1807 = vld [vmem:[%s9 + $0xd8] sm:$0xff]
  %v1808 = vld [vmem:[%s9 + $0xe0] sm:$0xff]
  %v1809 = vld [vmem:[%s9 + $0xe8] sm:$0xff]
  %v1810 = vld [vmem:[%s9 + $0xf0] sm:$0xff]
  %v1811 = vld [vmem:[%s9 + $0xf8] sm:$0xff]
  %v1812 = vld [vmem:[%s9 + $0x100] sm:$0xff]
  %v1813 = vld [vmem:[%s9 + $0x108] sm:$0xff]
  %v1814 = vld [vmem:[%s9 + $0x110] sm:$0xff]
  %v1815 = vld [vmem:[%s9 + $0x118] sm:$0xff]
  %v1816 = vld [vmem:[%s9 + $0x120] sm:$0xff]
  %v1817 = vld [vmem:[%s9 + $0x128] sm:$0xff]
  %v1818 = vld [vmem:[%s9 + $0x130] sm:$0xff]
  %v1819 = vld [vmem:[%s9 + $0x138] sm:$0xff]
  %v1820 = vld [vmem:[%s9 + $0x140] sm:$0xff]
  %v1821 = vld [vmem:[%s9 + $0x148] sm:$0xff]
  %v1822 = vld [vmem:[%s9 + $0x150] sm:$0xff]
  %v1823 = vld [vmem:[%s9 + $0x158] sm:$0xff]
  %v1824 = vld [vmem:[%s9 + $0x160] sm:$0xff]
  %v1825 = vld [vmem:[%s9 + $0x168] sm:$0xff]
  %v1826 = vld [vmem:[%s9 + $0x170] sm:$0xff]
  %v1827 = vld [vmem:[%s9 + $0x178] sm:$0xff]
  %v1828 = vld [vmem:[%s9 + $0x180] sm:$0xff]
  %v1829 = vld [vmem:[%s9 + $0x188] sm:$0xff]
  %v1830 = vld [vmem:[%s9 + $0x190] sm:$0xff]
  %v1831 = vld [vmem:[%s9 + $0x198] sm:$0xff]
  %v1832 = vld [vmem:[%s9 + $0x1a0] sm:$0xff]
  %v1833 = vld [vmem:[%s9 + $0x1a8] sm:$0xff]
  %v1834 = vld [vmem:[%s9 + $0x1b0] sm:$0xff]
  %v1835 = vld [vmem:[%s9 + $0x1b8] sm:$0xff]
  %v1836 = vld [vmem:[%s9 + $0x1c0] sm:$0xff]
  %v1837 = vld [vmem:[%s9 + $0x1c8] sm:$0xff]
  %v1838 = vld [vmem:[%s9 + $0x1d0] sm:$0xff]
  %v1839 = vld [vmem:[%s9 + $0x1d8] sm:$0xff]
  %v1840 = vld [vmem:[%s9 + $0x1e0] sm:$0xff]
  %v1841 = vld [vmem:[%s9 + $0x1e8] sm:$0xff]
  %v1842 = vld [vmem:[%s9 + $0x1f0] sm:$0xff]
  %v1843 = vld [vmem:[%s9 + $0x1f8] sm:$0xff]
  %v1844 = vld [vmem:[%s9 + $0x200] sm:$0xff]
  %v1845 = vld [vmem:[%s9 + $0x208] sm:$0xff]
  %v1846 = vld [vmem:[%s9 + $0x210] sm:$0xff]
  %v1847 = vld [vmem:[%s9 + $0x218] sm:$0xff]
  %v1848 = vld [vmem:[%s9 + $0x220] sm:$0xff]
  %v1849 = vld [vmem:[%s9 + $0x228] sm:$0xff]
  %v1850 = vld [vmem:[%s9 + $0x230] sm:$0xff]
  %v1851 = vld [vmem:[%s9 + $0x238] sm:$0xff]
  %v1852 = vld [vmem:[%s9 + $0x240] sm:$0xff]
  %v1853 = vld [vmem:[%s9 + $0x248] sm:$0xff]
  %v1854 = vld [vmem:[%s9 + $0x250] sm:$0xff]
  %v1855 = vld [vmem:[%s9 + $0x258] sm:$0xff]
  %v1856 = vld [vmem:[%s9 + $0x260] sm:$0xff]
  %v1857 = vld [vmem:[%s9 + $0x268] sm:$0xff]
  %v1858 = vld [vmem:[%s9 + $0x270] sm:$0xff]
  %v1859 = vld [vmem:[%s9 + $0x278] sm:$0xff]
  %v1860 = vld [vmem:[%s9 + $0x280] sm:$0xff]
  %v1861 = vld [vmem:[%s9 + $0x288] sm:$0xff]
  %v1862 = vld [vmem:[%s9 + $0x290] sm:$0xff]
  %v1863 = vld [vmem:[%s9 + $0x298] sm:$0xff]
  %v1864 = vld [vmem:[%s9 + $0x2a0] sm:$0xff]
  %v1865 = vld [vmem:[%s9 + $0x2a8] sm:$0xff]
  %v1866 = vld [vmem:[%s9 + $0x2b0] sm:$0xff]
  %v1867 = vld [vmem:[%s9 + $0x2b8] sm:$0xff]
  %v1868 = vld [vmem:[%s9 + $0x2c0] sm:$0xff]
  %v1869 = vld [vmem:[%s9 + $0x2c8] sm:$0xff]
  %v1870 = vld [vmem:[%s9 + $0x2d0] sm:$0xff]
  %v1871 = vld [vmem:[%s9 + $0x2d8] sm:$0xff]
  %v1872 = vld [vmem:[%s9 + $0x2e0] sm:$0xff]
  %v1873 = vld [vmem:[%s9 + $0x2e8] sm:$0xff]
  %v1874 = vld [vmem:[%s9 + $0x2f0] sm:$0xff]
  %v1875 = vld [vmem:[%s9 + $0x2f8] sm:$0xff]
  %v1876 = vld [vmem:[%s9 + $0x300] sm:$0xff]
  %v1877 = vld [vmem:[%s9 + $0x308] sm:$0xff]
  %v1878 = vld [vmem:[%s9 + $0x310] sm:$0xff]
  %v1879 = vld [vmem:[%s9 + $0x318] sm:$0xff]
  %v1880 = vld [vmem:[%s9 + $0x320] sm:$0xff]
  %v1881 = vld [vmem:[%s9 + $0x328] sm:$0xff]
  %v1882 = vld [vmem:[%s9 + $0x330] sm:$0xff]
  %v1883 = vld [vmem:[%s9 + $0x338] sm:$0xff]
  %v1884 = vld [vmem:[%s9 + $0x340] sm:$0xff]
  %v1885 = vld [vmem:[%s9 + $0x348] sm:$0xff]
  %v1886 = vld [vmem:[%s9 + $0x350] sm:$0xff]
  %v1887 = vld [vmem:[%s9 + $0x358] sm:$0xff]
  %v1888 = vld [vmem:[%s9 + $0x360] sm:$0xff]
  %v1889 = vld [vmem:[%s9 + $0x368] sm:$0xff]
  %v1890 = vld [vmem:[%s9 + $0x370] sm:$0xff]
  %v1891 = vld [vmem:[%s9 + $0x378] sm:$0xff]
  %v1892 = vld [vmem:[%s9 + $0x380] sm:$0xff]
  %v1893 = vld [vmem:[%s9 + $0x388] sm:$0xff]
  %v1894 = vld [vmem:[%s9 + $0x390] sm:$0xff]
  %v1895 = vld [vmem:[%s9 + $0x398] sm:$0xff]
  %v1896 = vld [vmem:[%s9 + $0x3a0] sm:$0xff]
  %v1897 = vld [vmem:[%s9 + $0x3a8] sm:$0xff]
  %v1898 = vld [vmem:[%s9 + $0x3b0] sm:$0xff]
  %v1899 = vld [vmem:[%s9 + $0x3b8] sm:$0xff]
  %v1900 = vld [vmem:[%s9 + $0x3c0] sm:$0xff]
  %v1901 = vld [vmem:[%s9 + $0x3c8] sm:$0xff]
  %v1902 = vld [vmem:[%s9 + $0x3d0] sm:$0xff]
  %v1903 = vld [vmem:[%s9 + $0x3d8] sm:$0xff]
  %v1904 = vld [vmem:[%s9 + $0x3e0] sm:$0xff]
  %v1905 = vld [vmem:[%s9 + $0x3e8] sm:$0xff]
  %v1906 = vld [vmem:[%s9 + $0x3f0] sm:$0xff]
  %v1907 = vld [vmem:[%s9 + $0x3f8] sm:$0xff]
  %v1908 = vld [vmem:[%s9 + $0x400] sm:$0xff]
  %v1909 = vld [vmem:[%s9 + $0x408] sm:$0xff]
  %v1910 = vld [vmem:[%s9 + $0x410] sm:$0xff]
  %v1911 = vld [vmem:[%s9 + $0x418] sm:$0xff]
  %v1912 = vld [vmem:[%s9 + $0x420] sm:$0xff]
  %v1913 = vld [vmem:[%s9 + $0x428] sm:$0xff]
  %v1914 = vld [vmem:[%s9 + $0x430] sm:$0xff]
  %v1915 = vld [vmem:[%s9 + $0x438] sm:$0xff]
  %v1916 = vld [vmem:[%s9 + $0x440] sm:$0xff]
  %v1917 = vld [vmem:[%s9 + $0x448] sm:$0xff]
  %v1918 = vld [vmem:[%s9 + $0x450] sm:$0xff]
  %v1919 = vld [vmem:[%s9 + $0x458] sm:$0xff]
  %v1920 = vld [vmem:[%s9 + $0x460] sm:$0xff]
  %v1921 = vld [vmem:[%s9 + $0x468] sm:$0xff]
  %v1922 = vld [vmem:[%s9 + $0x470] sm:$0xff]
  %v1923 = vld [vmem:[%s9 + $0x478] sm:$0xff]
  %v1924 = vld [vmem:[%s9 + $0x480] sm:$0xff]
  %v1925 = vld [vmem:[%s9 + $0x488] sm:$0xff]
  %v1926 = vld [vmem:[%s9 + $0x490] sm:$0xff]
  %v1927 = vld [vmem:[%s9 + $0x498] sm:$0xff]
  %v1928 = vld [vmem:[%s9 + $0x4a0] sm:$0xff]
  %v1929 = vld [vmem:[%s9 + $0x4a8] sm:$0xff]
  %v1930 = vld [vmem:[%s9 + $0x4b0] sm:$0xff]
  %v1931 = vld [vmem:[%s9 + $0x4b8] sm:$0xff]
  %v1932 = vld [vmem:[%s9 + $0x4c0] sm:$0xff]
  %v1933 = vld [vmem:[%s9 + $0x4c8] sm:$0xff]
  %v1934 = vld [vmem:[%s9 + $0x4d0] sm:$0xff]
  %v1935 = vld [vmem:[%s9 + $0x4d8] sm:$0xff]
  %v1936 = vld [vmem:[%s9 + $0x4e0] sm:$0xff]
  %v1937 = vld [vmem:[%s9 + $0x4e8] sm:$0xff]
  %v1938 = vld [vmem:[%s9 + $0x4f0] sm:$0xff]
  %v1939 = vld [vmem:[%s9 + $0x4f8] sm:$0xff]
  %v1940 = vld [vmem:[%s9 + $0x500] sm:$0xff]
  %v1941 = vld [vmem:[%s9 + $0x508] sm:$0xff]
  %v1942 = vld [vmem:[%s9 + $0x510] sm:$0xff]
  %v1943 = vld [vmem:[%s9 + $0x518] sm:$0xff]
  %v1944 = vld [vmem:[%s9 + $0x520] sm:$0xff]
  %v1945 = vld [vmem:[%s9 + $0x528] sm:$0xff]
  %v1946 = vld [vmem:[%s9 + $0x530] sm:$0xff]
  %v1947 = vld [vmem:[%s9 + $0x538] sm:$0xff]
  %v1948 = vld [vmem:[%s9 + $0x540] sm:$0xff]
  %v1949 = vld [vmem:[%s9 + $0x548] sm:$0xff]
  %v1950 = vld [vmem:[%s9 + $0x550] sm:$0xff]
  %v1951 = vld [vmem:[%s9 + $0x558] sm:$0xff]
  %v1952 = vld [vmem:[%s9 + $0x560] sm:$0xff]
  %v1953 = vld [vmem:[%s9 + $0x568] sm:$0xff]
  %v1954 = vld [vmem:[%s9 + $0x570] sm:$0xff]
  %v1955 = vld [vmem:[%s9 + $0x578] sm:$0xff]
  %v1956 = vld [vmem:[%s9 + $0x580] sm:$0xff]
  %v1957 = vld [vmem:[%s9 + $0x588] sm:$0xff]
  %v1958 = vld [vmem:[%s9 + $0x590] sm:$0xff]
  %v1959 = vld [vmem:[%s9 + $0x598] sm:$0xff]
  %v1960 = vld [vmem:[%s9 + $0x5a0] sm:$0xff]
  %v1961 = vld [vmem:[%s9 + $0x5a8] sm:$0xff]
  %v1962 = vld [vmem:[%s9 + $0x5b0] sm:$0xff]
  %v1963 = vld [vmem:[%s9 + $0x5b8] sm:$0xff]
  %v1964 = vld [vmem:[%s9 + $0x5c0] sm:$0xff]
  %v1965 = vld [vmem:[%s9 + $0x5c8] sm:$0xff]
  %v1966 = vld [vmem:[%s9 + $0x5d0] sm:$0xff]
  %v1967 = vld [vmem:[%s9 + $0x5d8] sm:$0xff]
  %v1968 = vld [vmem:[%s9 + $0x5e0] sm:$0xff]
  %v1969 = vld [vmem:[%s9 + $0x5e8] sm:$0xff]
  %v1970 = vld [vmem:[%s9 + $0x5f0] sm:$0xff]
  %v1971 = vld [vmem:[%s9 + $0x5f8] sm:$0xff]
  %v1972 = vld [vmem:[%s9 + $0x600] sm:$0xff]
  %v1973 = vld [vmem:[%s9 + $0x608] sm:$0xff]
  %v1974 = vld [vmem:[%s9 + $0x610] sm:$0xff]
  %v1975 = vld [vmem:[%s9 + $0x618] sm:$0xff]
  %v1976 = vld [vmem:[%s9 + $0x620] sm:$0xff]
  %v1977 = vld [vmem:[%s9 + $0x628] sm:$0xff]
  %v1978 = vld [vmem:[%s9 + $0x630] sm:$0xff]
  %v1979 = vld [vmem:[%s9 + $0x638] sm:$0xff]
  %v1980 = vld [vmem:[%s9 + $0x640] sm:$0xff]
  %v1981 = vld [vmem:[%s9 + $0x648] sm:$0xff]
  %v1982 = vld [vmem:[%s9 + $0x650] sm:$0xff]
  %v1983 = vld [vmem:[%s9 + $0x658] sm:$0xff]
  %v1984 = vld [vmem:[%s9 + $0x660] sm:$0xff]
  %v1985 = vld [vmem:[%s9 + $0x668] sm:$0xff]
  %v1986 = vld [vmem:[%s9 + $0x670] sm:$0xff]
  %v1987 = vld [vmem:[%s9 + $0x678] sm:$0xff]
  %v1988 = vld [vmem:[%s9 + $0x680] sm:$0xff]
  %v1989 = vld [vmem:[%s9 + $0x688] sm:$0xff]
  %v1990 = vld [vmem:[%s9 + $0x690] sm:$0xff]
  %v1991 = vld [vmem:[%s9 + $0x698] sm:$0xff]
  %v1992 = vld [vmem:[%s9 + $0x6a0] sm:$0xff]
  %v1993 = vld [vmem:[%s9 + $0x6a8] sm:$0xff]
  %v1994 = vld [vmem:[%s9 + $0x6b0] sm:$0xff]
  %v1995 = vld [vmem:[%s9 + $0x6b8] sm:$0xff]
  %v1996 = vld [vmem:[%s9 + $0x6c0] sm:$0xff]
  %v1997 = vld [vmem:[%s9 + $0x6c8] sm:$0xff]
  %v1998 = vld [vmem:[%s9 + $0x6d0] sm:$0xff]
  %v1999 = vld [vmem:[%s9 + $0x6d8] sm:$0xff]
  %v2000 = vld [vmem:[%s9 + $0x6e0] sm:$0xff]
  %v2001 = vld [vmem:[%s9 + $0x6e8] sm:$0xff]
  %v2002 = vld [vmem:[%s9 + $0x6f0] sm:$0xff]
  %v2003 = vld [vmem:[%s9 + $0x6f8] sm:$0xff]
  %v2004 = vld [vmem:[%s9 + $0x700] sm:$0xff]
  %v2005 = vld [vmem:[%s9 + $0x708] sm:$0xff]
  %v2006 = vld [vmem:[%s9 + $0x710] sm:$0xff]
  %v2007 = vld [vmem:[%s9 + $0x718] sm:$0xff]
  %v2008 = vld [vmem:[%s9 + $0x720] sm:$0xff]
  %v2009 = vld [vmem:[%s9 + $0x728] sm:$0xff]
  %v2010 = vld [vmem:[%s9 + $0x730] sm:$0xff]
  %v2011 = vld [vmem:[%s9 + $0x738] sm:$0xff]
  %v2012 = vld [vmem:[%s9 + $0x740] sm:$0xff]
  %v2013 = vld [vmem:[%s9 + $0x748] sm:$0xff]
  %v2014 = vld [vmem:[%s9 + $0x750] sm:$0xff]
  %v2015 = vld [vmem:[%s9 + $0x758] sm:$0xff]
  %v2016 = vld [vmem:[%s9 + $0x760] sm:$0xff]
  %v2017 = vld [vmem:[%s9 + $0x768] sm:$0xff]
  %v2018 = vld [vmem:[%s9 + $0x770] sm:$0xff]
  %v2019 = vld [vmem:[%s9 + $0x778] sm:$0xff]
  %v2020 = vld [vmem:[%s9 + $0x780] sm:$0xff]
  %v2021 = vld [vmem:[%s9 + $0x788] sm:$0xff]
  %v2022 = vld [vmem:[%s9 + $0x790] sm:$0xff]
  %v2023 = vld [vmem:[%s9 + $0x798] sm:$0xff]
  %v2024 = vld [vmem:[%s9 + $0x7a0] sm:$0xff]
  %v2025 = vld [vmem:[%s9 + $0x7a8] sm:$0xff]
  %v2026 = vld [vmem:[%s9 + $0x7b0] sm:$0xff]
  %v2027 = vld [vmem:[%s9 + $0x7b8] sm:$0xff]
  %v2028 = vld [vmem:[%s9 + $0x7c0] sm:$0xff]
  %v2029 = vld [vmem:[%s9 + $0x7c8] sm:$0xff]
  %v2030 = vld [vmem:[%s9 + $0x7d0] sm:$0xff]
  %v2031 = vld [vmem:[%s9 + $0x7d8] sm:$0xff]
  %v2032 = vld [vmem:[%s9 + $0x7e0] sm:$0xff]
  %v2033 = vld [vmem:[%s9 + $0x7e8] sm:$0xff]
  %v2034 = vld [vmem:[%s9 + $0x7f0] sm:$0xff]
  %v2035 = vld [vmem:[%s9 + $0x7f8] sm:$0xff]
  %v2036 = vld [vmem:[%s10] sm:$0xf]
  %v2038 = vperm.slane %v2036, 0
  %v2039 = vperm.slane %v2036, 1
  %v2040 = vperm.slane %v2036, 2
  %v2041 = vperm.slane %v2036, 3
  %v2302 = vunpack.c.l.b16 %v1780
  %v2303 = vunpack.c.h.b16 %v1780
  %v2304 = vunpack.c.l.b16 %v1781
  %v2305 = vunpack.c.h.b16 %v1781
  %v2306 = vunpack.c.l.b16 %v1782
  %v2307 = vunpack.c.h.b16 %v1782
  %v2308 = vunpack.c.l.b16 %v1783
  %v2309 = vunpack.c.h.b16 %v1783
  %v2310 = vunpack.c.l.b16 %v1784
  %v2311 = vunpack.c.h.b16 %v1784
  %v2312 = vunpack.c.l.b16 %v1785
  %v2313 = vunpack.c.h.b16 %v1785
  %v2314 = vunpack.c.l.b16 %v1786
  %v2315 = vunpack.c.h.b16 %v1786
  %v2316 = vunpack.c.l.b16 %v1787
  %v2317 = vunpack.c.h.b16 %v1787
  %v2318 = vunpack.c.l.b16 %v1788
  %v2319 = vunpack.c.h.b16 %v1788
  %v2320 = vunpack.c.l.b16 %v1789
  %v2321 = vunpack.c.h.b16 %v1789
  %v2322 = vunpack.c.l.b16 %v1790
  %v2323 = vunpack.c.h.b16 %v1790
  %v2324 = vunpack.c.l.b16 %v1791
  %v2325 = vunpack.c.h.b16 %v1791
  %v2326 = vunpack.c.l.b16 %v1792
  %v2327 = vunpack.c.h.b16 %v1792
  %v2328 = vunpack.c.l.b16 %v1793
  %v2329 = vunpack.c.h.b16 %v1793
  %v2330 = vunpack.c.l.b16 %v1794
  %v2331 = vunpack.c.h.b16 %v1794
  %v2332 = vunpack.c.l.b16 %v1795
  %v2333 = vunpack.c.h.b16 %v1795
  %v2334 = vunpack.c.l.b16 %v1796
  %v2335 = vunpack.c.h.b16 %v1796
  %v2336 = vunpack.c.l.b16 %v1797
  %v2337 = vunpack.c.h.b16 %v1797
  %v2338 = vunpack.c.l.b16 %v1798
  %v2339 = vunpack.c.h.b16 %v1798
  %v2340 = vunpack.c.l.b16 %v1799
  %v2341 = vunpack.c.h.b16 %v1799
  %v2342 = vunpack.c.l.b16 %v1800
  %v2343 = vunpack.c.h.b16 %v1800
  %v2344 = vunpack.c.l.b16 %v1801
  %v2345 = vunpack.c.h.b16 %v1801
  %v2346 = vunpack.c.l.b16 %v1802
  %v2347 = vunpack.c.h.b16 %v1802
  %v2348 = vunpack.c.l.b16 %v1803
  %v2349 = vunpack.c.h.b16 %v1803
  %v2350 = vunpack.c.l.b16 %v1804
  %v2351 = vunpack.c.h.b16 %v1804
  %v2352 = vunpack.c.l.b16 %v1805
  %v2353 = vunpack.c.h.b16 %v1805
  %v2354 = vunpack.c.l.b16 %v1806
  %v2355 = vunpack.c.h.b16 %v1806
  %v2356 = vunpack.c.l.b16 %v1807
  %v2357 = vunpack.c.h.b16 %v1807
  %v2358 = vunpack.c.l.b16 %v1808
  %v2359 = vunpack.c.h.b16 %v1808
  %v2360 = vunpack.c.l.b16 %v1809
  %v2361 = vunpack.c.h.b16 %v1809
  %v2362 = vunpack.c.l.b16 %v1810
  %v2363 = vunpack.c.h.b16 %v1810
  %v2364 = vunpack.c.l.b16 %v1811
  %v2365 = vunpack.c.h.b16 %v1811
  %v2366 = vunpack.c.l.b16 %v1812
  %v2367 = vunpack.c.h.b16 %v1812
  %v2368 = vunpack.c.l.b16 %v1813
  %v2369 = vunpack.c.h.b16 %v1813
  %v2370 = vunpack.c.l.b16 %v1814
  %v2371 = vunpack.c.h.b16 %v1814
  %v2372 = vunpack.c.l.b16 %v1815
  %v2373 = vunpack.c.h.b16 %v1815
  %v2374 = vunpack.c.l.b16 %v1816
  %v2375 = vunpack.c.h.b16 %v1816
  %v2376 = vunpack.c.l.b16 %v1817
  %v2377 = vunpack.c.h.b16 %v1817
  %v2378 = vunpack.c.l.b16 %v1818
  %v2379 = vunpack.c.h.b16 %v1818
  %v2380 = vunpack.c.l.b16 %v1819
  %v2381 = vunpack.c.h.b16 %v1819
  %v2382 = vunpack.c.l.b16 %v1820
  %v2383 = vunpack.c.h.b16 %v1820
  %v2384 = vunpack.c.l.b16 %v1821
  %v2385 = vunpack.c.h.b16 %v1821
  %v2386 = vunpack.c.l.b16 %v1822
  %v2387 = vunpack.c.h.b16 %v1822
  %v2388 = vunpack.c.l.b16 %v1823
  %v2389 = vunpack.c.h.b16 %v1823
  %v2390 = vunpack.c.l.b16 %v1824
  %v2391 = vunpack.c.h.b16 %v1824
  %v2392 = vunpack.c.l.b16 %v1825
  %v2393 = vunpack.c.h.b16 %v1825
  %v2394 = vunpack.c.l.b16 %v1826
  %v2395 = vunpack.c.h.b16 %v1826
  %v2396 = vunpack.c.l.b16 %v1827
  %v2397 = vunpack.c.h.b16 %v1827
  %v2398 = vunpack.c.l.b16 %v1828
  %v2399 = vunpack.c.h.b16 %v1828
  %v2400 = vunpack.c.l.b16 %v1829
  %v2401 = vunpack.c.h.b16 %v1829
  %v2402 = vunpack.c.l.b16 %v1830
  %v2403 = vunpack.c.h.b16 %v1830
  %v2404 = vunpack.c.l.b16 %v1831
  %v2405 = vunpack.c.h.b16 %v1831
  %v2406 = vunpack.c.l.b16 %v1832
  %v2407 = vunpack.c.h.b16 %v1832
  %v2408 = vunpack.c.l.b16 %v1833
  %v2409 = vunpack.c.h.b16 %v1833
  %v2410 = vunpack.c.l.b16 %v1834
  %v2411 = vunpack.c.h.b16 %v1834
  %v2412 = vunpack.c.l.b16 %v1835
  %v2413 = vunpack.c.h.b16 %v1835
  %v2414 = vunpack.c.l.b16 %v1836
  %v2415 = vunpack.c.h.b16 %v1836
  %v2416 = vunpack.c.l.b16 %v1837
  %v2417 = vunpack.c.h.b16 %v1837
  %v2418 = vunpack.c.l.b16 %v1838
  %v2419 = vunpack.c.h.b16 %v1838
  %v2420 = vunpack.c.l.b16 %v1839
  %v2421 = vunpack.c.h.b16 %v1839
  %v2422 = vunpack.c.l.b16 %v1840
  %v2423 = vunpack.c.h.b16 %v1840
  %v2424 = vunpack.c.l.b16 %v1841
  %v2425 = vunpack.c.h.b16 %v1841
  %v2426 = vunpack.c.l.b16 %v1842
  %v2427 = vunpack.c.h.b16 %v1842
  %v2428 = vunpack.c.l.b16 %v1843
  %v2429 = vunpack.c.h.b16 %v1843
  %v2430 = vunpack.c.l.b16 %v1844
  %v2431 = vunpack.c.h.b16 %v1844
  %v2432 = vunpack.c.l.b16 %v1845
  %v2433 = vunpack.c.h.b16 %v1845
  %v2434 = vunpack.c.l.b16 %v1846
  %v2435 = vunpack.c.h.b16 %v1846
  %v2436 = vunpack.c.l.b16 %v1847
  %v2437 = vunpack.c.h.b16 %v1847
  %v2438 = vunpack.c.l.b16 %v1848
  %v2439 = vunpack.c.h.b16 %v1848
  %v2440 = vunpack.c.l.b16 %v1849
  %v2441 = vunpack.c.h.b16 %v1849
  %v2442 = vunpack.c.l.b16 %v1850
  %v2443 = vunpack.c.h.b16 %v1850
  %v2444 = vunpack.c.l.b16 %v1851
  %v2445 = vunpack.c.h.b16 %v1851
  %v2446 = vunpack.c.l.b16 %v1852
  %v2447 = vunpack.c.h.b16 %v1852
  %v2448 = vunpack.c.l.b16 %v1853
  %v2449 = vunpack.c.h.b16 %v1853
  %v2450 = vunpack.c.l.b16 %v1854
  %v2451 = vunpack.c.h.b16 %v1854
  %v2452 = vunpack.c.l.b16 %v1855
  %v2453 = vunpack.c.h.b16 %v1855
  %v2454 = vunpack.c.l.b16 %v1856
  %v2455 = vunpack.c.h.b16 %v1856
  %v2456 = vunpack.c.l.b16 %v1857
  %v2457 = vunpack.c.h.b16 %v1857
  %v2458 = vunpack.c.l.b16 %v1858
  %v2459 = vunpack.c.h.b16 %v1858
  %v2460 = vunpack.c.l.b16 %v1859
  %v2461 = vunpack.c.h.b16 %v1859
  %v2462 = vunpack.c.l.b16 %v1860
  %v2463 = vunpack.c.h.b16 %v1860
  %v2464 = vunpack.c.l.b16 %v1861
  %v2465 = vunpack.c.h.b16 %v1861
  %v2466 = vunpack.c.l.b16 %v1862
  %v2467 = vunpack.c.h.b16 %v1862
  %v2468 = vunpack.c.l.b16 %v1863
  %v2469 = vunpack.c.h.b16 %v1863
  %v2470 = vunpack.c.l.b16 %v1864
  %v2471 = vunpack.c.h.b16 %v1864
  %v2472 = vunpack.c.l.b16 %v1865
  %v2473 = vunpack.c.h.b16 %v1865
  %v2474 = vunpack.c.l.b16 %v1866
  %v2475 = vunpack.c.h.b16 %v1866
  %v2476 = vunpack.c.l.b16 %v1867
  %v2477 = vunpack.c.h.b16 %v1867
  %v2478 = vunpack.c.l.b16 %v1868
  %v2479 = vunpack.c.h.b16 %v1868
  %v2480 = vunpack.c.l.b16 %v1869
  %v2481 = vunpack.c.h.b16 %v1869
  %v2482 = vunpack.c.l.b16 %v1870
  %v2483 = vunpack.c.h.b16 %v1870
  %v2484 = vunpack.c.l.b16 %v1871
  %v2485 = vunpack.c.h.b16 %v1871
  %v2486 = vunpack.c.l.b16 %v1872
  %v2487 = vunpack.c.h.b16 %v1872
  %v2488 = vunpack.c.l.b16 %v1873
  %v2489 = vunpack.c.h.b16 %v1873
  %v2490 = vunpack.c.l.b16 %v1874
  %v2491 = vunpack.c.h.b16 %v1874
  %v2492 = vunpack.c.l.b16 %v1875
  %v2493 = vunpack.c.h.b16 %v1875
  %v2494 = vunpack.c.l.b16 %v1876
  %v2495 = vunpack.c.h.b16 %v1876
  %v2496 = vunpack.c.l.b16 %v1877
  %v2497 = vunpack.c.h.b16 %v1877
  %v2498 = vunpack.c.l.b16 %v1878
  %v2499 = vunpack.c.h.b16 %v1878
  %v2500 = vunpack.c.l.b16 %v1879
  %v2501 = vunpack.c.h.b16 %v1879
  %v2502 = vunpack.c.l.b16 %v1880
  %v2503 = vunpack.c.h.b16 %v1880
  %v2504 = vunpack.c.l.b16 %v1881
  %v2505 = vunpack.c.h.b16 %v1881
  %v2506 = vunpack.c.l.b16 %v1882
  %v2507 = vunpack.c.h.b16 %v1882
  %v2508 = vunpack.c.l.b16 %v1883
  %v2509 = vunpack.c.h.b16 %v1883
  %v2510 = vunpack.c.l.b16 %v1884
  %v2511 = vunpack.c.h.b16 %v1884
  %v2512 = vunpack.c.l.b16 %v1885
  %v2513 = vunpack.c.h.b16 %v1885
  %v2514 = vunpack.c.l.b16 %v1886
  %v2515 = vunpack.c.h.b16 %v1886
  %v2516 = vunpack.c.l.b16 %v1887
  %v2517 = vunpack.c.h.b16 %v1887
  %v2518 = vunpack.c.l.b16 %v1888
  %v2519 = vunpack.c.h.b16 %v1888
  %v2520 = vunpack.c.l.b16 %v1889
  %v2521 = vunpack.c.h.b16 %v1889
  %v2522 = vunpack.c.l.b16 %v1890
  %v2523 = vunpack.c.h.b16 %v1890
  %v2524 = vunpack.c.l.b16 %v1891
  %v2525 = vunpack.c.h.b16 %v1891
  %v2526 = vunpack.c.l.b16 %v1892
  %v2527 = vunpack.c.h.b16 %v1892
  %v2528 = vunpack.c.l.b16 %v1893
  %v2529 = vunpack.c.h.b16 %v1893
  %v2530 = vunpack.c.l.b16 %v1894
  %v2531 = vunpack.c.h.b16 %v1894
  %v2532 = vunpack.c.l.b16 %v1895
  %v2533 = vunpack.c.h.b16 %v1895
  %v2534 = vunpack.c.l.b16 %v1896
  %v2535 = vunpack.c.h.b16 %v1896
  %v2536 = vunpack.c.l.b16 %v1897
  %v2537 = vunpack.c.h.b16 %v1897
  %v2538 = vunpack.c.l.b16 %v1898
  %v2539 = vunpack.c.h.b16 %v1898
  %v2540 = vunpack.c.l.b16 %v1899
  %v2541 = vunpack.c.h.b16 %v1899
  %v2542 = vunpack.c.l.b16 %v1900
  %v2543 = vunpack.c.h.b16 %v1900
  %v2544 = vunpack.c.l.b16 %v1901
  %v2545 = vunpack.c.h.b16 %v1901
  %v2546 = vunpack.c.l.b16 %v1902
  %v2547 = vunpack.c.h.b16 %v1902
  %v2548 = vunpack.c.l.b16 %v1903
  %v2549 = vunpack.c.h.b16 %v1903
  %v2550 = vunpack.c.l.b16 %v1904
  %v2551 = vunpack.c.h.b16 %v1904
  %v2552 = vunpack.c.l.b16 %v1905
  %v2553 = vunpack.c.h.b16 %v1905
  %v2554 = vunpack.c.l.b16 %v1906
  %v2555 = vunpack.c.h.b16 %v1906
  %v2556 = vunpack.c.l.b16 %v1907
  %v2557 = vunpack.c.h.b16 %v1907
  %v2558 = vunpack.c.l.b16 %v1908
  %v2559 = vunpack.c.h.b16 %v1908
  %v2560 = vunpack.c.l.b16 %v1909
  %v2561 = vunpack.c.h.b16 %v1909
  %v2562 = vunpack.c.l.b16 %v1910
  %v2563 = vunpack.c.h.b16 %v1910
  %v2564 = vunpack.c.l.b16 %v1911
  %v2565 = vunpack.c.h.b16 %v1911
  %v2566 = vunpack.c.l.b16 %v1912
  %v2567 = vunpack.c.h.b16 %v1912
  %v2568 = vunpack.c.l.b16 %v1913
  %v2569 = vunpack.c.h.b16 %v1913
  %v2570 = vunpack.c.l.b16 %v1914
  %v2571 = vunpack.c.h.b16 %v1914
  %v2572 = vunpack.c.l.b16 %v1915
  %v2573 = vunpack.c.h.b16 %v1915
  %v2574 = vunpack.c.l.b16 %v1916
  %v2575 = vunpack.c.h.b16 %v1916
  %v2576 = vunpack.c.l.b16 %v1917
  %v2577 = vunpack.c.h.b16 %v1917
  %v2578 = vunpack.c.l.b16 %v1918
  %v2579 = vunpack.c.h.b16 %v1918
  %v2580 = vunpack.c.l.b16 %v1919
  %v2581 = vunpack.c.h.b16 %v1919
  %v2582 = vunpack.c.l.b16 %v1920
  %v2583 = vunpack.c.h.b16 %v1920
  %v2584 = vunpack.c.l.b16 %v1921
  %v2585 = vunpack.c.h.b16 %v1921
  %v2586 = vunpack.c.l.b16 %v1922
  %v2587 = vunpack.c.h.b16 %v1922
  %v2588 = vunpack.c.l.b16 %v1923
  %v2589 = vunpack.c.h.b16 %v1923
  %v2590 = vunpack.c.l.b16 %v1924
  %v2591 = vunpack.c.h.b16 %v1924
  %v2592 = vunpack.c.l.b16 %v1925
  %v2593 = vunpack.c.h.b16 %v1925
  %v2594 = vunpack.c.l.b16 %v1926
  %v2595 = vunpack.c.h.b16 %v1926
  %v2596 = vunpack.c.l.b16 %v1927
  %v2597 = vunpack.c.h.b16 %v1927
  %v2598 = vunpack.c.l.b16 %v1928
  %v2599 = vunpack.c.h.b16 %v1928
  %v2600 = vunpack.c.l.b16 %v1929
  %v2601 = vunpack.c.h.b16 %v1929
  %v2602 = vunpack.c.l.b16 %v1930
  %v2603 = vunpack.c.h.b16 %v1930
  %v2604 = vunpack.c.l.b16 %v1931
  %v2605 = vunpack.c.h.b16 %v1931
  %v2606 = vunpack.c.l.b16 %v1932
  %v2607 = vunpack.c.h.b16 %v1932
  %v2608 = vunpack.c.l.b16 %v1933
  %v2609 = vunpack.c.h.b16 %v1933
  %v2610 = vunpack.c.l.b16 %v1934
  %v2611 = vunpack.c.h.b16 %v1934
  %v2612 = vunpack.c.l.b16 %v1935
  %v2613 = vunpack.c.h.b16 %v1935
  %v2614 = vunpack.c.l.b16 %v1936
  %v2615 = vunpack.c.h.b16 %v1936
  %v2616 = vunpack.c.l.b16 %v1937
  %v2617 = vunpack.c.h.b16 %v1937
  %v2618 = vunpack.c.l.b16 %v1938
  %v2619 = vunpack.c.h.b16 %v1938
  %v2620 = vunpack.c.l.b16 %v1939
  %v2621 = vunpack.c.h.b16 %v1939
  %v2622 = vunpack.c.l.b16 %v1940
  %v2623 = vunpack.c.h.b16 %v1940
  %v2624 = vunpack.c.l.b16 %v1941
  %v2625 = vunpack.c.h.b16 %v1941
  %v2626 = vunpack.c.l.b16 %v1942
  %v2627 = vunpack.c.h.b16 %v1942
  %v2628 = vunpack.c.l.b16 %v1943
  %v2629 = vunpack.c.h.b16 %v1943
  %v2630 = vunpack.c.l.b16 %v1944
  %v2631 = vunpack.c.h.b16 %v1944
  %v2632 = vunpack.c.l.b16 %v1945
  %v2633 = vunpack.c.h.b16 %v1945
  %v2634 = vunpack.c.l.b16 %v1946
  %v2635 = vunpack.c.h.b16 %v1946
  %v2636 = vunpack.c.l.b16 %v1947
  %v2637 = vunpack.c.h.b16 %v1947
  %v2638 = vunpack.c.l.b16 %v1948
  %v2639 = vunpack.c.h.b16 %v1948
  %v2640 = vunpack.c.l.b16 %v1949
  %v2641 = vunpack.c.h.b16 %v1949
  %v2642 = vunpack.c.l.b16 %v1950
  %v2643 = vunpack.c.h.b16 %v1950
  %v2644 = vunpack.c.l.b16 %v1951
  %v2645 = vunpack.c.h.b16 %v1951
  %v2646 = vunpack.c.l.b16 %v1952
  %v2647 = vunpack.c.h.b16 %v1952
  %v2648 = vunpack.c.l.b16 %v1953
  %v2649 = vunpack.c.h.b16 %v1953
  %v2650 = vunpack.c.l.b16 %v1954
  %v2651 = vunpack.c.h.b16 %v1954
  %v2652 = vunpack.c.l.b16 %v1955
  %v2653 = vunpack.c.h.b16 %v1955
  %v2654 = vunpack.c.l.b16 %v1956
  %v2655 = vunpack.c.h.b16 %v1956
  %v2656 = vunpack.c.l.b16 %v1957
  %v2657 = vunpack.c.h.b16 %v1957
  %v2658 = vunpack.c.l.b16 %v1958
  %v2659 = vunpack.c.h.b16 %v1958
  %v2660 = vunpack.c.l.b16 %v1959
  %v2661 = vunpack.c.h.b16 %v1959
  %v2662 = vunpack.c.l.b16 %v1960
  %v2663 = vunpack.c.h.b16 %v1960
  %v2664 = vunpack.c.l.b16 %v1961
  %v2665 = vunpack.c.h.b16 %v1961
  %v2666 = vunpack.c.l.b16 %v1962
  %v2667 = vunpack.c.h.b16 %v1962
  %v2668 = vunpack.c.l.b16 %v1963
  %v2669 = vunpack.c.h.b16 %v1963
  %v2670 = vunpack.c.l.b16 %v1964
  %v2671 = vunpack.c.h.b16 %v1964
  %v2672 = vunpack.c.l.b16 %v1965
  %v2673 = vunpack.c.h.b16 %v1965
  %v2674 = vunpack.c.l.b16 %v1966
  %v2675 = vunpack.c.h.b16 %v1966
  %v2676 = vunpack.c.l.b16 %v1967
  %v2677 = vunpack.c.h.b16 %v1967
  %v2678 = vunpack.c.l.b16 %v1968
  %v2679 = vunpack.c.h.b16 %v1968
  %v2680 = vunpack.c.l.b16 %v1969
  %v2681 = vunpack.c.h.b16 %v1969
  %v2682 = vunpack.c.l.b16 %v1970
  %v2683 = vunpack.c.h.b16 %v1970
  %v2684 = vunpack.c.l.b16 %v1971
  %v2685 = vunpack.c.h.b16 %v1971
  %v2686 = vunpack.c.l.b16 %v1972
  %v2687 = vunpack.c.h.b16 %v1972
  %v2688 = vunpack.c.l.b16 %v1973
  %v2689 = vunpack.c.h.b16 %v1973
  %v2690 = vunpack.c.l.b16 %v1974
  %v2691 = vunpack.c.h.b16 %v1974
  %v2692 = vunpack.c.l.b16 %v1975
  %v2693 = vunpack.c.h.b16 %v1975
  %v2694 = vunpack.c.l.b16 %v1976
  %v2695 = vunpack.c.h.b16 %v1976
  %v2696 = vunpack.c.l.b16 %v1977
  %v2697 = vunpack.c.h.b16 %v1977
  %v2698 = vunpack.c.l.b16 %v1978
  %v2699 = vunpack.c.h.b16 %v1978
  %v2700 = vunpack.c.l.b16 %v1979
  %v2701 = vunpack.c.h.b16 %v1979
  %v2702 = vunpack.c.l.b16 %v1980
  %v2703 = vunpack.c.h.b16 %v1980
  %v2704 = vunpack.c.l.b16 %v1981
  %v2705 = vunpack.c.h.b16 %v1981
  %v2706 = vunpack.c.l.b16 %v1982
  %v2707 = vunpack.c.h.b16 %v1982
  %v2708 = vunpack.c.l.b16 %v1983
  %v2709 = vunpack.c.h.b16 %v1983
  %v2710 = vunpack.c.l.b16 %v1984
  %v2711 = vunpack.c.h.b16 %v1984
  %v2712 = vunpack.c.l.b16 %v1985
  %v2713 = vunpack.c.h.b16 %v1985
  %v2714 = vunpack.c.l.b16 %v1986
  %v2715 = vunpack.c.h.b16 %v1986
  %v2716 = vunpack.c.l.b16 %v1987
  %v2717 = vunpack.c.h.b16 %v1987
  %v2718 = vunpack.c.l.b16 %v1988
  %v2719 = vunpack.c.h.b16 %v1988
  %v2720 = vunpack.c.l.b16 %v1989
  %v2721 = vunpack.c.h.b16 %v1989
  %v2722 = vunpack.c.l.b16 %v1990
  %v2723 = vunpack.c.h.b16 %v1990
  %v2724 = vunpack.c.l.b16 %v1991
  %v2725 = vunpack.c.h.b16 %v1991
  %v2726 = vunpack.c.l.b16 %v1992
  %v2727 = vunpack.c.h.b16 %v1992
  %v2728 = vunpack.c.l.b16 %v1993
  %v2729 = vunpack.c.h.b16 %v1993
  %v2730 = vunpack.c.l.b16 %v1994
  %v2731 = vunpack.c.h.b16 %v1994
  %v2732 = vunpack.c.l.b16 %v1995
  %v2733 = vunpack.c.h.b16 %v1995
  %v2734 = vunpack.c.l.b16 %v1996
  %v2735 = vunpack.c.h.b16 %v1996
  %v2736 = vunpack.c.l.b16 %v1997
  %v2737 = vunpack.c.h.b16 %v1997
  %v2738 = vunpack.c.l.b16 %v1998
  %v2739 = vunpack.c.h.b16 %v1998
  %v2740 = vunpack.c.l.b16 %v1999
  %v2741 = vunpack.c.h.b16 %v1999
  %v2742 = vunpack.c.l.b16 %v2000
  %v2743 = vunpack.c.h.b16 %v2000
  %v2744 = vunpack.c.l.b16 %v2001
  %v2745 = vunpack.c.h.b16 %v2001
  %v2746 = vunpack.c.l.b16 %v2002
  %v2747 = vunpack.c.h.b16 %v2002
  %v2748 = vunpack.c.l.b16 %v2003
  %v2749 = vunpack.c.h.b16 %v2003
  %v2750 = vunpack.c.l.b16 %v2004
  %v2751 = vunpack.c.h.b16 %v2004
  %v2752 = vunpack.c.l.b16 %v2005
  %v2753 = vunpack.c.h.b16 %v2005
  %v2754 = vunpack.c.l.b16 %v2006
  %v2755 = vunpack.c.h.b16 %v2006
  %v2756 = vunpack.c.l.b16 %v2007
  %v2757 = vunpack.c.h.b16 %v2007
  %v2758 = vunpack.c.l.b16 %v2008
  %v2759 = vunpack.c.h.b16 %v2008
  %v2760 = vunpack.c.l.b16 %v2009
  %v2761 = vunpack.c.h.b16 %v2009
  %v2762 = vunpack.c.l.b16 %v2010
  %v2763 = vunpack.c.h.b16 %v2010
  %v2764 = vunpack.c.l.b16 %v2011
  %v2765 = vunpack.c.h.b16 %v2011
  %v2766 = vunpack.c.l.b16 %v2012
  %v2767 = vunpack.c.h.b16 %v2012
  %v2768 = vunpack.c.l.b16 %v2013
  %v2769 = vunpack.c.h.b16 %v2013
  %v2770 = vunpack.c.l.b16 %v2014
  %v2771 = vunpack.c.h.b16 %v2014
  %v2772 = vunpack.c.l.b16 %v2015
  %v2773 = vunpack.c.h.b16 %v2015
  %v2774 = vunpack.c.l.b16 %v2016
  %v2775 = vunpack.c.h.b16 %v2016
  %v2776 = vunpack.c.l.b16 %v2017
  %v2777 = vunpack.c.h.b16 %v2017
  %v2778 = vunpack.c.l.b16 %v2018
  %v2779 = vunpack.c.h.b16 %v2018
  %v2780 = vunpack.c.l.b16 %v2019
  %v2781 = vunpack.c.h.b16 %v2019
  %v2782 = vunpack.c.l.b16 %v2020
  %v2783 = vunpack.c.h.b16 %v2020
  %v2784 = vunpack.c.l.b16 %v2021
  %v2785 = vunpack.c.h.b16 %v2021
  %v2786 = vunpack.c.l.b16 %v2022
  %v2787 = vunpack.c.h.b16 %v2022
  %v2788 = vunpack.c.l.b16 %v2023
  %v2789 = vunpack.c.h.b16 %v2023
  %v2790 = vunpack.c.l.b16 %v2024
  %v2791 = vunpack.c.h.b16 %v2024
  %v2792 = vunpack.c.l.b16 %v2025
  %v2793 = vunpack.c.h.b16 %v2025
  %v2794 = vunpack.c.l.b16 %v2026
  %v2795 = vunpack.c.h.b16 %v2026
  %v2796 = vunpack.c.l.b16 %v2027
  %v2797 = vunpack.c.h.b16 %v2027
  %v2798 = vunpack.c.l.b16 %v2028
  %v2799 = vunpack.c.h.b16 %v2028
  %v2800 = vunpack.c.l.b16 %v2029
  %v2801 = vunpack.c.h.b16 %v2029
  %v2802 = vunpack.c.l.b16 %v2030
  %v2803 = vunpack.c.h.b16 %v2030
  %v2804 = vunpack.c.l.b16 %v2031
  %v2805 = vunpack.c.h.b16 %v2031
  %v2806 = vunpack.c.l.b16 %v2032
  %v2807 = vunpack.c.h.b16 %v2032
  %v2808 = vunpack.c.l.b16 %v2033
  %v2809 = vunpack.c.h.b16 %v2033
  %v2810 = vunpack.c.l.b16 %v2034
  %v2811 = vunpack.c.h.b16 %v2034
  %v2812 = vunpack.c.l.b16 %v2035
  %v2813 = vunpack.c.h.b16 %v2035
  %v2814 = vpack.c.b16 %v2306, %v2302
  %v2815 = vpack.c.b16 %v2307, %v2303
  %v2816 = vpack.c.b16 %v2308, %v2304
  %v2817 = vpack.c.b16 %v2309, %v2305
  %v2818 = vpack.c.b16 %v2314, %v2310
  %v2819 = vpack.c.b16 %v2315, %v2311
  %v2820 = vpack.c.b16 %v2316, %v2312
  %v2821 = vpack.c.b16 %v2317, %v2313
  %v2822 = vpack.c.b16 %v2322, %v2318
  %v2823 = vpack.c.b16 %v2323, %v2319
  %v2824 = vpack.c.b16 %v2324, %v2320
  %v2825 = vpack.c.b16 %v2325, %v2321
  %v2826 = vpack.c.b16 %v2330, %v2326
  %v2827 = vpack.c.b16 %v2331, %v2327
  %v2828 = vpack.c.b16 %v2332, %v2328
  %v2829 = vpack.c.b16 %v2333, %v2329
  %v2830 = vpack.c.b16 %v2338, %v2334
  %v2831 = vpack.c.b16 %v2339, %v2335
  %v2832 = vpack.c.b16 %v2340, %v2336
  %v2833 = vpack.c.b16 %v2341, %v2337
  %v2834 = vpack.c.b16 %v2346, %v2342
  %v2835 = vpack.c.b16 %v2347, %v2343
  %v2836 = vpack.c.b16 %v2348, %v2344
  %v2837 = vpack.c.b16 %v2349, %v2345
  %v2838 = vpack.c.b16 %v2354, %v2350
  %v2839 = vpack.c.b16 %v2355, %v2351
  %v2840 = vpack.c.b16 %v2356, %v2352
  %v2841 = vpack.c.b16 %v2357, %v2353
  %v2842 = vpack.c.b16 %v2362, %v2358
  %v2843 = vpack.c.b16 %v2363, %v2359
  %v2844 = vpack.c.b16 %v2364, %v2360
  %v2845 = vpack.c.b16 %v2365, %v2361
  %v2846 = vpack.c.b16 %v2370, %v2366
  %v2847 = vpack.c.b16 %v2371, %v2367
  %v2848 = vpack.c.b16 %v2372, %v2368
  %v2849 = vpack.c.b16 %v2373, %v2369
  %v2850 = vpack.c.b16 %v2378, %v2374
  %v2851 = vpack.c.b16 %v2379, %v2375
  %v2852 = vpack.c.b16 %v2380, %v2376
  %v2853 = vpack.c.b16 %v2381, %v2377
  %v2854 = vpack.c.b16 %v2386, %v2382
  %v2855 = vpack.c.b16 %v2387, %v2383
  %v2856 = vpack.c.b16 %v2388, %v2384
  %v2857 = vpack.c.b16 %v2389, %v2385
  %v2858 = vpack.c.b16 %v2394, %v2390
  %v2859 = vpack.c.b16 %v2395, %v2391
  %v2860 = vpack.c.b16 %v2396, %v2392
  %v2861 = vpack.c.b16 %v2397, %v2393
  %v2862 = vpack.c.b16 %v2402, %v2398
  %v2863 = vpack.c.b16 %v2403, %v2399
  %v2864 = vpack.c.b16 %v2404, %v2400
  %v2865 = vpack.c.b16 %v2405, %v2401
  %v2866 = vpack.c.b16 %v2410, %v2406
  %v2867 = vpack.c.b16 %v2411, %v2407
  %v2868 = vpack.c.b16 %v2412, %v2408
  %v2869 = vpack.c.b16 %v2413, %v2409
  %v2870 = vpack.c.b16 %v2418, %v2414
  %v2871 = vpack.c.b16 %v2419, %v2415
  %v2872 = vpack.c.b16 %v2420, %v2416
  %v2873 = vpack.c.b16 %v2421, %v2417
  %v2874 = vpack.c.b16 %v2426, %v2422
  %v2875 = vpack.c.b16 %v2427, %v2423
  %v2876 = vpack.c.b16 %v2428, %v2424
  %v2877 = vpack.c.b16 %v2429, %v2425
  %v2878 = vpack.c.b16 %v2434, %v2430
  %v2879 = vpack.c.b16 %v2435, %v2431
  %v2880 = vpack.c.b16 %v2436, %v2432
  %v2881 = vpack.c.b16 %v2437, %v2433
  %v2882 = vpack.c.b16 %v2442, %v2438
  %v2883 = vpack.c.b16 %v2443, %v2439
  %v2884 = vpack.c.b16 %v2444, %v2440
  %v2885 = vpack.c.b16 %v2445, %v2441
  %v2886 = vpack.c.b16 %v2450, %v2446
  %v2887 = vpack.c.b16 %v2451, %v2447
  %v2888 = vpack.c.b16 %v2452, %v2448
  %v2889 = vpack.c.b16 %v2453, %v2449
  %v2890 = vpack.c.b16 %v2458, %v2454
  %v2891 = vpack.c.b16 %v2459, %v2455
  %v2892 = vpack.c.b16 %v2460, %v2456
  %v2893 = vpack.c.b16 %v2461, %v2457
  %v2894 = vpack.c.b16 %v2466, %v2462
  %v2895 = vpack.c.b16 %v2467, %v2463
  %v2896 = vpack.c.b16 %v2468, %v2464
  %v2897 = vpack.c.b16 %v2469, %v2465
  %v2898 = vpack.c.b16 %v2474, %v2470
  %v2899 = vpack.c.b16 %v2475, %v2471
  %v2900 = vpack.c.b16 %v2476, %v2472
  %v2901 = vpack.c.b16 %v2477, %v2473
  %v2902 = vpack.c.b16 %v2482, %v2478
  %v2903 = vpack.c.b16 %v2483, %v2479
  %v2904 = vpack.c.b16 %v2484, %v2480
  %v2905 = vpack.c.b16 %v2485, %v2481
  %v2906 = vpack.c.b16 %v2490, %v2486
  %v2907 = vpack.c.b16 %v2491, %v2487
  %v2908 = vpack.c.b16 %v2492, %v2488
  %v2909 = vpack.c.b16 %v2493, %v2489
  %v2910 = vpack.c.b16 %v2498, %v2494
  %v2911 = vpack.c.b16 %v2499, %v2495
  %v2912 = vpack.c.b16 %v2500, %v2496
  %v2913 = vpack.c.b16 %v2501, %v2497
  %v2914 = vpack.c.b16 %v2506, %v2502
  %v2915 = vpack.c.b16 %v2507, %v2503
  %v2916 = vpack.c.b16 %v2508, %v2504
  %v2917 = vpack.c.b16 %v2509, %v2505
  %v2918 = vpack.c.b16 %v2514, %v2510
  %v2919 = vpack.c.b16 %v2515, %v2511
  %v2920 = vpack.c.b16 %v2516, %v2512
  %v2921 = vpack.c.b16 %v2517, %v2513
  %v2922 = vpack.c.b16 %v2522, %v2518
  %v2923 = vpack.c.b16 %v2523, %v2519
  %v2924 = vpack.c.b16 %v2524, %v2520
  %v2925 = vpack.c.b16 %v2525, %v2521
  %v2926 = vpack.c.b16 %v2530, %v2526
  %v2927 = vpack.c.b16 %v2531, %v2527
  %v2928 = vpack.c.b16 %v2532, %v2528
  %v2929 = vpack.c.b16 %v2533, %v2529
  %v2930 = vpack.c.b16 %v2538, %v2534
  %v2931 = vpack.c.b16 %v2539, %v2535
  %v2932 = vpack.c.b16 %v2540, %v2536
  %v2933 = vpack.c.b16 %v2541, %v2537
  %v2934 = vpack.c.b16 %v2546, %v2542
  %v2935 = vpack.c.b16 %v2547, %v2543
  %v2936 = vpack.c.b16 %v2548, %v2544
  %v2937 = vpack.c.b16 %v2549, %v2545
  %v2938 = vpack.c.b16 %v2554, %v2550
  %v2939 = vpack.c.b16 %v2555, %v2551
  %v2940 = vpack.c.b16 %v2556, %v2552
  %v2941 = vpack.c.b16 %v2557, %v2553
  %v2942 = vpack.c.b16 %v2562, %v2558
  %v2943 = vpack.c.b16 %v2563, %v2559
  %v2944 = vpack.c.b16 %v2564, %v2560
  %v2945 = vpack.c.b16 %v2565, %v2561
  %v2946 = vpack.c.b16 %v2570, %v2566
  %v2947 = vpack.c.b16 %v2571, %v2567
  %v2948 = vpack.c.b16 %v2572, %v2568
  %v2949 = vpack.c.b16 %v2573, %v2569
  %v2950 = vpack.c.b16 %v2578, %v2574
  %v2951 = vpack.c.b16 %v2579, %v2575
  %v2952 = vpack.c.b16 %v2580, %v2576
  %v2953 = vpack.c.b16 %v2581, %v2577
  %v2954 = vpack.c.b16 %v2586, %v2582
  %v2955 = vpack.c.b16 %v2587, %v2583
  %v2956 = vpack.c.b16 %v2588, %v2584
  %v2957 = vpack.c.b16 %v2589, %v2585
  %v2958 = vpack.c.b16 %v2594, %v2590
  %v2959 = vpack.c.b16 %v2595, %v2591
  %v2960 = vpack.c.b16 %v2596, %v2592
  %v2961 = vpack.c.b16 %v2597, %v2593
  %v2962 = vpack.c.b16 %v2602, %v2598
  %v2963 = vpack.c.b16 %v2603, %v2599
  %v2964 = vpack.c.b16 %v2604, %v2600
  %v2965 = vpack.c.b16 %v2605, %v2601
  %v2966 = vpack.c.b16 %v2610, %v2606
  %v2967 = vpack.c.b16 %v2611, %v2607
  %v2968 = vpack.c.b16 %v2612, %v2608
  %v2969 = vpack.c.b16 %v2613, %v2609
  %v2970 = vpack.c.b16 %v2618, %v2614
  %v2971 = vpack.c.b16 %v2619, %v2615
  %v2972 = vpack.c.b16 %v2620, %v2616
  %v2973 = vpack.c.b16 %v2621, %v2617
  %v2974 = vpack.c.b16 %v2626, %v2622
  %v2975 = vpack.c.b16 %v2627, %v2623
  %v2976 = vpack.c.b16 %v2628, %v2624
  %v2977 = vpack.c.b16 %v2629, %v2625
  %v2978 = vpack.c.b16 %v2634, %v2630
  %v2979 = vpack.c.b16 %v2635, %v2631
  %v2980 = vpack.c.b16 %v2636, %v2632
  %v2981 = vpack.c.b16 %v2637, %v2633
  %v2982 = vpack.c.b16 %v2642, %v2638
  %v2983 = vpack.c.b16 %v2643, %v2639
  %v2984 = vpack.c.b16 %v2644, %v2640
  %v2985 = vpack.c.b16 %v2645, %v2641
  %v2986 = vpack.c.b16 %v2650, %v2646
  %v2987 = vpack.c.b16 %v2651, %v2647
  %v2988 = vpack.c.b16 %v2652, %v2648
  %v2989 = vpack.c.b16 %v2653, %v2649
  %v2990 = vpack.c.b16 %v2658, %v2654
  %v2991 = vpack.c.b16 %v2659, %v2655
  %v2992 = vpack.c.b16 %v2660, %v2656
  %v2993 = vpack.c.b16 %v2661, %v2657
  %v2994 = vpack.c.b16 %v2666, %v2662
  %v2995 = vpack.c.b16 %v2667, %v2663
  %v2996 = vpack.c.b16 %v2668, %v2664
  %v2997 = vpack.c.b16 %v2669, %v2665
  %v2998 = vpack.c.b16 %v2674, %v2670
  %v2999 = vpack.c.b16 %v2675, %v2671
  %v3000 = vpack.c.b16 %v2676, %v2672
  %v3001 = vpack.c.b16 %v2677, %v2673
  %v3002 = vpack.c.b16 %v2682, %v2678
  %v3003 = vpack.c.b16 %v2683, %v2679
  %v3004 = vpack.c.b16 %v2684, %v2680
  %v3005 = vpack.c.b16 %v2685, %v2681
  %v3006 = vpack.c.b16 %v2690, %v2686
  %v3007 = vpack.c.b16 %v2691, %v2687
  %v3008 = vpack.c.b16 %v2692, %v2688
  %v3009 = vpack.c.b16 %v2693, %v2689
  %v3010 = vpack.c.b16 %v2698, %v2694
  %v3011 = vpack.c.b16 %v2699, %v2695
  %v3012 = vpack.c.b16 %v2700, %v2696
  %v3013 = vpack.c.b16 %v2701, %v2697
  %v3014 = vpack.c.b16 %v2706, %v2702
  %v3015 = vpack.c.b16 %v2707, %v2703
  %v3016 = vpack.c.b16 %v2708, %v2704
  %v3017 = vpack.c.b16 %v2709, %v2705
  %v3018 = vpack.c.b16 %v2714, %v2710
  %v3019 = vpack.c.b16 %v2715, %v2711
  %v3020 = vpack.c.b16 %v2716, %v2712
  %v3021 = vpack.c.b16 %v2717, %v2713
  %v3022 = vpack.c.b16 %v2722, %v2718
  %v3023 = vpack.c.b16 %v2723, %v2719
  %v3024 = vpack.c.b16 %v2724, %v2720
  %v3025 = vpack.c.b16 %v2725, %v2721
  %v3026 = vpack.c.b16 %v2730, %v2726
  %v3027 = vpack.c.b16 %v2731, %v2727
  %v3028 = vpack.c.b16 %v2732, %v2728
  %v3029 = vpack.c.b16 %v2733, %v2729
  %v3030 = vpack.c.b16 %v2738, %v2734
  %v3031 = vpack.c.b16 %v2739, %v2735
  %v3032 = vpack.c.b16 %v2740, %v2736
  %v3033 = vpack.c.b16 %v2741, %v2737
  %v3034 = vpack.c.b16 %v2746, %v2742
  %v3035 = vpack.c.b16 %v2747, %v2743
  %v3036 = vpack.c.b16 %v2748, %v2744
  %v3037 = vpack.c.b16 %v2749, %v2745
  %v3038 = vpack.c.b16 %v2754, %v2750
  %v3039 = vpack.c.b16 %v2755, %v2751
  %v3040 = vpack.c.b16 %v2756, %v2752
  %v3041 = vpack.c.b16 %v2757, %v2753
  %v3042 = vpack.c.b16 %v2762, %v2758
  %v3043 = vpack.c.b16 %v2763, %v2759
  %v3044 = vpack.c.b16 %v2764, %v2760
  %v3045 = vpack.c.b16 %v2765, %v2761
  %v3046 = vpack.c.b16 %v2770, %v2766
  %v3047 = vpack.c.b16 %v2771, %v2767
  %v3048 = vpack.c.b16 %v2772, %v2768
  %v3049 = vpack.c.b16 %v2773, %v2769
  %v3050 = vpack.c.b16 %v2778, %v2774
  %v3051 = vpack.c.b16 %v2779, %v2775
  %v3052 = vpack.c.b16 %v2780, %v2776
  %v3053 = vpack.c.b16 %v2781, %v2777
  %v3054 = vpack.c.b16 %v2786, %v2782
  %v3055 = vpack.c.b16 %v2787, %v2783
  %v3056 = vpack.c.b16 %v2788, %v2784
  %v3057 = vpack.c.b16 %v2789, %v2785
  %v3058 = vpack.c.b16 %v2794, %v2790
  %v3059 = vpack.c.b16 %v2795, %v2791
  %v3060 = vpack.c.b16 %v2796, %v2792
  %v3061 = vpack.c.b16 %v2797, %v2793
  %v3062 = vpack.c.b16 %v2802, %v2798
  %v3063 = vpack.c.b16 %v2803, %v2799
  %v3064 = vpack.c.b16 %v2804, %v2800
  %v3065 = vpack.c.b16 %v2805, %v2801
  %v3066 = vpack.c.b16 %v2810, %v2806
  %v3067 = vpack.c.b16 %v2811, %v2807
  %v3068 = vpack.c.b16 %v2812, %v2808
  %v3069 = vpack.c.b16 %v2813, %v2809
  %3326 = vmatpush.bf16.msra.mxu0 %v2842
  %3327 = vmatpush.bf16.msra.mxu0 %v2838
  %3328 = vmatpush.bf16.msra.mxu0 %v2834
  %3329 = vmatpush.bf16.msra.mxu0 %v2830
  %3330 = vmatpush.bf16.msra.mxu0 %v2826
  %3331 = vmatpush.bf16.msra.mxu0 %v2822
  %3332 = vmatpush.bf16.msra.mxu0 %v2818
  %3333 = vmatpush.bf16.msra.mxu0 %v2814
  %3334 = vmatmul.bf16.gmra.mxu0 %v1772
  %v3335 = vpop.f32.mrf.mxu0
  %v3336 = vadd.f32 %v2038, %v3335
  %v3337 = vpop.f32.mrf.mxu0
  %3338 = vdwg.mxu0
  %3339 = vmatpush.bf16.msra.mxu0 %v2874
  %3340 = vmatpush.bf16.msra.mxu0 %v2870
  %3341 = vmatpush.bf16.msra.mxu0 %v2866
  %3342 = vmatpush.bf16.msra.mxu0 %v2862
  %3343 = vmatpush.bf16.msra.mxu0 %v2858
  %3344 = vmatpush.bf16.msra.mxu0 %v2854
  %3345 = vmatpush.bf16.msra.mxu0 %v2850
  %3346 = vmatpush.bf16.msra.mxu0 %v2846
  %3347 = vmatmul.bf16.gmra.mxu0 %v1773
  %v3348 = vpop.f32.mrf.mxu0
  %v3349 = vadd.f32 %v3336, %v3348
  %v3350 = vpop.f32.mrf.mxu0
  %3351 = vdwg.mxu0
  %3352 = vmatpush.bf16.msra.mxu0 %v2906
  %3353 = vmatpush.bf16.msra.mxu0 %v2902
  %3354 = vmatpush.bf16.msra.mxu0 %v2898
  %3355 = vmatpush.bf16.msra.mxu0 %v2894
  %3356 = vmatpush.bf16.msra.mxu0 %v2890
  %3357 = vmatpush.bf16.msra.mxu0 %v2886
  %3358 = vmatpush.bf16.msra.mxu0 %v2882
  %3359 = vmatpush.bf16.msra.mxu0 %v2878
  %3360 = vmatmul.bf16.gmra.mxu0 %v1774
  %v3361 = vpop.f32.mrf.mxu0
  %v3362 = vadd.f32 %v3349, %v3361
  %v3363 = vpop.f32.mrf.mxu0
  %3364 = vdwg.mxu0
  %3365 = vmatpush.bf16.msra.mxu0 %v2938
  %3366 = vmatpush.bf16.msra.mxu0 %v2934
  %3367 = vmatpush.bf16.msra.mxu0 %v2930
  %3368 = vmatpush.bf16.msra.mxu0 %v2926
  %3369 = vmatpush.bf16.msra.mxu0 %v2922
  %3370 = vmatpush.bf16.msra.mxu0 %v2918
  %3371 = vmatpush.bf16.msra.mxu0 %v2914
  %3372 = vmatpush.bf16.msra.mxu0 %v2910
  %3373 = vmatmul.bf16.gmra.mxu0 %v1775
  %v3374 = vpop.f32.mrf.mxu0
  %v3375 = vadd.f32 %v3362, %v3374
  %v3376 = vpop.f32.mrf.mxu0
  %3377 = vdwg.mxu0
  %3378 = vmatpush.bf16.msra.mxu0 %v2970
  %3379 = vmatpush.bf16.msra.mxu0 %v2966
  %3380 = vmatpush.bf16.msra.mxu0 %v2962
  %3381 = vmatpush.bf16.msra.mxu0 %v2958
  %3382 = vmatpush.bf16.msra.mxu0 %v2954
  %3383 = vmatpush.bf16.msra.mxu0 %v2950
  %3384 = vmatpush.bf16.msra.mxu0 %v2946
  %3385 = vmatpush.bf16.msra.mxu0 %v2942
  %3386 = vmatmul.bf16.gmra.mxu0 %v1776
  %v3387 = vpop.f32.mrf.mxu0
  %v3388 = vadd.f32 %v3375, %v3387
  %v3389 = vpop.f32.mrf.mxu0
  %3390 = vdwg.mxu0
  %3391 = vmatpush.bf16.msra.mxu0 %v3002
  %3392 = vmatpush.bf16.msra.mxu0 %v2998
  %3393 = vmatpush.bf16.msra.mxu0 %v2994
  %3394 = vmatpush.bf16.msra.mxu0 %v2990
  %3395 = vmatpush.bf16.msra.mxu0 %v2986
  %3396 = vmatpush.bf16.msra.mxu0 %v2982
  %3397 = vmatpush.bf16.msra.mxu0 %v2978
  %3398 = vmatpush.bf16.msra.mxu0 %v2974
  %3399 = vmatmul.bf16.gmra.mxu0 %v1777
  %v3400 = vpop.f32.mrf.mxu0
  %v3401 = vadd.f32 %v3388, %v3400
  %v3402 = vpop.f32.mrf.mxu0
  %3403 = vdwg.mxu0
  %3404 = vmatpush.bf16.msra.mxu0 %v3034
  %3405 = vmatpush.bf16.msra.mxu0 %v3030
  %3406 = vmatpush.bf16.msra.mxu0 %v3026
  %3407 = vmatpush.bf16.msra.mxu0 %v3022
  %3408 = vmatpush.bf16.msra.mxu0 %v3018
  %3409 = vmatpush.bf16.msra.mxu0 %v3014
  %3410 = vmatpush.bf16.msra.mxu0 %v3010
  %3411 = vmatpush.bf16.msra.mxu0 %v3006
  %3412 = vmatmul.bf16.gmra.mxu0 %v1778
  %v3413 = vpop.f32.mrf.mxu0
  %v3414 = vadd.f32 %v3401, %v3413
  %v3415 = vpop.f32.mrf.mxu0
  %3416 = vdwg.mxu0
  %3417 = vmatpush.bf16.msra.mxu0 %v3066
  %3418 = vmatpush.bf16.msra.mxu0 %v3062
  %3419 = vmatpush.bf16.msra.mxu0 %v3058
  %3420 = vmatpush.bf16.msra.mxu0 %v3054
  %3421 = vmatpush.bf16.msra.mxu0 %v3050
  %3422 = vmatpush.bf16.msra.mxu0 %v3046
  %3423 = vmatpush.bf16.msra.mxu0 %v3042
  %3424 = vmatpush.bf16.msra.mxu0 %v3038
  %3425 = vmatmul.bf16.gmra.mxu0 %v1779
  %v3426 = vpop.f32.mrf.mxu0
  %v3427 = vadd.f32 %v3414, %v3426
  %v3428 = vpop.f32.mrf.mxu0
  %3429 = vdwg.mxu0
  %3430 = vmatpush.bf16.msra.mxu0 %v2843
  %3431 = vmatpush.bf16.msra.mxu0 %v2839
  %3432 = vmatpush.bf16.msra.mxu0 %v2835
  %3433 = vmatpush.bf16.msra.mxu0 %v2831
  %3434 = vmatpush.bf16.msra.mxu0 %v2827
  %3435 = vmatpush.bf16.msra.mxu0 %v2823
  %3436 = vmatpush.bf16.msra.mxu0 %v2819
  %3437 = vmatpush.bf16.msra.mxu0 %v2815
  %3438 = vmatmul.bf16.gmra.mxu0 %v1772
  %v3439 = vpop.f32.mrf.mxu0
  %v3440 = vadd.f32 %v2039, %v3439
  %v3441 = vpop.f32.mrf.mxu0
  %3442 = vdwg.mxu0
  %3443 = vmatpush.bf16.msra.mxu0 %v2875
  %3444 = vmatpush.bf16.msra.mxu0 %v2871
  %3445 = vmatpush.bf16.msra.mxu0 %v2867
  %3446 = vmatpush.bf16.msra.mxu0 %v2863
  %3447 = vmatpush.bf16.msra.mxu0 %v2859
  %3448 = vmatpush.bf16.msra.mxu0 %v2855
  %3449 = vmatpush.bf16.msra.mxu0 %v2851
  %3450 = vmatpush.bf16.msra.mxu0 %v2847
  %3451 = vmatmul.bf16.gmra.mxu0 %v1773
  %v3452 = vpop.f32.mrf.mxu0
  %v3453 = vadd.f32 %v3440, %v3452
  %v3454 = vpop.f32.mrf.mxu0
  %3455 = vdwg.mxu0
  %3456 = vmatpush.bf16.msra.mxu0 %v2907
  %3457 = vmatpush.bf16.msra.mxu0 %v2903
  %3458 = vmatpush.bf16.msra.mxu0 %v2899
  %3459 = vmatpush.bf16.msra.mxu0 %v2895
  %3460 = vmatpush.bf16.msra.mxu0 %v2891
  %3461 = vmatpush.bf16.msra.mxu0 %v2887
  %3462 = vmatpush.bf16.msra.mxu0 %v2883
  %3463 = vmatpush.bf16.msra.mxu0 %v2879
  %3464 = vmatmul.bf16.gmra.mxu0 %v1774
  %v3465 = vpop.f32.mrf.mxu0
  %v3466 = vadd.f32 %v3453, %v3465
  %v3467 = vpop.f32.mrf.mxu0
  %3468 = vdwg.mxu0
  %3469 = vmatpush.bf16.msra.mxu0 %v2939
  %3470 = vmatpush.bf16.msra.mxu0 %v2935
  %3471 = vmatpush.bf16.msra.mxu0 %v2931
  %3472 = vmatpush.bf16.msra.mxu0 %v2927
  %3473 = vmatpush.bf16.msra.mxu0 %v2923
  %3474 = vmatpush.bf16.msra.mxu0 %v2919
  %3475 = vmatpush.bf16.msra.mxu0 %v2915
  %3476 = vmatpush.bf16.msra.mxu0 %v2911
  %3477 = vmatmul.bf16.gmra.mxu0 %v1775
  %v3478 = vpop.f32.mrf.mxu0
  %v3479 = vadd.f32 %v3466, %v3478
  %v3480 = vpop.f32.mrf.mxu0
  %3481 = vdwg.mxu0
  %3482 = vmatpush.bf16.msra.mxu0 %v2971
  %3483 = vmatpush.bf16.msra.mxu0 %v2967
  %3484 = vmatpush.bf16.msra.mxu0 %v2963
  %3485 = vmatpush.bf16.msra.mxu0 %v2959
  %3486 = vmatpush.bf16.msra.mxu0 %v2955
  %3487 = vmatpush.bf16.msra.mxu0 %v2951
  %3488 = vmatpush.bf16.msra.mxu0 %v2947
  %3489 = vmatpush.bf16.msra.mxu0 %v2943
  %3490 = vmatmul.bf16.gmra.mxu0 %v1776
  %v3491 = vpop.f32.mrf.mxu0
  %v3492 = vadd.f32 %v3479, %v3491
  %v3493 = vpop.f32.mrf.mxu0
  %3494 = vdwg.mxu0
  %3495 = vmatpush.bf16.msra.mxu0 %v3003
  %3496 = vmatpush.bf16.msra.mxu0 %v2999
  %3497 = vmatpush.bf16.msra.mxu0 %v2995
  %3498 = vmatpush.bf16.msra.mxu0 %v2991
  %3499 = vmatpush.bf16.msra.mxu0 %v2987
  %3500 = vmatpush.bf16.msra.mxu0 %v2983
  %3501 = vmatpush.bf16.msra.mxu0 %v2979
  %3502 = vmatpush.bf16.msra.mxu0 %v2975
  %3503 = vmatmul.bf16.gmra.mxu0 %v1777
  %v3504 = vpop.f32.mrf.mxu0
  %v3505 = vadd.f32 %v3492, %v3504
  %v3506 = vpop.f32.mrf.mxu0
  %3507 = vdwg.mxu0
  %3508 = vmatpush.bf16.msra.mxu0 %v3035
  %3509 = vmatpush.bf16.msra.mxu0 %v3031
  %3510 = vmatpush.bf16.msra.mxu0 %v3027
  %3511 = vmatpush.bf16.msra.mxu0 %v3023
  %3512 = vmatpush.bf16.msra.mxu0 %v3019
  %3513 = vmatpush.bf16.msra.mxu0 %v3015
  %3514 = vmatpush.bf16.msra.mxu0 %v3011
  %3515 = vmatpush.bf16.msra.mxu0 %v3007
  %3516 = vmatmul.bf16.gmra.mxu0 %v1778
  %v3517 = vpop.f32.mrf.mxu0
  %v3518 = vadd.f32 %v3505, %v3517
  %v3519 = vpop.f32.mrf.mxu0
  %3520 = vdwg.mxu0
  %3521 = vmatpush.bf16.msra.mxu0 %v3067
  %3522 = vmatpush.bf16.msra.mxu0 %v3063
  %3523 = vmatpush.bf16.msra.mxu0 %v3059
  %3524 = vmatpush.bf16.msra.mxu0 %v3055
  %3525 = vmatpush.bf16.msra.mxu0 %v3051
  %3526 = vmatpush.bf16.msra.mxu0 %v3047
  %3527 = vmatpush.bf16.msra.mxu0 %v3043
  %3528 = vmatpush.bf16.msra.mxu0 %v3039
  %3529 = vmatmul.bf16.gmra.mxu0 %v1779
  %v3530 = vpop.f32.mrf.mxu0
  %v3531 = vadd.f32 %v3518, %v3530
  %v3532 = vpop.f32.mrf.mxu0
  %3533 = vdwg.mxu0
  %3534 = vmatpush.bf16.msra.mxu0 %v2844
  %3535 = vmatpush.bf16.msra.mxu0 %v2840
  %3536 = vmatpush.bf16.msra.mxu0 %v2836
  %3537 = vmatpush.bf16.msra.mxu0 %v2832
  %3538 = vmatpush.bf16.msra.mxu0 %v2828
  %3539 = vmatpush.bf16.msra.mxu0 %v2824
  %3540 = vmatpush.bf16.msra.mxu0 %v2820
  %3541 = vmatpush.bf16.msra.mxu0 %v2816
  %3542 = vmatmul.bf16.gmra.mxu0 %v1772
  %v3543 = vpop.f32.mrf.mxu0
  %v3544 = vadd.f32 %v2040, %v3543
  %v3545 = vpop.f32.mrf.mxu0
  %3546 = vdwg.mxu0
  %3547 = vmatpush.bf16.msra.mxu0 %v2876
  %3548 = vmatpush.bf16.msra.mxu0 %v2872
  %3549 = vmatpush.bf16.msra.mxu0 %v2868
  %3550 = vmatpush.bf16.msra.mxu0 %v2864
  %3551 = vmatpush.bf16.msra.mxu0 %v2860
  %3552 = vmatpush.bf16.msra.mxu0 %v2856
  %3553 = vmatpush.bf16.msra.mxu0 %v2852
  %3554 = vmatpush.bf16.msra.mxu0 %v2848
  %3555 = vmatmul.bf16.gmra.mxu0 %v1773
  %v3556 = vpop.f32.mrf.mxu0
  %v3557 = vadd.f32 %v3544, %v3556
  %v3558 = vpop.f32.mrf.mxu0
  %3559 = vdwg.mxu0
  %3560 = vmatpush.bf16.msra.mxu0 %v2908
  %3561 = vmatpush.bf16.msra.mxu0 %v2904
  %3562 = vmatpush.bf16.msra.mxu0 %v2900
  %3563 = vmatpush.bf16.msra.mxu0 %v2896
  %3564 = vmatpush.bf16.msra.mxu0 %v2892
  %3565 = vmatpush.bf16.msra.mxu0 %v2888
  %3566 = vmatpush.bf16.msra.mxu0 %v2884
  %3567 = vmatpush.bf16.msra.mxu0 %v2880
  %3568 = vmatmul.bf16.gmra.mxu0 %v1774
  %v3569 = vpop.f32.mrf.mxu0
  %v3570 = vadd.f32 %v3557, %v3569
  %v3571 = vpop.f32.mrf.mxu0
  %3572 = vdwg.mxu0
  %3573 = vmatpush.bf16.msra.mxu0 %v2940
  %3574 = vmatpush.bf16.msra.mxu0 %v2936
  %3575 = vmatpush.bf16.msra.mxu0 %v2932
  %3576 = vmatpush.bf16.msra.mxu0 %v2928
  %3577 = vmatpush.bf16.msra.mxu0 %v2924
  %3578 = vmatpush.bf16.msra.mxu0 %v2920
  %3579 = vmatpush.bf16.msra.mxu0 %v2916
  %3580 = vmatpush.bf16.msra.mxu0 %v2912
  %3581 = vmatmul.bf16.gmra.mxu0 %v1775
  %v3582 = vpop.f32.mrf.mxu0
  %v3583 = vadd.f32 %v3570, %v3582
  %v3584 = vpop.f32.mrf.mxu0
  %3585 = vdwg.mxu0
  %3586 = vmatpush.bf16.msra.mxu0 %v2972
  %3587 = vmatpush.bf16.msra.mxu0 %v2968
  %3588 = vmatpush.bf16.msra.mxu0 %v2964
  %3589 = vmatpush.bf16.msra.mxu0 %v2960
  %3590 = vmatpush.bf16.msra.mxu0 %v2956
  %3591 = vmatpush.bf16.msra.mxu0 %v2952
  %3592 = vmatpush.bf16.msra.mxu0 %v2948
  %3593 = vmatpush.bf16.msra.mxu0 %v2944
  %3594 = vmatmul.bf16.gmra.mxu0 %v1776
  %v3595 = vpop.f32.mrf.mxu0
  %v3596 = vadd.f32 %v3583, %v3595
  %v3597 = vpop.f32.mrf.mxu0
  %3598 = vdwg.mxu0
  %3599 = vmatpush.bf16.msra.mxu0 %v3004
  %3600 = vmatpush.bf16.msra.mxu0 %v3000
  %3601 = vmatpush.bf16.msra.mxu0 %v2996
  %3602 = vmatpush.bf16.msra.mxu0 %v2992
  %3603 = vmatpush.bf16.msra.mxu0 %v2988
  %3604 = vmatpush.bf16.msra.mxu0 %v2984
  %3605 = vmatpush.bf16.msra.mxu0 %v2980
  %3606 = vmatpush.bf16.msra.mxu0 %v2976
  %3607 = vmatmul.bf16.gmra.mxu0 %v1777
  %v3608 = vpop.f32.mrf.mxu0
  %v3609 = vadd.f32 %v3596, %v3608
  %v3610 = vpop.f32.mrf.mxu0
  %3611 = vdwg.mxu0
  %3612 = vmatpush.bf16.msra.mxu0 %v3036
  %3613 = vmatpush.bf16.msra.mxu0 %v3032
  %3614 = vmatpush.bf16.msra.mxu0 %v3028
  %3615 = vmatpush.bf16.msra.mxu0 %v3024
  %3616 = vmatpush.bf16.msra.mxu0 %v3020
  %3617 = vmatpush.bf16.msra.mxu0 %v3016
  %3618 = vmatpush.bf16.msra.mxu0 %v3012
  %3619 = vmatpush.bf16.msra.mxu0 %v3008
  %3620 = vmatmul.bf16.gmra.mxu0 %v1778
  %v3621 = vpop.f32.mrf.mxu0
  %v3622 = vadd.f32 %v3609, %v3621
  %v3623 = vpop.f32.mrf.mxu0
  %3624 = vdwg.mxu0
  %3625 = vmatpush.bf16.msra.mxu0 %v3068
  %3626 = vmatpush.bf16.msra.mxu0 %v3064
  %3627 = vmatpush.bf16.msra.mxu0 %v3060
  %3628 = vmatpush.bf16.msra.mxu0 %v3056
  %3629 = vmatpush.bf16.msra.mxu0 %v3052
  %3630 = vmatpush.bf16.msra.mxu0 %v3048
  %3631 = vmatpush.bf16.msra.mxu0 %v3044
  %3632 = vmatpush.bf16.msra.mxu0 %v3040
  %3633 = vmatmul.bf16.gmra.mxu0 %v1779
  %v3634 = vpop.f32.mrf.mxu0
  %v3635 = vadd.f32 %v3622, %v3634
  %v3636 = vpop.f32.mrf.mxu0
  %3637 = vdwg.mxu0
  %3638 = vmatpush.bf16.msra.mxu0 %v2845
  %3639 = vmatpush.bf16.msra.mxu0 %v2841
  %3640 = vmatpush.bf16.msra.mxu0 %v2837
  %3641 = vmatpush.bf16.msra.mxu0 %v2833
  %3642 = vmatpush.bf16.msra.mxu0 %v2829
  %3643 = vmatpush.bf16.msra.mxu0 %v2825
  %3644 = vmatpush.bf16.msra.mxu0 %v2821
  %3645 = vmatpush.bf16.msra.mxu0 %v2817
  %3646 = vmatmul.bf16.gmra.mxu0 %v1772
  %v3647 = vpop.f32.mrf.mxu0
  %v3648 = vadd.f32 %v2041, %v3647
  %v3649 = vpop.f32.mrf.mxu0
  %3650 = vdwg.mxu0
  %3651 = vmatpush.bf16.msra.mxu0 %v2877
  %3652 = vmatpush.bf16.msra.mxu0 %v2873
  %3653 = vmatpush.bf16.msra.mxu0 %v2869
  %3654 = vmatpush.bf16.msra.mxu0 %v2865
  %3655 = vmatpush.bf16.msra.mxu0 %v2861
  %3656 = vmatpush.bf16.msra.mxu0 %v2857
  %3657 = vmatpush.bf16.msra.mxu0 %v2853
  %3658 = vmatpush.bf16.msra.mxu0 %v2849
  %3659 = vmatmul.bf16.gmra.mxu0 %v1773
  %v3660 = vpop.f32.mrf.mxu0
  %v3661 = vadd.f32 %v3648, %v3660
  %v3662 = vpop.f32.mrf.mxu0
  %3663 = vdwg.mxu0
  %3664 = vmatpush.bf16.msra.mxu0 %v2909
  %3665 = vmatpush.bf16.msra.mxu0 %v2905
  %3666 = vmatpush.bf16.msra.mxu0 %v2901
  %3667 = vmatpush.bf16.msra.mxu0 %v2897
  %3668 = vmatpush.bf16.msra.mxu0 %v2893
  %3669 = vmatpush.bf16.msra.mxu0 %v2889
  %3670 = vmatpush.bf16.msra.mxu0 %v2885
  %3671 = vmatpush.bf16.msra.mxu0 %v2881
  %3672 = vmatmul.bf16.gmra.mxu0 %v1774
  %v3673 = vpop.f32.mrf.mxu0
  %v3674 = vadd.f32 %v3661, %v3673
  %v3675 = vpop.f32.mrf.mxu0
  %3676 = vdwg.mxu0
  %3677 = vmatpush.bf16.msra.mxu0 %v2941
  %3678 = vmatpush.bf16.msra.mxu0 %v2937
  %3679 = vmatpush.bf16.msra.mxu0 %v2933
  %3680 = vmatpush.bf16.msra.mxu0 %v2929
  %3681 = vmatpush.bf16.msra.mxu0 %v2925
  %3682 = vmatpush.bf16.msra.mxu0 %v2921
  %3683 = vmatpush.bf16.msra.mxu0 %v2917
  %3684 = vmatpush.bf16.msra.mxu0 %v2913
  %3685 = vmatmul.bf16.gmra.mxu0 %v1775
  %v3686 = vpop.f32.mrf.mxu0
  %v3687 = vadd.f32 %v3674, %v3686
  %v3688 = vpop.f32.mrf.mxu0
  %3689 = vdwg.mxu0
  %3690 = vmatpush.bf16.msra.mxu0 %v2973
  %3691 = vmatpush.bf16.msra.mxu0 %v2969
  %3692 = vmatpush.bf16.msra.mxu0 %v2965
  %3693 = vmatpush.bf16.msra.mxu0 %v2961
  %3694 = vmatpush.bf16.msra.mxu0 %v2957
  %3695 = vmatpush.bf16.msra.mxu0 %v2953
  %3696 = vmatpush.bf16.msra.mxu0 %v2949
  %3697 = vmatpush.bf16.msra.mxu0 %v2945
  %3698 = vmatmul.bf16.gmra.mxu0 %v1776
  %v3699 = vpop.f32.mrf.mxu0
  %v3700 = vadd.f32 %v3687, %v3699
  %v3701 = vpop.f32.mrf.mxu0
  %3702 = vdwg.mxu0
  %3703 = vmatpush.bf16.msra.mxu0 %v3005
  %3704 = vmatpush.bf16.msra.mxu0 %v3001
  %3705 = vmatpush.bf16.msra.mxu0 %v2997
  %3706 = vmatpush.bf16.msra.mxu0 %v2993
  %3707 = vmatpush.bf16.msra.mxu0 %v2989
  %3708 = vmatpush.bf16.msra.mxu0 %v2985
  %3709 = vmatpush.bf16.msra.mxu0 %v2981
  %3710 = vmatpush.bf16.msra.mxu0 %v2977
  %3711 = vmatmul.bf16.gmra.mxu0 %v1777
  %v3712 = vpop.f32.mrf.mxu0
  %v3713 = vadd.f32 %v3700, %v3712
  %v3714 = vpop.f32.mrf.mxu0
  %3715 = vdwg.mxu0
  %3716 = vmatpush.bf16.msra.mxu0 %v3037
  %3717 = vmatpush.bf16.msra.mxu0 %v3033
  %3718 = vmatpush.bf16.msra.mxu0 %v3029
  %3719 = vmatpush.bf16.msra.mxu0 %v3025
  %3720 = vmatpush.bf16.msra.mxu0 %v3021
  %3721 = vmatpush.bf16.msra.mxu0 %v3017
  %3722 = vmatpush.bf16.msra.mxu0 %v3013
  %3723 = vmatpush.bf16.msra.mxu0 %v3009
  %3724 = vmatmul.bf16.gmra.mxu0 %v1778
  %v3725 = vpop.f32.mrf.mxu0
  %v3726 = vadd.f32 %v3713, %v3725
  %v3727 = vpop.f32.mrf.mxu0
  %3728 = vdwg.mxu0
  %3729 = vmatpush.bf16.msra.mxu0 %v3069
  %3730 = vmatpush.bf16.msra.mxu0 %v3065
  %3731 = vmatpush.bf16.msra.mxu0 %v3061
  %3732 = vmatpush.bf16.msra.mxu0 %v3057
  %3733 = vmatpush.bf16.msra.mxu0 %v3053
  %3734 = vmatpush.bf16.msra.mxu0 %v3049
  %3735 = vmatpush.bf16.msra.mxu0 %v3045
  %3736 = vmatpush.bf16.msra.mxu0 %v3041
  %3737 = vmatmul.bf16.gmra.mxu0 %v1779
  %v3738 = vpop.f32.mrf.mxu0
  %v3739 = vadd.f32 %v3726, %v3738
  %v3740 = vpop.f32.mrf.mxu0
  %3741 = vdwg.mxu0
  %v3742 = vmax.f32 %v3427, 0.0
  %v3743 = vmax.f32 %v3531, 0.0
  %v3744 = vmax.f32 %v3635, 0.0
  %v3745 = vmax.f32 %v3739, 0.0
  %v3746 = vpack.c.bf16 %v3742, %v3742
  %v3747 = vpack.c.bf16 %v3743, %v3743
  %v3748 = vpack.c.bf16 %v3744, %v3744
  %v3749 = vpack.c.bf16 %v3745, %v3745
  %v3750 = vld [vmem:[%s11] sm:$0xf]
  %v3751 = vld [vmem:[%s11 + $0x4] sm:$0xf]
  %v3752 = vld [vmem:[%s11 + $0x8] sm:$0xf]
  %v3753 = vld [vmem:[%s11 + $0xc] sm:$0xf]
  %v3754 = vld [vmem:[%s11 + $0x10] sm:$0xf]
  %v3755 = vld [vmem:[%s11 + $0x14] sm:$0xf]
  %v3756 = vld [vmem:[%s11 + $0x18] sm:$0xf]
  %v3757 = vld [vmem:[%s11 + $0x1c] sm:$0xf]
  %v3758 = vld [vmem:[%s11 + $0x20] sm:$0xf]
  %v3759 = vld [vmem:[%s11 + $0x24] sm:$0xf]
  %v3760 = vld [vmem:[%s11 + $0x28] sm:$0xf]
  %v3761 = vld [vmem:[%s11 + $0x2c] sm:$0xf]
  %v3762 = vld [vmem:[%s11 + $0x30] sm:$0xf]
  %v3763 = vld [vmem:[%s11 + $0x34] sm:$0xf]
  %v3764 = vld [vmem:[%s11 + $0x38] sm:$0xf]
  %v3765 = vld [vmem:[%s11 + $0x3c] sm:$0xf]
  %v3766 = vld [vmem:[%s11 + $0x40] sm:$0xf]
  %v3767 = vld [vmem:[%s11 + $0x44] sm:$0xf]
  %v3768 = vld [vmem:[%s11 + $0x48] sm:$0xf]
  %v3769 = vld [vmem:[%s11 + $0x4c] sm:$0xf]
  %v3770 = vld [vmem:[%s11 + $0x50] sm:$0xf]
  %v3771 = vld [vmem:[%s11 + $0x54] sm:$0xf]
  %v3772 = vld [vmem:[%s11 + $0x58] sm:$0xf]
  %v3773 = vld [vmem:[%s11 + $0x5c] sm:$0xf]
  %v3774 = vld [vmem:[%s11 + $0x60] sm:$0xf]
  %v3775 = vld [vmem:[%s11 + $0x64] sm:$0xf]
  %v3776 = vld [vmem:[%s11 + $0x68] sm:$0xf]
  %v3777 = vld [vmem:[%s11 + $0x6c] sm:$0xf]
  %v3778 = vld [vmem:[%s11 + $0x70] sm:$0xf]
  %v3779 = vld [vmem:[%s11 + $0x74] sm:$0xf]
  %v3780 = vld [vmem:[%s11 + $0x78] sm:$0xf]
  %v3781 = vld [vmem:[%s11 + $0x7c] sm:$0xf]
  %v3782 = vld [vmem:[%s11 + $0x80] sm:$0xf]
  %v3783 = vld [vmem:[%s11 + $0x84] sm:$0xf]
  %v3784 = vld [vmem:[%s11 + $0x88] sm:$0xf]
  %v3785 = vld [vmem:[%s11 + $0x8c] sm:$0xf]
  %v3786 = vld [vmem:[%s11 + $0x90] sm:$0xf]
  %v3787 = vld [vmem:[%s11 + $0x94] sm:$0xf]
  %v3788 = vld [vmem:[%s11 + $0x98] sm:$0xf]
  %v3789 = vld [vmem:[%s11 + $0x9c] sm:$0xf]
  %v3790 = vld [vmem:[%s11 + $0xa0] sm:$0xf]
  %v3791 = vld [vmem:[%s11 + $0xa4] sm:$0xf]
  %v3792 = vld [vmem:[%s11 + $0xa8] sm:$0xf]
  %v3793 = vld [vmem:[%s11 + $0xac] sm:$0xf]
  %v3794 = vld [vmem:[%s11 + $0xb0] sm:$0xf]
  %v3795 = vld [vmem:[%s11 + $0xb4] sm:$0xf]
  %v3796 = vld [vmem:[%s11 + $0xb8] sm:$0xf]
  %v3797 = vld [vmem:[%s11 + $0xbc] sm:$0xf]
  %v3798 = vld [vmem:[%s11 + $0xc0] sm:$0xf]
  %v3799 = vld [vmem:[%s11 + $0xc4] sm:$0xf]
  %v3800 = vld [vmem:[%s11 + $0xc8] sm:$0xf]
  %v3801 = vld [vmem:[%s11 + $0xcc] sm:$0xf]
  %v3802 = vld [vmem:[%s11 + $0xd0] sm:$0xf]
  %v3803 = vld [vmem:[%s11 + $0xd4] sm:$0xf]
  %v3804 = vld [vmem:[%s11 + $0xd8] sm:$0xf]
  %v3805 = vld [vmem:[%s11 + $0xdc] sm:$0xf]
  %v3806 = vld [vmem:[%s11 + $0xe0] sm:$0xf]
  %v3807 = vld [vmem:[%s11 + $0xe4] sm:$0xf]
  %v3808 = vld [vmem:[%s11 + $0xe8] sm:$0xf]
  %v3809 = vld [vmem:[%s11 + $0xec] sm:$0xf]
  %v3810 = vld [vmem:[%s11 + $0xf0] sm:$0xf]
  %v3811 = vld [vmem:[%s11 + $0xf4] sm:$0xf]
  %v3812 = vld [vmem:[%s11 + $0xf8] sm:$0xf]
  %v3813 = vld [vmem:[%s11 + $0xfc] sm:$0xf]
  %v3814 = vld [vmem:[#allocation2] sm:$0x1]
  %v3816 = vperm.slane %v3814, 0
  %v3882 = vunpack.c.l.b16 %v3750
  %v3883 = vunpack.c.l.b16 %v3751
  %v3884 = vunpack.c.l.b16 %v3752
  %v3885 = vunpack.c.l.b16 %v3753
  %v3886 = vunpack.c.l.b16 %v3754
  %v3887 = vunpack.c.l.b16 %v3755
  %v3888 = vunpack.c.l.b16 %v3756
  %v3889 = vunpack.c.l.b16 %v3757
  %v3890 = vunpack.c.l.b16 %v3758
  %v3891 = vunpack.c.l.b16 %v3759
  %v3892 = vunpack.c.l.b16 %v3760
  %v3893 = vunpack.c.l.b16 %v3761
  %v3894 = vunpack.c.l.b16 %v3762
  %v3895 = vunpack.c.l.b16 %v3763
  %v3896 = vunpack.c.l.b16 %v3764
  %v3897 = vunpack.c.l.b16 %v3765
  %v3898 = vunpack.c.l.b16 %v3766
  %v3899 = vunpack.c.l.b16 %v3767
  %v3900 = vunpack.c.l.b16 %v3768
  %v3901 = vunpack.c.l.b16 %v3769
  %v3902 = vunpack.c.l.b16 %v3770
  %v3903 = vunpack.c.l.b16 %v3771
  %v3904 = vunpack.c.l.b16 %v3772
  %v3905 = vunpack.c.l.b16 %v3773
  %v3906 = vunpack.c.l.b16 %v3774
  %v3907 = vunpack.c.l.b16 %v3775
  %v3908 = vunpack.c.l.b16 %v3776
  %v3909 = vunpack.c.l.b16 %v3777
  %v3910 = vunpack.c.l.b16 %v3778
  %v3911 = vunpack.c.l.b16 %v3779
  %v3912 = vunpack.c.l.b16 %v3780
  %v3913 = vunpack.c.l.b16 %v3781
  %v3914 = vunpack.c.l.b16 %v3782
  %v3915 = vunpack.c.l.b16 %v3783
  %v3916 = vunpack.c.l.b16 %v3784
  %v3917 = vunpack.c.l.b16 %v3785
  %v3918 = vunpack.c.l.b16 %v3786
  %v3919 = vunpack.c.l.b16 %v3787
  %v3920 = vunpack.c.l.b16 %v3788
  %v3921 = vunpack.c.l.b16 %v3789
  %v3922 = vunpack.c.l.b16 %v3790
  %v3923 = vunpack.c.l.b16 %v3791
  %v3924 = vunpack.c.l.b16 %v3792
  %v3925 = vunpack.c.l.b16 %v3793
  %v3926 = vunpack.c.l.b16 %v3794
  %v3927 = vunpack.c.l.b16 %v3795
  %v3928 = vunpack.c.l.b16 %v3796
  %v3929 = vunpack.c.l.b16 %v3797
  %v3930 = vunpack.c.l.b16 %v3798
  %v3931 = vunpack.c.l.b16 %v3799
  %v3932 = vunpack.c.l.b16 %v3800
  %v3933 = vunpack.c.l.b16 %v3801
  %v3934 = vunpack.c.l.b16 %v3802
  %v3935 = vunpack.c.l.b16 %v3803
  %v3936 = vunpack.c.l.b16 %v3804
  %v3937 = vunpack.c.l.b16 %v3805
  %v3938 = vunpack.c.l.b16 %v3806
  %v3939 = vunpack.c.l.b16 %v3807
  %v3940 = vunpack.c.l.b16 %v3808
  %v3941 = vunpack.c.l.b16 %v3809
  %v3942 = vunpack.c.l.b16 %v3810
  %v3943 = vunpack.c.l.b16 %v3811
  %v3944 = vunpack.c.l.b16 %v3812
  %v3945 = vunpack.c.l.b16 %v3813
  %v3946 = vpack.c.b16 %v3883, %v3882
  %v3947 = vpack.c.b16 %v3885, %v3884
  %v3948 = vpack.c.b16 %v3887, %v3886
  %v3949 = vpack.c.b16 %v3889, %v3888
  %v3950 = vpack.c.b16 %v3891, %v3890
  %v3951 = vpack.c.b16 %v3893, %v3892
  %v3952 = vpack.c.b16 %v3895, %v3894
  %v3953 = vpack.c.b16 %v3897, %v3896
  %v3954 = vpack.c.b16 %v3899, %v3898
  %v3955 = vpack.c.b16 %v3901, %v3900
  %v3956 = vpack.c.b16 %v3903, %v3902
  %v3957 = vpack.c.b16 %v3905, %v3904
  %v3958 = vpack.c.b16 %v3907, %v3906
  %v3959 = vpack.c.b16 %v3909, %v3908
  %v3960 = vpack.c.b16 %v3911, %v3910
  %v3961 = vpack.c.b16 %v3913, %v3912
  %v3962 = vpack.c.b16 %v3915, %v3914
  %v3963 = vpack.c.b16 %v3917, %v3916
  %v3964 = vpack.c.b16 %v3919, %v3918
  %v3965 = vpack.c.b16 %v3921, %v3920
  %v3966 = vpack.c.b16 %v3923, %v3922
  %v3967 = vpack.c.b16 %v3925, %v3924
  %v3968 = vpack.c.b16 %v3927, %v3926
  %v3969 = vpack.c.b16 %v3929, %v3928
  %v3970 = vpack.c.b16 %v3931, %v3930
  %v3971 = vpack.c.b16 %v3933, %v3932
  %v3972 = vpack.c.b16 %v3935, %v3934
  %v3973 = vpack.c.b16 %v3937, %v3936
  %v3974 = vpack.c.b16 %v3939, %v3938
  %v3975 = vpack.c.b16 %v3941, %v3940
  %v3976 = vpack.c.b16 %v3943, %v3942
  %v3977 = vpack.c.b16 %v3945, %v3944
  %4010 = vmatpush.bf16.msra.mxu0 %v3953
  %4011 = vmatpush.bf16.msra.mxu0 %v3952
  %4012 = vmatpush.bf16.msra.mxu0 %v3951
  %4013 = vmatpush.bf16.msra.mxu0 %v3950
  %4014 = vmatpush.bf16.msra.mxu0 %v3949
  %4015 = vmatpush.bf16.msra.mxu0 %v3948
  %4016 = vmatpush.bf16.msra.mxu0 %v3947
  %4017 = vmatpush.bf16.msra.mxu0 %v3946
  %4018 = vmatmul.bf16.gmra.mxu0 %v3746
  %v4019 = vpop.f32.mrf.mxu0
  %v4020 = vadd.f32 %v3816, %v4019
  %v4021 = vpop.f32.mrf.mxu0
  %4022 = vdwg.mxu0
  %4023 = vmatpush.bf16.msra.mxu0 %v3961
  %4024 = vmatpush.bf16.msra.mxu0 %v3960
  %4025 = vmatpush.bf16.msra.mxu0 %v3959
  %4026 = vmatpush.bf16.msra.mxu0 %v3958
  %4027 = vmatpush.bf16.msra.mxu0 %v3957
  %4028 = vmatpush.bf16.msra.mxu0 %v3956
  %4029 = vmatpush.bf16.msra.mxu0 %v3955
  %4030 = vmatpush.bf16.msra.mxu0 %v3954
  %4031 = vmatmul.bf16.gmra.mxu0 %v3747
  %v4032 = vpop.f32.mrf.mxu0
  %v4033 = vadd.f32 %v4020, %v4032
  %v4034 = vpop.f32.mrf.mxu0
  %4035 = vdwg.mxu0
  %4036 = vmatpush.bf16.msra.mxu0 %v3969
  %4037 = vmatpush.bf16.msra.mxu0 %v3968
  %4038 = vmatpush.bf16.msra.mxu0 %v3967
  %4039 = vmatpush.bf16.msra.mxu0 %v3966
  %4040 = vmatpush.bf16.msra.mxu0 %v3965
  %4041 = vmatpush.bf16.msra.mxu0 %v3964
  %4042 = vmatpush.bf16.msra.mxu0 %v3963
  %4043 = vmatpush.bf16.msra.mxu0 %v3962
  %4044 = vmatmul.bf16.gmra.mxu0 %v3748
  %v4045 = vpop.f32.mrf.mxu0
  %v4046 = vadd.f32 %v4033, %v4045
  %v4047 = vpop.f32.mrf.mxu0
  %4048 = vdwg.mxu0
  %4049 = vmatpush.bf16.msra.mxu0 %v3977
  %4050 = vmatpush.bf16.msra.mxu0 %v3976
  %4051 = vmatpush.bf16.msra.mxu0 %v3975
  %4052 = vmatpush.bf16.msra.mxu0 %v3974
  %4053 = vmatpush.bf16.msra.mxu0 %v3973
  %4054 = vmatpush.bf16.msra.mxu0 %v3972
  %4055 = vmatpush.bf16.msra.mxu0 %v3971
  %4056 = vmatpush.bf16.msra.mxu0 %v3970
  %4057 = vmatmul.bf16.gmra.mxu0 %v3749
  %v4058 = vpop.f32.mrf.mxu0
  %v4059 = vadd.f32 %v4046, %v4058
  %v4060 = vpop.f32.mrf.mxu0
  %4061 = vdwg.mxu0
  %vm4062 = vcmask 1024
  %4063 = vst.msk [vmem:[%s13] sm:$0x3] %vm4062, %v4059
  // Predicated region
  $region54: #{gcnfg_forward.5} parent=0 // pred_check
    _
  $region55: #{gcnfg_forward.5} parent=0 // pred_check_branch
    %4065 = sbr.rel (0) target = $region57
  $region56: #{gcnfg_forward.5} parent=0 // pred_region
    _
  $region57: #{gcnfg_forward.5} parent=0 // pred_fallthru
    _
  // Predicated region
  $region58: #{gcnfg_forward.5} parent=0 // pred_check
    _
  $region59: #{gcnfg_forward.5} parent=0 // pred_check_branch
    %4067 = sbr.rel (0) target = $region61
  $region60: #{gcnfg_forward.5} parent=0 // pred_region
    _
  $region61: #{gcnfg_forward.5} parent=0 // pred_fallthru
    _

</llo_original>
